<compile_context>
chip_gen: v7x
topology: tpu7x:2x2x1
jax: 0.10.0
libtpu: 0.0.40
codegen_flags: <defaults>
</compile_context>

<pallas_src>
import jax
import jax.numpy as jnp
from jax.experimental import pallas as pl
from jax.experimental.pallas import tpu as pltpu

# ----------------------------------------------------------------------------
# Static problem geometry (fixed by the PyTorch module: Dense1(16384)).
# ----------------------------------------------------------------------------
C_IN = 6
C1, K1_D, K1_H, K1_W, S1_D = 64, 5, 3, 3, 2      # conv1: Conv3d(6,64,(5,3,3),(2,1,1))
C2, K2_D, K2_H, K2_W, S2_D = 128, 3, 3, 3, 2     # conv2: Conv3d(64,128,(3,3,3),(2,1,1))
N_OUT = 10   # TODO(synk): Dense1 definition not provided; modeled as Linear(16384 -> 10).

T_IN, H_IN, W_IN = 13, 12, 12                    # input (B, T, 6, H, W)
D1, H1, W1 = 5, 10, 10                           # conv1 output spatial dims
W1P = 16                                         # conv1 W padded to a multiple of 8
D2, H2, W2 = 2, 8, 8                             # conv2 output spatial dims
M1 = D1 * H1 * W1P                               # 800  conv1 rows (incl. padding)
KC1 = K1_D * K1_H * K1_W * C_IN                  # 270  conv1 im2col depth
KC2 = K2_D * K2_H * K2_W * C1                    # 1728 conv2 im2col depth
M2 = D2 * H2 * W2                                # 128  conv2 rows (= flatten / C2)
FLAT = C2 * D2 * H2 * W2                         # 16384


# ----------------------------------------------------------------------------
# Fused per-sample kernel: conv1 matmul -> conv2 (im2col in VMEM) -> dense.
# ----------------------------------------------------------------------------
def _fused_forward_kernel(p1_ref, w1_ref, b1_ref, w2_ref, b2_ref, wd_ref, bd_ref,
                          out_ref, y1_ref, p2_ref):
    # ---- conv1: (800,270)bf16 @ (270,64)bf16 -> f32, +bias, ReLU ------------
    acc1 = jnp.dot(p1_ref[0], w1_ref[...], preferred_element_type=jnp.float32)
    y1 = jnp.maximum(acc1 + b1_ref[...], 0.0)                     # (800, 64) f32
    # Rows are ordered (d, h, w_padded); reshape is tile-layout preserving.
    y1_ref[...] = y1.reshape(D1, H1, W1P, C1).astype(y1_ref.dtype)

    # ---- conv2 im2col entirely in VMEM (y1 never leaves the chip) ----------
    for do in range(D2):
        for kd in range(K2_D):
            for kh in range(K2_H):
                for kw in range(K2_W):
                    t = (kd * K2_H + kh) * K2_W + kw
                    sl = y1_ref[S2_D * do + kd, kh:kh + H2, kw:kw + W2, :]  # (8,8,64)
                    p2_ref[do * H2 * W2:(do + 1) * H2 * W2,
                           t * C1:(t + 1) * C1] = sl.reshape(H2 * W2, C1)

    # ---- conv2: (128,1728)bf16 @ (1728,128)bf16 -> f32, +bias, ReLU ---------
    acc2 = jnp.dot(p2_ref[...], w2_ref[...], preferred_element_type=jnp.float32)
    y2 = jnp.maximum(acc2 + b2_ref[...], 0.0)                     # (128, 128) f32
    # y2[g, c] with g = d*64 + h*8 + w is the flattened conv2 output; the dense
    # weight rows were pre-permuted to this ordering (absorbs the NCDHW flatten).

    # ---- dense epilogue (Linear(16384 -> 10)): out[o] = sum(y2 * wd[o]) + bd -
    for o in range(N_OUT):
        prod = y2 * wd_ref[o]                                     # (128,128) f32
        s = jnp.sum(prod, axis=1, keepdims=True)                  # (128, 1)
        s = jnp.sum(s, axis=0, keepdims=True)                     # (1, 1)
        out_ref[0, :, o:o + 1] = s + bd_ref[:, o:o + 1]


# ----------------------------------------------------------------------------
# One-time parameter re-layout (hoisted out of the per-call forward).
# ----------------------------------------------------------------------------
def prepare_params(w1, b1, w2, b2, wd, bd):
    w1m = jnp.transpose(w1, (2, 3, 4, 1, 0)).reshape(KC1, C1).astype(jnp.bfloat16)
    w2m = jnp.transpose(w2, (2, 3, 4, 1, 0)).reshape(KC2, C2).astype(jnp.bfloat16)
    # Dense weight: permute input-feature order from PyTorch's NCDHW flatten
    # (c, d, h, w) to the kernel's (d, h, w, c) order; keep f32: (10, 128, 128).
    wdk = jnp.transpose(wd.reshape(N_OUT, C2, D2, H2, W2),
                        (0, 2, 3, 4, 1)).reshape(N_OUT, M2, C2).astype(jnp.float32)
    return (w1m,
            b1.reshape(1, C1).astype(jnp.float32),
            w2m,
            b2.reshape(1, C2).astype(jnp.float32),
            wdk,
            bd.reshape(1, N_OUT).astype(jnp.float32))


# ----------------------------------------------------------------------------
# XLA glue: channels-last + conv1 im2col (padded to a layout-friendly width).
# ----------------------------------------------------------------------------
def _im2col_conv1(xc):
    """xc: (B, 13, 12, 12, 6) channels-last -> bf16 patches (B, 800, 270)."""
    B = xc.shape[0]
    cols = []
    for kd in range(K1_D):
        for kh in range(K1_H):
            for kw in range(K1_W):
                cols.append(xc[:, kd:kd + S1_D * D1:S1_D,
                               kh:kh + H1, kw:kw + W1, :])        # (B,5,10,10,6)
    p = jnp.stack(cols, axis=-2).reshape(B, D1, H1, W1, KC1)      # (B,5,10,10,270)
    p = jnp.pad(p, ((0, 0), (0, 0), (0, 0), (0, W1P - W1), (0, 0)))
    return p.reshape(B, M1, KC1).astype(jnp.bfloat16)


@jax.jit
def conv1_forward(x, params):
    """x: (B, T, 6, H, W) -- same layout the PyTorch module receives."""
    w1m, b1r, w2m, b2r, wdk, bdr = params
    B = x.shape[0]
    xc = jnp.transpose(x, (0, 1, 3, 4, 2))       # single transpose -> (B,T,H,W,C)
    patches = _im2col_conv1(xc)

    flops = B * 2 * (M1 * KC1 * C1 + M2 * KC2 * C2 + M2 * C2 * N_OUT)
    bytes_accessed = (patches.size * 2 + w1m.size * 2 + w2m.size * 2
                      + wdk.size * 4 + B * N_OUT * 4)

    out = pl.pallas_call(
        _fused_forward_kernel,
        out_shape=jax.ShapeDtypeStruct((B, 1, N_OUT), jnp.float32),
        grid=(B,),
        in_specs=[
            pl.BlockSpec((1, M1, KC1), lambda b: (b, 0, 0)),      # per-sample patches
            pl.BlockSpec((KC1, C1), lambda b: (0, 0)),            # w1 (resident)
            pl.BlockSpec((1, C1), lambda b: (0, 0)),              # b1
            pl.BlockSpec((KC2, C2), lambda b: (0, 0)),            # w2 (resident)
            pl.BlockSpec((1, C2), lambda b: (0, 0)),              # b2
            pl.BlockSpec((N_OUT, M2, C2), lambda b: (0, 0, 0)),   # dense weights
            pl.BlockSpec((1, N_OUT), lambda b: (0, 0)),           # dense bias
        ],
        out_specs=pl.BlockSpec((1, 1, N_OUT), lambda b: (b, 0, 0)),
        scratch_shapes=[
            pltpu.VMEM((D1, H1, W1P, C1), jnp.bfloat16),          # y1 (VMEM-resident)
            pltpu.VMEM((M2, KC2), jnp.bfloat16),                  # conv2 patches
        ],
        compiler_params=pltpu.CompilerParams(
            dimension_semantics=("parallel",)),
        cost_estimate=pl.CostEstimate(
            flops=flops, transcendentals=0, bytes_accessed=bytes_accessed),
    )(patches, w1m, b1r, w2m, b2r, wdk, bdr)
    return out.reshape(B, N_OUT)


# ----------------------------------------------------------------------------
# Plain-XLA reference of the same module semantics (f32, HIGHEST precision).
# ----------------------------------------------------------------------------
def _reference_forward(x, w1, b1, w2, b2, wd, bd):
    xp = jnp.transpose(x, (0, 2, 1, 3, 4))                        # NCDHW
    y1 = jax.lax.conv_general_dilated(
        xp, w1, window_strides=(S1_D, 1, 1), padding="VALID",
        dimension_numbers=("NCDHW", "OIDHW", "NCDHW"),
        precision=jax.lax.Precision.HIGHEST)
    y1 = jax.nn.relu(y1 + b1.reshape(1, -1, 1, 1, 1))
    y2 = jax.lax.conv_general_dilated(
        y1, w2, window_strides=(S2_D, 1, 1), padding="VALID",
        dimension_numbers=("NCDHW", "OIDHW", "NCDHW"),
        precision=jax.lax.Precision.HIGHEST)
    y2 = jax.nn.relu(y2 + b2.reshape(1, -1, 1, 1, 1))
    flat = y2.reshape(y2.shape[0], -1)
    return jnp.dot(flat, wd.T, precision=jax.lax.Precision.HIGHEST) + bd


if __name__ == "__main__":
    # Shapes chosen so the flattened conv2 output is exactly 16384 = 128*2*8*8.
    B = 2
    key = jax.random.PRNGKey(0)
    ks = jax.random.split(key, 7)

    x = jax.random.normal(ks[0], (B, T_IN, C_IN, H_IN, W_IN), jnp.float32)

    # Deterministic synthetic parameters in PyTorch Conv3d / Linear layouts.
    w1 = 0.05 * jax.random.normal(ks[1], (C1, C_IN, K1_D, K1_H, K1_W), jnp.float32)
    b1 = 0.05 * jax.random.normal(ks[2], (C1,), jnp.float32)
    w2 = 0.02 * jax.random.normal(ks[3], (C2, C1, K2_D, K2_H, K2_W), jnp.float32)
    b2 = 0.02 * jax.random.normal(ks[4], (C2,), jnp.float32)
    wd = 0.01 * jax.random.normal(ks[5], (N_OUT, FLAT), jnp.float32)
    bd = 0.01 * jax.random.normal(ks[6], (N_OUT,), jnp.float32)

    params = prepare_params(w1, b1, w2, b2, wd, bd)
    out = jax.block_until_ready(conv1_forward(x, params))
    assert out.shape == (B, N_OUT), out.shape
    assert bool(jnp.all(jnp.isfinite(out)))

    # Numerical cross-check (bf16 MXU operands -> loose tolerance).
    ref = _reference_forward(x, w1, b1, w2, b2, wd, bd)
    max_err = float(jnp.max(jnp.abs(out - ref)))
    assert jnp.allclose(out, ref, rtol=5e-2, atol=5e-2), f"max abs err {max_err}"
    print("KERNEL_OK")
</pallas_src>

<mosaic_0001>
module attributes {stable_mosaic.version = 11 : i64} {
  func.func @_fused_forward_kernel(%arg0: i32, %arg1: memref<1x800x270xbf16, #tpu.memory_space<vmem>>, %arg2: memref<270x64xbf16, #tpu.memory_space<vmem>>, %arg3: memref<1x64xf32, #tpu.memory_space<vmem>>, %arg4: memref<1728x128xbf16, #tpu.memory_space<vmem>>, %arg5: memref<1x128xf32, #tpu.memory_space<vmem>>, %arg6: memref<10x128x128xf32, #tpu.memory_space<vmem>>, %arg7: memref<1x10xf32, #tpu.memory_space<vmem>>, %arg8: memref<1x1x10xf32, #tpu.memory_space<vmem>>, %arg9: memref<5x10x16x64xbf16, #tpu.memory_space<vmem>>, %arg10: memref<128x1728xbf16, #tpu.memory_space<vmem>>) attributes {dimension_semantics = [#tpu.dimension_semantics<parallel>], iteration_bounds = array<i64: 2>, scalar_prefetch = 0 : i64, scratch_operands = 2 : i64, tpu.core_type = #tpu.core_type<tc>, window_params = [{transform_indices = @transform_0, window_bounds = array<i64: 1, 800, 270>}, {pipeline_mode = #tpu.pipeline_mode<synchronous>, transform_indices = @transform_1, window_bounds = array<i64: 270, 64>}, {pipeline_mode = #tpu.pipeline_mode<synchronous>, transform_indices = @transform_2, window_bounds = array<i64: 1, 64>}, {pipeline_mode = #tpu.pipeline_mode<synchronous>, transform_indices = @transform_3, window_bounds = array<i64: 1728, 128>}, {pipeline_mode = #tpu.pipeline_mode<synchronous>, transform_indices = @transform_4, window_bounds = array<i64: 1, 128>}, {pipeline_mode = #tpu.pipeline_mode<synchronous>, transform_indices = @transform_5, window_bounds = array<i64: 10, 128, 128>}, {pipeline_mode = #tpu.pipeline_mode<synchronous>, transform_indices = @transform_6, window_bounds = array<i64: 1, 10>}, {transform_indices = @transform_7, window_bounds = array<i64: 1, 1, 10>}]} {
    %c0 = arith.constant 0 : index
    %c0_0 = arith.constant 0 : index
    %c0_1 = arith.constant 0 : index
    %0 = vector.load %arg1[%c0, %c0_0, %c0_1] : memref<1x800x270xbf16, #tpu.memory_space<vmem>>, vector<1x800x270xbf16>
    %1 = vector.shape_cast %0 : vector<1x800x270xbf16> to vector<800x270xbf16>
    %c0_2 = arith.constant 0 : index
    %c0_3 = arith.constant 0 : index
    %2 = vector.load %arg2[%c0_2, %c0_3] : memref<270x64xbf16, #tpu.memory_space<vmem>>, vector<270x64xbf16>
    %cst = arith.constant dense<0.000000e+00> : vector<800x64xf32>
    %3 = tpu.matmul %1, %2, %cst {dimension_numbers = #tpu.dot_dimension_numbers<[1], [0], [0], [1], [0, 0, 1, 1], [], []>} : vector<800x270xbf16>, vector<270x64xbf16>, vector<800x64xf32> -> vector<800x64xf32>
    %c0_4 = arith.constant 0 : index
    %c0_5 = arith.constant 0 : index
    %4 = vector.load %arg3[%c0_4, %c0_5] : memref<1x64xf32, #tpu.memory_space<vmem>>, vector<1x64xf32>
    %5 = vector.broadcast %4 : vector<1x64xf32> to vector<800x64xf32>
    %6 = arith.addf %3, %5 : vector<800x64xf32>
    %cst_6 = arith.constant 0.000000e+00 : f32
    %7 = vector.broadcast %cst_6 : f32 to vector<800x64xf32>
    %8 = arith.maximumf %6, %7 : vector<800x64xf32>
    %9 = vector.shape_cast %8 : vector<800x64xf32> to vector<5x10x16x64xf32>
    %10 = arith.truncf %9 : vector<5x10x16x64xf32> to vector<5x10x16x64xbf16>
    %c0_7 = arith.constant 0 : index
    %c0_8 = arith.constant 0 : index
    %c0_9 = arith.constant 0 : index
    %c0_10 = arith.constant 0 : index
    %11 = vector.load %arg9[%c0_7, %c0_8, %c0_9, %c0_10] : memref<5x10x16x64xbf16, #tpu.memory_space<vmem>>, vector<5x10x16x64xbf16>
    tpu.vector_store %arg9[%c0_7, %c0_8, %c0_9, %c0_10], %10 {strides = array<i32>} : memref<5x10x16x64xbf16, #tpu.memory_space<vmem>>, vector<5x10x16x64xbf16>,
    %c0_11 = arith.constant 0 : index
    %c0_12 = arith.constant 0 : index
    %c0_13 = arith.constant 0 : index
    %c0_14 = arith.constant 0 : index
    %12 = vector.load %arg9[%c0_11, %c0_12, %c0_13, %c0_14] : memref<5x10x16x64xbf16, #tpu.memory_space<vmem>>, vector<1x8x8x64xbf16>
    %13 = vector.shape_cast %12 : vector<1x8x8x64xbf16> to vector<8x8x64xbf16>
    %14 = vector.shape_cast %13 : vector<8x8x64xbf16> to vector<64x64xbf16>
    %c0_15 = arith.constant 0 : index
    %c0_16 = arith.constant 0 : index
    %15 = vector.load %arg10[%c0_15, %c0_16] : memref<128x1728xbf16, #tpu.memory_space<vmem>>, vector<64x64xbf16>
    tpu.vector_store %arg10[%c0_15, %c0_16], %14 {strides = array<i32>} : memref<128x1728xbf16, #tpu.memory_space<vmem>>, vector<64x64xbf16>,
    %c0_17 = arith.constant 0 : index
    %c0_18 = arith.constant 0 : index
    %c1 = arith.constant 1 : index
    %c0_19 = arith.constant 0 : index
    %16 = vector.load %arg9[%c0_17, %c0_18, %c1, %c0_19] : memref<5x10x16x64xbf16, #tpu.memory_space<vmem>>, vector<1x8x8x64xbf16>
    %17 = vector.shape_cast %16 : vector<1x8x8x64xbf16> to vector<8x8x64xbf16>
    %18 = vector.shape_cast %17 : vector<8x8x64xbf16> to vector<64x64xbf16>
    %c0_20 = arith.constant 0 : index
    %c64 = arith.constant 64 : index
    %19 = vector.load %arg10[%c0_20, %c64] : memref<128x1728xbf16, #tpu.memory_space<vmem>>, vector<64x64xbf16>
    tpu.vector_store %arg10[%c0_20, %c64], %18 {strides = array<i32>} : memref<128x1728xbf16, #tpu.memory_space<vmem>>, vector<64x64xbf16>,
    %c0_21 = arith.constant 0 : index
    %c0_22 = arith.constant 0 : index
    %c2 = arith.constant 2 : index
    %c0_23 = arith.constant 0 : index
    %20 = vector.load %arg9[%c0_21, %c0_22, %c2, %c0_23] : memref<5x10x16x64xbf16, #tpu.memory_space<vmem>>, vector<1x8x8x64xbf16>
    %21 = vector.shape_cast %20 : vector<1x8x8x64xbf16> to vector<8x8x64xbf16>
    %22 = vector.shape_cast %21 : vector<8x8x64xbf16> to vector<64x64xbf16>
    %c0_24 = arith.constant 0 : index
    %c128 = arith.constant 128 : index
    %23 = vector.load %arg10[%c0_24, %c128] : memref<128x1728xbf16, #tpu.memory_space<vmem>>, vector<64x64xbf16>
    tpu.vector_store %arg10[%c0_24, %c128], %22 {strides = array<i32>} : memref<128x1728xbf16, #tpu.memory_space<vmem>>, vector<64x64xbf16>,
    %c0_25 = arith.constant 0 : index
    %c1_26 = arith.constant 1 : index
    %c0_27 = arith.constant 0 : index
    %c0_28 = arith.constant 0 : index
    %24 = vector.load %arg9[%c0_25, %c1_26, %c0_27, %c0_28] : memref<5x10x16x64xbf16, #tpu.memory_space<vmem>>, vector<1x8x8x64xbf16>
    %25 = vector.shape_cast %24 : vector<1x8x8x64xbf16> to vector<8x8x64xbf16>
    %26 = vector.shape_cast %25 : vector<8x8x64xbf16> to vector<64x64xbf16>
    %c0_29 = arith.constant 0 : index
    %c192 = arith.constant 192 : index
    %27 = vector.load %arg10[%c0_29, %c192] : memref<128x1728xbf16, #tpu.memory_space<vmem>>, vector<64x64xbf16>
    tpu.vector_store %arg10[%c0_29, %c192], %26 {strides = array<i32>} : memref<128x1728xbf16, #tpu.memory_space<vmem>>, vector<64x64xbf16>,
    %c0_30 = arith.constant 0 : index
    %c1_31 = arith.constant 1 : index
    %c1_32 = arith.constant 1 : index
    %c0_33 = arith.constant 0 : index
    %28 = vector.load %arg9[%c0_30, %c1_31, %c1_32, %c0_33] : memref<5x10x16x64xbf16, #tpu.memory_space<vmem>>, vector<1x8x8x64xbf16>
    %29 = vector.shape_cast %28 : vector<1x8x8x64xbf16> to vector<8x8x64xbf16>
    %30 = vector.shape_cast %29 : vector<8x8x64xbf16> to vector<64x64xbf16>
    %c0_34 = arith.constant 0 : index
    %c256 = arith.constant 256 : index
    %31 = vector.load %arg10[%c0_34, %c256] : memref<128x1728xbf16, #tpu.memory_space<vmem>>, vector<64x64xbf16>
    tpu.vector_store %arg10[%c0_34, %c256], %30 {strides = array<i32>} : memref<128x1728xbf16, #tpu.memory_space<vmem>>, vector<64x64xbf16>,
    %c0_35 = arith.constant 0 : index
    %c1_36 = arith.constant 1 : index
    %c2_37 = arith.constant 2 : index
    %c0_38 = arith.constant 0 : index
    %32 = vector.load %arg9[%c0_35, %c1_36, %c2_37, %c0_38] : memref<5x10x16x64xbf16, #tpu.memory_space<vmem>>, vector<1x8x8x64xbf16>
    %33 = vector.shape_cast %32 : vector<1x8x8x64xbf16> to vector<8x8x64xbf16>
    %34 = vector.shape_cast %33 : vector<8x8x64xbf16> to vector<64x64xbf16>
    %c0_39 = arith.constant 0 : index
    %c320 = arith.constant 320 : index
    %35 = vector.load %arg10[%c0_39, %c320] : memref<128x1728xbf16, #tpu.memory_space<vmem>>, vector<64x64xbf16>
    tpu.vector_store %arg10[%c0_39, %c320], %34 {strides = array<i32>} : memref<128x1728xbf16, #tpu.memory_space<vmem>>, vector<64x64xbf16>,
    %c0_40 = arith.constant 0 : index
    %c2_41 = arith.constant 2 : index
    %c0_42 = arith.constant 0 : index
    %c0_43 = arith.constant 0 : index
    %36 = vector.load %arg9[%c0_40, %c2_41, %c0_42, %c0_43] : memref<5x10x16x64xbf16, #tpu.memory_space<vmem>>, vector<1x8x8x64xbf16>
    %37 = vector.shape_cast %36 : vector<1x8x8x64xbf16> to vector<8x8x64xbf16>
    %38 = vector.shape_cast %37 : vector<8x8x64xbf16> to vector<64x64xbf16>
    %c0_44 = arith.constant 0 : index
    %c384 = arith.constant 384 : index
    %39 = vector.load %arg10[%c0_44, %c384] : memref<128x1728xbf16, #tpu.memory_space<vmem>>, vector<64x64xbf16>
    tpu.vector_store %arg10[%c0_44, %c384], %38 {strides = array<i32>} : memref<128x1728xbf16, #tpu.memory_space<vmem>>, vector<64x64xbf16>,
    %c0_45 = arith.constant 0 : index
    %c2_46 = arith.constant 2 : index
    %c1_47 = arith.constant 1 : index
    %c0_48 = arith.constant 0 : index
    %40 = vector.load %arg9[%c0_45, %c2_46, %c1_47, %c0_48] : memref<5x10x16x64xbf16, #tpu.memory_space<vmem>>, vector<1x8x8x64xbf16>
    %41 = vector.shape_cast %40 : vector<1x8x8x64xbf16> to vector<8x8x64xbf16>
    %42 = vector.shape_cast %41 : vector<8x8x64xbf16> to vector<64x64xbf16>
    %c0_49 = arith.constant 0 : index
    %c448 = arith.constant 448 : index
    %43 = vector.load %arg10[%c0_49, %c448] : memref<128x1728xbf16, #tpu.memory_space<vmem>>, vector<64x64xbf16>
    tpu.vector_store %arg10[%c0_49, %c448], %42 {strides = array<i32>} : memref<128x1728xbf16, #tpu.memory_space<vmem>>, vector<64x64xbf16>,
    %c0_50 = arith.constant 0 : index
    %c2_51 = arith.constant 2 : index
    %c2_52 = arith.constant 2 : index
    %c0_53 = arith.constant 0 : index
    %44 = vector.load %arg9[%c0_50, %c2_51, %c2_52, %c0_53] : memref<5x10x16x64xbf16, #tpu.memory_space<vmem>>, vector<1x8x8x64xbf16>
    %45 = vector.shape_cast %44 : vector<1x8x8x64xbf16> to vector<8x8x64xbf16>
    %46 = vector.shape_cast %45 : vector<8x8x64xbf16> to vector<64x64xbf16>
    %c0_54 = arith.constant 0 : index
    %c512 = arith.constant 512 : index
    %47 = vector.load %arg10[%c0_54, %c512] : memref<128x1728xbf16, #tpu.memory_space<vmem>>, vector<64x64xbf16>
    tpu.vector_store %arg10[%c0_54, %c512], %46 {strides = array<i32>} : memref<128x1728xbf16, #tpu.memory_space<vmem>>, vector<64x64xbf16>,
    %c1_55 = arith.constant 1 : index
    %c0_56 = arith.constant 0 : index
    %c0_57 = arith.constant 0 : index
    %c0_58 = arith.constant 0 : index
    %48 = vector.load %arg9[%c1_55, %c0_56, %c0_57, %c0_58] : memref<5x10x16x64xbf16, #tpu.memory_space<vmem>>, vector<1x8x8x64xbf16>
    %49 = vector.shape_cast %48 : vector<1x8x8x64xbf16> to vector<8x8x64xbf16>
    %50 = vector.shape_cast %49 : vector<8x8x64xbf16> to vector<64x64xbf16>
    %c0_59 = arith.constant 0 : index
    %c576 = arith.constant 576 : index
    %51 = vector.load %arg10[%c0_59, %c576] : memref<128x1728xbf16, #tpu.memory_space<vmem>>, vector<64x64xbf16>
    tpu.vector_store %arg10[%c0_59, %c576], %50 {strides = array<i32>} : memref<128x1728xbf16, #tpu.memory_space<vmem>>, vector<64x64xbf16>,
    %c1_60 = arith.constant 1 : index
    %c0_61 = arith.constant 0 : index
    %c1_62 = arith.constant 1 : index
    %c0_63 = arith.constant 0 : index
    %52 = vector.load %arg9[%c1_60, %c0_61, %c1_62, %c0_63] : memref<5x10x16x64xbf16, #tpu.memory_space<vmem>>, vector<1x8x8x64xbf16>
    %53 = vector.shape_cast %52 : vector<1x8x8x64xbf16> to vector<8x8x64xbf16>
    %54 = vector.shape_cast %53 : vector<8x8x64xbf16> to vector<64x64xbf16>
    %c0_64 = arith.constant 0 : index
    %c640 = arith.constant 640 : index
    %55 = vector.load %arg10[%c0_64, %c640] : memref<128x1728xbf16, #tpu.memory_space<vmem>>, vector<64x64xbf16>
    tpu.vector_store %arg10[%c0_64, %c640], %54 {strides = array<i32>} : memref<128x1728xbf16, #tpu.memory_space<vmem>>, vector<64x64xbf16>,
    %c1_65 = arith.constant 1 : index
    %c0_66 = arith.constant 0 : index
    %c2_67 = arith.constant 2 : index
    %c0_68 = arith.constant 0 : index
    %56 = vector.load %arg9[%c1_65, %c0_66, %c2_67, %c0_68] : memref<5x10x16x64xbf16, #tpu.memory_space<vmem>>, vector<1x8x8x64xbf16>
    %57 = vector.shape_cast %56 : vector<1x8x8x64xbf16> to vector<8x8x64xbf16>
    %58 = vector.shape_cast %57 : vector<8x8x64xbf16> to vector<64x64xbf16>
    %c0_69 = arith.constant 0 : index
    %c704 = arith.constant 704 : index
    %59 = vector.load %arg10[%c0_69, %c704] : memref<128x1728xbf16, #tpu.memory_space<vmem>>, vector<64x64xbf16>
    tpu.vector_store %arg10[%c0_69, %c704], %58 {strides = array<i32>} : memref<128x1728xbf16, #tpu.memory_space<vmem>>, vector<64x64xbf16>,
    %c1_70 = arith.constant 1 : index
    %c1_71 = arith.constant 1 : index
    %c0_72 = arith.constant 0 : index
    %c0_73 = arith.constant 0 : index
    %60 = vector.load %arg9[%c1_70, %c1_71, %c0_72, %c0_73] : memref<5x10x16x64xbf16, #tpu.memory_space<vmem>>, vector<1x8x8x64xbf16>
    %61 = vector.shape_cast %60 : vector<1x8x8x64xbf16> to vector<8x8x64xbf16>
    %62 = vector.shape_cast %61 : vector<8x8x64xbf16> to vector<64x64xbf16>
    %c0_74 = arith.constant 0 : index
    %c768 = arith.constant 768 : index
    %63 = vector.load %arg10[%c0_74, %c768] : memref<128x1728xbf16, #tpu.memory_space<vmem>>, vector<64x64xbf16>
    tpu.vector_store %arg10[%c0_74, %c768], %62 {strides = array<i32>} : memref<128x1728xbf16, #tpu.memory_space<vmem>>, vector<64x64xbf16>,
    %c1_75 = arith.constant 1 : index
    %c1_76 = arith.constant 1 : index
    %c1_77 = arith.constant 1 : index
    %c0_78 = arith.constant 0 : index
    %64 = vector.load %arg9[%c1_75, %c1_76, %c1_77, %c0_78] : memref<5x10x16x64xbf16, #tpu.memory_space<vmem>>, vector<1x8x8x64xbf16>
    %65 = vector.shape_cast %64 : vector<1x8x8x64xbf16> to vector<8x8x64xbf16>
    %66 = vector.shape_cast %65 : vector<8x8x64xbf16> to vector<64x64xbf16>
    %c0_79 = arith.constant 0 : index
    %c832 = arith.constant 832 : index
    %67 = vector.load %arg10[%c0_79, %c832] : memref<128x1728xbf16, #tpu.memory_space<vmem>>, vector<64x64xbf16>
    tpu.vector_store %arg10[%c0_79, %c832], %66 {strides = array<i32>} : memref<128x1728xbf16, #tpu.memory_space<vmem>>, vector<64x64xbf16>,
    %c1_80 = arith.constant 1 : index
    %c1_81 = arith.constant 1 : index
    %c2_82 = arith.constant 2 : index
    %c0_83 = arith.constant 0 : index
    %68 = vector.load %arg9[%c1_80, %c1_81, %c2_82, %c0_83] : memref<5x10x16x64xbf16, #tpu.memory_space<vmem>>, vector<1x8x8x64xbf16>
    %69 = vector.shape_cast %68 : vector<1x8x8x64xbf16> to vector<8x8x64xbf16>
    %70 = vector.shape_cast %69 : vector<8x8x64xbf16> to vector<64x64xbf16>
    %c0_84 = arith.constant 0 : index
    %c896 = arith.constant 896 : index
    %71 = vector.load %arg10[%c0_84, %c896] : memref<128x1728xbf16, #tpu.memory_space<vmem>>, vector<64x64xbf16>
    tpu.vector_store %arg10[%c0_84, %c896], %70 {strides = array<i32>} : memref<128x1728xbf16, #tpu.memory_space<vmem>>, vector<64x64xbf16>,
    %c1_85 = arith.constant 1 : index
    %c2_86 = arith.constant 2 : index
    %c0_87 = arith.constant 0 : index
    %c0_88 = arith.constant 0 : index
    %72 = vector.load %arg9[%c1_85, %c2_86, %c0_87, %c0_88] : memref<5x10x16x64xbf16, #tpu.memory_space<vmem>>, vector<1x8x8x64xbf16>
    %73 = vector.shape_cast %72 : vector<1x8x8x64xbf16> to vector<8x8x64xbf16>
    %74 = vector.shape_cast %73 : vector<8x8x64xbf16> to vector<64x64xbf16>
    %c0_89 = arith.constant 0 : index
    %c960 = arith.constant 960 : index
    %75 = vector.load %arg10[%c0_89, %c960] : memref<128x1728xbf16, #tpu.memory_space<vmem>>, vector<64x64xbf16>
    tpu.vector_store %arg10[%c0_89, %c960], %74 {strides = array<i32>} : memref<128x1728xbf16, #tpu.memory_space<vmem>>, vector<64x64xbf16>,
    %c1_90 = arith.constant 1 : index
    %c2_91 = arith.constant 2 : index
    %c1_92 = arith.constant 1 : index
    %c0_93 = arith.constant 0 : index
    %76 = vector.load %arg9[%c1_90, %c2_91, %c1_92, %c0_93] : memref<5x10x16x64xbf16, #tpu.memory_space<vmem>>, vector<1x8x8x64xbf16>
    %77 = vector.shape_cast %76 : vector<1x8x8x64xbf16> to vector<8x8x64xbf16>
    %78 = vector.shape_cast %77 : vector<8x8x64xbf16> to vector<64x64xbf16>
    %c0_94 = arith.constant 0 : index
    %c1024 = arith.constant 1024 : index
    %79 = vector.load %arg10[%c0_94, %c1024] : memref<128x1728xbf16, #tpu.memory_space<vmem>>, vector<64x64xbf16>
    tpu.vector_store %arg10[%c0_94, %c1024], %78 {strides = array<i32>} : memref<128x1728xbf16, #tpu.memory_space<vmem>>, vector<64x64xbf16>,
    %c1_95 = arith.constant 1 : index
    %c2_96 = arith.constant 2 : index
    %c2_97 = arith.constant 2 : index
    %c0_98 = arith.constant 0 : index
    %80 = vector.load %arg9[%c1_95, %c2_96, %c2_97, %c0_98] : memref<5x10x16x64xbf16, #tpu.memory_space<vmem>>, vector<1x8x8x64xbf16>
    %81 = vector.shape_cast %80 : vector<1x8x8x64xbf16> to vector<8x8x64xbf16>
    %82 = vector.shape_cast %81 : vector<8x8x64xbf16> to vector<64x64xbf16>
    %c0_99 = arith.constant 0 : index
    %c1088 = arith.constant 1088 : index
    %83 = vector.load %arg10[%c0_99, %c1088] : memref<128x1728xbf16, #tpu.memory_space<vmem>>, vector<64x64xbf16>
    tpu.vector_store %arg10[%c0_99, %c1088], %82 {strides = array<i32>} : memref<128x1728xbf16, #tpu.memory_space<vmem>>, vector<64x64xbf16>,
    %c2_100 = arith.constant 2 : index
    %c0_101 = arith.constant 0 : index
    %c0_102 = arith.constant 0 : index
    %c0_103 = arith.constant 0 : index
    %84 = vector.load %arg9[%c2_100, %c0_101, %c0_102, %c0_103] : memref<5x10x16x64xbf16, #tpu.memory_space<vmem>>, vector<1x8x8x64xbf16>
    %85 = vector.shape_cast %84 : vector<1x8x8x64xbf16> to vector<8x8x64xbf16>
    %86 = vector.shape_cast %85 : vector<8x8x64xbf16> to vector<64x64xbf16>
    %c0_104 = arith.constant 0 : index
    %c1152 = arith.constant 1152 : index
    %87 = vector.load %arg10[%c0_104, %c1152] : memref<128x1728xbf16, #tpu.memory_space<vmem>>, vector<64x64xbf16>
    tpu.vector_store %arg10[%c0_104, %c1152], %86 {strides = array<i32>} : memref<128x1728xbf16, #tpu.memory_space<vmem>>, vector<64x64xbf16>,
    %c2_105 = arith.constant 2 : index
    %c0_106 = arith.constant 0 : index
    %c1_107 = arith.constant 1 : index
    %c0_108 = arith.constant 0 : index
    %88 = vector.load %arg9[%c2_105, %c0_106, %c1_107, %c0_108] : memref<5x10x16x64xbf16, #tpu.memory_space<vmem>>, vector<1x8x8x64xbf16>
    %89 = vector.shape_cast %88 : vector<1x8x8x64xbf16> to vector<8x8x64xbf16>
    %90 = vector.shape_cast %89 : vector<8x8x64xbf16> to vector<64x64xbf16>
    %c0_109 = arith.constant 0 : index
    %c1216 = arith.constant 1216 : index
    %91 = vector.load %arg10[%c0_109, %c1216] : memref<128x1728xbf16, #tpu.memory_space<vmem>>, vector<64x64xbf16>
    tpu.vector_store %arg10[%c0_109, %c1216], %90 {strides = array<i32>} : memref<128x1728xbf16, #tpu.memory_space<vmem>>, vector<64x64xbf16>,
    %c2_110 = arith.constant 2 : index
    %c0_111 = arith.constant 0 : index
    %c2_112 = arith.constant 2 : index
    %c0_113 = arith.constant 0 : index
    %92 = vector.load %arg9[%c2_110, %c0_111, %c2_112, %c0_113] : memref<5x10x16x64xbf16, #tpu.memory_space<vmem>>, vector<1x8x8x64xbf16>
    %93 = vector.shape_cast %92 : vector<1x8x8x64xbf16> to vector<8x8x64xbf16>
    %94 = vector.shape_cast %93 : vector<8x8x64xbf16> to vector<64x64xbf16>
    %c0_114 = arith.constant 0 : index
    %c1280 = arith.constant 1280 : index
    %95 = vector.load %arg10[%c0_114, %c1280] : memref<128x1728xbf16, #tpu.memory_space<vmem>>, vector<64x64xbf16>
    tpu.vector_store %arg10[%c0_114, %c1280], %94 {strides = array<i32>} : memref<128x1728xbf16, #tpu.memory_space<vmem>>, vector<64x64xbf16>,
    %c2_115 = arith.constant 2 : index
    %c1_116 = arith.constant 1 : index
    %c0_117 = arith.constant 0 : index
    %c0_118 = arith.constant 0 : index
    %96 = vector.load %arg9[%c2_115, %c1_116, %c0_117, %c0_118] : memref<5x10x16x64xbf16, #tpu.memory_space<vmem>>, vector<1x8x8x64xbf16>
    %97 = vector.shape_cast %96 : vector<1x8x8x64xbf16> to vector<8x8x64xbf16>
    %98 = vector.shape_cast %97 : vector<8x8x64xbf16> to vector<64x64xbf16>
    %c0_119 = arith.constant 0 : index
    %c1344 = arith.constant 1344 : index
    %99 = vector.load %arg10[%c0_119, %c1344] : memref<128x1728xbf16, #tpu.memory_space<vmem>>, vector<64x64xbf16>
    tpu.vector_store %arg10[%c0_119, %c1344], %98 {strides = array<i32>} : memref<128x1728xbf16, #tpu.memory_space<vmem>>, vector<64x64xbf16>,
    %c2_120 = arith.constant 2 : index
    %c1_121 = arith.constant 1 : index
    %c1_122 = arith.constant 1 : index
    %c0_123 = arith.constant 0 : index
    %100 = vector.load %arg9[%c2_120, %c1_121, %c1_122, %c0_123] : memref<5x10x16x64xbf16, #tpu.memory_space<vmem>>, vector<1x8x8x64xbf16>
    %101 = vector.shape_cast %100 : vector<1x8x8x64xbf16> to vector<8x8x64xbf16>
    %102 = vector.shape_cast %101 : vector<8x8x64xbf16> to vector<64x64xbf16>
    %c0_124 = arith.constant 0 : index
    %c1408 = arith.constant 1408 : index
    %103 = vector.load %arg10[%c0_124, %c1408] : memref<128x1728xbf16, #tpu.memory_space<vmem>>, vector<64x64xbf16>
    tpu.vector_store %arg10[%c0_124, %c1408], %102 {strides = array<i32>} : memref<128x1728xbf16, #tpu.memory_space<vmem>>, vector<64x64xbf16>,
    %c2_125 = arith.constant 2 : index
    %c1_126 = arith.constant 1 : index
    %c2_127 = arith.constant 2 : index
    %c0_128 = arith.constant 0 : index
    %104 = vector.load %arg9[%c2_125, %c1_126, %c2_127, %c0_128] : memref<5x10x16x64xbf16, #tpu.memory_space<vmem>>, vector<1x8x8x64xbf16>
    %105 = vector.shape_cast %104 : vector<1x8x8x64xbf16> to vector<8x8x64xbf16>
    %106 = vector.shape_cast %105 : vector<8x8x64xbf16> to vector<64x64xbf16>
    %c0_129 = arith.constant 0 : index
    %c1472 = arith.constant 1472 : index
    %107 = vector.load %arg10[%c0_129, %c1472] : memref<128x1728xbf16, #tpu.memory_space<vmem>>, vector<64x64xbf16>
    tpu.vector_store %arg10[%c0_129, %c1472], %106 {strides = array<i32>} : memref<128x1728xbf16, #tpu.memory_space<vmem>>, vector<64x64xbf16>,
    %c2_130 = arith.constant 2 : index
    %c2_131 = arith.constant 2 : index
    %c0_132 = arith.constant 0 : index
    %c0_133 = arith.constant 0 : index
    %108 = vector.load %arg9[%c2_130, %c2_131, %c0_132, %c0_133] : memref<5x10x16x64xbf16, #tpu.memory_space<vmem>>, vector<1x8x8x64xbf16>
    %109 = vector.shape_cast %108 : vector<1x8x8x64xbf16> to vector<8x8x64xbf16>
    %110 = vector.shape_cast %109 : vector<8x8x64xbf16> to vector<64x64xbf16>
    %c0_134 = arith.constant 0 : index
    %c1536 = arith.constant 1536 : index
    %111 = vector.load %arg10[%c0_134, %c1536] : memref<128x1728xbf16, #tpu.memory_space<vmem>>, vector<64x64xbf16>
    tpu.vector_store %arg10[%c0_134, %c1536], %110 {strides = array<i32>} : memref<128x1728xbf16, #tpu.memory_space<vmem>>, vector<64x64xbf16>,
    %c2_135 = arith.constant 2 : index
    %c2_136 = arith.constant 2 : index
    %c1_137 = arith.constant 1 : index
    %c0_138 = arith.constant 0 : index
    %112 = vector.load %arg9[%c2_135, %c2_136, %c1_137, %c0_138] : memref<5x10x16x64xbf16, #tpu.memory_space<vmem>>, vector<1x8x8x64xbf16>
    %113 = vector.shape_cast %112 : vector<1x8x8x64xbf16> to vector<8x8x64xbf16>
    %114 = vector.shape_cast %113 : vector<8x8x64xbf16> to vector<64x64xbf16>
    %c0_139 = arith.constant 0 : index
    %c1600 = arith.constant 1600 : index
    %115 = vector.load %arg10[%c0_139, %c1600] : memref<128x1728xbf16, #tpu.memory_space<vmem>>, vector<64x64xbf16>
    tpu.vector_store %arg10[%c0_139, %c1600], %114 {strides = array<i32>} : memref<128x1728xbf16, #tpu.memory_space<vmem>>, vector<64x64xbf16>,
    %c2_140 = arith.constant 2 : index
    %c2_141 = arith.constant 2 : index
    %c2_142 = arith.constant 2 : index
    %c0_143 = arith.constant 0 : index
    %116 = vector.load %arg9[%c2_140, %c2_141, %c2_142, %c0_143] : memref<5x10x16x64xbf16, #tpu.memory_space<vmem>>, vector<1x8x8x64xbf16>
    %117 = vector.shape_cast %116 : vector<1x8x8x64xbf16> to vector<8x8x64xbf16>
    %118 = vector.shape_cast %117 : vector<8x8x64xbf16> to vector<64x64xbf16>
    %c0_144 = arith.constant 0 : index
    %c1664 = arith.constant 1664 : index
    %119 = vector.load %arg10[%c0_144, %c1664] : memref<128x1728xbf16, #tpu.memory_space<vmem>>, vector<64x64xbf16>
    tpu.vector_store %arg10[%c0_144, %c1664], %118 {strides = array<i32>} : memref<128x1728xbf16, #tpu.memory_space<vmem>>, vector<64x64xbf16>,
    %c2_145 = arith.constant 2 : index
    %c0_146 = arith.constant 0 : index
    %c0_147 = arith.constant 0 : index
    %c0_148 = arith.constant 0 : index
    %120 = vector.load %arg9[%c2_145, %c0_146, %c0_147, %c0_148] : memref<5x10x16x64xbf16, #tpu.memory_space<vmem>>, vector<1x8x8x64xbf16>
    %121 = vector.shape_cast %120 : vector<1x8x8x64xbf16> to vector<8x8x64xbf16>
    %122 = vector.shape_cast %121 : vector<8x8x64xbf16> to vector<64x64xbf16>
    %c64_149 = arith.constant 64 : index
    %c0_150 = arith.constant 0 : index
    %123 = vector.load %arg10[%c64_149, %c0_150] : memref<128x1728xbf16, #tpu.memory_space<vmem>>, vector<64x64xbf16>
    tpu.vector_store %arg10[%c64_149, %c0_150], %122 {strides = array<i32>} : memref<128x1728xbf16, #tpu.memory_space<vmem>>, vector<64x64xbf16>,
    %c2_151 = arith.constant 2 : index
    %c0_152 = arith.constant 0 : index
    %c1_153 = arith.constant 1 : index
    %c0_154 = arith.constant 0 : index
    %124 = vector.load %arg9[%c2_151, %c0_152, %c1_153, %c0_154] : memref<5x10x16x64xbf16, #tpu.memory_space<vmem>>, vector<1x8x8x64xbf16>
    %125 = vector.shape_cast %124 : vector<1x8x8x64xbf16> to vector<8x8x64xbf16>
    %126 = vector.shape_cast %125 : vector<8x8x64xbf16> to vector<64x64xbf16>
    %c64_155 = arith.constant 64 : index
    %c64_156 = arith.constant 64 : index
    %127 = vector.load %arg10[%c64_155, %c64_156] : memref<128x1728xbf16, #tpu.memory_space<vmem>>, vector<64x64xbf16>
    tpu.vector_store %arg10[%c64_155, %c64_156], %126 {strides = array<i32>} : memref<128x1728xbf16, #tpu.memory_space<vmem>>, vector<64x64xbf16>,
    %c2_157 = arith.constant 2 : index
    %c0_158 = arith.constant 0 : index
    %c2_159 = arith.constant 2 : index
    %c0_160 = arith.constant 0 : index
    %128 = vector.load %arg9[%c2_157, %c0_158, %c2_159, %c0_160] : memref<5x10x16x64xbf16, #tpu.memory_space<vmem>>, vector<1x8x8x64xbf16>
    %129 = vector.shape_cast %128 : vector<1x8x8x64xbf16> to vector<8x8x64xbf16>
    %130 = vector.shape_cast %129 : vector<8x8x64xbf16> to vector<64x64xbf16>
    %c64_161 = arith.constant 64 : index
    %c128_162 = arith.constant 128 : index
    %131 = vector.load %arg10[%c64_161, %c128_162] : memref<128x1728xbf16, #tpu.memory_space<vmem>>, vector<64x64xbf16>
    tpu.vector_store %arg10[%c64_161, %c128_162], %130 {strides = array<i32>} : memref<128x1728xbf16, #tpu.memory_space<vmem>>, vector<64x64xbf16>,
    %c2_163 = arith.constant 2 : index
    %c1_164 = arith.constant 1 : index
    %c0_165 = arith.constant 0 : index
    %c0_166 = arith.constant 0 : index
    %132 = vector.load %arg9[%c2_163, %c1_164, %c0_165, %c0_166] : memref<5x10x16x64xbf16, #tpu.memory_space<vmem>>, vector<1x8x8x64xbf16>
    %133 = vector.shape_cast %132 : vector<1x8x8x64xbf16> to vector<8x8x64xbf16>
    %134 = vector.shape_cast %133 : vector<8x8x64xbf16> to vector<64x64xbf16>
    %c64_167 = arith.constant 64 : index
    %c192_168 = arith.constant 192 : index
    %135 = vector.load %arg10[%c64_167, %c192_168] : memref<128x1728xbf16, #tpu.memory_space<vmem>>, vector<64x64xbf16>
    tpu.vector_store %arg10[%c64_167, %c192_168], %134 {strides = array<i32>} : memref<128x1728xbf16, #tpu.memory_space<vmem>>, vector<64x64xbf16>,
    %c2_169 = arith.constant 2 : index
    %c1_170 = arith.constant 1 : index
    %c1_171 = arith.constant 1 : index
    %c0_172 = arith.constant 0 : index
    %136 = vector.load %arg9[%c2_169, %c1_170, %c1_171, %c0_172] : memref<5x10x16x64xbf16, #tpu.memory_space<vmem>>, vector<1x8x8x64xbf16>
    %137 = vector.shape_cast %136 : vector<1x8x8x64xbf16> to vector<8x8x64xbf16>
    %138 = vector.shape_cast %137 : vector<8x8x64xbf16> to vector<64x64xbf16>
    %c64_173 = arith.constant 64 : index
    %c256_174 = arith.constant 256 : index
    %139 = vector.load %arg10[%c64_173, %c256_174] : memref<128x1728xbf16, #tpu.memory_space<vmem>>, vector<64x64xbf16>
    tpu.vector_store %arg10[%c64_173, %c256_174], %138 {strides = array<i32>} : memref<128x1728xbf16, #tpu.memory_space<vmem>>, vector<64x64xbf16>,
    %c2_175 = arith.constant 2 : index
    %c1_176 = arith.constant 1 : index
    %c2_177 = arith.constant 2 : index
    %c0_178 = arith.constant 0 : index
    %140 = vector.load %arg9[%c2_175, %c1_176, %c2_177, %c0_178] : memref<5x10x16x64xbf16, #tpu.memory_space<vmem>>, vector<1x8x8x64xbf16>
    %141 = vector.shape_cast %140 : vector<1x8x8x64xbf16> to vector<8x8x64xbf16>
    %142 = vector.shape_cast %141 : vector<8x8x64xbf16> to vector<64x64xbf16>
    %c64_179 = arith.constant 64 : index
    %c320_180 = arith.constant 320 : index
    %143 = vector.load %arg10[%c64_179, %c320_180] : memref<128x1728xbf16, #tpu.memory_space<vmem>>, vector<64x64xbf16>
    tpu.vector_store %arg10[%c64_179, %c320_180], %142 {strides = array<i32>} : memref<128x1728xbf16, #tpu.memory_space<vmem>>, vector<64x64xbf16>,
    %c2_181 = arith.constant 2 : index
    %c2_182 = arith.constant 2 : index
    %c0_183 = arith.constant 0 : index
    %c0_184 = arith.constant 0 : index
    %144 = vector.load %arg9[%c2_181, %c2_182, %c0_183, %c0_184] : memref<5x10x16x64xbf16, #tpu.memory_space<vmem>>, vector<1x8x8x64xbf16>
    %145 = vector.shape_cast %144 : vector<1x8x8x64xbf16> to vector<8x8x64xbf16>
    %146 = vector.shape_cast %145 : vector<8x8x64xbf16> to vector<64x64xbf16>
    %c64_185 = arith.constant 64 : index
    %c384_186 = arith.constant 384 : index
    %147 = vector.load %arg10[%c64_185, %c384_186] : memref<128x1728xbf16, #tpu.memory_space<vmem>>, vector<64x64xbf16>
    tpu.vector_store %arg10[%c64_185, %c384_186], %146 {strides = array<i32>} : memref<128x1728xbf16, #tpu.memory_space<vmem>>, vector<64x64xbf16>,
    %c2_187 = arith.constant 2 : index
    %c2_188 = arith.constant 2 : index
    %c1_189 = arith.constant 1 : index
    %c0_190 = arith.constant 0 : index
    %148 = vector.load %arg9[%c2_187, %c2_188, %c1_189, %c0_190] : memref<5x10x16x64xbf16, #tpu.memory_space<vmem>>, vector<1x8x8x64xbf16>
    %149 = vector.shape_cast %148 : vector<1x8x8x64xbf16> to vector<8x8x64xbf16>
    %150 = vector.shape_cast %149 : vector<8x8x64xbf16> to vector<64x64xbf16>
    %c64_191 = arith.constant 64 : index
    %c448_192 = arith.constant 448 : index
    %151 = vector.load %arg10[%c64_191, %c448_192] : memref<128x1728xbf16, #tpu.memory_space<vmem>>, vector<64x64xbf16>
    tpu.vector_store %arg10[%c64_191, %c448_192], %150 {strides = array<i32>} : memref<128x1728xbf16, #tpu.memory_space<vmem>>, vector<64x64xbf16>,
    %c2_193 = arith.constant 2 : index
    %c2_194 = arith.constant 2 : index
    %c2_195 = arith.constant 2 : index
    %c0_196 = arith.constant 0 : index
    %152 = vector.load %arg9[%c2_193, %c2_194, %c2_195, %c0_196] : memref<5x10x16x64xbf16, #tpu.memory_space<vmem>>, vector<1x8x8x64xbf16>
    %153 = vector.shape_cast %152 : vector<1x8x8x64xbf16> to vector<8x8x64xbf16>
    %154 = vector.shape_cast %153 : vector<8x8x64xbf16> to vector<64x64xbf16>
    %c64_197 = arith.constant 64 : index
    %c512_198 = arith.constant 512 : index
    %155 = vector.load %arg10[%c64_197, %c512_198] : memref<128x1728xbf16, #tpu.memory_space<vmem>>, vector<64x64xbf16>
    tpu.vector_store %arg10[%c64_197, %c512_198], %154 {strides = array<i32>} : memref<128x1728xbf16, #tpu.memory_space<vmem>>, vector<64x64xbf16>,
    %c3 = arith.constant 3 : index
    %c0_199 = arith.constant 0 : index
    %c0_200 = arith.constant 0 : index
    %c0_201 = arith.constant 0 : index
    %156 = vector.load %arg9[%c3, %c0_199, %c0_200, %c0_201] : memref<5x10x16x64xbf16, #tpu.memory_space<vmem>>, vector<1x8x8x64xbf16>
    %157 = vector.shape_cast %156 : vector<1x8x8x64xbf16> to vector<8x8x64xbf16>
    %158 = vector.shape_cast %157 : vector<8x8x64xbf16> to vector<64x64xbf16>
    %c64_202 = arith.constant 64 : index
    %c576_203 = arith.constant 576 : index
    %159 = vector.load %arg10[%c64_202, %c576_203] : memref<128x1728xbf16, #tpu.memory_space<vmem>>, vector<64x64xbf16>
    tpu.vector_store %arg10[%c64_202, %c576_203], %158 {strides = array<i32>} : memref<128x1728xbf16, #tpu.memory_space<vmem>>, vector<64x64xbf16>,
    %c3_204 = arith.constant 3 : index
    %c0_205 = arith.constant 0 : index
    %c1_206 = arith.constant 1 : index
    %c0_207 = arith.constant 0 : index
    %160 = vector.load %arg9[%c3_204, %c0_205, %c1_206, %c0_207] : memref<5x10x16x64xbf16, #tpu.memory_space<vmem>>, vector<1x8x8x64xbf16>
    %161 = vector.shape_cast %160 : vector<1x8x8x64xbf16> to vector<8x8x64xbf16>
    %162 = vector.shape_cast %161 : vector<8x8x64xbf16> to vector<64x64xbf16>
    %c64_208 = arith.constant 64 : index
    %c640_209 = arith.constant 640 : index
    %163 = vector.load %arg10[%c64_208, %c640_209] : memref<128x1728xbf16, #tpu.memory_space<vmem>>, vector<64x64xbf16>
    tpu.vector_store %arg10[%c64_208, %c640_209], %162 {strides = array<i32>} : memref<128x1728xbf16, #tpu.memory_space<vmem>>, vector<64x64xbf16>,
    %c3_210 = arith.constant 3 : index
    %c0_211 = arith.constant 0 : index
    %c2_212 = arith.constant 2 : index
    %c0_213 = arith.constant 0 : index
    %164 = vector.load %arg9[%c3_210, %c0_211, %c2_212, %c0_213] : memref<5x10x16x64xbf16, #tpu.memory_space<vmem>>, vector<1x8x8x64xbf16>
    %165 = vector.shape_cast %164 : vector<1x8x8x64xbf16> to vector<8x8x64xbf16>
    %166 = vector.shape_cast %165 : vector<8x8x64xbf16> to vector<64x64xbf16>
    %c64_214 = arith.constant 64 : index
    %c704_215 = arith.constant 704 : index
    %167 = vector.load %arg10[%c64_214, %c704_215] : memref<128x1728xbf16, #tpu.memory_space<vmem>>, vector<64x64xbf16>
    tpu.vector_store %arg10[%c64_214, %c704_215], %166 {strides = array<i32>} : memref<128x1728xbf16, #tpu.memory_space<vmem>>, vector<64x64xbf16>,
    %c3_216 = arith.constant 3 : index
    %c1_217 = arith.constant 1 : index
    %c0_218 = arith.constant 0 : index
    %c0_219 = arith.constant 0 : index
    %168 = vector.load %arg9[%c3_216, %c1_217, %c0_218, %c0_219] : memref<5x10x16x64xbf16, #tpu.memory_space<vmem>>, vector<1x8x8x64xbf16>
    %169 = vector.shape_cast %168 : vector<1x8x8x64xbf16> to vector<8x8x64xbf16>
    %170 = vector.shape_cast %169 : vector<8x8x64xbf16> to vector<64x64xbf16>
    %c64_220 = arith.constant 64 : index
    %c768_221 = arith.constant 768 : index
    %171 = vector.load %arg10[%c64_220, %c768_221] : memref<128x1728xbf16, #tpu.memory_space<vmem>>, vector<64x64xbf16>
    tpu.vector_store %arg10[%c64_220, %c768_221], %170 {strides = array<i32>} : memref<128x1728xbf16, #tpu.memory_space<vmem>>, vector<64x64xbf16>,
    %c3_222 = arith.constant 3 : index
    %c1_223 = arith.constant 1 : index
    %c1_224 = arith.constant 1 : index
    %c0_225 = arith.constant 0 : index
    %172 = vector.load %arg9[%c3_222, %c1_223, %c1_224, %c0_225] : memref<5x10x16x64xbf16, #tpu.memory_space<vmem>>, vector<1x8x8x64xbf16>
    %173 = vector.shape_cast %172 : vector<1x8x8x64xbf16> to vector<8x8x64xbf16>
    %174 = vector.shape_cast %173 : vector<8x8x64xbf16> to vector<64x64xbf16>
    %c64_226 = arith.constant 64 : index
    %c832_227 = arith.constant 832 : index
    %175 = vector.load %arg10[%c64_226, %c832_227] : memref<128x1728xbf16, #tpu.memory_space<vmem>>, vector<64x64xbf16>
    tpu.vector_store %arg10[%c64_226, %c832_227], %174 {strides = array<i32>} : memref<128x1728xbf16, #tpu.memory_space<vmem>>, vector<64x64xbf16>,
    %c3_228 = arith.constant 3 : index
    %c1_229 = arith.constant 1 : index
    %c2_230 = arith.constant 2 : index
    %c0_231 = arith.constant 0 : index
    %176 = vector.load %arg9[%c3_228, %c1_229, %c2_230, %c0_231] : memref<5x10x16x64xbf16, #tpu.memory_space<vmem>>, vector<1x8x8x64xbf16>
    %177 = vector.shape_cast %176 : vector<1x8x8x64xbf16> to vector<8x8x64xbf16>
    %178 = vector.shape_cast %177 : vector<8x8x64xbf16> to vector<64x64xbf16>
    %c64_232 = arith.constant 64 : index
    %c896_233 = arith.constant 896 : index
    %179 = vector.load %arg10[%c64_232, %c896_233] : memref<128x1728xbf16, #tpu.memory_space<vmem>>, vector<64x64xbf16>
    tpu.vector_store %arg10[%c64_232, %c896_233], %178 {strides = array<i32>} : memref<128x1728xbf16, #tpu.memory_space<vmem>>, vector<64x64xbf16>,
    %c3_234 = arith.constant 3 : index
    %c2_235 = arith.constant 2 : index
    %c0_236 = arith.constant 0 : index
    %c0_237 = arith.constant 0 : index
    %180 = vector.load %arg9[%c3_234, %c2_235, %c0_236, %c0_237] : memref<5x10x16x64xbf16, #tpu.memory_space<vmem>>, vector<1x8x8x64xbf16>
    %181 = vector.shape_cast %180 : vector<1x8x8x64xbf16> to vector<8x8x64xbf16>
    %182 = vector.shape_cast %181 : vector<8x8x64xbf16> to vector<64x64xbf16>
    %c64_238 = arith.constant 64 : index
    %c960_239 = arith.constant 960 : index
    %183 = vector.load %arg10[%c64_238, %c960_239] : memref<128x1728xbf16, #tpu.memory_space<vmem>>, vector<64x64xbf16>
    tpu.vector_store %arg10[%c64_238, %c960_239], %182 {strides = array<i32>} : memref<128x1728xbf16, #tpu.memory_space<vmem>>, vector<64x64xbf16>,
    %c3_240 = arith.constant 3 : index
    %c2_241 = arith.constant 2 : index
    %c1_242 = arith.constant 1 : index
    %c0_243 = arith.constant 0 : index
    %184 = vector.load %arg9[%c3_240, %c2_241, %c1_242, %c0_243] : memref<5x10x16x64xbf16, #tpu.memory_space<vmem>>, vector<1x8x8x64xbf16>
    %185 = vector.shape_cast %184 : vector<1x8x8x64xbf16> to vector<8x8x64xbf16>
    %186 = vector.shape_cast %185 : vector<8x8x64xbf16> to vector<64x64xbf16>
    %c64_244 = arith.constant 64 : index
    %c1024_245 = arith.constant 1024 : index
    %187 = vector.load %arg10[%c64_244, %c1024_245] : memref<128x1728xbf16, #tpu.memory_space<vmem>>, vector<64x64xbf16>
    tpu.vector_store %arg10[%c64_244, %c1024_245], %186 {strides = array<i32>} : memref<128x1728xbf16, #tpu.memory_space<vmem>>, vector<64x64xbf16>,
    %c3_246 = arith.constant 3 : index
    %c2_247 = arith.constant 2 : index
    %c2_248 = arith.constant 2 : index
    %c0_249 = arith.constant 0 : index
    %188 = vector.load %arg9[%c3_246, %c2_247, %c2_248, %c0_249] : memref<5x10x16x64xbf16, #tpu.memory_space<vmem>>, vector<1x8x8x64xbf16>
    %189 = vector.shape_cast %188 : vector<1x8x8x64xbf16> to vector<8x8x64xbf16>
    %190 = vector.shape_cast %189 : vector<8x8x64xbf16> to vector<64x64xbf16>
    %c64_250 = arith.constant 64 : index
    %c1088_251 = arith.constant 1088 : index
    %191 = vector.load %arg10[%c64_250, %c1088_251] : memref<128x1728xbf16, #tpu.memory_space<vmem>>, vector<64x64xbf16>
    tpu.vector_store %arg10[%c64_250, %c1088_251], %190 {strides = array<i32>} : memref<128x1728xbf16, #tpu.memory_space<vmem>>, vector<64x64xbf16>,
    %c4 = arith.constant 4 : index
    %c0_252 = arith.constant 0 : index
    %c0_253 = arith.constant 0 : index
    %c0_254 = arith.constant 0 : index
    %192 = vector.load %arg9[%c4, %c0_252, %c0_253, %c0_254] : memref<5x10x16x64xbf16, #tpu.memory_space<vmem>>, vector<1x8x8x64xbf16>
    %193 = vector.shape_cast %192 : vector<1x8x8x64xbf16> to vector<8x8x64xbf16>
    %194 = vector.shape_cast %193 : vector<8x8x64xbf16> to vector<64x64xbf16>
    %c64_255 = arith.constant 64 : index
    %c1152_256 = arith.constant 1152 : index
    %195 = vector.load %arg10[%c64_255, %c1152_256] : memref<128x1728xbf16, #tpu.memory_space<vmem>>, vector<64x64xbf16>
    tpu.vector_store %arg10[%c64_255, %c1152_256], %194 {strides = array<i32>} : memref<128x1728xbf16, #tpu.memory_space<vmem>>, vector<64x64xbf16>,
    %c4_257 = arith.constant 4 : index
    %c0_258 = arith.constant 0 : index
    %c1_259 = arith.constant 1 : index
    %c0_260 = arith.constant 0 : index
    %196 = vector.load %arg9[%c4_257, %c0_258, %c1_259, %c0_260] : memref<5x10x16x64xbf16, #tpu.memory_space<vmem>>, vector<1x8x8x64xbf16>
    %197 = vector.shape_cast %196 : vector<1x8x8x64xbf16> to vector<8x8x64xbf16>
    %198 = vector.shape_cast %197 : vector<8x8x64xbf16> to vector<64x64xbf16>
    %c64_261 = arith.constant 64 : index
    %c1216_262 = arith.constant 1216 : index
    %199 = vector.load %arg10[%c64_261, %c1216_262] : memref<128x1728xbf16, #tpu.memory_space<vmem>>, vector<64x64xbf16>
    tpu.vector_store %arg10[%c64_261, %c1216_262], %198 {strides = array<i32>} : memref<128x1728xbf16, #tpu.memory_space<vmem>>, vector<64x64xbf16>,
    %c4_263 = arith.constant 4 : index
    %c0_264 = arith.constant 0 : index
    %c2_265 = arith.constant 2 : index
    %c0_266 = arith.constant 0 : index
    %200 = vector.load %arg9[%c4_263, %c0_264, %c2_265, %c0_266] : memref<5x10x16x64xbf16, #tpu.memory_space<vmem>>, vector<1x8x8x64xbf16>
    %201 = vector.shape_cast %200 : vector<1x8x8x64xbf16> to vector<8x8x64xbf16>
    %202 = vector.shape_cast %201 : vector<8x8x64xbf16> to vector<64x64xbf16>
    %c64_267 = arith.constant 64 : index
    %c1280_268 = arith.constant 1280 : index
    %203 = vector.load %arg10[%c64_267, %c1280_268] : memref<128x1728xbf16, #tpu.memory_space<vmem>>, vector<64x64xbf16>
    tpu.vector_store %arg10[%c64_267, %c1280_268], %202 {strides = array<i32>} : memref<128x1728xbf16, #tpu.memory_space<vmem>>, vector<64x64xbf16>,
    %c4_269 = arith.constant 4 : index
    %c1_270 = arith.constant 1 : index
    %c0_271 = arith.constant 0 : index
    %c0_272 = arith.constant 0 : index
    %204 = vector.load %arg9[%c4_269, %c1_270, %c0_271, %c0_272] : memref<5x10x16x64xbf16, #tpu.memory_space<vmem>>, vector<1x8x8x64xbf16>
    %205 = vector.shape_cast %204 : vector<1x8x8x64xbf16> to vector<8x8x64xbf16>
    %206 = vector.shape_cast %205 : vector<8x8x64xbf16> to vector<64x64xbf16>
    %c64_273 = arith.constant 64 : index
    %c1344_274 = arith.constant 1344 : index
    %207 = vector.load %arg10[%c64_273, %c1344_274] : memref<128x1728xbf16, #tpu.memory_space<vmem>>, vector<64x64xbf16>
    tpu.vector_store %arg10[%c64_273, %c1344_274], %206 {strides = array<i32>} : memref<128x1728xbf16, #tpu.memory_space<vmem>>, vector<64x64xbf16>,
    %c4_275 = arith.constant 4 : index
    %c1_276 = arith.constant 1 : index
    %c1_277 = arith.constant 1 : index
    %c0_278 = arith.constant 0 : index
    %208 = vector.load %arg9[%c4_275, %c1_276, %c1_277, %c0_278] : memref<5x10x16x64xbf16, #tpu.memory_space<vmem>>, vector<1x8x8x64xbf16>
    %209 = vector.shape_cast %208 : vector<1x8x8x64xbf16> to vector<8x8x64xbf16>
    %210 = vector.shape_cast %209 : vector<8x8x64xbf16> to vector<64x64xbf16>
    %c64_279 = arith.constant 64 : index
    %c1408_280 = arith.constant 1408 : index
    %211 = vector.load %arg10[%c64_279, %c1408_280] : memref<128x1728xbf16, #tpu.memory_space<vmem>>, vector<64x64xbf16>
    tpu.vector_store %arg10[%c64_279, %c1408_280], %210 {strides = array<i32>} : memref<128x1728xbf16, #tpu.memory_space<vmem>>, vector<64x64xbf16>,
    %c4_281 = arith.constant 4 : index
    %c1_282 = arith.constant 1 : index
    %c2_283 = arith.constant 2 : index
    %c0_284 = arith.constant 0 : index
    %212 = vector.load %arg9[%c4_281, %c1_282, %c2_283, %c0_284] : memref<5x10x16x64xbf16, #tpu.memory_space<vmem>>, vector<1x8x8x64xbf16>
    %213 = vector.shape_cast %212 : vector<1x8x8x64xbf16> to vector<8x8x64xbf16>
    %214 = vector.shape_cast %213 : vector<8x8x64xbf16> to vector<64x64xbf16>
    %c64_285 = arith.constant 64 : index
    %c1472_286 = arith.constant 1472 : index
    %215 = vector.load %arg10[%c64_285, %c1472_286] : memref<128x1728xbf16, #tpu.memory_space<vmem>>, vector<64x64xbf16>
    tpu.vector_store %arg10[%c64_285, %c1472_286], %214 {strides = array<i32>} : memref<128x1728xbf16, #tpu.memory_space<vmem>>, vector<64x64xbf16>,
    %c4_287 = arith.constant 4 : index
    %c2_288 = arith.constant 2 : index
    %c0_289 = arith.constant 0 : index
    %c0_290 = arith.constant 0 : index
    %216 = vector.load %arg9[%c4_287, %c2_288, %c0_289, %c0_290] : memref<5x10x16x64xbf16, #tpu.memory_space<vmem>>, vector<1x8x8x64xbf16>
    %217 = vector.shape_cast %216 : vector<1x8x8x64xbf16> to vector<8x8x64xbf16>
    %218 = vector.shape_cast %217 : vector<8x8x64xbf16> to vector<64x64xbf16>
    %c64_291 = arith.constant 64 : index
    %c1536_292 = arith.constant 1536 : index
    %219 = vector.load %arg10[%c64_291, %c1536_292] : memref<128x1728xbf16, #tpu.memory_space<vmem>>, vector<64x64xbf16>
    tpu.vector_store %arg10[%c64_291, %c1536_292], %218 {strides = array<i32>} : memref<128x1728xbf16, #tpu.memory_space<vmem>>, vector<64x64xbf16>,
    %c4_293 = arith.constant 4 : index
    %c2_294 = arith.constant 2 : index
    %c1_295 = arith.constant 1 : index
    %c0_296 = arith.constant 0 : index
    %220 = vector.load %arg9[%c4_293, %c2_294, %c1_295, %c0_296] : memref<5x10x16x64xbf16, #tpu.memory_space<vmem>>, vector<1x8x8x64xbf16>
    %221 = vector.shape_cast %220 : vector<1x8x8x64xbf16> to vector<8x8x64xbf16>
    %222 = vector.shape_cast %221 : vector<8x8x64xbf16> to vector<64x64xbf16>
    %c64_297 = arith.constant 64 : index
    %c1600_298 = arith.constant 1600 : index
    %223 = vector.load %arg10[%c64_297, %c1600_298] : memref<128x1728xbf16, #tpu.memory_space<vmem>>, vector<64x64xbf16>
    tpu.vector_store %arg10[%c64_297, %c1600_298], %222 {strides = array<i32>} : memref<128x1728xbf16, #tpu.memory_space<vmem>>, vector<64x64xbf16>,
    %c4_299 = arith.constant 4 : index
    %c2_300 = arith.constant 2 : index
    %c2_301 = arith.constant 2 : index
    %c0_302 = arith.constant 0 : index
    %224 = vector.load %arg9[%c4_299, %c2_300, %c2_301, %c0_302] : memref<5x10x16x64xbf16, #tpu.memory_space<vmem>>, vector<1x8x8x64xbf16>
    %225 = vector.shape_cast %224 : vector<1x8x8x64xbf16> to vector<8x8x64xbf16>
    %226 = vector.shape_cast %225 : vector<8x8x64xbf16> to vector<64x64xbf16>
    %c64_303 = arith.constant 64 : index
    %c1664_304 = arith.constant 1664 : index
    %227 = vector.load %arg10[%c64_303, %c1664_304] : memref<128x1728xbf16, #tpu.memory_space<vmem>>, vector<64x64xbf16>
    tpu.vector_store %arg10[%c64_303, %c1664_304], %226 {strides = array<i32>} : memref<128x1728xbf16, #tpu.memory_space<vmem>>, vector<64x64xbf16>,
    %c0_305 = arith.constant 0 : index
    %c0_306 = arith.constant 0 : index
    %228 = vector.load %arg10[%c0_305, %c0_306] : memref<128x1728xbf16, #tpu.memory_space<vmem>>, vector<128x1728xbf16>
    %c0_307 = arith.constant 0 : index
    %c0_308 = arith.constant 0 : index
    %229 = vector.load %arg4[%c0_307, %c0_308] : memref<1728x128xbf16, #tpu.memory_space<vmem>>, vector<1728x128xbf16>
    %cst_309 = arith.constant dense<0.000000e+00> : vector<128x128xf32>
    %230 = tpu.matmul %228, %229, %cst_309 {dimension_numbers = #tpu.dot_dimension_numbers<[1], [0], [0], [1], [0, 0, 1, 1], [], []>} : vector<128x1728xbf16>, vector<1728x128xbf16>, vector<128x128xf32> -> vector<128x128xf32>
    %c0_310 = arith.constant 0 : index
    %c0_311 = arith.constant 0 : index
    %231 = vector.load %arg5[%c0_310, %c0_311] : memref<1x128xf32, #tpu.memory_space<vmem>>, vector<1x128xf32>
    %232 = vector.broadcast %231 : vector<1x128xf32> to vector<128x128xf32>
    %233 = arith.addf %230, %232 : vector<128x128xf32>
    %cst_312 = arith.constant 0.000000e+00 : f32
    %234 = vector.broadcast %cst_312 : f32 to vector<128x128xf32>
    %235 = arith.maximumf %233, %234 : vector<128x128xf32>
    %c0_313 = arith.constant 0 : index
    %c0_314 = arith.constant 0 : index
    %c0_315 = arith.constant 0 : index
    %236 = vector.load %arg6[%c0_313, %c0_314, %c0_315] : memref<10x128x128xf32, #tpu.memory_space<vmem>>, vector<1x128x128xf32>
    %237 = vector.shape_cast %236 : vector<1x128x128xf32> to vector<128x128xf32>
    %238 = arith.mulf %235, %237 : vector<128x128xf32>
    %cst_316 = arith.constant dense<0.000000e+00> : vector<128xf32>
    %239 = vector.multi_reduction <add>, %238, %cst_316 [1] : vector<128x128xf32> to vector<128xf32>
    %240 = vector.shape_cast %239 : vector<128xf32> to vector<128x1xf32>
    %cst_317 = arith.constant dense<0.000000e+00> : vector<1xf32>
    %241 = vector.multi_reduction <add>, %240, %cst_317 [0] : vector<128x1xf32> to vector<1xf32>
    %242 = vector.shape_cast %241 : vector<1xf32> to vector<1x1xf32>
    %c0_318 = arith.constant 0 : index
    %c0_319 = arith.constant 0 : index
    %243 = vector.load %arg7[%c0_318, %c0_319] : memref<1x10xf32, #tpu.memory_space<vmem>>, vector<1x1xf32>
    %244 = arith.addf %242, %243 : vector<1x1xf32>
    %c0_320 = arith.constant 0 : index
    %c0_321 = arith.constant 0 : index
    %c0_322 = arith.constant 0 : index
    %245 = vector.load %arg8[%c0_320, %c0_321, %c0_322] : memref<1x1x10xf32, #tpu.memory_space<vmem>>, vector<1x1x1xf32>
    %246 = vector.shape_cast %245 : vector<1x1x1xf32> to vector<1x1xf32>
    %247 = vector.shape_cast %244 : vector<1x1xf32> to vector<1x1x1xf32>
    tpu.vector_store %arg8[%c0_320, %c0_321, %c0_322], %247 {strides = array<i32>} : memref<1x1x10xf32, #tpu.memory_space<vmem>>, vector<1x1x1xf32>,
    %c1_323 = arith.constant 1 : index
    %c0_324 = arith.constant 0 : index
    %c0_325 = arith.constant 0 : index
    %248 = vector.load %arg6[%c1_323, %c0_324, %c0_325] : memref<10x128x128xf32, #tpu.memory_space<vmem>>, vector<1x128x128xf32>
    %249 = vector.shape_cast %248 : vector<1x128x128xf32> to vector<128x128xf32>
    %250 = arith.mulf %235, %249 : vector<128x128xf32>
    %cst_326 = arith.constant dense<0.000000e+00> : vector<128xf32>
    %251 = vector.multi_reduction <add>, %250, %cst_326 [1] : vector<128x128xf32> to vector<128xf32>
    %252 = vector.shape_cast %251 : vector<128xf32> to vector<128x1xf32>
    %cst_327 = arith.constant dense<0.000000e+00> : vector<1xf32>
    %253 = vector.multi_reduction <add>, %252, %cst_327 [0] : vector<128x1xf32> to vector<1xf32>
    %254 = vector.shape_cast %253 : vector<1xf32> to vector<1x1xf32>
    %c0_328 = arith.constant 0 : index
    %c1_329 = arith.constant 1 : index
    %255 = vector.load %arg7[%c0_328, %c1_329] : memref<1x10xf32, #tpu.memory_space<vmem>>, vector<1x1xf32>
    %256 = arith.addf %254, %255 : vector<1x1xf32>
    %c0_330 = arith.constant 0 : index
    %c0_331 = arith.constant 0 : index
    %c1_332 = arith.constant 1 : index
    %257 = vector.load %arg8[%c0_330, %c0_331, %c1_332] : memref<1x1x10xf32, #tpu.memory_space<vmem>>, vector<1x1x1xf32>
    %258 = vector.shape_cast %257 : vector<1x1x1xf32> to vector<1x1xf32>
    %259 = vector.shape_cast %256 : vector<1x1xf32> to vector<1x1x1xf32>
    tpu.vector_store %arg8[%c0_330, %c0_331, %c1_332], %259 {strides = array<i32>} : memref<1x1x10xf32, #tpu.memory_space<vmem>>, vector<1x1x1xf32>,
    %c2_333 = arith.constant 2 : index
    %c0_334 = arith.constant 0 : index
    %c0_335 = arith.constant 0 : index
    %260 = vector.load %arg6[%c2_333, %c0_334, %c0_335] : memref<10x128x128xf32, #tpu.memory_space<vmem>>, vector<1x128x128xf32>
    %261 = vector.shape_cast %260 : vector<1x128x128xf32> to vector<128x128xf32>
    %262 = arith.mulf %235, %261 : vector<128x128xf32>
    %cst_336 = arith.constant dense<0.000000e+00> : vector<128xf32>
    %263 = vector.multi_reduction <add>, %262, %cst_336 [1] : vector<128x128xf32> to vector<128xf32>
    %264 = vector.shape_cast %263 : vector<128xf32> to vector<128x1xf32>
    %cst_337 = arith.constant dense<0.000000e+00> : vector<1xf32>
    %265 = vector.multi_reduction <add>, %264, %cst_337 [0] : vector<128x1xf32> to vector<1xf32>
    %266 = vector.shape_cast %265 : vector<1xf32> to vector<1x1xf32>
    %c0_338 = arith.constant 0 : index
    %c2_339 = arith.constant 2 : index
    %267 = vector.load %arg7[%c0_338, %c2_339] : memref<1x10xf32, #tpu.memory_space<vmem>>, vector<1x1xf32>
    %268 = arith.addf %266, %267 : vector<1x1xf32>
    %c0_340 = arith.constant 0 : index
    %c0_341 = arith.constant 0 : index
    %c2_342 = arith.constant 2 : index
    %269 = vector.load %arg8[%c0_340, %c0_341, %c2_342] : memref<1x1x10xf32, #tpu.memory_space<vmem>>, vector<1x1x1xf32>
    %270 = vector.shape_cast %269 : vector<1x1x1xf32> to vector<1x1xf32>
    %271 = vector.shape_cast %268 : vector<1x1xf32> to vector<1x1x1xf32>
    tpu.vector_store %arg8[%c0_340, %c0_341, %c2_342], %271 {strides = array<i32>} : memref<1x1x10xf32, #tpu.memory_space<vmem>>, vector<1x1x1xf32>,
    %c3_343 = arith.constant 3 : index
    %c0_344 = arith.constant 0 : index
    %c0_345 = arith.constant 0 : index
    %272 = vector.load %arg6[%c3_343, %c0_344, %c0_345] : memref<10x128x128xf32, #tpu.memory_space<vmem>>, vector<1x128x128xf32>
    %273 = vector.shape_cast %272 : vector<1x128x128xf32> to vector<128x128xf32>
    %274 = arith.mulf %235, %273 : vector<128x128xf32>
    %cst_346 = arith.constant dense<0.000000e+00> : vector<128xf32>
    %275 = vector.multi_reduction <add>, %274, %cst_346 [1] : vector<128x128xf32> to vector<128xf32>
    %276 = vector.shape_cast %275 : vector<128xf32> to vector<128x1xf32>
    %cst_347 = arith.constant dense<0.000000e+00> : vector<1xf32>
    %277 = vector.multi_reduction <add>, %276, %cst_347 [0] : vector<128x1xf32> to vector<1xf32>
    %278 = vector.shape_cast %277 : vector<1xf32> to vector<1x1xf32>
    %c0_348 = arith.constant 0 : index
    %c3_349 = arith.constant 3 : index
    %279 = vector.load %arg7[%c0_348, %c3_349] : memref<1x10xf32, #tpu.memory_space<vmem>>, vector<1x1xf32>
    %280 = arith.addf %278, %279 : vector<1x1xf32>
    %c0_350 = arith.constant 0 : index
    %c0_351 = arith.constant 0 : index
    %c3_352 = arith.constant 3 : index
    %281 = vector.load %arg8[%c0_350, %c0_351, %c3_352] : memref<1x1x10xf32, #tpu.memory_space<vmem>>, vector<1x1x1xf32>
    %282 = vector.shape_cast %281 : vector<1x1x1xf32> to vector<1x1xf32>
    %283 = vector.shape_cast %280 : vector<1x1xf32> to vector<1x1x1xf32>
    tpu.vector_store %arg8[%c0_350, %c0_351, %c3_352], %283 {strides = array<i32>} : memref<1x1x10xf32, #tpu.memory_space<vmem>>, vector<1x1x1xf32>,
    %c4_353 = arith.constant 4 : index
    %c0_354 = arith.constant 0 : index
    %c0_355 = arith.constant 0 : index
    %284 = vector.load %arg6[%c4_353, %c0_354, %c0_355] : memref<10x128x128xf32, #tpu.memory_space<vmem>>, vector<1x128x128xf32>
    %285 = vector.shape_cast %284 : vector<1x128x128xf32> to vector<128x128xf32>
    %286 = arith.mulf %235, %285 : vector<128x128xf32>
    %cst_356 = arith.constant dense<0.000000e+00> : vector<128xf32>
    %287 = vector.multi_reduction <add>, %286, %cst_356 [1] : vector<128x128xf32> to vector<128xf32>
    %288 = vector.shape_cast %287 : vector<128xf32> to vector<128x1xf32>
    %cst_357 = arith.constant dense<0.000000e+00> : vector<1xf32>
    %289 = vector.multi_reduction <add>, %288, %cst_357 [0] : vector<128x1xf32> to vector<1xf32>
    %290 = vector.shape_cast %289 : vector<1xf32> to vector<1x1xf32>
    %c0_358 = arith.constant 0 : index
    %c4_359 = arith.constant 4 : index
    %291 = vector.load %arg7[%c0_358, %c4_359] : memref<1x10xf32, #tpu.memory_space<vmem>>, vector<1x1xf32>
    %292 = arith.addf %290, %291 : vector<1x1xf32>
    %c0_360 = arith.constant 0 : index
    %c0_361 = arith.constant 0 : index
    %c4_362 = arith.constant 4 : index
    %293 = vector.load %arg8[%c0_360, %c0_361, %c4_362] : memref<1x1x10xf32, #tpu.memory_space<vmem>>, vector<1x1x1xf32>
    %294 = vector.shape_cast %293 : vector<1x1x1xf32> to vector<1x1xf32>
    %295 = vector.shape_cast %292 : vector<1x1xf32> to vector<1x1x1xf32>
    tpu.vector_store %arg8[%c0_360, %c0_361, %c4_362], %295 {strides = array<i32>} : memref<1x1x10xf32, #tpu.memory_space<vmem>>, vector<1x1x1xf32>,
    %c5 = arith.constant 5 : index
    %c0_363 = arith.constant 0 : index
    %c0_364 = arith.constant 0 : index
    %296 = vector.load %arg6[%c5, %c0_363, %c0_364] : memref<10x128x128xf32, #tpu.memory_space<vmem>>, vector<1x128x128xf32>
    %297 = vector.shape_cast %296 : vector<1x128x128xf32> to vector<128x128xf32>
    %298 = arith.mulf %235, %297 : vector<128x128xf32>
    %cst_365 = arith.constant dense<0.000000e+00> : vector<128xf32>
    %299 = vector.multi_reduction <add>, %298, %cst_365 [1] : vector<128x128xf32> to vector<128xf32>
    %300 = vector.shape_cast %299 : vector<128xf32> to vector<128x1xf32>
    %cst_366 = arith.constant dense<0.000000e+00> : vector<1xf32>
    %301 = vector.multi_reduction <add>, %300, %cst_366 [0] : vector<128x1xf32> to vector<1xf32>
    %302 = vector.shape_cast %301 : vector<1xf32> to vector<1x1xf32>
    %c0_367 = arith.constant 0 : index
    %c5_368 = arith.constant 5 : index
    %303 = vector.load %arg7[%c0_367, %c5_368] : memref<1x10xf32, #tpu.memory_space<vmem>>, vector<1x1xf32>
    %304 = arith.addf %302, %303 : vector<1x1xf32>
    %c0_369 = arith.constant 0 : index
    %c0_370 = arith.constant 0 : index
    %c5_371 = arith.constant 5 : index
    %305 = vector.load %arg8[%c0_369, %c0_370, %c5_371] : memref<1x1x10xf32, #tpu.memory_space<vmem>>, vector<1x1x1xf32>
    %306 = vector.shape_cast %305 : vector<1x1x1xf32> to vector<1x1xf32>
    %307 = vector.shape_cast %304 : vector<1x1xf32> to vector<1x1x1xf32>
    tpu.vector_store %arg8[%c0_369, %c0_370, %c5_371], %307 {strides = array<i32>} : memref<1x1x10xf32, #tpu.memory_space<vmem>>, vector<1x1x1xf32>,
    %c6 = arith.constant 6 : index
    %c0_372 = arith.constant 0 : index
    %c0_373 = arith.constant 0 : index
    %308 = vector.load %arg6[%c6, %c0_372, %c0_373] : memref<10x128x128xf32, #tpu.memory_space<vmem>>, vector<1x128x128xf32>
    %309 = vector.shape_cast %308 : vector<1x128x128xf32> to vector<128x128xf32>
    %310 = arith.mulf %235, %309 : vector<128x128xf32>
    %cst_374 = arith.constant dense<0.000000e+00> : vector<128xf32>
    %311 = vector.multi_reduction <add>, %310, %cst_374 [1] : vector<128x128xf32> to vector<128xf32>
    %312 = vector.shape_cast %311 : vector<128xf32> to vector<128x1xf32>
    %cst_375 = arith.constant dense<0.000000e+00> : vector<1xf32>
    %313 = vector.multi_reduction <add>, %312, %cst_375 [0] : vector<128x1xf32> to vector<1xf32>
    %314 = vector.shape_cast %313 : vector<1xf32> to vector<1x1xf32>
    %c0_376 = arith.constant 0 : index
    %c6_377 = arith.constant 6 : index
    %315 = vector.load %arg7[%c0_376, %c6_377] : memref<1x10xf32, #tpu.memory_space<vmem>>, vector<1x1xf32>
    %316 = arith.addf %314, %315 : vector<1x1xf32>
    %c0_378 = arith.constant 0 : index
    %c0_379 = arith.constant 0 : index
    %c6_380 = arith.constant 6 : index
    %317 = vector.load %arg8[%c0_378, %c0_379, %c6_380] : memref<1x1x10xf32, #tpu.memory_space<vmem>>, vector<1x1x1xf32>
    %318 = vector.shape_cast %317 : vector<1x1x1xf32> to vector<1x1xf32>
    %319 = vector.shape_cast %316 : vector<1x1xf32> to vector<1x1x1xf32>
    tpu.vector_store %arg8[%c0_378, %c0_379, %c6_380], %319 {strides = array<i32>} : memref<1x1x10xf32, #tpu.memory_space<vmem>>, vector<1x1x1xf32>,
    %c7 = arith.constant 7 : index
    %c0_381 = arith.constant 0 : index
    %c0_382 = arith.constant 0 : index
    %320 = vector.load %arg6[%c7, %c0_381, %c0_382] : memref<10x128x128xf32, #tpu.memory_space<vmem>>, vector<1x128x128xf32>
    %321 = vector.shape_cast %320 : vector<1x128x128xf32> to vector<128x128xf32>
    %322 = arith.mulf %235, %321 : vector<128x128xf32>
    %cst_383 = arith.constant dense<0.000000e+00> : vector<128xf32>
    %323 = vector.multi_reduction <add>, %322, %cst_383 [1] : vector<128x128xf32> to vector<128xf32>
    %324 = vector.shape_cast %323 : vector<128xf32> to vector<128x1xf32>
    %cst_384 = arith.constant dense<0.000000e+00> : vector<1xf32>
    %325 = vector.multi_reduction <add>, %324, %cst_384 [0] : vector<128x1xf32> to vector<1xf32>
    %326 = vector.shape_cast %325 : vector<1xf32> to vector<1x1xf32>
    %c0_385 = arith.constant 0 : index
    %c7_386 = arith.constant 7 : index
    %327 = vector.load %arg7[%c0_385, %c7_386] : memref<1x10xf32, #tpu.memory_space<vmem>>, vector<1x1xf32>
    %328 = arith.addf %326, %327 : vector<1x1xf32>
    %c0_387 = arith.constant 0 : index
    %c0_388 = arith.constant 0 : index
    %c7_389 = arith.constant 7 : index
    %329 = vector.load %arg8[%c0_387, %c0_388, %c7_389] : memref<1x1x10xf32, #tpu.memory_space<vmem>>, vector<1x1x1xf32>
    %330 = vector.shape_cast %329 : vector<1x1x1xf32> to vector<1x1xf32>
    %331 = vector.shape_cast %328 : vector<1x1xf32> to vector<1x1x1xf32>
    tpu.vector_store %arg8[%c0_387, %c0_388, %c7_389], %331 {strides = array<i32>} : memref<1x1x10xf32, #tpu.memory_space<vmem>>, vector<1x1x1xf32>,
    %c8 = arith.constant 8 : index
    %c0_390 = arith.constant 0 : index
    %c0_391 = arith.constant 0 : index
    %332 = vector.load %arg6[%c8, %c0_390, %c0_391] : memref<10x128x128xf32, #tpu.memory_space<vmem>>, vector<1x128x128xf32>
    %333 = vector.shape_cast %332 : vector<1x128x128xf32> to vector<128x128xf32>
    %334 = arith.mulf %235, %333 : vector<128x128xf32>
    %cst_392 = arith.constant dense<0.000000e+00> : vector<128xf32>
    %335 = vector.multi_reduction <add>, %334, %cst_392 [1] : vector<128x128xf32> to vector<128xf32>
    %336 = vector.shape_cast %335 : vector<128xf32> to vector<128x1xf32>
    %cst_393 = arith.constant dense<0.000000e+00> : vector<1xf32>
    %337 = vector.multi_reduction <add>, %336, %cst_393 [0] : vector<128x1xf32> to vector<1xf32>
    %338 = vector.shape_cast %337 : vector<1xf32> to vector<1x1xf32>
    %c0_394 = arith.constant 0 : index
    %c8_395 = arith.constant 8 : index
    %339 = vector.load %arg7[%c0_394, %c8_395] : memref<1x10xf32, #tpu.memory_space<vmem>>, vector<1x1xf32>
    %340 = arith.addf %338, %339 : vector<1x1xf32>
    %c0_396 = arith.constant 0 : index
    %c0_397 = arith.constant 0 : index
    %c8_398 = arith.constant 8 : index
    %341 = vector.load %arg8[%c0_396, %c0_397, %c8_398] : memref<1x1x10xf32, #tpu.memory_space<vmem>>, vector<1x1x1xf32>
    %342 = vector.shape_cast %341 : vector<1x1x1xf32> to vector<1x1xf32>
    %343 = vector.shape_cast %340 : vector<1x1xf32> to vector<1x1x1xf32>
    tpu.vector_store %arg8[%c0_396, %c0_397, %c8_398], %343 {strides = array<i32>} : memref<1x1x10xf32, #tpu.memory_space<vmem>>, vector<1x1x1xf32>,
    %c9 = arith.constant 9 : index
    %c0_399 = arith.constant 0 : index
    %c0_400 = arith.constant 0 : index
    %344 = vector.load %arg6[%c9, %c0_399, %c0_400] : memref<10x128x128xf32, #tpu.memory_space<vmem>>, vector<1x128x128xf32>
    %345 = vector.shape_cast %344 : vector<1x128x128xf32> to vector<128x128xf32>
    %346 = arith.mulf %235, %345 : vector<128x128xf32>
    %cst_401 = arith.constant dense<0.000000e+00> : vector<128xf32>
    %347 = vector.multi_reduction <add>, %346, %cst_401 [1] : vector<128x128xf32> to vector<128xf32>
    %348 = vector.shape_cast %347 : vector<128xf32> to vector<128x1xf32>
    %cst_402 = arith.constant dense<0.000000e+00> : vector<1xf32>
    %349 = vector.multi_reduction <add>, %348, %cst_402 [0] : vector<128x1xf32> to vector<1xf32>
    %350 = vector.shape_cast %349 : vector<1xf32> to vector<1x1xf32>
    %c0_403 = arith.constant 0 : index
    %c9_404 = arith.constant 9 : index
    %351 = vector.load %arg7[%c0_403, %c9_404] : memref<1x10xf32, #tpu.memory_space<vmem>>, vector<1x1xf32>
    %352 = arith.addf %350, %351 : vector<1x1xf32>
    %c0_405 = arith.constant 0 : index
    %c0_406 = arith.constant 0 : index
    %c9_407 = arith.constant 9 : index
    %353 = vector.load %arg8[%c0_405, %c0_406, %c9_407] : memref<1x1x10xf32, #tpu.memory_space<vmem>>, vector<1x1x1xf32>
    %354 = vector.shape_cast %353 : vector<1x1x1xf32> to vector<1x1xf32>
    %355 = vector.shape_cast %352 : vector<1x1xf32> to vector<1x1x1xf32>
    tpu.vector_store %arg8[%c0_405, %c0_406, %c9_407], %355 {strides = array<i32>} : memref<1x1x10xf32, #tpu.memory_space<vmem>>, vector<1x1x1xf32>,
    return
  }
  func.func @transform_0(%arg0: i32) -> (i32, i32, i32) {
    %c0_i32 = arith.constant 0 : i32
    %c0_i32_0 = arith.constant 0 : i32
    %c0_i32_1 = arith.constant 0 : i32
    return %arg0, %c0_i32, %c0_i32_0 : i32, i32, i32
  }
  func.func @transform_1(%arg0: i32) -> (i32, i32) {
    %c0_i32 = arith.constant 0 : i32
    %c0_i32_0 = arith.constant 0 : i32
    %c0_i32_1 = arith.constant 0 : i32
    return %c0_i32, %c0_i32_0 : i32, i32
  }
  func.func @transform_2(%arg0: i32) -> (i32, i32) {
    %c0_i32 = arith.constant 0 : i32
    %c0_i32_0 = arith.constant 0 : i32
    %c0_i32_1 = arith.constant 0 : i32
    return %c0_i32, %c0_i32_0 : i32, i32
  }
  func.func @transform_3(%arg0: i32) -> (i32, i32) {
    %c0_i32 = arith.constant 0 : i32
    %c0_i32_0 = arith.constant 0 : i32
    %c0_i32_1 = arith.constant 0 : i32
    return %c0_i32, %c0_i32_0 : i32, i32
  }
  func.func @transform_4(%arg0: i32) -> (i32, i32) {
    %c0_i32 = arith.constant 0 : i32
    %c0_i32_0 = arith.constant 0 : i32
    %c0_i32_1 = arith.constant 0 : i32
    return %c0_i32, %c0_i32_0 : i32, i32
  }
  func.func @transform_5(%arg0: i32) -> (i32, i32, i32) {
    %c0_i32 = arith.constant 0 : i32
    %c0_i32_0 = arith.constant 0 : i32
    %c0_i32_1 = arith.constant 0 : i32
    %c0_i32_2 = arith.constant 0 : i32
    return %c0_i32, %c0_i32_0, %c0_i32_1 : i32, i32, i32
  }
  func.func @transform_6(%arg0: i32) -> (i32, i32) {
    %c0_i32 = arith.constant 0 : i32
    %c0_i32_0 = arith.constant 0 : i32
    %c0_i32_1 = arith.constant 0 : i32
    return %c0_i32, %c0_i32_0 : i32, i32
  }
  func.func @transform_7(%arg0: i32) -> (i32, i32, i32) {
    %c0_i32 = arith.constant 0 : i32
    %c0_i32_0 = arith.constant 0 : i32
    %c0_i32_1 = arith.constant 0 : i32
    return %arg0, %c0_i32, %c0_i32_0 : i32, i32, i32
  }
}

</mosaic_0001>

<llo_original>
// kernel: conv1_forward.1
$region0: #{conv1_forward.1}
  #allocation0 [shape = 'u32[]', space=smem, size = 0x4, offset = 0x4, fixed_abs, tag = 'smem constant byte address 0x4 - core index']
  #allocation1 [shape = 'u32[144,128]{1,0:T(1,128)}', space=vmem, size = 0x12000, scoped, tag = 'internal scratch']
  #allocation2 [shape = 'bf16[5,10,16,64]{3,2,1,0:T(16,128)(2,1)}', space=vmem, size = 0x32000, scoped, tag = 'scratch operand']
  #allocation3 [shape = 'bf16[128,1728]{1,0:T(16,128)(2,1)}', space=vmem, size = 0x70000, scoped, tag = 'scratch operand']
  %s0 = inlined_call_operand.vmem [shape: bf16[2,800,270], index: 0, kind: input, shape index: {}]
  %s1 = inlined_call_operand.vmem [shape: bf16[270,64], index: 1, kind: input, shape index: {}]
  %s2 = inlined_call_operand.vmem [shape: f32[1,64], index: 2, kind: input, shape index: {}]
  %s3 = inlined_call_operand.vmem [shape: bf16[1728,128], index: 3, kind: input, shape index: {}]
  %s4 = inlined_call_operand.vmem [shape: f32[1,128], index: 4, kind: input, shape index: {}]
  %s5 = inlined_call_operand.vmem [shape: f32[10,128,128], index: 5, kind: input, shape index: {}]
  %s6 = inlined_call_operand.vmem [shape: f32[1,10], index: 6, kind: input, shape index: {}]
  %s7 = inlined_call_operand.hbm [shape: f32[2,1,10], index: 7, kind: output, shape index: {}]
  %s8 = sld [smem:[#allocation0]]
  $region61: #{conv1_forward.1} parent=0
    _
  %s10 = ssub.s32 1, %s8
  %s11 = scalar_select 0, %s10, %s8
  $region1: #{conv1_forward.1} parent=0
    #allocation4 [shape = 'u8[1024]{0}', space=vmem, size = 0x400, scoped, tag = 'output window, operand 0']
    #allocation5 [shape = 's32[2]{0}', space=sflag, size = 0x8, scoped, tag = 'scoped memory for conv1_forward.1']
    %12 = vsyncpa [#allocation5], 0
    %s13 = scalar_lea.sflag [#allocation5], 1
    %14 = vsyncpa %s13, 0
    loop: start=0, step=1, limit=4
    $region2: #{conv1_forward.1} parent=1 // loop_pre_header
      _
    $region3: #{conv1_forward.1} parent=1 // loop_header
      %s16 = sphi 0, %s20
      %p17 = scmp.ge.s32.totalorder %s16, 4
      %s26 = sphi 0, %s28
      %s29 = sphi 0, %s26
      %s30 = sphi 0, %s29
      %s46 = sphi 0, %s30
      %s50 = sphi 0, %s50
      %s52 = sphi 0, %s50
      %s53 = sphi 0, %s52
      %s67 = sphi 0, %s53
      %s71 = sphi 0, %s71
      %s73 = sphi 0, %s71
      %s74 = sphi 0, %s73
      %s88 = sphi 0, %s74
      %s92 = sphi 0, %s92
      %s94 = sphi 0, %s92
      %s95 = sphi 0, %s94
      %s109 = sphi 0, %s95
      %s113 = sphi 0, %s113
      %s115 = sphi 0, %s113
      %s116 = sphi 0, %s115
      %s130 = sphi 0, %s116
      %s134 = sphi 0, %s134
      %s136 = sphi 0, %s134
      %s137 = sphi 0, %s136
      %s151 = sphi 0, %s137
      %s155 = sphi 0, %s155
      %s157 = sphi 0, %s155
      %s158 = sphi 0, %s157
      %s172 = sphi 0, %s158
      %s178 = sphi 0, %s180
      %s181 = sphi 0, %s178
      %s182 = sphi 0, %s181
      %s198 = sphi 0, %s182
    $region4: #{conv1_forward.1} parent=1 // loop_header_branch
      %19 = sbr.rel (%p17) target = $region8
    $region5: #{conv1_forward.1} parent=1 // loop_body
      %s21 = ssub.s32 %s16, 1
      %s22 = ssub.s32 %s16, 2
      %s23 = sadd.s32 %s16, 1
      %s24 = ssub.s32 %s16, %s23
      %p25 = scmp.eq.s32.totalorder %s24, 0
      %s27 = sadd.s32 %s26, 1
      %s28 = scalar_select %p25, %s26, %s27
      %p31 = pneg %p25
      %p32 = scmp.eq.s32.totalorder %s16, 1
      %p33 = por %p31, %p32
      %p34 = scmp.ne.s32.totalorder %s26, %s29
      %p35 = scmp.eq.s32.totalorder %s16, 0
      %p36 = por %p34, %p35
      %p37 = scmp.ne.s32.totalorder %s26, %s29
      %p38 = scmp.eq.s32.totalorder %s21, 1
      %p39 = por %p37, %p38
      %p40 = scmp.ne.s32.totalorder %s29, %s30
      %p41 = scmp.eq.s32.totalorder %s21, 0
      %p42 = por %p40, %p41
      %p43 = scmp.ne.s32.totalorder %s29, %s30
      %p44 = scmp.eq.s32.totalorder %s22, 1
      %p45 = por %p43, %p44
      %p47 = scmp.ne.s32.totalorder %s30, %s46
      %p48 = scmp.eq.s32.totalorder %s22, 0
      %p49 = por %p47, %p48
      %s51 = sadd.s32 %s50, 1
      %p54 = scmp.eq.s32.totalorder %s16, 1
      %p55 = scmp.ne.s32.totalorder %s50, %s52
      %p56 = scmp.eq.s32.totalorder %s16, 0
      %p57 = por %p55, %p56
      %p58 = scmp.ne.s32.totalorder %s50, %s52
      %p59 = scmp.eq.s32.totalorder %s21, 1
      %p60 = por %p58, %p59
      %p61 = scmp.ne.s32.totalorder %s52, %s53
      %p62 = scmp.eq.s32.totalorder %s21, 0
      %p63 = por %p61, %p62
      %p64 = scmp.ne.s32.totalorder %s52, %s53
      %p65 = scmp.eq.s32.totalorder %s22, 1
      %p66 = por %p64, %p65
      %p68 = scmp.ne.s32.totalorder %s53, %s67
      %p69 = scmp.eq.s32.totalorder %s22, 0
      %p70 = por %p68, %p69
      %s72 = sadd.s32 %s71, 1
      %p75 = scmp.eq.s32.totalorder %s16, 1
      %p76 = scmp.ne.s32.totalorder %s71, %s73
      %p77 = scmp.eq.s32.totalorder %s16, 0
      %p78 = por %p76, %p77
      %p79 = scmp.ne.s32.totalorder %s71, %s73
      %p80 = scmp.eq.s32.totalorder %s21, 1
      %p81 = por %p79, %p80
      %p82 = scmp.ne.s32.totalorder %s73, %s74
      %p83 = scmp.eq.s32.totalorder %s21, 0
      %p84 = por %p82, %p83
      %p85 = scmp.ne.s32.totalorder %s73, %s74
      %p86 = scmp.eq.s32.totalorder %s22, 1
      %p87 = por %p85, %p86
      %p89 = scmp.ne.s32.totalorder %s74, %s88
      %p90 = scmp.eq.s32.totalorder %s22, 0
      %p91 = por %p89, %p90
      %s93 = sadd.s32 %s92, 1
      %p96 = scmp.eq.s32.totalorder %s16, 1
      %p97 = scmp.ne.s32.totalorder %s92, %s94
      %p98 = scmp.eq.s32.totalorder %s16, 0
      %p99 = por %p97, %p98
      %p100 = scmp.ne.s32.totalorder %s92, %s94
      %p101 = scmp.eq.s32.totalorder %s21, 1
      %p102 = por %p100, %p101
      %p103 = scmp.ne.s32.totalorder %s94, %s95
      %p104 = scmp.eq.s32.totalorder %s21, 0
      %p105 = por %p103, %p104
      %p106 = scmp.ne.s32.totalorder %s94, %s95
      %p107 = scmp.eq.s32.totalorder %s22, 1
      %p108 = por %p106, %p107
      %p110 = scmp.ne.s32.totalorder %s95, %s109
      %p111 = scmp.eq.s32.totalorder %s22, 0
      %p112 = por %p110, %p111
      %s114 = sadd.s32 %s113, 1
      %p117 = scmp.eq.s32.totalorder %s16, 1
      %p118 = scmp.ne.s32.totalorder %s113, %s115
      %p119 = scmp.eq.s32.totalorder %s16, 0
      %p120 = por %p118, %p119
      %p121 = scmp.ne.s32.totalorder %s113, %s115
      %p122 = scmp.eq.s32.totalorder %s21, 1
      %p123 = por %p121, %p122
      %p124 = scmp.ne.s32.totalorder %s115, %s116
      %p125 = scmp.eq.s32.totalorder %s21, 0
      %p126 = por %p124, %p125
      %p127 = scmp.ne.s32.totalorder %s115, %s116
      %p128 = scmp.eq.s32.totalorder %s22, 1
      %p129 = por %p127, %p128
      %p131 = scmp.ne.s32.totalorder %s116, %s130
      %p132 = scmp.eq.s32.totalorder %s22, 0
      %p133 = por %p131, %p132
      %s135 = sadd.s32 %s134, 1
      %p138 = scmp.eq.s32.totalorder %s16, 1
      %p139 = scmp.ne.s32.totalorder %s134, %s136
      %p140 = scmp.eq.s32.totalorder %s16, 0
      %p141 = por %p139, %p140
      %p142 = scmp.ne.s32.totalorder %s134, %s136
      %p143 = scmp.eq.s32.totalorder %s21, 1
      %p144 = por %p142, %p143
      %p145 = scmp.ne.s32.totalorder %s136, %s137
      %p146 = scmp.eq.s32.totalorder %s21, 0
      %p147 = por %p145, %p146
      %p148 = scmp.ne.s32.totalorder %s136, %s137
      %p149 = scmp.eq.s32.totalorder %s22, 1
      %p150 = por %p148, %p149
      %p152 = scmp.ne.s32.totalorder %s137, %s151
      %p153 = scmp.eq.s32.totalorder %s22, 0
      %p154 = por %p152, %p153
      %s156 = sadd.s32 %s155, 1
      %p159 = scmp.eq.s32.totalorder %s16, 1
      %p160 = scmp.ne.s32.totalorder %s155, %s157
      %p161 = scmp.eq.s32.totalorder %s16, 0
      %p162 = por %p160, %p161
      %p163 = scmp.ne.s32.totalorder %s155, %s157
      %p164 = scmp.eq.s32.totalorder %s21, 1
      %p165 = por %p163, %p164
      %p166 = scmp.ne.s32.totalorder %s157, %s158
      %p167 = scmp.eq.s32.totalorder %s21, 0
      %p168 = por %p166, %p167
      %p169 = scmp.ne.s32.totalorder %s157, %s158
      %p170 = scmp.eq.s32.totalorder %s22, 1
      %p171 = por %p169, %p170
      %p173 = scmp.ne.s32.totalorder %s158, %s172
      %p174 = scmp.eq.s32.totalorder %s22, 0
      %p175 = por %p173, %p174
      %s176 = ssub.s32 %s16, %s23
      %p177 = scmp.eq.s32.totalorder %s176, 0
      %s179 = sadd.s32 %s178, 1
      %s180 = scalar_select %p177, %s178, %s179
      %p183 = pneg %p177
      %p184 = scmp.eq.s32.totalorder %s16, 1
      %p185 = por %p183, %p184
      %p186 = scmp.ne.s32.totalorder %s178, %s181
      %p187 = scmp.eq.s32.totalorder %s16, 0
      %p188 = por %p186, %p187
      %p189 = scmp.ne.s32.totalorder %s178, %s181
      %p190 = scmp.eq.s32.totalorder %s21, 1
      %p191 = por %p189, %p190
      %p192 = scmp.ne.s32.totalorder %s181, %s182
      %p193 = scmp.eq.s32.totalorder %s21, 0
      %p194 = por %p192, %p193
      %p195 = scmp.ne.s32.totalorder %s181, %s182
      %p196 = scmp.eq.s32.totalorder %s22, 1
      %p197 = por %p195, %p196
      %p199 = scmp.ne.s32.totalorder %s182, %s198
      %p200 = scmp.eq.s32.totalorder %s22, 0
      %p201 = por %p199, %p200
      %p202 = scmp.le.s32.totalorder 1, %s16
      %p203 = scmp.lt.s32.totalorder %s16, 3
      %p204 = pnand %p202, %p203
      %p205 = pneg %p204
      // Predicated region
      $region9: #{conv1_forward.1} parent=5 // pred_check
        _
      $region10: #{conv1_forward.1} parent=5 // pred_check_branch
        %207 = sbr.rel (%p204) target = $region12
      $region11: #{conv1_forward.1} parent=5 // pred_region
        %s208 = ssub.s32 %s16, 1
        // Predicated region
        $region13: #{conv1_forward.1} parent=11 // pred_check
          %p209 = pneg %p63
        $region14: #{conv1_forward.1} parent=11 // pred_check_branch
          %211 = sbr.rel (%p209) target = $region16
        $region15: #{conv1_forward.1} parent=11 // pred_region
          _
        $region16: #{conv1_forward.1} parent=11 // pred_fallthru
          _
        // Predicated region
        $region17: #{conv1_forward.1} parent=11 // pred_check
          %p212 = pneg %p84
        $region18: #{conv1_forward.1} parent=11 // pred_check_branch
          %214 = sbr.rel (%p212) target = $region20
        $region19: #{conv1_forward.1} parent=11 // pred_region
          _
        $region20: #{conv1_forward.1} parent=11 // pred_fallthru
          _
        // Predicated region
        $region21: #{conv1_forward.1} parent=11 // pred_check
          %p215 = pneg %p105
        $region22: #{conv1_forward.1} parent=11 // pred_check_branch
          %217 = sbr.rel (%p215) target = $region24
        $region23: #{conv1_forward.1} parent=11 // pred_region
          _
        $region24: #{conv1_forward.1} parent=11 // pred_fallthru
          _
        // Predicated region
        $region25: #{conv1_forward.1} parent=11 // pred_check
          %p218 = pneg %p126
        $region26: #{conv1_forward.1} parent=11 // pred_check_branch
          %220 = sbr.rel (%p218) target = $region28
        $region27: #{conv1_forward.1} parent=11 // pred_region
          _
        $region28: #{conv1_forward.1} parent=11 // pred_fallthru
          _
        // Predicated region
        $region29: #{conv1_forward.1} parent=11 // pred_check
          %p221 = pneg %p147
        $region30: #{conv1_forward.1} parent=11 // pred_check_branch
          %223 = sbr.rel (%p221) target = $region32
        $region31: #{conv1_forward.1} parent=11 // pred_region
          _
        $region32: #{conv1_forward.1} parent=11 // pred_fallthru
          _
        // Predicated region
        $region33: #{conv1_forward.1} parent=11 // pred_check
          %p224 = pneg %p168
        $region34: #{conv1_forward.1} parent=11 // pred_check_branch
          %226 = sbr.rel (%p224) target = $region36
        $region35: #{conv1_forward.1} parent=11 // pred_region
          _
        $region36: #{conv1_forward.1} parent=11 // pred_fallthru
          _
      $region12: #{conv1_forward.1} parent=5 // pred_fallthru
        _
      %p227 = scmp.lt.s32.totalorder %s16, 2
      // Predicated region
      $region37: #{conv1_forward.1} parent=5 // pred_check
        %p228 = pneg %p227
      $region38: #{conv1_forward.1} parent=5 // pred_check_branch
        %230 = sbr.rel (%p228) target = $region40
      $region39: #{conv1_forward.1} parent=5 // pred_region
        // Predicated region
        $region41: #{conv1_forward.1} parent=39 // pred_check
          %p231 = pneg %p36
        $region42: #{conv1_forward.1} parent=39 // pred_check_branch
          %233 = sbr.rel (%p231) target = $region44
        $region43: #{conv1_forward.1} parent=39 // pred_region
          %p234 = scmp.lt.s32.totalorder %s16, 1
          %s235 = scalar_select %p234, %s16, 1
          %s236 = smul.addr %s235, 300
          %s237 = smul.addr %s236, 4
          %s238 = scalar_lea.vmem %s0, %s237
        $region44: #{conv1_forward.1} parent=39 // pred_fallthru
          _
      $region40: #{conv1_forward.1} parent=5 // pred_fallthru
        _
      %p239 = scmp.le.s32.totalorder 1, %s16
      %p240 = scmp.lt.s32.totalorder %s16, 3
      %p241 = pnand %p239, %p240
      %p242 = pneg %p241
      // Predicated region
      $region45: #{conv1_forward.1} parent=5 // pred_check
        _
      $region46: #{conv1_forward.1} parent=5 // pred_check_branch
        %244 = sbr.rel (%p241) target = $region48
      $region47: #{conv1_forward.1} parent=5 // pred_region
        %s245 = ssub.s32 %s16, 1
        %p246 = scmp.lt.s32.totalorder %s21, 1
        %s247 = scalar_select %p246, %s21, 1
        %s248 = smul.addr %s247, 300
        %s249 = smul.addr %s248, 4
        %s250 = scalar_lea.vmem %s0, %s249
        %p251 = pneg %p42
        %p252 = pneg %p39
        %p253 = pneg %p63
        %p254 = pneg %p60
        %p255 = pneg %p84
        %p256 = pneg %p81
        %p257 = pneg %p105
        %p258 = pneg %p102
        %p259 = pneg %p126
        %p260 = pneg %p123
        %p261 = pneg %p147
        %p262 = pneg %p144
        %p263 = pneg %p168
        %p264 = pneg %p165
        %p265 = pneg %p194
        %p266 = pneg %p191
        %s267 = sand.u32 %s181, 1
        %s268 = scalar_lea.sflag [#allocation5], %s267
        %s269 = sand.u32 %s181, 1
        %s270 = scalar_lea.vmem [#allocation4], %s269
        %p271 = scmp.lt.s32.totalorder %s21, 1
        %s272 = scalar_select %p271, %s21, 1
        %s273 = smul.addr %s272, 300
        %s274 = smul.addr %s273, 4
        %s275 = scalar_lea.vmem %s0, %s274
        %v277 = vld [vmem:[%s275] sm:$0xff]
        %v278 = vld [vmem:[%s275 + $0x8] sm:$0xf]
        %v279 = vld [vmem:[%s275 + $0xc] sm:$0xff]
        %v280 = vld [vmem:[%s275 + $0x14] sm:$0xf]
        %v281 = vld [vmem:[%s275 + $0x18] sm:$0xff]
        %v282 = vld [vmem:[%s275 + $0x20] sm:$0xf]
        %v283 = vld [vmem:[%s275 + $0x24] sm:$0xff]
        %v284 = vld [vmem:[%s275 + $0x2c] sm:$0xf]
        %v285 = vld [vmem:[%s275 + $0x30] sm:$0xff]
        %v286 = vld [vmem:[%s275 + $0x38] sm:$0xf]
        %v287 = vld [vmem:[%s275 + $0x3c] sm:$0xff]
        %v288 = vld [vmem:[%s275 + $0x44] sm:$0xf]
        %v289 = vld [vmem:[%s275 + $0x48] sm:$0xff]
        %v290 = vld [vmem:[%s275 + $0x50] sm:$0xf]
        %v291 = vld [vmem:[%s275 + $0x54] sm:$0xff]
        %v292 = vld [vmem:[%s275 + $0x5c] sm:$0xf]
        %v293 = vld [vmem:[%s275 + $0x60] sm:$0xff]
        %v294 = vld [vmem:[%s275 + $0x68] sm:$0xf]
        %v295 = vld [vmem:[%s275 + $0x6c] sm:$0xff]
        %v296 = vld [vmem:[%s275 + $0x74] sm:$0xf]
        %v297 = vld [vmem:[%s275 + $0x78] sm:$0xff]
        %v298 = vld [vmem:[%s275 + $0x80] sm:$0xf]
        %v299 = vld [vmem:[%s275 + $0x84] sm:$0xff]
        %v300 = vld [vmem:[%s275 + $0x8c] sm:$0xf]
        %v301 = vld [vmem:[%s275 + $0x90] sm:$0xff]
        %v302 = vld [vmem:[%s275 + $0x98] sm:$0xf]
        %v303 = vld [vmem:[%s275 + $0x9c] sm:$0xff]
        %v304 = vld [vmem:[%s275 + $0xa4] sm:$0xf]
        %v305 = vld [vmem:[%s275 + $0xa8] sm:$0xff]
        %v306 = vld [vmem:[%s275 + $0xb0] sm:$0xf]
        %v307 = vld [vmem:[%s275 + $0xb4] sm:$0xff]
        %v308 = vld [vmem:[%s275 + $0xbc] sm:$0xf]
        %v309 = vld [vmem:[%s275 + $0xc0] sm:$0xff]
        %v310 = vld [vmem:[%s275 + $0xc8] sm:$0xf]
        %v311 = vld [vmem:[%s275 + $0xcc] sm:$0xff]
        %v312 = vld [vmem:[%s275 + $0xd4] sm:$0xf]
        %v313 = vld [vmem:[%s275 + $0xd8] sm:$0xff]
        %v314 = vld [vmem:[%s275 + $0xe0] sm:$0xf]
        %v315 = vld [vmem:[%s275 + $0xe4] sm:$0xff]
        %v316 = vld [vmem:[%s275 + $0xec] sm:$0xf]
        %v317 = vld [vmem:[%s275 + $0xf0] sm:$0xff]
        %v318 = vld [vmem:[%s275 + $0xf8] sm:$0xf]
        %v319 = vld [vmem:[%s275 + $0xfc] sm:$0xff]
        %v320 = vld [vmem:[%s275 + $0x104] sm:$0xf]
        %v321 = vld [vmem:[%s275 + $0x108] sm:$0xff]
        %v322 = vld [vmem:[%s275 + $0x110] sm:$0xf]
        %v323 = vld [vmem:[%s275 + $0x114] sm:$0xff]
        %v324 = vld [vmem:[%s275 + $0x11c] sm:$0xf]
        %v325 = vld [vmem:[%s275 + $0x120] sm:$0xff]
        %v326 = vld [vmem:[%s275 + $0x128] sm:$0xf]
        %v327 = vld [vmem:[%s275 + $0x12c] sm:$0xff]
        %v328 = vld [vmem:[%s275 + $0x134] sm:$0xf]
        %v329 = vld [vmem:[%s275 + $0x138] sm:$0xff]
        %v330 = vld [vmem:[%s275 + $0x140] sm:$0xf]
        %v331 = vld [vmem:[%s275 + $0x144] sm:$0xff]
        %v332 = vld [vmem:[%s275 + $0x14c] sm:$0xf]
        %v333 = vld [vmem:[%s275 + $0x150] sm:$0xff]
        %v334 = vld [vmem:[%s275 + $0x158] sm:$0xf]
        %v335 = vld [vmem:[%s275 + $0x15c] sm:$0xff]
        %v336 = vld [vmem:[%s275 + $0x164] sm:$0xf]
        %v337 = vld [vmem:[%s275 + $0x168] sm:$0xff]
        %v338 = vld [vmem:[%s275 + $0x170] sm:$0xf]
        %v339 = vld [vmem:[%s275 + $0x174] sm:$0xff]
        %v340 = vld [vmem:[%s275 + $0x17c] sm:$0xf]
        %v341 = vld [vmem:[%s275 + $0x180] sm:$0xff]
        %v342 = vld [vmem:[%s275 + $0x188] sm:$0xf]
        %v343 = vld [vmem:[%s275 + $0x18c] sm:$0xff]
        %v344 = vld [vmem:[%s275 + $0x194] sm:$0xf]
        %v345 = vld [vmem:[%s275 + $0x198] sm:$0xff]
        %v346 = vld [vmem:[%s275 + $0x1a0] sm:$0xf]
        %v347 = vld [vmem:[%s275 + $0x1a4] sm:$0xff]
        %v348 = vld [vmem:[%s275 + $0x1ac] sm:$0xf]
        %v349 = vld [vmem:[%s275 + $0x1b0] sm:$0xff]
        %v350 = vld [vmem:[%s275 + $0x1b8] sm:$0xf]
        %v351 = vld [vmem:[%s275 + $0x1bc] sm:$0xff]
        %v352 = vld [vmem:[%s275 + $0x1c4] sm:$0xf]
        %v353 = vld [vmem:[%s275 + $0x1c8] sm:$0xff]
        %v354 = vld [vmem:[%s275 + $0x1d0] sm:$0xf]
        %v355 = vld [vmem:[%s275 + $0x1d4] sm:$0xff]
        %v356 = vld [vmem:[%s275 + $0x1dc] sm:$0xf]
        %v357 = vld [vmem:[%s275 + $0x1e0] sm:$0xff]
        %v358 = vld [vmem:[%s275 + $0x1e8] sm:$0xf]
        %v359 = vld [vmem:[%s275 + $0x1ec] sm:$0xff]
        %v360 = vld [vmem:[%s275 + $0x1f4] sm:$0xf]
        %v361 = vld [vmem:[%s275 + $0x1f8] sm:$0xff]
        %v362 = vld [vmem:[%s275 + $0x200] sm:$0xf]
        %v363 = vld [vmem:[%s275 + $0x204] sm:$0xff]
        %v364 = vld [vmem:[%s275 + $0x20c] sm:$0xf]
        %v365 = vld [vmem:[%s275 + $0x210] sm:$0xff]
        %v366 = vld [vmem:[%s275 + $0x218] sm:$0xf]
        %v367 = vld [vmem:[%s275 + $0x21c] sm:$0xff]
        %v368 = vld [vmem:[%s275 + $0x224] sm:$0xf]
        %v369 = vld [vmem:[%s275 + $0x228] sm:$0xff]
        %v370 = vld [vmem:[%s275 + $0x230] sm:$0xf]
        %v371 = vld [vmem:[%s275 + $0x234] sm:$0xff]
        %v372 = vld [vmem:[%s275 + $0x23c] sm:$0xf]
        %v373 = vld [vmem:[%s275 + $0x240] sm:$0xff]
        %v374 = vld [vmem:[%s275 + $0x248] sm:$0xf]
        %v375 = vld [vmem:[%s275 + $0x24c] sm:$0xff]
        %v376 = vld [vmem:[%s275 + $0x254] sm:$0xf]
        %v377 = vld [vmem:[%s275 + $0x258] sm:$0xff]
        %v378 = vld [vmem:[%s275 + $0x260] sm:$0xf]
        %v379 = vld [vmem:[%s275 + $0x264] sm:$0xff]
        %v380 = vld [vmem:[%s275 + $0x26c] sm:$0xf]
        %v381 = vld [vmem:[%s275 + $0x270] sm:$0xff]
        %v382 = vld [vmem:[%s275 + $0x278] sm:$0xf]
        %v383 = vld [vmem:[%s275 + $0x27c] sm:$0xff]
        %v384 = vld [vmem:[%s275 + $0x284] sm:$0xf]
        %v385 = vld [vmem:[%s275 + $0x288] sm:$0xff]
        %v386 = vld [vmem:[%s275 + $0x290] sm:$0xf]
        %v387 = vld [vmem:[%s275 + $0x294] sm:$0xff]
        %v388 = vld [vmem:[%s275 + $0x29c] sm:$0xf]
        %v389 = vld [vmem:[%s275 + $0x2a0] sm:$0xff]
        %v390 = vld [vmem:[%s275 + $0x2a8] sm:$0xf]
        %v391 = vld [vmem:[%s275 + $0x2ac] sm:$0xff]
        %v392 = vld [vmem:[%s275 + $0x2b4] sm:$0xf]
        %v393 = vld [vmem:[%s275 + $0x2b8] sm:$0xff]
        %v394 = vld [vmem:[%s275 + $0x2c0] sm:$0xf]
        %v395 = vld [vmem:[%s275 + $0x2c4] sm:$0xff]
        %v396 = vld [vmem:[%s275 + $0x2cc] sm:$0xf]
        %v397 = vld [vmem:[%s275 + $0x2d0] sm:$0xff]
        %v398 = vld [vmem:[%s275 + $0x2d8] sm:$0xf]
        %v399 = vld [vmem:[%s275 + $0x2dc] sm:$0xff]
        %v400 = vld [vmem:[%s275 + $0x2e4] sm:$0xf]
        %v401 = vld [vmem:[%s275 + $0x2e8] sm:$0xff]
        %v402 = vld [vmem:[%s275 + $0x2f0] sm:$0xf]
        %v403 = vld [vmem:[%s275 + $0x2f4] sm:$0xff]
        %v404 = vld [vmem:[%s275 + $0x2fc] sm:$0xf]
        %v405 = vld [vmem:[%s275 + $0x300] sm:$0xff]
        %v406 = vld [vmem:[%s275 + $0x308] sm:$0xf]
        %v407 = vld [vmem:[%s275 + $0x30c] sm:$0xff]
        %v408 = vld [vmem:[%s275 + $0x314] sm:$0xf]
        %v409 = vld [vmem:[%s275 + $0x318] sm:$0xff]
        %v410 = vld [vmem:[%s275 + $0x320] sm:$0xf]
        %v411 = vld [vmem:[%s275 + $0x324] sm:$0xff]
        %v412 = vld [vmem:[%s275 + $0x32c] sm:$0xf]
        %v413 = vld [vmem:[%s275 + $0x330] sm:$0xff]
        %v414 = vld [vmem:[%s275 + $0x338] sm:$0xf]
        %v415 = vld [vmem:[%s275 + $0x33c] sm:$0xff]
        %v416 = vld [vmem:[%s275 + $0x344] sm:$0xf]
        %v417 = vld [vmem:[%s275 + $0x348] sm:$0xff]
        %v418 = vld [vmem:[%s275 + $0x350] sm:$0xf]
        %v419 = vld [vmem:[%s275 + $0x354] sm:$0xff]
        %v420 = vld [vmem:[%s275 + $0x35c] sm:$0xf]
        %v421 = vld [vmem:[%s275 + $0x360] sm:$0xff]
        %v422 = vld [vmem:[%s275 + $0x368] sm:$0xf]
        %v423 = vld [vmem:[%s275 + $0x36c] sm:$0xff]
        %v424 = vld [vmem:[%s275 + $0x374] sm:$0xf]
        %v425 = vld [vmem:[%s275 + $0x378] sm:$0xff]
        %v426 = vld [vmem:[%s275 + $0x380] sm:$0xf]
        %v427 = vld [vmem:[%s275 + $0x384] sm:$0xff]
        %v428 = vld [vmem:[%s275 + $0x38c] sm:$0xf]
        %v429 = vld [vmem:[%s275 + $0x390] sm:$0xff]
        %v430 = vld [vmem:[%s275 + $0x398] sm:$0xf]
        %v431 = vld [vmem:[%s275 + $0x39c] sm:$0xff]
        %v432 = vld [vmem:[%s275 + $0x3a4] sm:$0xf]
        %v433 = vld [vmem:[%s275 + $0x3a8] sm:$0xff]
        %v434 = vld [vmem:[%s275 + $0x3b0] sm:$0xf]
        %v435 = vld [vmem:[%s275 + $0x3b4] sm:$0xff]
        %v436 = vld [vmem:[%s275 + $0x3bc] sm:$0xf]
        %v437 = vld [vmem:[%s275 + $0x3c0] sm:$0xff]
        %v438 = vld [vmem:[%s275 + $0x3c8] sm:$0xf]
        %v439 = vld [vmem:[%s275 + $0x3cc] sm:$0xff]
        %v440 = vld [vmem:[%s275 + $0x3d4] sm:$0xf]
        %v441 = vld [vmem:[%s275 + $0x3d8] sm:$0xff]
        %v442 = vld [vmem:[%s275 + $0x3e0] sm:$0xf]
        %v443 = vld [vmem:[%s275 + $0x3e4] sm:$0xff]
        %v444 = vld [vmem:[%s275 + $0x3ec] sm:$0xf]
        %v445 = vld [vmem:[%s275 + $0x3f0] sm:$0xff]
        %v446 = vld [vmem:[%s275 + $0x3f8] sm:$0xf]
        %v447 = vld [vmem:[%s275 + $0x3fc] sm:$0xff]
        %v448 = vld [vmem:[%s275 + $0x404] sm:$0xf]
        %v449 = vld [vmem:[%s275 + $0x408] sm:$0xff]
        %v450 = vld [vmem:[%s275 + $0x410] sm:$0xf]
        %v451 = vld [vmem:[%s275 + $0x414] sm:$0xff]
        %v452 = vld [vmem:[%s275 + $0x41c] sm:$0xf]
        %v453 = vld [vmem:[%s275 + $0x420] sm:$0xff]
        %v454 = vld [vmem:[%s275 + $0x428] sm:$0xf]
        %v455 = vld [vmem:[%s275 + $0x42c] sm:$0xff]
        %v456 = vld [vmem:[%s275 + $0x434] sm:$0xf]
        %v457 = vld [vmem:[%s275 + $0x438] sm:$0xff]
        %v458 = vld [vmem:[%s275 + $0x440] sm:$0xf]
        %v459 = vld [vmem:[%s275 + $0x444] sm:$0xff]
        %v460 = vld [vmem:[%s275 + $0x44c] sm:$0xf]
        %v461 = vld [vmem:[%s275 + $0x450] sm:$0xff]
        %v462 = vld [vmem:[%s275 + $0x458] sm:$0xf]
        %v463 = vld [vmem:[%s275 + $0x45c] sm:$0xff]
        %v464 = vld [vmem:[%s275 + $0x464] sm:$0xf]
        %v465 = vld [vmem:[%s275 + $0x468] sm:$0xff]
        %v466 = vld [vmem:[%s275 + $0x470] sm:$0xf]
        %v467 = vld [vmem:[%s275 + $0x474] sm:$0xff]
        %v468 = vld [vmem:[%s275 + $0x47c] sm:$0xf]
        %v469 = vld [vmem:[%s275 + $0x480] sm:$0xff]
        %v470 = vld [vmem:[%s275 + $0x488] sm:$0xf]
        %v471 = vld [vmem:[%s275 + $0x48c] sm:$0xff]
        %v472 = vld [vmem:[%s275 + $0x494] sm:$0xf]
        %v473 = vld [vmem:[%s275 + $0x498] sm:$0xff]
        %v474 = vld [vmem:[%s275 + $0x4a0] sm:$0xf]
        %v475 = vld [vmem:[%s275 + $0x4a4] sm:$0xff]
        %v476 = vld [vmem:[%s275 + $0x4ac] sm:$0xf]
        %v477 = vld [vmem:[%s1] sm:$0xf]
        %v478 = vld [vmem:[%s1 + $0x4] sm:$0xf]
        %v479 = vld [vmem:[%s1 + $0x8] sm:$0xf]
        %v480 = vld [vmem:[%s1 + $0xc] sm:$0xf]
        %v481 = vld [vmem:[%s1 + $0x10] sm:$0xf]
        %v482 = vld [vmem:[%s1 + $0x14] sm:$0xf]
        %v483 = vld [vmem:[%s1 + $0x18] sm:$0xf]
        %v484 = vld [vmem:[%s1 + $0x1c] sm:$0xf]
        %v485 = vld [vmem:[%s1 + $0x20] sm:$0xf]
        %v486 = vld [vmem:[%s1 + $0x24] sm:$0xf]
        %v487 = vld [vmem:[%s1 + $0x28] sm:$0xf]
        %v488 = vld [vmem:[%s1 + $0x2c] sm:$0xf]
        %v489 = vld [vmem:[%s1 + $0x30] sm:$0xf]
        %v490 = vld [vmem:[%s1 + $0x34] sm:$0xf]
        %v491 = vld [vmem:[%s1 + $0x38] sm:$0xf]
        %v492 = vld [vmem:[%s1 + $0x3c] sm:$0xf]
        %v493 = vld [vmem:[%s1 + $0x40] sm:$0xf]
        %v494 = vld [vmem:[%s1 + $0x44] sm:$0xf]
        %v495 = vld [vmem:[%s1 + $0x48] sm:$0xf]
        %v496 = vld [vmem:[%s1 + $0x4c] sm:$0xf]
        %v497 = vld [vmem:[%s1 + $0x50] sm:$0xf]
        %v498 = vld [vmem:[%s1 + $0x54] sm:$0xf]
        %v499 = vld [vmem:[%s1 + $0x58] sm:$0xf]
        %v500 = vld [vmem:[%s1 + $0x5c] sm:$0xf]
        %v501 = vld [vmem:[%s1 + $0x60] sm:$0xf]
        %v502 = vld [vmem:[%s1 + $0x64] sm:$0xf]
        %v503 = vld [vmem:[%s1 + $0x68] sm:$0xf]
        %v504 = vld [vmem:[%s1 + $0x6c] sm:$0xf]
        %v505 = vld [vmem:[%s1 + $0x70] sm:$0xf]
        %v506 = vld [vmem:[%s1 + $0x74] sm:$0xf]
        %v507 = vld [vmem:[%s1 + $0x78] sm:$0xf]
        %v508 = vld [vmem:[%s1 + $0x7c] sm:$0xf]
        %v509 = vld [vmem:[%s1 + $0x80] sm:$0xf]
        %v510 = vld [vmem:[%s1 + $0x84] sm:$0x7]
        %v511 = vld [vmem:[%s2] sm:$0x1]
        %v513 = vlaneseq
        %v514 = vshrl.u32 %v513, 7
        %v515 = vsub.s32 0, %v514
        %v516 = vrot.slane %v511, %v515
        %v718 = vunpack.c.l.b16 %v277
        %v719 = vunpack.c.h.b16 %v277
        %v720 = vunpack.c.l.b16 %v278
        %v721 = vunpack.c.l.b16 %v279
        %v722 = vunpack.c.h.b16 %v279
        %v723 = vunpack.c.l.b16 %v280
        %v724 = vunpack.c.l.b16 %v281
        %v725 = vunpack.c.h.b16 %v281
        %v726 = vunpack.c.l.b16 %v282
        %v727 = vunpack.c.l.b16 %v283
        %v728 = vunpack.c.h.b16 %v283
        %v729 = vunpack.c.l.b16 %v284
        %v730 = vunpack.c.l.b16 %v285
        %v731 = vunpack.c.h.b16 %v285
        %v732 = vunpack.c.l.b16 %v286
        %v733 = vunpack.c.l.b16 %v287
        %v734 = vunpack.c.h.b16 %v287
        %v735 = vunpack.c.l.b16 %v288
        %v736 = vunpack.c.l.b16 %v289
        %v737 = vunpack.c.h.b16 %v289
        %v738 = vunpack.c.l.b16 %v290
        %v739 = vunpack.c.l.b16 %v291
        %v740 = vunpack.c.h.b16 %v291
        %v741 = vunpack.c.l.b16 %v292
        %v742 = vunpack.c.l.b16 %v293
        %v743 = vunpack.c.h.b16 %v293
        %v744 = vunpack.c.l.b16 %v294
        %v745 = vunpack.c.l.b16 %v295
        %v746 = vunpack.c.h.b16 %v295
        %v747 = vunpack.c.l.b16 %v296
        %v748 = vunpack.c.l.b16 %v297
        %v749 = vunpack.c.h.b16 %v297
        %v750 = vunpack.c.l.b16 %v298
        %v751 = vunpack.c.l.b16 %v299
        %v752 = vunpack.c.h.b16 %v299
        %v753 = vunpack.c.l.b16 %v300
        %v754 = vunpack.c.l.b16 %v301
        %v755 = vunpack.c.h.b16 %v301
        %v756 = vunpack.c.l.b16 %v302
        %v757 = vunpack.c.l.b16 %v303
        %v758 = vunpack.c.h.b16 %v303
        %v759 = vunpack.c.l.b16 %v304
        %v760 = vunpack.c.l.b16 %v305
        %v761 = vunpack.c.h.b16 %v305
        %v762 = vunpack.c.l.b16 %v306
        %v763 = vunpack.c.l.b16 %v307
        %v764 = vunpack.c.h.b16 %v307
        %v765 = vunpack.c.l.b16 %v308
        %v766 = vunpack.c.l.b16 %v309
        %v767 = vunpack.c.h.b16 %v309
        %v768 = vunpack.c.l.b16 %v310
        %v769 = vunpack.c.l.b16 %v311
        %v770 = vunpack.c.h.b16 %v311
        %v771 = vunpack.c.l.b16 %v312
        %v772 = vunpack.c.l.b16 %v313
        %v773 = vunpack.c.h.b16 %v313
        %v774 = vunpack.c.l.b16 %v314
        %v775 = vunpack.c.l.b16 %v315
        %v776 = vunpack.c.h.b16 %v315
        %v777 = vunpack.c.l.b16 %v316
        %v778 = vunpack.c.l.b16 %v317
        %v779 = vunpack.c.h.b16 %v317
        %v780 = vunpack.c.l.b16 %v318
        %v781 = vunpack.c.l.b16 %v319
        %v782 = vunpack.c.h.b16 %v319
        %v783 = vunpack.c.l.b16 %v320
        %v784 = vunpack.c.l.b16 %v321
        %v785 = vunpack.c.h.b16 %v321
        %v786 = vunpack.c.l.b16 %v322
        %v787 = vunpack.c.l.b16 %v323
        %v788 = vunpack.c.h.b16 %v323
        %v789 = vunpack.c.l.b16 %v324
        %v790 = vunpack.c.l.b16 %v325
        %v791 = vunpack.c.h.b16 %v325
        %v792 = vunpack.c.l.b16 %v326
        %v793 = vunpack.c.l.b16 %v327
        %v794 = vunpack.c.h.b16 %v327
        %v795 = vunpack.c.l.b16 %v328
        %v796 = vunpack.c.l.b16 %v329
        %v797 = vunpack.c.h.b16 %v329
        %v798 = vunpack.c.l.b16 %v330
        %v799 = vunpack.c.l.b16 %v331
        %v800 = vunpack.c.h.b16 %v331
        %v801 = vunpack.c.l.b16 %v332
        %v802 = vunpack.c.l.b16 %v333
        %v803 = vunpack.c.h.b16 %v333
        %v804 = vunpack.c.l.b16 %v334
        %v805 = vunpack.c.l.b16 %v335
        %v806 = vunpack.c.h.b16 %v335
        %v807 = vunpack.c.l.b16 %v336
        %v808 = vunpack.c.l.b16 %v337
        %v809 = vunpack.c.h.b16 %v337
        %v810 = vunpack.c.l.b16 %v338
        %v811 = vunpack.c.l.b16 %v339
        %v812 = vunpack.c.h.b16 %v339
        %v813 = vunpack.c.l.b16 %v340
        %v814 = vunpack.c.l.b16 %v341
        %v815 = vunpack.c.h.b16 %v341
        %v816 = vunpack.c.l.b16 %v342
        %v817 = vunpack.c.l.b16 %v343
        %v818 = vunpack.c.h.b16 %v343
        %v819 = vunpack.c.l.b16 %v344
        %v820 = vunpack.c.l.b16 %v345
        %v821 = vunpack.c.h.b16 %v345
        %v822 = vunpack.c.l.b16 %v346
        %v823 = vunpack.c.l.b16 %v347
        %v824 = vunpack.c.h.b16 %v347
        %v825 = vunpack.c.l.b16 %v348
        %v826 = vunpack.c.l.b16 %v349
        %v827 = vunpack.c.h.b16 %v349
        %v828 = vunpack.c.l.b16 %v350
        %v829 = vunpack.c.l.b16 %v351
        %v830 = vunpack.c.h.b16 %v351
        %v831 = vunpack.c.l.b16 %v352
        %v832 = vunpack.c.l.b16 %v353
        %v833 = vunpack.c.h.b16 %v353
        %v834 = vunpack.c.l.b16 %v354
        %v835 = vunpack.c.l.b16 %v355
        %v836 = vunpack.c.h.b16 %v355
        %v837 = vunpack.c.l.b16 %v356
        %v838 = vunpack.c.l.b16 %v357
        %v839 = vunpack.c.h.b16 %v357
        %v840 = vunpack.c.l.b16 %v358
        %v841 = vunpack.c.l.b16 %v359
        %v842 = vunpack.c.h.b16 %v359
        %v843 = vunpack.c.l.b16 %v360
        %v844 = vunpack.c.l.b16 %v361
        %v845 = vunpack.c.h.b16 %v361
        %v846 = vunpack.c.l.b16 %v362
        %v847 = vunpack.c.l.b16 %v363
        %v848 = vunpack.c.h.b16 %v363
        %v849 = vunpack.c.l.b16 %v364
        %v850 = vunpack.c.l.b16 %v365
        %v851 = vunpack.c.h.b16 %v365
        %v852 = vunpack.c.l.b16 %v366
        %v853 = vunpack.c.l.b16 %v367
        %v854 = vunpack.c.h.b16 %v367
        %v855 = vunpack.c.l.b16 %v368
        %v856 = vunpack.c.l.b16 %v369
        %v857 = vunpack.c.h.b16 %v369
        %v858 = vunpack.c.l.b16 %v370
        %v859 = vunpack.c.l.b16 %v371
        %v860 = vunpack.c.h.b16 %v371
        %v861 = vunpack.c.l.b16 %v372
        %v862 = vunpack.c.l.b16 %v373
        %v863 = vunpack.c.h.b16 %v373
        %v864 = vunpack.c.l.b16 %v374
        %v865 = vunpack.c.l.b16 %v375
        %v866 = vunpack.c.h.b16 %v375
        %v867 = vunpack.c.l.b16 %v376
        %v868 = vunpack.c.l.b16 %v377
        %v869 = vunpack.c.h.b16 %v377
        %v870 = vunpack.c.l.b16 %v378
        %v871 = vunpack.c.l.b16 %v379
        %v872 = vunpack.c.h.b16 %v379
        %v873 = vunpack.c.l.b16 %v380
        %v874 = vunpack.c.l.b16 %v381
        %v875 = vunpack.c.h.b16 %v381
        %v876 = vunpack.c.l.b16 %v382
        %v877 = vunpack.c.l.b16 %v383
        %v878 = vunpack.c.h.b16 %v383
        %v879 = vunpack.c.l.b16 %v384
        %v880 = vunpack.c.l.b16 %v385
        %v881 = vunpack.c.h.b16 %v385
        %v882 = vunpack.c.l.b16 %v386
        %v883 = vunpack.c.l.b16 %v387
        %v884 = vunpack.c.h.b16 %v387
        %v885 = vunpack.c.l.b16 %v388
        %v886 = vunpack.c.l.b16 %v389
        %v887 = vunpack.c.h.b16 %v389
        %v888 = vunpack.c.l.b16 %v390
        %v889 = vunpack.c.l.b16 %v391
        %v890 = vunpack.c.h.b16 %v391
        %v891 = vunpack.c.l.b16 %v392
        %v892 = vunpack.c.l.b16 %v393
        %v893 = vunpack.c.h.b16 %v393
        %v894 = vunpack.c.l.b16 %v394
        %v895 = vunpack.c.l.b16 %v395
        %v896 = vunpack.c.h.b16 %v395
        %v897 = vunpack.c.l.b16 %v396
        %v898 = vunpack.c.l.b16 %v397
        %v899 = vunpack.c.h.b16 %v397
        %v900 = vunpack.c.l.b16 %v398
        %v901 = vunpack.c.l.b16 %v399
        %v902 = vunpack.c.h.b16 %v399
        %v903 = vunpack.c.l.b16 %v400
        %v904 = vunpack.c.l.b16 %v401
        %v905 = vunpack.c.h.b16 %v401
        %v906 = vunpack.c.l.b16 %v402
        %v907 = vunpack.c.l.b16 %v403
        %v908 = vunpack.c.h.b16 %v403
        %v909 = vunpack.c.l.b16 %v404
        %v910 = vunpack.c.l.b16 %v405
        %v911 = vunpack.c.h.b16 %v405
        %v912 = vunpack.c.l.b16 %v406
        %v913 = vunpack.c.l.b16 %v407
        %v914 = vunpack.c.h.b16 %v407
        %v915 = vunpack.c.l.b16 %v408
        %v916 = vunpack.c.l.b16 %v409
        %v917 = vunpack.c.h.b16 %v409
        %v918 = vunpack.c.l.b16 %v410
        %v919 = vunpack.c.l.b16 %v411
        %v920 = vunpack.c.h.b16 %v411
        %v921 = vunpack.c.l.b16 %v412
        %v922 = vunpack.c.l.b16 %v413
        %v923 = vunpack.c.h.b16 %v413
        %v924 = vunpack.c.l.b16 %v414
        %v925 = vunpack.c.l.b16 %v415
        %v926 = vunpack.c.h.b16 %v415
        %v927 = vunpack.c.l.b16 %v416
        %v928 = vunpack.c.l.b16 %v417
        %v929 = vunpack.c.h.b16 %v417
        %v930 = vunpack.c.l.b16 %v418
        %v931 = vunpack.c.l.b16 %v419
        %v932 = vunpack.c.h.b16 %v419
        %v933 = vunpack.c.l.b16 %v420
        %v934 = vunpack.c.l.b16 %v421
        %v935 = vunpack.c.h.b16 %v421
        %v936 = vunpack.c.l.b16 %v422
        %v937 = vunpack.c.l.b16 %v423
        %v938 = vunpack.c.h.b16 %v423
        %v939 = vunpack.c.l.b16 %v424
        %v940 = vunpack.c.l.b16 %v425
        %v941 = vunpack.c.h.b16 %v425
        %v942 = vunpack.c.l.b16 %v426
        %v943 = vunpack.c.l.b16 %v427
        %v944 = vunpack.c.h.b16 %v427
        %v945 = vunpack.c.l.b16 %v428
        %v946 = vunpack.c.l.b16 %v429
        %v947 = vunpack.c.h.b16 %v429
        %v948 = vunpack.c.l.b16 %v430
        %v949 = vunpack.c.l.b16 %v431
        %v950 = vunpack.c.h.b16 %v431
        %v951 = vunpack.c.l.b16 %v432
        %v952 = vunpack.c.l.b16 %v433
        %v953 = vunpack.c.h.b16 %v433
        %v954 = vunpack.c.l.b16 %v434
        %v955 = vunpack.c.l.b16 %v435
        %v956 = vunpack.c.h.b16 %v435
        %v957 = vunpack.c.l.b16 %v436
        %v958 = vunpack.c.l.b16 %v437
        %v959 = vunpack.c.h.b16 %v437
        %v960 = vunpack.c.l.b16 %v438
        %v961 = vunpack.c.l.b16 %v439
        %v962 = vunpack.c.h.b16 %v439
        %v963 = vunpack.c.l.b16 %v440
        %v964 = vunpack.c.l.b16 %v441
        %v965 = vunpack.c.h.b16 %v441
        %v966 = vunpack.c.l.b16 %v442
        %v967 = vunpack.c.l.b16 %v443
        %v968 = vunpack.c.h.b16 %v443
        %v969 = vunpack.c.l.b16 %v444
        %v970 = vunpack.c.l.b16 %v445
        %v971 = vunpack.c.h.b16 %v445
        %v972 = vunpack.c.l.b16 %v446
        %v973 = vunpack.c.l.b16 %v447
        %v974 = vunpack.c.h.b16 %v447
        %v975 = vunpack.c.l.b16 %v448
        %v976 = vunpack.c.l.b16 %v449
        %v977 = vunpack.c.h.b16 %v449
        %v978 = vunpack.c.l.b16 %v450
        %v979 = vunpack.c.l.b16 %v451
        %v980 = vunpack.c.h.b16 %v451
        %v981 = vunpack.c.l.b16 %v452
        %v982 = vunpack.c.l.b16 %v453
        %v983 = vunpack.c.h.b16 %v453
        %v984 = vunpack.c.l.b16 %v454
        %v985 = vunpack.c.l.b16 %v455
        %v986 = vunpack.c.h.b16 %v455
        %v987 = vunpack.c.l.b16 %v456
        %v988 = vunpack.c.l.b16 %v457
        %v989 = vunpack.c.h.b16 %v457
        %v990 = vunpack.c.l.b16 %v458
        %v991 = vunpack.c.l.b16 %v459
        %v992 = vunpack.c.h.b16 %v459
        %v993 = vunpack.c.l.b16 %v460
        %v994 = vunpack.c.l.b16 %v461
        %v995 = vunpack.c.h.b16 %v461
        %v996 = vunpack.c.l.b16 %v462
        %v997 = vunpack.c.l.b16 %v463
        %v998 = vunpack.c.h.b16 %v463
        %v999 = vunpack.c.l.b16 %v464
        %v1000 = vunpack.c.l.b16 %v465
        %v1001 = vunpack.c.h.b16 %v465
        %v1002 = vunpack.c.l.b16 %v466
        %v1003 = vunpack.c.l.b16 %v467
        %v1004 = vunpack.c.h.b16 %v467
        %v1005 = vunpack.c.l.b16 %v468
        %v1006 = vunpack.c.l.b16 %v469
        %v1007 = vunpack.c.h.b16 %v469
        %v1008 = vunpack.c.l.b16 %v470
        %v1009 = vunpack.c.l.b16 %v471
        %v1010 = vunpack.c.h.b16 %v471
        %v1011 = vunpack.c.l.b16 %v472
        %v1012 = vunpack.c.l.b16 %v473
        %v1013 = vunpack.c.h.b16 %v473
        %v1014 = vunpack.c.l.b16 %v474
        %v1015 = vunpack.c.l.b16 %v475
        %v1016 = vunpack.c.h.b16 %v475
        %v1017 = vunpack.c.l.b16 %v476
        %v1018 = vpack.c.b16 %v721, %v718
        %v1019 = vpack.c.b16 %v722, %v719
        %v1020 = vpack.c.b16 %v723, %v720
        %v1021 = vpack.c.b16 %v727, %v724
        %v1022 = vpack.c.b16 %v728, %v725
        %v1023 = vpack.c.b16 %v729, %v726
        %v1024 = vpack.c.b16 %v733, %v730
        %v1025 = vpack.c.b16 %v734, %v731
        %v1026 = vpack.c.b16 %v735, %v732
        %v1027 = vpack.c.b16 %v739, %v736
        %v1028 = vpack.c.b16 %v740, %v737
        %v1029 = vpack.c.b16 %v741, %v738
        %v1030 = vpack.c.b16 %v745, %v742
        %v1031 = vpack.c.b16 %v746, %v743
        %v1032 = vpack.c.b16 %v747, %v744
        %v1033 = vpack.c.b16 %v751, %v748
        %v1034 = vpack.c.b16 %v752, %v749
        %v1035 = vpack.c.b16 %v753, %v750
        %v1036 = vpack.c.b16 %v757, %v754
        %v1037 = vpack.c.b16 %v758, %v755
        %v1038 = vpack.c.b16 %v759, %v756
        %v1039 = vpack.c.b16 %v763, %v760
        %v1040 = vpack.c.b16 %v764, %v761
        %v1041 = vpack.c.b16 %v765, %v762
        %v1042 = vpack.c.b16 %v769, %v766
        %v1043 = vpack.c.b16 %v770, %v767
        %v1044 = vpack.c.b16 %v771, %v768
        %v1045 = vpack.c.b16 %v775, %v772
        %v1046 = vpack.c.b16 %v776, %v773
        %v1047 = vpack.c.b16 %v777, %v774
        %v1048 = vpack.c.b16 %v781, %v778
        %v1049 = vpack.c.b16 %v782, %v779
        %v1050 = vpack.c.b16 %v783, %v780
        %v1051 = vpack.c.b16 %v787, %v784
        %v1052 = vpack.c.b16 %v788, %v785
        %v1053 = vpack.c.b16 %v789, %v786
        %v1054 = vpack.c.b16 %v793, %v790
        %v1055 = vpack.c.b16 %v794, %v791
        %v1056 = vpack.c.b16 %v795, %v792
        %v1057 = vpack.c.b16 %v799, %v796
        %v1058 = vpack.c.b16 %v800, %v797
        %v1059 = vpack.c.b16 %v801, %v798
        %v1060 = vpack.c.b16 %v805, %v802
        %v1061 = vpack.c.b16 %v806, %v803
        %v1062 = vpack.c.b16 %v807, %v804
        %v1063 = vpack.c.b16 %v811, %v808
        %v1064 = vpack.c.b16 %v812, %v809
        %v1065 = vpack.c.b16 %v813, %v810
        %v1066 = vpack.c.b16 %v817, %v814
        %v1067 = vpack.c.b16 %v818, %v815
        %v1068 = vpack.c.b16 %v819, %v816
        %v1069 = vpack.c.b16 %v823, %v820
        %v1070 = vpack.c.b16 %v824, %v821
        %v1071 = vpack.c.b16 %v825, %v822
        %v1072 = vpack.c.b16 %v829, %v826
        %v1073 = vpack.c.b16 %v830, %v827
        %v1074 = vpack.c.b16 %v831, %v828
        %v1075 = vpack.c.b16 %v835, %v832
        %v1076 = vpack.c.b16 %v836, %v833
        %v1077 = vpack.c.b16 %v837, %v834
        %v1078 = vpack.c.b16 %v841, %v838
        %v1079 = vpack.c.b16 %v842, %v839
        %v1080 = vpack.c.b16 %v843, %v840
        %v1081 = vpack.c.b16 %v847, %v844
        %v1082 = vpack.c.b16 %v848, %v845
        %v1083 = vpack.c.b16 %v849, %v846
        %v1084 = vpack.c.b16 %v853, %v850
        %v1085 = vpack.c.b16 %v854, %v851
        %v1086 = vpack.c.b16 %v855, %v852
        %v1087 = vpack.c.b16 %v859, %v856
        %v1088 = vpack.c.b16 %v860, %v857
        %v1089 = vpack.c.b16 %v861, %v858
        %v1090 = vpack.c.b16 %v865, %v862
        %v1091 = vpack.c.b16 %v866, %v863
        %v1092 = vpack.c.b16 %v867, %v864
        %v1093 = vpack.c.b16 %v871, %v868
        %v1094 = vpack.c.b16 %v872, %v869
        %v1095 = vpack.c.b16 %v873, %v870
        %v1096 = vpack.c.b16 %v877, %v874
        %v1097 = vpack.c.b16 %v878, %v875
        %v1098 = vpack.c.b16 %v879, %v876
        %v1099 = vpack.c.b16 %v883, %v880
        %v1100 = vpack.c.b16 %v884, %v881
        %v1101 = vpack.c.b16 %v885, %v882
        %v1102 = vpack.c.b16 %v889, %v886
        %v1103 = vpack.c.b16 %v890, %v887
        %v1104 = vpack.c.b16 %v891, %v888
        %v1105 = vpack.c.b16 %v895, %v892
        %v1106 = vpack.c.b16 %v896, %v893
        %v1107 = vpack.c.b16 %v897, %v894
        %v1108 = vpack.c.b16 %v901, %v898
        %v1109 = vpack.c.b16 %v902, %v899
        %v1110 = vpack.c.b16 %v903, %v900
        %v1111 = vpack.c.b16 %v907, %v904
        %v1112 = vpack.c.b16 %v908, %v905
        %v1113 = vpack.c.b16 %v909, %v906
        %v1114 = vpack.c.b16 %v913, %v910
        %v1115 = vpack.c.b16 %v914, %v911
        %v1116 = vpack.c.b16 %v915, %v912
        %v1117 = vpack.c.b16 %v919, %v916
        %v1118 = vpack.c.b16 %v920, %v917
        %v1119 = vpack.c.b16 %v921, %v918
        %v1120 = vpack.c.b16 %v925, %v922
        %v1121 = vpack.c.b16 %v926, %v923
        %v1122 = vpack.c.b16 %v927, %v924
        %v1123 = vpack.c.b16 %v931, %v928
        %v1124 = vpack.c.b16 %v932, %v929
        %v1125 = vpack.c.b16 %v933, %v930
        %v1126 = vpack.c.b16 %v937, %v934
        %v1127 = vpack.c.b16 %v938, %v935
        %v1128 = vpack.c.b16 %v939, %v936
        %v1129 = vpack.c.b16 %v943, %v940
        %v1130 = vpack.c.b16 %v944, %v941
        %v1131 = vpack.c.b16 %v945, %v942
        %v1132 = vpack.c.b16 %v949, %v946
        %v1133 = vpack.c.b16 %v950, %v947
        %v1134 = vpack.c.b16 %v951, %v948
        %v1135 = vpack.c.b16 %v955, %v952
        %v1136 = vpack.c.b16 %v956, %v953
        %v1137 = vpack.c.b16 %v957, %v954
        %v1138 = vpack.c.b16 %v961, %v958
        %v1139 = vpack.c.b16 %v962, %v959
        %v1140 = vpack.c.b16 %v963, %v960
        %v1141 = vpack.c.b16 %v967, %v964
        %v1142 = vpack.c.b16 %v968, %v965
        %v1143 = vpack.c.b16 %v969, %v966
        %v1144 = vpack.c.b16 %v973, %v970
        %v1145 = vpack.c.b16 %v974, %v971
        %v1146 = vpack.c.b16 %v975, %v972
        %v1147 = vpack.c.b16 %v979, %v976
        %v1148 = vpack.c.b16 %v980, %v977
        %v1149 = vpack.c.b16 %v981, %v978
        %v1150 = vpack.c.b16 %v985, %v982
        %v1151 = vpack.c.b16 %v986, %v983
        %v1152 = vpack.c.b16 %v987, %v984
        %v1153 = vpack.c.b16 %v991, %v988
        %v1154 = vpack.c.b16 %v992, %v989
        %v1155 = vpack.c.b16 %v993, %v990
        %v1156 = vpack.c.b16 %v997, %v994
        %v1157 = vpack.c.b16 %v998, %v995
        %v1158 = vpack.c.b16 %v999, %v996
        %v1159 = vpack.c.b16 %v1003, %v1000
        %v1160 = vpack.c.b16 %v1004, %v1001
        %v1161 = vpack.c.b16 %v1005, %v1002
        %v1162 = vpack.c.b16 %v1009, %v1006
        %v1163 = vpack.c.b16 %v1010, %v1007
        %v1164 = vpack.c.b16 %v1011, %v1008
        %v1165 = vpack.c.b16 %v1015, %v1012
        %v1166 = vpack.c.b16 %v1016, %v1013
        %v1167 = vpack.c.b16 %v1017, %v1014
        %v1302 = vunpack.c.l.b16 %v477
        %v1303 = vunpack.c.l.b16 %v478
        %v1304 = vunpack.c.l.b16 %v479
        %v1305 = vunpack.c.l.b16 %v480
        %v1306 = vunpack.c.l.b16 %v481
        %v1307 = vunpack.c.l.b16 %v482
        %v1308 = vunpack.c.l.b16 %v483
        %v1309 = vunpack.c.l.b16 %v484
        %v1310 = vunpack.c.l.b16 %v485
        %v1311 = vunpack.c.l.b16 %v486
        %v1312 = vunpack.c.l.b16 %v487
        %v1313 = vunpack.c.l.b16 %v488
        %v1314 = vunpack.c.l.b16 %v489
        %v1315 = vunpack.c.l.b16 %v490
        %v1316 = vunpack.c.l.b16 %v491
        %v1317 = vunpack.c.l.b16 %v492
        %v1318 = vunpack.c.l.b16 %v493
        %v1319 = vunpack.c.l.b16 %v494
        %v1320 = vunpack.c.l.b16 %v495
        %v1321 = vunpack.c.l.b16 %v496
        %v1322 = vunpack.c.l.b16 %v497
        %v1323 = vunpack.c.l.b16 %v498
        %v1324 = vunpack.c.l.b16 %v499
        %v1325 = vunpack.c.l.b16 %v500
        %v1326 = vunpack.c.l.b16 %v501
        %v1327 = vunpack.c.l.b16 %v502
        %v1328 = vunpack.c.l.b16 %v503
        %v1329 = vunpack.c.l.b16 %v504
        %v1330 = vunpack.c.l.b16 %v505
        %v1331 = vunpack.c.l.b16 %v506
        %v1332 = vunpack.c.l.b16 %v507
        %v1333 = vunpack.c.l.b16 %v508
        %v1334 = vunpack.c.l.b16 %v509
        %v1335 = vunpack.c.l.b16 %v510
        %v1336 = vpack.c.b16 %v1303, %v1302
        %v1337 = vpack.c.b16 %v1305, %v1304
        %v1338 = vpack.c.b16 %v1307, %v1306
        %v1339 = vpack.c.b16 %v1309, %v1308
        %v1340 = vpack.c.b16 %v1311, %v1310
        %v1341 = vpack.c.b16 %v1313, %v1312
        %v1342 = vpack.c.b16 %v1315, %v1314
        %v1343 = vpack.c.b16 %v1317, %v1316
        %v1344 = vpack.c.b16 %v1319, %v1318
        %v1345 = vpack.c.b16 %v1321, %v1320
        %v1346 = vpack.c.b16 %v1323, %v1322
        %v1347 = vpack.c.b16 %v1325, %v1324
        %v1348 = vpack.c.b16 %v1327, %v1326
        %v1349 = vpack.c.b16 %v1329, %v1328
        %v1350 = vpack.c.b16 %v1331, %v1330
        %v1351 = vpack.c.b16 %v1333, %v1332
        %v1352 = vpack.c.b16 %v1335, %v1334
        %vm1369 = vcmask 113664
        %v1371 = vsel %vm1369, %v1020, 0
        %v1374 = vsel %vm1369, %v1023, 0
        %v1377 = vsel %vm1369, %v1026, 0
        %v1380 = vsel %vm1369, %v1029, 0
        %v1383 = vsel %vm1369, %v1032, 0
        %v1386 = vsel %vm1369, %v1035, 0
        %v1389 = vsel %vm1369, %v1038, 0
        %v1392 = vsel %vm1369, %v1041, 0
        %v1395 = vsel %vm1369, %v1044, 0
        %v1398 = vsel %vm1369, %v1047, 0
        %v1401 = vsel %vm1369, %v1050, 0
        %v1404 = vsel %vm1369, %v1053, 0
        %v1407 = vsel %vm1369, %v1056, 0
        %v1410 = vsel %vm1369, %v1059, 0
        %v1413 = vsel %vm1369, %v1062, 0
        %v1416 = vsel %vm1369, %v1065, 0
        %v1419 = vsel %vm1369, %v1068, 0
        %v1422 = vsel %vm1369, %v1071, 0
        %v1425 = vsel %vm1369, %v1074, 0
        %v1428 = vsel %vm1369, %v1077, 0
        %v1431 = vsel %vm1369, %v1080, 0
        %v1434 = vsel %vm1369, %v1083, 0
        %v1437 = vsel %vm1369, %v1086, 0
        %v1440 = vsel %vm1369, %v1089, 0
        %v1443 = vsel %vm1369, %v1092, 0
        %v1446 = vsel %vm1369, %v1095, 0
        %v1449 = vsel %vm1369, %v1098, 0
        %v1452 = vsel %vm1369, %v1101, 0
        %v1455 = vsel %vm1369, %v1104, 0
        %v1458 = vsel %vm1369, %v1107, 0
        %v1461 = vsel %vm1369, %v1110, 0
        %v1464 = vsel %vm1369, %v1113, 0
        %v1467 = vsel %vm1369, %v1116, 0
        %v1470 = vsel %vm1369, %v1119, 0
        %v1473 = vsel %vm1369, %v1122, 0
        %v1476 = vsel %vm1369, %v1125, 0
        %v1479 = vsel %vm1369, %v1128, 0
        %v1482 = vsel %vm1369, %v1131, 0
        %v1485 = vsel %vm1369, %v1134, 0
        %v1488 = vsel %vm1369, %v1137, 0
        %v1491 = vsel %vm1369, %v1140, 0
        %v1494 = vsel %vm1369, %v1143, 0
        %v1497 = vsel %vm1369, %v1146, 0
        %v1500 = vsel %vm1369, %v1149, 0
        %v1503 = vsel %vm1369, %v1152, 0
        %v1506 = vsel %vm1369, %v1155, 0
        %v1509 = vsel %vm1369, %v1158, 0
        %v1512 = vsel %vm1369, %v1161, 0
        %v1515 = vsel %vm1369, %v1164, 0
        %v1518 = vsel %vm1369, %v1167, 0
        %vm1520 = vcmask 1046528
        %v1522 = vsel %vm1520, %v1352, 0
        %1524 = vmatprep.subr.bf16.mxu0 0
        %1525 = vmatpush1.bf16.msra.mxu0 %v1336
        %1526 = vmatprep.subr.bf16.mxu0 0
        %1527 = vmatpush1.bf16.msra.mxu0 %v1337
        %1528 = vmatprep.subr.bf16.mxu0 0
        %1529 = vmatpush1.bf16.msra.mxu0 %v1338
        %1530 = vmatprep.subr.bf16.mxu0 0
        %1531 = vmatpush1.bf16.msra.mxu0 %v1339
        %1532 = vmatprep.subr.bf16.mxu0 0
        %1533 = vmatpush1.bf16.msra.mxu0 %v1340
        %1534 = vmatprep.subr.bf16.mxu0 0
        %1535 = vmatpush1.bf16.msra.mxu0 %v1341
        %1536 = vmatprep.subr.bf16.mxu0 0
        %1537 = vmatpush1.bf16.msra.mxu0 %v1342
        %1538 = vmatprep.subr.bf16.mxu0 0
        %1539 = vmatpush1.bf16.msra.mxu0 %v1343
        %1540 = vmatprep.subr.bf16.mxu0 0
        %1541 = vmatpush1.bf16.msra.mxu0 %v1344
        %1542 = vmatprep.subr.bf16.mxu0 0
        %1543 = vmatpush1.bf16.msra.mxu0 %v1345
        %1544 = vmatprep.subr.bf16.mxu0 0
        %1545 = vmatpush1.bf16.msra.mxu0 %v1346
        %1546 = vmatprep.subr.bf16.mxu0 0
        %1547 = vmatpush1.bf16.msra.mxu0 %v1347
        %1548 = vmatprep.subr.bf16.mxu0 0
        %1549 = vmatpush1.bf16.msra.mxu0 %v1348
        %1550 = vmatprep.subr.bf16.mxu0 0
        %1551 = vmatpush1.bf16.msra.mxu0 %v1349
        %1552 = vmatprep.subr.bf16.mxu0 0
        %1553 = vmatpush1.bf16.msra.mxu0 %v1350
        %1554 = vmatprep.subr.bf16.mxu0 0
        %1555 = vmatpush1.bf16.msra.mxu0 %v1351
        %1556 = vmatprep.mubr.bf16.mxu0 %v1019
        %1557 = vmatmul.mubr.bf16.gmra.mrb[0].mxu0 %v1018
        %v1558 = vpop.f32.mrb[0].mxu0
        %v1559 = vadd.f32 %v516, %v1558
        %v1560 = vpop.f32.mrb[0].mxu0
        %v1561 = vpop.f32.mrb[0].mxu0
        %v1562 = vadd.f32 %v516, %v1561
        %v1563 = vpop.f32.mrb[0].mxu0
        %1564 = vmatprep.mubr.bf16.mxu0 %v1022
        %1565 = vmatmul.mubr.bf16.gmra.mrb[0].mxu0 %v1021
        %v1566 = vpop.f32.mrb[0].mxu0
        %v1567 = vadd.f32 %v516, %v1566
        %v1568 = vpop.f32.mrb[0].mxu0
        %v1569 = vpop.f32.mrb[0].mxu0
        %v1570 = vadd.f32 %v516, %v1569
        %v1571 = vpop.f32.mrb[0].mxu0
        %1572 = vmatprep.mubr.bf16.mxu0 %v1025
        %1573 = vmatmul.mubr.bf16.gmra.mrb[0].mxu0 %v1024
        %v1574 = vpop.f32.mrb[0].mxu0
        %v1575 = vadd.f32 %v516, %v1574
        %v1576 = vpop.f32.mrb[0].mxu0
        %v1577 = vpop.f32.mrb[0].mxu0
        %v1578 = vadd.f32 %v516, %v1577
        %v1579 = vpop.f32.mrb[0].mxu0
        %1580 = vmatprep.mubr.bf16.mxu0 %v1028
        %1581 = vmatmul.mubr.bf16.gmra.mrb[0].mxu0 %v1027
        %v1582 = vpop.f32.mrb[0].mxu0
        %v1583 = vadd.f32 %v516, %v1582
        %v1584 = vpop.f32.mrb[0].mxu0
        %v1585 = vpop.f32.mrb[0].mxu0
        %v1586 = vadd.f32 %v516, %v1585
        %v1587 = vpop.f32.mrb[0].mxu0
        %1588 = vmatprep.mubr.bf16.mxu0 %v1031
        %1589 = vmatmul.mubr.bf16.gmra.mrb[0].mxu0 %v1030
        %v1590 = vpop.f32.mrb[0].mxu0
        %v1591 = vadd.f32 %v516, %v1590
        %v1592 = vpop.f32.mrb[0].mxu0
        %v1593 = vpop.f32.mrb[0].mxu0
        %v1594 = vadd.f32 %v516, %v1593
        %v1595 = vpop.f32.mrb[0].mxu0
        %1596 = vmatprep.mubr.bf16.mxu0 %v1034
        %1597 = vmatmul.mubr.bf16.gmra.mrb[0].mxu0 %v1033
        %v1598 = vpop.f32.mrb[0].mxu0
        %v1599 = vadd.f32 %v516, %v1598
        %v1600 = vpop.f32.mrb[0].mxu0
        %v1601 = vpop.f32.mrb[0].mxu0
        %v1602 = vadd.f32 %v516, %v1601
        %v1603 = vpop.f32.mrb[0].mxu0
        %1604 = vmatprep.mubr.bf16.mxu0 %v1037
        %1605 = vmatmul.mubr.bf16.gmra.mrb[0].mxu0 %v1036
        %v1606 = vpop.f32.mrb[0].mxu0
        %v1607 = vadd.f32 %v516, %v1606
        %v1608 = vpop.f32.mrb[0].mxu0
        %v1609 = vpop.f32.mrb[0].mxu0
        %v1610 = vadd.f32 %v516, %v1609
        %v1611 = vpop.f32.mrb[0].mxu0
        %1612 = vmatprep.mubr.bf16.mxu0 %v1040
        %1613 = vmatmul.mubr.bf16.gmra.mrb[0].mxu0 %v1039
        %v1614 = vpop.f32.mrb[0].mxu0
        %v1615 = vadd.f32 %v516, %v1614
        %v1616 = vpop.f32.mrb[0].mxu0
        %v1617 = vpop.f32.mrb[0].mxu0
        %v1618 = vadd.f32 %v516, %v1617
        %v1619 = vpop.f32.mrb[0].mxu0
        %1620 = vmatprep.mubr.bf16.mxu0 %v1043
        %1621 = vmatmul.mubr.bf16.gmra.mrb[0].mxu0 %v1042
        %v1622 = vpop.f32.mrb[0].mxu0
        %v1623 = vadd.f32 %v516, %v1622
        %v1624 = vpop.f32.mrb[0].mxu0
        %v1625 = vpop.f32.mrb[0].mxu0
        %v1626 = vadd.f32 %v516, %v1625
        %v1627 = vpop.f32.mrb[0].mxu0
        %1628 = vmatprep.mubr.bf16.mxu0 %v1046
        %1629 = vmatmul.mubr.bf16.gmra.mrb[0].mxu0 %v1045
        %v1630 = vpop.f32.mrb[0].mxu0
        %v1631 = vadd.f32 %v516, %v1630
        %v1632 = vpop.f32.mrb[0].mxu0
        %v1633 = vpop.f32.mrb[0].mxu0
        %v1634 = vadd.f32 %v516, %v1633
        %v1635 = vpop.f32.mrb[0].mxu0
        %1636 = vmatprep.mubr.bf16.mxu0 %v1049
        %1637 = vmatmul.mubr.bf16.gmra.mrb[0].mxu0 %v1048
        %v1638 = vpop.f32.mrb[0].mxu0
        %v1639 = vadd.f32 %v516, %v1638
        %v1640 = vpop.f32.mrb[0].mxu0
        %v1641 = vpop.f32.mrb[0].mxu0
        %v1642 = vadd.f32 %v516, %v1641
        %v1643 = vpop.f32.mrb[0].mxu0
        %1644 = vmatprep.mubr.bf16.mxu0 %v1052
        %1645 = vmatmul.mubr.bf16.gmra.mrb[0].mxu0 %v1051
        %v1646 = vpop.f32.mrb[0].mxu0
        %v1647 = vadd.f32 %v516, %v1646
        %v1648 = vpop.f32.mrb[0].mxu0
        %v1649 = vpop.f32.mrb[0].mxu0
        %v1650 = vadd.f32 %v516, %v1649
        %v1651 = vpop.f32.mrb[0].mxu0
        %1652 = vmatprep.mubr.bf16.mxu0 %v1055
        %1653 = vmatmul.mubr.bf16.gmra.mrb[0].mxu0 %v1054
        %v1654 = vpop.f32.mrb[0].mxu0
        %v1655 = vadd.f32 %v516, %v1654
        %v1656 = vpop.f32.mrb[0].mxu0
        %v1657 = vpop.f32.mrb[0].mxu0
        %v1658 = vadd.f32 %v516, %v1657
        %v1659 = vpop.f32.mrb[0].mxu0
        %1660 = vmatprep.mubr.bf16.mxu0 %v1058
        %1661 = vmatmul.mubr.bf16.gmra.mrb[0].mxu0 %v1057
        %v1662 = vpop.f32.mrb[0].mxu0
        %v1663 = vadd.f32 %v516, %v1662
        %v1664 = vpop.f32.mrb[0].mxu0
        %v1665 = vpop.f32.mrb[0].mxu0
        %v1666 = vadd.f32 %v516, %v1665
        %v1667 = vpop.f32.mrb[0].mxu0
        %1668 = vmatprep.mubr.bf16.mxu0 %v1061
        %1669 = vmatmul.mubr.bf16.gmra.mrb[0].mxu0 %v1060
        %v1670 = vpop.f32.mrb[0].mxu0
        %v1671 = vadd.f32 %v516, %v1670
        %v1672 = vpop.f32.mrb[0].mxu0
        %v1673 = vpop.f32.mrb[0].mxu0
        %v1674 = vadd.f32 %v516, %v1673
        %v1675 = vpop.f32.mrb[0].mxu0
        %1676 = vmatprep.mubr.bf16.mxu0 %v1064
        %1677 = vmatmul.mubr.bf16.gmra.mrb[0].mxu0 %v1063
        %v1678 = vpop.f32.mrb[0].mxu0
        %v1679 = vadd.f32 %v516, %v1678
        %v1680 = vpop.f32.mrb[0].mxu0
        %v1681 = vpop.f32.mrb[0].mxu0
        %v1682 = vadd.f32 %v516, %v1681
        %v1683 = vpop.f32.mrb[0].mxu0
        %1684 = vmatprep.mubr.bf16.mxu0 %v1067
        %1685 = vmatmul.mubr.bf16.gmra.mrb[0].mxu0 %v1066
        %v1686 = vpop.f32.mrb[0].mxu0
        %v1687 = vadd.f32 %v516, %v1686
        %v1688 = vpop.f32.mrb[0].mxu0
        %v1689 = vpop.f32.mrb[0].mxu0
        %v1690 = vadd.f32 %v516, %v1689
        %v1691 = vpop.f32.mrb[0].mxu0
        %1692 = vmatprep.mubr.bf16.mxu0 %v1070
        %1693 = vmatmul.mubr.bf16.gmra.mrb[0].mxu0 %v1069
        %v1694 = vpop.f32.mrb[0].mxu0
        %v1695 = vadd.f32 %v516, %v1694
        %v1696 = vpop.f32.mrb[0].mxu0
        %v1697 = vpop.f32.mrb[0].mxu0
        %v1698 = vadd.f32 %v516, %v1697
        %v1699 = vpop.f32.mrb[0].mxu0
        %1700 = vmatprep.mubr.bf16.mxu0 %v1073
        %1701 = vmatmul.mubr.bf16.gmra.mrb[0].mxu0 %v1072
        %v1702 = vpop.f32.mrb[0].mxu0
        %v1703 = vadd.f32 %v516, %v1702
        %v1704 = vpop.f32.mrb[0].mxu0
        %v1705 = vpop.f32.mrb[0].mxu0
        %v1706 = vadd.f32 %v516, %v1705
        %v1707 = vpop.f32.mrb[0].mxu0
        %1708 = vmatprep.mubr.bf16.mxu0 %v1076
        %1709 = vmatmul.mubr.bf16.gmra.mrb[0].mxu0 %v1075
        %v1710 = vpop.f32.mrb[0].mxu0
        %v1711 = vadd.f32 %v516, %v1710
        %v1712 = vpop.f32.mrb[0].mxu0
        %v1713 = vpop.f32.mrb[0].mxu0
        %v1714 = vadd.f32 %v516, %v1713
        %v1715 = vpop.f32.mrb[0].mxu0
        %1716 = vmatprep.mubr.bf16.mxu0 %v1079
        %1717 = vmatmul.mubr.bf16.gmra.mrb[0].mxu0 %v1078
        %v1718 = vpop.f32.mrb[0].mxu0
        %v1719 = vadd.f32 %v516, %v1718
        %v1720 = vpop.f32.mrb[0].mxu0
        %v1721 = vpop.f32.mrb[0].mxu0
        %v1722 = vadd.f32 %v516, %v1721
        %v1723 = vpop.f32.mrb[0].mxu0
        %1724 = vmatprep.mubr.bf16.mxu0 %v1082
        %1725 = vmatmul.mubr.bf16.gmra.mrb[0].mxu0 %v1081
        %v1726 = vpop.f32.mrb[0].mxu0
        %v1727 = vadd.f32 %v516, %v1726
        %v1728 = vpop.f32.mrb[0].mxu0
        %v1729 = vpop.f32.mrb[0].mxu0
        %v1730 = vadd.f32 %v516, %v1729
        %v1731 = vpop.f32.mrb[0].mxu0
        %1732 = vmatprep.mubr.bf16.mxu0 %v1085
        %1733 = vmatmul.mubr.bf16.gmra.mrb[0].mxu0 %v1084
        %v1734 = vpop.f32.mrb[0].mxu0
        %v1735 = vadd.f32 %v516, %v1734
        %v1736 = vpop.f32.mrb[0].mxu0
        %v1737 = vpop.f32.mrb[0].mxu0
        %v1738 = vadd.f32 %v516, %v1737
        %v1739 = vpop.f32.mrb[0].mxu0
        %1740 = vmatprep.mubr.bf16.mxu0 %v1088
        %1741 = vmatmul.mubr.bf16.gmra.mrb[0].mxu0 %v1087
        %v1742 = vpop.f32.mrb[0].mxu0
        %v1743 = vadd.f32 %v516, %v1742
        %v1744 = vpop.f32.mrb[0].mxu0
        %v1745 = vpop.f32.mrb[0].mxu0
        %v1746 = vadd.f32 %v516, %v1745
        %v1747 = vpop.f32.mrb[0].mxu0
        %1748 = vmatprep.mubr.bf16.mxu0 %v1091
        %1749 = vmatmul.mubr.bf16.gmra.mrb[0].mxu0 %v1090
        %v1750 = vpop.f32.mrb[0].mxu0
        %v1751 = vadd.f32 %v516, %v1750
        %v1752 = vpop.f32.mrb[0].mxu0
        %v1753 = vpop.f32.mrb[0].mxu0
        %v1754 = vadd.f32 %v516, %v1753
        %v1755 = vpop.f32.mrb[0].mxu0
        %1756 = vmatprep.mubr.bf16.mxu0 %v1094
        %1757 = vmatmul.mubr.bf16.gmra.mrb[0].mxu0 %v1093
        %v1758 = vpop.f32.mrb[0].mxu0
        %v1759 = vadd.f32 %v516, %v1758
        %v1760 = vpop.f32.mrb[0].mxu0
        %v1761 = vpop.f32.mrb[0].mxu0
        %v1762 = vadd.f32 %v516, %v1761
        %v1763 = vpop.f32.mrb[0].mxu0
        %1764 = vmatprep.mubr.bf16.mxu0 %v1097
        %1765 = vmatmul.mubr.bf16.gmra.mrb[0].mxu0 %v1096
        %v1766 = vpop.f32.mrb[0].mxu0
        %v1767 = vadd.f32 %v516, %v1766
        %v1768 = vpop.f32.mrb[0].mxu0
        %v1769 = vpop.f32.mrb[0].mxu0
        %v1770 = vadd.f32 %v516, %v1769
        %v1771 = vpop.f32.mrb[0].mxu0
        %1772 = vmatprep.mubr.bf16.mxu0 %v1100
        %1773 = vmatmul.mubr.bf16.gmra.mrb[0].mxu0 %v1099
        %v1774 = vpop.f32.mrb[0].mxu0
        %v1775 = vadd.f32 %v516, %v1774
        %v1776 = vpop.f32.mrb[0].mxu0
        %v1777 = vpop.f32.mrb[0].mxu0
        %v1778 = vadd.f32 %v516, %v1777
        %v1779 = vpop.f32.mrb[0].mxu0
        %1780 = vmatprep.mubr.bf16.mxu0 %v1103
        %1781 = vmatmul.mubr.bf16.gmra.mrb[0].mxu0 %v1102
        %v1782 = vpop.f32.mrb[0].mxu0
        %v1783 = vadd.f32 %v516, %v1782
        %v1784 = vpop.f32.mrb[0].mxu0
        %v1785 = vpop.f32.mrb[0].mxu0
        %v1786 = vadd.f32 %v516, %v1785
        %v1787 = vpop.f32.mrb[0].mxu0
        %1788 = vmatprep.mubr.bf16.mxu0 %v1106
        %1789 = vmatmul.mubr.bf16.gmra.mrb[0].mxu0 %v1105
        %v1790 = vpop.f32.mrb[0].mxu0
        %v1791 = vadd.f32 %v516, %v1790
        %v1792 = vpop.f32.mrb[0].mxu0
        %v1793 = vpop.f32.mrb[0].mxu0
        %v1794 = vadd.f32 %v516, %v1793
        %v1795 = vpop.f32.mrb[0].mxu0
        %1796 = vmatprep.mubr.bf16.mxu0 %v1109
        %1797 = vmatmul.mubr.bf16.gmra.mrb[0].mxu0 %v1108
        %v1798 = vpop.f32.mrb[0].mxu0
        %v1799 = vadd.f32 %v516, %v1798
        %v1800 = vpop.f32.mrb[0].mxu0
        %v1801 = vpop.f32.mrb[0].mxu0
        %v1802 = vadd.f32 %v516, %v1801
        %v1803 = vpop.f32.mrb[0].mxu0
        %1804 = vmatprep.mubr.bf16.mxu0 %v1112
        %1805 = vmatmul.mubr.bf16.gmra.mrb[0].mxu0 %v1111
        %v1806 = vpop.f32.mrb[0].mxu0
        %v1807 = vadd.f32 %v516, %v1806
        %v1808 = vpop.f32.mrb[0].mxu0
        %v1809 = vpop.f32.mrb[0].mxu0
        %v1810 = vadd.f32 %v516, %v1809
        %v1811 = vpop.f32.mrb[0].mxu0
        %1812 = vmatprep.mubr.bf16.mxu0 %v1115
        %1813 = vmatmul.mubr.bf16.gmra.mrb[0].mxu0 %v1114
        %v1814 = vpop.f32.mrb[0].mxu0
        %v1815 = vadd.f32 %v516, %v1814
        %v1816 = vpop.f32.mrb[0].mxu0
        %v1817 = vpop.f32.mrb[0].mxu0
        %v1818 = vadd.f32 %v516, %v1817
        %v1819 = vpop.f32.mrb[0].mxu0
        %1820 = vmatprep.mubr.bf16.mxu0 %v1118
        %1821 = vmatmul.mubr.bf16.gmra.mrb[0].mxu0 %v1117
        %v1822 = vpop.f32.mrb[0].mxu0
        %v1823 = vadd.f32 %v516, %v1822
        %v1824 = vpop.f32.mrb[0].mxu0
        %v1825 = vpop.f32.mrb[0].mxu0
        %v1826 = vadd.f32 %v516, %v1825
        %v1827 = vpop.f32.mrb[0].mxu0
        %1828 = vmatprep.mubr.bf16.mxu0 %v1121
        %1829 = vmatmul.mubr.bf16.gmra.mrb[0].mxu0 %v1120
        %v1830 = vpop.f32.mrb[0].mxu0
        %v1831 = vadd.f32 %v516, %v1830
        %v1832 = vpop.f32.mrb[0].mxu0
        %v1833 = vpop.f32.mrb[0].mxu0
        %v1834 = vadd.f32 %v516, %v1833
        %v1835 = vpop.f32.mrb[0].mxu0
        %1836 = vmatprep.mubr.bf16.mxu0 %v1124
        %1837 = vmatmul.mubr.bf16.gmra.mrb[0].mxu0 %v1123
        %v1838 = vpop.f32.mrb[0].mxu0
        %v1839 = vadd.f32 %v516, %v1838
        %v1840 = vpop.f32.mrb[0].mxu0
        %v1841 = vpop.f32.mrb[0].mxu0
        %v1842 = vadd.f32 %v516, %v1841
        %v1843 = vpop.f32.mrb[0].mxu0
        %1844 = vmatprep.mubr.bf16.mxu0 %v1127
        %1845 = vmatmul.mubr.bf16.gmra.mrb[0].mxu0 %v1126
        %v1846 = vpop.f32.mrb[0].mxu0
        %v1847 = vadd.f32 %v516, %v1846
        %v1848 = vpop.f32.mrb[0].mxu0
        %v1849 = vpop.f32.mrb[0].mxu0
        %v1850 = vadd.f32 %v516, %v1849
        %v1851 = vpop.f32.mrb[0].mxu0
        %1852 = vmatprep.mubr.bf16.mxu0 %v1130
        %1853 = vmatmul.mubr.bf16.gmra.mrb[0].mxu0 %v1129
        %v1854 = vpop.f32.mrb[0].mxu0
        %v1855 = vadd.f32 %v516, %v1854
        %v1856 = vpop.f32.mrb[0].mxu0
        %v1857 = vpop.f32.mrb[0].mxu0
        %v1858 = vadd.f32 %v516, %v1857
        %v1859 = vpop.f32.mrb[0].mxu0
        %1860 = vmatprep.mubr.bf16.mxu0 %v1133
        %1861 = vmatmul.mubr.bf16.gmra.mrb[0].mxu0 %v1132
        %v1862 = vpop.f32.mrb[0].mxu0
        %v1863 = vadd.f32 %v516, %v1862
        %v1864 = vpop.f32.mrb[0].mxu0
        %v1865 = vpop.f32.mrb[0].mxu0
        %v1866 = vadd.f32 %v516, %v1865
        %v1867 = vpop.f32.mrb[0].mxu0
        %1868 = vmatprep.mubr.bf16.mxu0 %v1136
        %1869 = vmatmul.mubr.bf16.gmra.mrb[0].mxu0 %v1135
        %v1870 = vpop.f32.mrb[0].mxu0
        %v1871 = vadd.f32 %v516, %v1870
        %v1872 = vpop.f32.mrb[0].mxu0
        %v1873 = vpop.f32.mrb[0].mxu0
        %v1874 = vadd.f32 %v516, %v1873
        %v1875 = vpop.f32.mrb[0].mxu0
        %1876 = vmatprep.mubr.bf16.mxu0 %v1139
        %1877 = vmatmul.mubr.bf16.gmra.mrb[0].mxu0 %v1138
        %v1878 = vpop.f32.mrb[0].mxu0
        %v1879 = vadd.f32 %v516, %v1878
        %v1880 = vpop.f32.mrb[0].mxu0
        %v1881 = vpop.f32.mrb[0].mxu0
        %v1882 = vadd.f32 %v516, %v1881
        %v1883 = vpop.f32.mrb[0].mxu0
        %1884 = vmatprep.mubr.bf16.mxu0 %v1142
        %1885 = vmatmul.mubr.bf16.gmra.mrb[0].mxu0 %v1141
        %v1886 = vpop.f32.mrb[0].mxu0
        %v1887 = vadd.f32 %v516, %v1886
        %v1888 = vpop.f32.mrb[0].mxu0
        %v1889 = vpop.f32.mrb[0].mxu0
        %v1890 = vadd.f32 %v516, %v1889
        %v1891 = vpop.f32.mrb[0].mxu0
        %1892 = vmatprep.mubr.bf16.mxu0 %v1145
        %1893 = vmatmul.mubr.bf16.gmra.mrb[0].mxu0 %v1144
        %v1894 = vpop.f32.mrb[0].mxu0
        %v1895 = vadd.f32 %v516, %v1894
        %v1896 = vpop.f32.mrb[0].mxu0
        %v1897 = vpop.f32.mrb[0].mxu0
        %v1898 = vadd.f32 %v516, %v1897
        %v1899 = vpop.f32.mrb[0].mxu0
        %1900 = vmatprep.mubr.bf16.mxu0 %v1148
        %1901 = vmatmul.mubr.bf16.gmra.mrb[0].mxu0 %v1147
        %v1902 = vpop.f32.mrb[0].mxu0
        %v1903 = vadd.f32 %v516, %v1902
        %v1904 = vpop.f32.mrb[0].mxu0
        %v1905 = vpop.f32.mrb[0].mxu0
        %v1906 = vadd.f32 %v516, %v1905
        %v1907 = vpop.f32.mrb[0].mxu0
        %1908 = vmatprep.mubr.bf16.mxu0 %v1151
        %1909 = vmatmul.mubr.bf16.gmra.mrb[0].mxu0 %v1150
        %v1910 = vpop.f32.mrb[0].mxu0
        %v1911 = vadd.f32 %v516, %v1910
        %v1912 = vpop.f32.mrb[0].mxu0
        %v1913 = vpop.f32.mrb[0].mxu0
        %v1914 = vadd.f32 %v516, %v1913
        %v1915 = vpop.f32.mrb[0].mxu0
        %1916 = vmatprep.mubr.bf16.mxu0 %v1154
        %1917 = vmatmul.mubr.bf16.gmra.mrb[0].mxu0 %v1153
        %v1918 = vpop.f32.mrb[0].mxu0
        %v1919 = vadd.f32 %v516, %v1918
        %v1920 = vpop.f32.mrb[0].mxu0
        %v1921 = vpop.f32.mrb[0].mxu0
        %v1922 = vadd.f32 %v516, %v1921
        %v1923 = vpop.f32.mrb[0].mxu0
        %1924 = vmatprep.mubr.bf16.mxu0 %v1157
        %1925 = vmatmul.mubr.bf16.gmra.mrb[0].mxu0 %v1156
        %v1926 = vpop.f32.mrb[0].mxu0
        %v1927 = vadd.f32 %v516, %v1926
        %v1928 = vpop.f32.mrb[0].mxu0
        %v1929 = vpop.f32.mrb[0].mxu0
        %v1930 = vadd.f32 %v516, %v1929
        %v1931 = vpop.f32.mrb[0].mxu0
        %1932 = vmatprep.mubr.bf16.mxu0 %v1160
        %1933 = vmatmul.mubr.bf16.gmra.mrb[0].mxu0 %v1159
        %v1934 = vpop.f32.mrb[0].mxu0
        %v1935 = vadd.f32 %v516, %v1934
        %v1936 = vpop.f32.mrb[0].mxu0
        %v1937 = vpop.f32.mrb[0].mxu0
        %v1938 = vadd.f32 %v516, %v1937
        %v1939 = vpop.f32.mrb[0].mxu0
        %1940 = vmatprep.mubr.bf16.mxu0 %v1163
        %1941 = vmatmul.mubr.bf16.gmra.mrb[0].mxu0 %v1162
        %v1942 = vpop.f32.mrb[0].mxu0
        %v1943 = vadd.f32 %v516, %v1942
        %v1944 = vpop.f32.mrb[0].mxu0
        %v1945 = vpop.f32.mrb[0].mxu0
        %v1946 = vadd.f32 %v516, %v1945
        %v1947 = vpop.f32.mrb[0].mxu0
        %1948 = vmatprep.mubr.bf16.mxu0 %v1166
        %1949 = vmatmul.mubr.bf16.gmra.mrb[0].mxu0 %v1165
        %v1950 = vpop.f32.mrb[0].mxu0
        %v1951 = vadd.f32 %v516, %v1950
        %v1952 = vpop.f32.mrb[0].mxu0
        %v1953 = vpop.f32.mrb[0].mxu0
        %v1954 = vadd.f32 %v516, %v1953
        %v1955 = vpop.f32.mrb[0].mxu0
        %1956 = vdwg.mxu0
        %1957 = vmatprep.subr.bf16.mxu0 0
        %1958 = vmatpush1.bf16.msra.mxu0 %v1522
        %1959 = vmatprep.subr.bf16.mxu0 0
        %1960 = vmatpush1.bf16.msra.mxu0 0
        %1961 = vmatprep.subr.bf16.mxu0 0
        %1962 = vmatpush1.bf16.msra.mxu0 0
        %1963 = vmatprep.subr.bf16.mxu0 0
        %1964 = vmatpush1.bf16.msra.mxu0 0
        %1965 = vmatprep.subr.bf16.mxu0 0
        %1966 = vmatpush1.bf16.msra.mxu0 0
        %1967 = vmatprep.subr.bf16.mxu0 0
        %1968 = vmatpush1.bf16.msra.mxu0 0
        %1969 = vmatprep.subr.bf16.mxu0 0
        %1970 = vmatpush1.bf16.msra.mxu0 0
        %1971 = vmatprep.subr.bf16.mxu0 0
        %1972 = vmatpush1.bf16.msra.mxu0 0
        %1973 = vmatprep.subr.bf16.mxu0 0
        %1974 = vmatpush1.bf16.msra.mxu0 0
        %1975 = vmatprep.subr.bf16.mxu0 0
        %1976 = vmatpush1.bf16.msra.mxu0 0
        %1977 = vmatprep.subr.bf16.mxu0 0
        %1978 = vmatpush1.bf16.msra.mxu0 0
        %1979 = vmatprep.subr.bf16.mxu0 0
        %1980 = vmatpush1.bf16.msra.mxu0 0
        %1981 = vmatprep.subr.bf16.mxu0 0
        %1982 = vmatpush1.bf16.msra.mxu0 0
        %1983 = vmatprep.subr.bf16.mxu0 0
        %1984 = vmatpush1.bf16.msra.mxu0 0
        %1985 = vmatprep.subr.bf16.mxu0 0
        %1986 = vmatpush1.bf16.msra.mxu0 0
        %1987 = vmatprep.subr.bf16.mxu0 0
        %1988 = vmatpush1.bf16.msra.mxu0 0
        %1989 = vmatprep.mubr.bf16.mxu0 0
        %1990 = vmatmul.mubr.bf16.gmra.mrb[0].mxu0 %v1371
        %v1991 = vpop.f32.mrb[0].mxu0
        %v1992 = vadd.f32 %v1559, %v1991
        %v1993 = vpop.f32.mrb[0].mxu0
        %v1994 = vpop.f32.mrb[0].mxu0
        %v1995 = vadd.f32 %v1562, %v1994
        %v1996 = vpop.f32.mrb[0].mxu0
        %1997 = vmatprep.mubr.bf16.mxu0 0
        %1998 = vmatmul.mubr.bf16.gmra.mrb[0].mxu0 %v1374
        %v1999 = vpop.f32.mrb[0].mxu0
        %v2000 = vadd.f32 %v1567, %v1999
        %v2001 = vpop.f32.mrb[0].mxu0
        %v2002 = vpop.f32.mrb[0].mxu0
        %v2003 = vadd.f32 %v1570, %v2002
        %v2004 = vpop.f32.mrb[0].mxu0
        %2005 = vmatprep.mubr.bf16.mxu0 0
        %2006 = vmatmul.mubr.bf16.gmra.mrb[0].mxu0 %v1377
        %v2007 = vpop.f32.mrb[0].mxu0
        %v2008 = vadd.f32 %v1575, %v2007
        %v2009 = vpop.f32.mrb[0].mxu0
        %v2010 = vpop.f32.mrb[0].mxu0
        %v2011 = vadd.f32 %v1578, %v2010
        %v2012 = vpop.f32.mrb[0].mxu0
        %2013 = vmatprep.mubr.bf16.mxu0 0
        %2014 = vmatmul.mubr.bf16.gmra.mrb[0].mxu0 %v1380
        %v2015 = vpop.f32.mrb[0].mxu0
        %v2016 = vadd.f32 %v1583, %v2015
        %v2017 = vpop.f32.mrb[0].mxu0
        %v2018 = vpop.f32.mrb[0].mxu0
        %v2019 = vadd.f32 %v1586, %v2018
        %v2020 = vpop.f32.mrb[0].mxu0
        %2021 = vmatprep.mubr.bf16.mxu0 0
        %2022 = vmatmul.mubr.bf16.gmra.mrb[0].mxu0 %v1383
        %v2023 = vpop.f32.mrb[0].mxu0
        %v2024 = vadd.f32 %v1591, %v2023
        %v2025 = vpop.f32.mrb[0].mxu0
        %v2026 = vpop.f32.mrb[0].mxu0
        %v2027 = vadd.f32 %v1594, %v2026
        %v2028 = vpop.f32.mrb[0].mxu0
        %2029 = vmatprep.mubr.bf16.mxu0 0
        %2030 = vmatmul.mubr.bf16.gmra.mrb[0].mxu0 %v1386
        %v2031 = vpop.f32.mrb[0].mxu0
        %v2032 = vadd.f32 %v1599, %v2031
        %v2033 = vpop.f32.mrb[0].mxu0
        %v2034 = vpop.f32.mrb[0].mxu0
        %v2035 = vadd.f32 %v1602, %v2034
        %v2036 = vpop.f32.mrb[0].mxu0
        %2037 = vmatprep.mubr.bf16.mxu0 0
        %2038 = vmatmul.mubr.bf16.gmra.mrb[0].mxu0 %v1389
        %v2039 = vpop.f32.mrb[0].mxu0
        %v2040 = vadd.f32 %v1607, %v2039
        %v2041 = vpop.f32.mrb[0].mxu0
        %v2042 = vpop.f32.mrb[0].mxu0
        %v2043 = vadd.f32 %v1610, %v2042
        %v2044 = vpop.f32.mrb[0].mxu0
        %2045 = vmatprep.mubr.bf16.mxu0 0
        %2046 = vmatmul.mubr.bf16.gmra.mrb[0].mxu0 %v1392
        %v2047 = vpop.f32.mrb[0].mxu0
        %v2048 = vadd.f32 %v1615, %v2047
        %v2049 = vpop.f32.mrb[0].mxu0
        %v2050 = vpop.f32.mrb[0].mxu0
        %v2051 = vadd.f32 %v1618, %v2050
        %v2052 = vpop.f32.mrb[0].mxu0
        %2053 = vmatprep.mubr.bf16.mxu0 0
        %2054 = vmatmul.mubr.bf16.gmra.mrb[0].mxu0 %v1395
        %v2055 = vpop.f32.mrb[0].mxu0
        %v2056 = vadd.f32 %v1623, %v2055
        %v2057 = vpop.f32.mrb[0].mxu0
        %v2058 = vpop.f32.mrb[0].mxu0
        %v2059 = vadd.f32 %v1626, %v2058
        %v2060 = vpop.f32.mrb[0].mxu0
        %2061 = vmatprep.mubr.bf16.mxu0 0
        %2062 = vmatmul.mubr.bf16.gmra.mrb[0].mxu0 %v1398
        %v2063 = vpop.f32.mrb[0].mxu0
        %v2064 = vadd.f32 %v1631, %v2063
        %v2065 = vpop.f32.mrb[0].mxu0
        %v2066 = vpop.f32.mrb[0].mxu0
        %v2067 = vadd.f32 %v1634, %v2066
        %v2068 = vpop.f32.mrb[0].mxu0
        %2069 = vmatprep.mubr.bf16.mxu0 0
        %2070 = vmatmul.mubr.bf16.gmra.mrb[0].mxu0 %v1401
        %v2071 = vpop.f32.mrb[0].mxu0
        %v2072 = vadd.f32 %v1639, %v2071
        %v2073 = vpop.f32.mrb[0].mxu0
        %v2074 = vpop.f32.mrb[0].mxu0
        %v2075 = vadd.f32 %v1642, %v2074
        %v2076 = vpop.f32.mrb[0].mxu0
        %2077 = vmatprep.mubr.bf16.mxu0 0
        %2078 = vmatmul.mubr.bf16.gmra.mrb[0].mxu0 %v1404
        %v2079 = vpop.f32.mrb[0].mxu0
        %v2080 = vadd.f32 %v1647, %v2079
        %v2081 = vpop.f32.mrb[0].mxu0
        %v2082 = vpop.f32.mrb[0].mxu0
        %v2083 = vadd.f32 %v1650, %v2082
        %v2084 = vpop.f32.mrb[0].mxu0
        %2085 = vmatprep.mubr.bf16.mxu0 0
        %2086 = vmatmul.mubr.bf16.gmra.mrb[0].mxu0 %v1407
        %v2087 = vpop.f32.mrb[0].mxu0
        %v2088 = vadd.f32 %v1655, %v2087
        %v2089 = vpop.f32.mrb[0].mxu0
        %v2090 = vpop.f32.mrb[0].mxu0
        %v2091 = vadd.f32 %v1658, %v2090
        %v2092 = vpop.f32.mrb[0].mxu0
        %2093 = vmatprep.mubr.bf16.mxu0 0
        %2094 = vmatmul.mubr.bf16.gmra.mrb[0].mxu0 %v1410
        %v2095 = vpop.f32.mrb[0].mxu0
        %v2096 = vadd.f32 %v1663, %v2095
        %v2097 = vpop.f32.mrb[0].mxu0
        %v2098 = vpop.f32.mrb[0].mxu0
        %v2099 = vadd.f32 %v1666, %v2098
        %v2100 = vpop.f32.mrb[0].mxu0
        %2101 = vmatprep.mubr.bf16.mxu0 0
        %2102 = vmatmul.mubr.bf16.gmra.mrb[0].mxu0 %v1413
        %v2103 = vpop.f32.mrb[0].mxu0
        %v2104 = vadd.f32 %v1671, %v2103
        %v2105 = vpop.f32.mrb[0].mxu0
        %v2106 = vpop.f32.mrb[0].mxu0
        %v2107 = vadd.f32 %v1674, %v2106
        %v2108 = vpop.f32.mrb[0].mxu0
        %2109 = vmatprep.mubr.bf16.mxu0 0
        %2110 = vmatmul.mubr.bf16.gmra.mrb[0].mxu0 %v1416
        %v2111 = vpop.f32.mrb[0].mxu0
        %v2112 = vadd.f32 %v1679, %v2111
        %v2113 = vpop.f32.mrb[0].mxu0
        %v2114 = vpop.f32.mrb[0].mxu0
        %v2115 = vadd.f32 %v1682, %v2114
        %v2116 = vpop.f32.mrb[0].mxu0
        %2117 = vmatprep.mubr.bf16.mxu0 0
        %2118 = vmatmul.mubr.bf16.gmra.mrb[0].mxu0 %v1419
        %v2119 = vpop.f32.mrb[0].mxu0
        %v2120 = vadd.f32 %v1687, %v2119
        %v2121 = vpop.f32.mrb[0].mxu0
        %v2122 = vpop.f32.mrb[0].mxu0
        %v2123 = vadd.f32 %v1690, %v2122
        %v2124 = vpop.f32.mrb[0].mxu0
        %2125 = vmatprep.mubr.bf16.mxu0 0
        %2126 = vmatmul.mubr.bf16.gmra.mrb[0].mxu0 %v1422
        %v2127 = vpop.f32.mrb[0].mxu0
        %v2128 = vadd.f32 %v1695, %v2127
        %v2129 = vpop.f32.mrb[0].mxu0
        %v2130 = vpop.f32.mrb[0].mxu0
        %v2131 = vadd.f32 %v1698, %v2130
        %v2132 = vpop.f32.mrb[0].mxu0
        %2133 = vmatprep.mubr.bf16.mxu0 0
        %2134 = vmatmul.mubr.bf16.gmra.mrb[0].mxu0 %v1425
        %v2135 = vpop.f32.mrb[0].mxu0
        %v2136 = vadd.f32 %v1703, %v2135
        %v2137 = vpop.f32.mrb[0].mxu0
        %v2138 = vpop.f32.mrb[0].mxu0
        %v2139 = vadd.f32 %v1706, %v2138
        %v2140 = vpop.f32.mrb[0].mxu0
        %2141 = vmatprep.mubr.bf16.mxu0 0
        %2142 = vmatmul.mubr.bf16.gmra.mrb[0].mxu0 %v1428
        %v2143 = vpop.f32.mrb[0].mxu0
        %v2144 = vadd.f32 %v1711, %v2143
        %v2145 = vpop.f32.mrb[0].mxu0
        %v2146 = vpop.f32.mrb[0].mxu0
        %v2147 = vadd.f32 %v1714, %v2146
        %v2148 = vpop.f32.mrb[0].mxu0
        %2149 = vmatprep.mubr.bf16.mxu0 0
        %2150 = vmatmul.mubr.bf16.gmra.mrb[0].mxu0 %v1431
        %v2151 = vpop.f32.mrb[0].mxu0
        %v2152 = vadd.f32 %v1719, %v2151
        %v2153 = vpop.f32.mrb[0].mxu0
        %v2154 = vpop.f32.mrb[0].mxu0
        %v2155 = vadd.f32 %v1722, %v2154
        %v2156 = vpop.f32.mrb[0].mxu0
        %2157 = vmatprep.mubr.bf16.mxu0 0
        %2158 = vmatmul.mubr.bf16.gmra.mrb[0].mxu0 %v1434
        %v2159 = vpop.f32.mrb[0].mxu0
        %v2160 = vadd.f32 %v1727, %v2159
        %v2161 = vpop.f32.mrb[0].mxu0
        %v2162 = vpop.f32.mrb[0].mxu0
        %v2163 = vadd.f32 %v1730, %v2162
        %v2164 = vpop.f32.mrb[0].mxu0
        %2165 = vmatprep.mubr.bf16.mxu0 0
        %2166 = vmatmul.mubr.bf16.gmra.mrb[0].mxu0 %v1437
        %v2167 = vpop.f32.mrb[0].mxu0
        %v2168 = vadd.f32 %v1735, %v2167
        %v2169 = vpop.f32.mrb[0].mxu0
        %v2170 = vpop.f32.mrb[0].mxu0
        %v2171 = vadd.f32 %v1738, %v2170
        %v2172 = vpop.f32.mrb[0].mxu0
        %2173 = vmatprep.mubr.bf16.mxu0 0
        %2174 = vmatmul.mubr.bf16.gmra.mrb[0].mxu0 %v1440
        %v2175 = vpop.f32.mrb[0].mxu0
        %v2176 = vadd.f32 %v1743, %v2175
        %v2177 = vpop.f32.mrb[0].mxu0
        %v2178 = vpop.f32.mrb[0].mxu0
        %v2179 = vadd.f32 %v1746, %v2178
        %v2180 = vpop.f32.mrb[0].mxu0
        %2181 = vmatprep.mubr.bf16.mxu0 0
        %2182 = vmatmul.mubr.bf16.gmra.mrb[0].mxu0 %v1443
        %v2183 = vpop.f32.mrb[0].mxu0
        %v2184 = vadd.f32 %v1751, %v2183
        %v2185 = vpop.f32.mrb[0].mxu0
        %v2186 = vpop.f32.mrb[0].mxu0
        %v2187 = vadd.f32 %v1754, %v2186
        %v2188 = vpop.f32.mrb[0].mxu0
        %2189 = vmatprep.mubr.bf16.mxu0 0
        %2190 = vmatmul.mubr.bf16.gmra.mrb[0].mxu0 %v1446
        %v2191 = vpop.f32.mrb[0].mxu0
        %v2192 = vadd.f32 %v1759, %v2191
        %v2193 = vpop.f32.mrb[0].mxu0
        %v2194 = vpop.f32.mrb[0].mxu0
        %v2195 = vadd.f32 %v1762, %v2194
        %v2196 = vpop.f32.mrb[0].mxu0
        %2197 = vmatprep.mubr.bf16.mxu0 0
        %2198 = vmatmul.mubr.bf16.gmra.mrb[0].mxu0 %v1449
        %v2199 = vpop.f32.mrb[0].mxu0
        %v2200 = vadd.f32 %v1767, %v2199
        %v2201 = vpop.f32.mrb[0].mxu0
        %v2202 = vpop.f32.mrb[0].mxu0
        %v2203 = vadd.f32 %v1770, %v2202
        %v2204 = vpop.f32.mrb[0].mxu0
        %2205 = vmatprep.mubr.bf16.mxu0 0
        %2206 = vmatmul.mubr.bf16.gmra.mrb[0].mxu0 %v1452
        %v2207 = vpop.f32.mrb[0].mxu0
        %v2208 = vadd.f32 %v1775, %v2207
        %v2209 = vpop.f32.mrb[0].mxu0
        %v2210 = vpop.f32.mrb[0].mxu0
        %v2211 = vadd.f32 %v1778, %v2210
        %v2212 = vpop.f32.mrb[0].mxu0
        %2213 = vmatprep.mubr.bf16.mxu0 0
        %2214 = vmatmul.mubr.bf16.gmra.mrb[0].mxu0 %v1455
        %v2215 = vpop.f32.mrb[0].mxu0
        %v2216 = vadd.f32 %v1783, %v2215
        %v2217 = vpop.f32.mrb[0].mxu0
        %v2218 = vpop.f32.mrb[0].mxu0
        %v2219 = vadd.f32 %v1786, %v2218
        %v2220 = vpop.f32.mrb[0].mxu0
        %2221 = vmatprep.mubr.bf16.mxu0 0
        %2222 = vmatmul.mubr.bf16.gmra.mrb[0].mxu0 %v1458
        %v2223 = vpop.f32.mrb[0].mxu0
        %v2224 = vadd.f32 %v1791, %v2223
        %v2225 = vpop.f32.mrb[0].mxu0
        %v2226 = vpop.f32.mrb[0].mxu0
        %v2227 = vadd.f32 %v1794, %v2226
        %v2228 = vpop.f32.mrb[0].mxu0
        %2229 = vmatprep.mubr.bf16.mxu0 0
        %2230 = vmatmul.mubr.bf16.gmra.mrb[0].mxu0 %v1461
        %v2231 = vpop.f32.mrb[0].mxu0
        %v2232 = vadd.f32 %v1799, %v2231
        %v2233 = vpop.f32.mrb[0].mxu0
        %v2234 = vpop.f32.mrb[0].mxu0
        %v2235 = vadd.f32 %v1802, %v2234
        %v2236 = vpop.f32.mrb[0].mxu0
        %2237 = vmatprep.mubr.bf16.mxu0 0
        %2238 = vmatmul.mubr.bf16.gmra.mrb[0].mxu0 %v1464
        %v2239 = vpop.f32.mrb[0].mxu0
        %v2240 = vadd.f32 %v1807, %v2239
        %v2241 = vpop.f32.mrb[0].mxu0
        %v2242 = vpop.f32.mrb[0].mxu0
        %v2243 = vadd.f32 %v1810, %v2242
        %v2244 = vpop.f32.mrb[0].mxu0
        %2245 = vmatprep.mubr.bf16.mxu0 0
        %2246 = vmatmul.mubr.bf16.gmra.mrb[0].mxu0 %v1467
        %v2247 = vpop.f32.mrb[0].mxu0
        %v2248 = vadd.f32 %v1815, %v2247
        %v2249 = vpop.f32.mrb[0].mxu0
        %v2250 = vpop.f32.mrb[0].mxu0
        %v2251 = vadd.f32 %v1818, %v2250
        %v2252 = vpop.f32.mrb[0].mxu0
        %2253 = vmatprep.mubr.bf16.mxu0 0
        %2254 = vmatmul.mubr.bf16.gmra.mrb[0].mxu0 %v1470
        %v2255 = vpop.f32.mrb[0].mxu0
        %v2256 = vadd.f32 %v1823, %v2255
        %v2257 = vpop.f32.mrb[0].mxu0
        %v2258 = vpop.f32.mrb[0].mxu0
        %v2259 = vadd.f32 %v1826, %v2258
        %v2260 = vpop.f32.mrb[0].mxu0
        %2261 = vmatprep.mubr.bf16.mxu0 0
        %2262 = vmatmul.mubr.bf16.gmra.mrb[0].mxu0 %v1473
        %v2263 = vpop.f32.mrb[0].mxu0
        %v2264 = vadd.f32 %v1831, %v2263
        %v2265 = vpop.f32.mrb[0].mxu0
        %v2266 = vpop.f32.mrb[0].mxu0
        %v2267 = vadd.f32 %v1834, %v2266
        %v2268 = vpop.f32.mrb[0].mxu0
        %2269 = vmatprep.mubr.bf16.mxu0 0
        %2270 = vmatmul.mubr.bf16.gmra.mrb[0].mxu0 %v1476
        %v2271 = vpop.f32.mrb[0].mxu0
        %v2272 = vadd.f32 %v1839, %v2271
        %v2273 = vpop.f32.mrb[0].mxu0
        %v2274 = vpop.f32.mrb[0].mxu0
        %v2275 = vadd.f32 %v1842, %v2274
        %v2276 = vpop.f32.mrb[0].mxu0
        %2277 = vmatprep.mubr.bf16.mxu0 0
        %2278 = vmatmul.mubr.bf16.gmra.mrb[0].mxu0 %v1479
        %v2279 = vpop.f32.mrb[0].mxu0
        %v2280 = vadd.f32 %v1847, %v2279
        %v2281 = vpop.f32.mrb[0].mxu0
        %v2282 = vpop.f32.mrb[0].mxu0
        %v2283 = vadd.f32 %v1850, %v2282
        %v2284 = vpop.f32.mrb[0].mxu0
        %2285 = vmatprep.mubr.bf16.mxu0 0
        %2286 = vmatmul.mubr.bf16.gmra.mrb[0].mxu0 %v1482
        %v2287 = vpop.f32.mrb[0].mxu0
        %v2288 = vadd.f32 %v1855, %v2287
        %v2289 = vpop.f32.mrb[0].mxu0
        %v2290 = vpop.f32.mrb[0].mxu0
        %v2291 = vadd.f32 %v1858, %v2290
        %v2292 = vpop.f32.mrb[0].mxu0
        %2293 = vmatprep.mubr.bf16.mxu0 0
        %2294 = vmatmul.mubr.bf16.gmra.mrb[0].mxu0 %v1485
        %v2295 = vpop.f32.mrb[0].mxu0
        %v2296 = vadd.f32 %v1863, %v2295
        %v2297 = vpop.f32.mrb[0].mxu0
        %v2298 = vpop.f32.mrb[0].mxu0
        %v2299 = vadd.f32 %v1866, %v2298
        %v2300 = vpop.f32.mrb[0].mxu0
        %2301 = vmatprep.mubr.bf16.mxu0 0
        %2302 = vmatmul.mubr.bf16.gmra.mrb[0].mxu0 %v1488
        %v2303 = vpop.f32.mrb[0].mxu0
        %v2304 = vadd.f32 %v1871, %v2303
        %v2305 = vpop.f32.mrb[0].mxu0
        %v2306 = vpop.f32.mrb[0].mxu0
        %v2307 = vadd.f32 %v1874, %v2306
        %v2308 = vpop.f32.mrb[0].mxu0
        %2309 = vmatprep.mubr.bf16.mxu0 0
        %2310 = vmatmul.mubr.bf16.gmra.mrb[0].mxu0 %v1491
        %v2311 = vpop.f32.mrb[0].mxu0
        %v2312 = vadd.f32 %v1879, %v2311
        %v2313 = vpop.f32.mrb[0].mxu0
        %v2314 = vpop.f32.mrb[0].mxu0
        %v2315 = vadd.f32 %v1882, %v2314
        %v2316 = vpop.f32.mrb[0].mxu0
        %2317 = vmatprep.mubr.bf16.mxu0 0
        %2318 = vmatmul.mubr.bf16.gmra.mrb[0].mxu0 %v1494
        %v2319 = vpop.f32.mrb[0].mxu0
        %v2320 = vadd.f32 %v1887, %v2319
        %v2321 = vpop.f32.mrb[0].mxu0
        %v2322 = vpop.f32.mrb[0].mxu0
        %v2323 = vadd.f32 %v1890, %v2322
        %v2324 = vpop.f32.mrb[0].mxu0
        %2325 = vmatprep.mubr.bf16.mxu0 0
        %2326 = vmatmul.mubr.bf16.gmra.mrb[0].mxu0 %v1497
        %v2327 = vpop.f32.mrb[0].mxu0
        %v2328 = vadd.f32 %v1895, %v2327
        %v2329 = vpop.f32.mrb[0].mxu0
        %v2330 = vpop.f32.mrb[0].mxu0
        %v2331 = vadd.f32 %v1898, %v2330
        %v2332 = vpop.f32.mrb[0].mxu0
        %2333 = vmatprep.mubr.bf16.mxu0 0
        %2334 = vmatmul.mubr.bf16.gmra.mrb[0].mxu0 %v1500
        %v2335 = vpop.f32.mrb[0].mxu0
        %v2336 = vadd.f32 %v1903, %v2335
        %v2337 = vpop.f32.mrb[0].mxu0
        %v2338 = vpop.f32.mrb[0].mxu0
        %v2339 = vadd.f32 %v1906, %v2338
        %v2340 = vpop.f32.mrb[0].mxu0
        %2341 = vmatprep.mubr.bf16.mxu0 0
        %2342 = vmatmul.mubr.bf16.gmra.mrb[0].mxu0 %v1503
        %v2343 = vpop.f32.mrb[0].mxu0
        %v2344 = vadd.f32 %v1911, %v2343
        %v2345 = vpop.f32.mrb[0].mxu0
        %v2346 = vpop.f32.mrb[0].mxu0
        %v2347 = vadd.f32 %v1914, %v2346
        %v2348 = vpop.f32.mrb[0].mxu0
        %2349 = vmatprep.mubr.bf16.mxu0 0
        %2350 = vmatmul.mubr.bf16.gmra.mrb[0].mxu0 %v1506
        %v2351 = vpop.f32.mrb[0].mxu0
        %v2352 = vadd.f32 %v1919, %v2351
        %v2353 = vpop.f32.mrb[0].mxu0
        %v2354 = vpop.f32.mrb[0].mxu0
        %v2355 = vadd.f32 %v1922, %v2354
        %v2356 = vpop.f32.mrb[0].mxu0
        %2357 = vmatprep.mubr.bf16.mxu0 0
        %2358 = vmatmul.mubr.bf16.gmra.mrb[0].mxu0 %v1509
        %v2359 = vpop.f32.mrb[0].mxu0
        %v2360 = vadd.f32 %v1927, %v2359
        %v2361 = vpop.f32.mrb[0].mxu0
        %v2362 = vpop.f32.mrb[0].mxu0
        %v2363 = vadd.f32 %v1930, %v2362
        %v2364 = vpop.f32.mrb[0].mxu0
        %2365 = vmatprep.mubr.bf16.mxu0 0
        %2366 = vmatmul.mubr.bf16.gmra.mrb[0].mxu0 %v1512
        %v2367 = vpop.f32.mrb[0].mxu0
        %v2368 = vadd.f32 %v1935, %v2367
        %v2369 = vpop.f32.mrb[0].mxu0
        %v2370 = vpop.f32.mrb[0].mxu0
        %v2371 = vadd.f32 %v1938, %v2370
        %v2372 = vpop.f32.mrb[0].mxu0
        %2373 = vmatprep.mubr.bf16.mxu0 0
        %2374 = vmatmul.mubr.bf16.gmra.mrb[0].mxu0 %v1515
        %v2375 = vpop.f32.mrb[0].mxu0
        %v2376 = vadd.f32 %v1943, %v2375
        %v2377 = vpop.f32.mrb[0].mxu0
        %v2378 = vpop.f32.mrb[0].mxu0
        %v2379 = vadd.f32 %v1946, %v2378
        %v2380 = vpop.f32.mrb[0].mxu0
        %2381 = vmatprep.mubr.bf16.mxu0 0
        %2382 = vmatmul.mubr.bf16.gmra.mrb[0].mxu0 %v1518
        %v2383 = vpop.f32.mrb[0].mxu0
        %v2384 = vadd.f32 %v1951, %v2383
        %v2385 = vpop.f32.mrb[0].mxu0
        %v2386 = vpop.f32.mrb[0].mxu0
        %v2387 = vadd.f32 %v1954, %v2386
        %v2388 = vpop.f32.mrb[0].mxu0
        %2389 = vdwg.mxu0
        %v2390 = vmax.f32 %v1992, 0.0
        %v2391 = vmax.f32 %v1995, 0.0
        %v2392 = vmax.f32 %v2000, 0.0
        %v2393 = vmax.f32 %v2003, 0.0
        %v2394 = vmax.f32 %v2008, 0.0
        %v2395 = vmax.f32 %v2011, 0.0
        %v2396 = vmax.f32 %v2016, 0.0
        %v2397 = vmax.f32 %v2019, 0.0
        %v2398 = vmax.f32 %v2024, 0.0
        %v2399 = vmax.f32 %v2027, 0.0
        %v2400 = vmax.f32 %v2032, 0.0
        %v2401 = vmax.f32 %v2035, 0.0
        %v2402 = vmax.f32 %v2040, 0.0
        %v2403 = vmax.f32 %v2043, 0.0
        %v2404 = vmax.f32 %v2048, 0.0
        %v2405 = vmax.f32 %v2051, 0.0
        %v2406 = vmax.f32 %v2056, 0.0
        %v2407 = vmax.f32 %v2059, 0.0
        %v2408 = vmax.f32 %v2064, 0.0
        %v2409 = vmax.f32 %v2067, 0.0
        %v2410 = vmax.f32 %v2072, 0.0
        %v2411 = vmax.f32 %v2075, 0.0
        %v2412 = vmax.f32 %v2080, 0.0
        %v2413 = vmax.f32 %v2083, 0.0
        %v2414 = vmax.f32 %v2088, 0.0
        %v2415 = vmax.f32 %v2091, 0.0
        %v2416 = vmax.f32 %v2096, 0.0
        %v2417 = vmax.f32 %v2099, 0.0
        %v2418 = vmax.f32 %v2104, 0.0
        %v2419 = vmax.f32 %v2107, 0.0
        %v2420 = vmax.f32 %v2112, 0.0
        %v2421 = vmax.f32 %v2115, 0.0
        %v2422 = vmax.f32 %v2120, 0.0
        %v2423 = vmax.f32 %v2123, 0.0
        %v2424 = vmax.f32 %v2128, 0.0
        %v2425 = vmax.f32 %v2131, 0.0
        %v2426 = vmax.f32 %v2136, 0.0
        %v2427 = vmax.f32 %v2139, 0.0
        %v2428 = vmax.f32 %v2144, 0.0
        %v2429 = vmax.f32 %v2147, 0.0
        %v2430 = vmax.f32 %v2152, 0.0
        %v2431 = vmax.f32 %v2155, 0.0
        %v2432 = vmax.f32 %v2160, 0.0
        %v2433 = vmax.f32 %v2163, 0.0
        %v2434 = vmax.f32 %v2168, 0.0
        %v2435 = vmax.f32 %v2171, 0.0
        %v2436 = vmax.f32 %v2176, 0.0
        %v2437 = vmax.f32 %v2179, 0.0
        %v2438 = vmax.f32 %v2184, 0.0
        %v2439 = vmax.f32 %v2187, 0.0
        %v2440 = vmax.f32 %v2192, 0.0
        %v2441 = vmax.f32 %v2195, 0.0
        %v2442 = vmax.f32 %v2200, 0.0
        %v2443 = vmax.f32 %v2203, 0.0
        %v2444 = vmax.f32 %v2208, 0.0
        %v2445 = vmax.f32 %v2211, 0.0
        %v2446 = vmax.f32 %v2216, 0.0
        %v2447 = vmax.f32 %v2219, 0.0
        %v2448 = vmax.f32 %v2224, 0.0
        %v2449 = vmax.f32 %v2227, 0.0
        %v2450 = vmax.f32 %v2232, 0.0
        %v2451 = vmax.f32 %v2235, 0.0
        %v2452 = vmax.f32 %v2240, 0.0
        %v2453 = vmax.f32 %v2243, 0.0
        %v2454 = vmax.f32 %v2248, 0.0
        %v2455 = vmax.f32 %v2251, 0.0
        %v2456 = vmax.f32 %v2256, 0.0
        %v2457 = vmax.f32 %v2259, 0.0
        %v2458 = vmax.f32 %v2264, 0.0
        %v2459 = vmax.f32 %v2267, 0.0
        %v2460 = vmax.f32 %v2272, 0.0
        %v2461 = vmax.f32 %v2275, 0.0
        %v2462 = vmax.f32 %v2280, 0.0
        %v2463 = vmax.f32 %v2283, 0.0
        %v2464 = vmax.f32 %v2288, 0.0
        %v2465 = vmax.f32 %v2291, 0.0
        %v2466 = vmax.f32 %v2296, 0.0
        %v2467 = vmax.f32 %v2299, 0.0
        %v2468 = vmax.f32 %v2304, 0.0
        %v2469 = vmax.f32 %v2307, 0.0
        %v2470 = vmax.f32 %v2312, 0.0
        %v2471 = vmax.f32 %v2315, 0.0
        %v2472 = vmax.f32 %v2320, 0.0
        %v2473 = vmax.f32 %v2323, 0.0
        %v2474 = vmax.f32 %v2328, 0.0
        %v2475 = vmax.f32 %v2331, 0.0
        %v2476 = vmax.f32 %v2336, 0.0
        %v2477 = vmax.f32 %v2339, 0.0
        %v2478 = vmax.f32 %v2344, 0.0
        %v2479 = vmax.f32 %v2347, 0.0
        %v2480 = vmax.f32 %v2352, 0.0
        %v2481 = vmax.f32 %v2355, 0.0
        %v2482 = vmax.f32 %v2360, 0.0
        %v2483 = vmax.f32 %v2363, 0.0
        %v2484 = vmax.f32 %v2368, 0.0
        %v2485 = vmax.f32 %v2371, 0.0
        %v2486 = vmax.f32 %v2376, 0.0
        %v2487 = vmax.f32 %v2379, 0.0
        %v2488 = vmax.f32 %v2384, 0.0
        %v2489 = vmax.f32 %v2387, 0.0
        %v2490 = vpack.c.bf16 %v2391, %v2390
        %v2491 = vpack.c.bf16 %v2393, %v2392
        %v2492 = vpack.c.bf16 %v2395, %v2394
        %v2493 = vpack.c.bf16 %v2397, %v2396
        %v2494 = vpack.c.bf16 %v2399, %v2398
        %v2495 = vpack.c.bf16 %v2401, %v2400
        %v2496 = vpack.c.bf16 %v2403, %v2402
        %v2497 = vpack.c.bf16 %v2405, %v2404
        %v2498 = vpack.c.bf16 %v2407, %v2406
        %v2499 = vpack.c.bf16 %v2409, %v2408
        %v2500 = vpack.c.bf16 %v2411, %v2410
        %v2501 = vpack.c.bf16 %v2413, %v2412
        %v2502 = vpack.c.bf16 %v2415, %v2414
        %v2503 = vpack.c.bf16 %v2417, %v2416
        %v2504 = vpack.c.bf16 %v2419, %v2418
        %v2505 = vpack.c.bf16 %v2421, %v2420
        %v2506 = vpack.c.bf16 %v2423, %v2422
        %v2507 = vpack.c.bf16 %v2425, %v2424
        %v2508 = vpack.c.bf16 %v2427, %v2426
        %v2509 = vpack.c.bf16 %v2429, %v2428
        %v2510 = vpack.c.bf16 %v2431, %v2430
        %v2511 = vpack.c.bf16 %v2433, %v2432
        %v2512 = vpack.c.bf16 %v2435, %v2434
        %v2513 = vpack.c.bf16 %v2437, %v2436
        %v2514 = vpack.c.bf16 %v2439, %v2438
        %v2515 = vpack.c.bf16 %v2441, %v2440
        %v2516 = vpack.c.bf16 %v2443, %v2442
        %v2517 = vpack.c.bf16 %v2445, %v2444
        %v2518 = vpack.c.bf16 %v2447, %v2446
        %v2519 = vpack.c.bf16 %v2449, %v2448
        %v2520 = vpack.c.bf16 %v2451, %v2450
        %v2521 = vpack.c.bf16 %v2453, %v2452
        %v2522 = vpack.c.bf16 %v2455, %v2454
        %v2523 = vpack.c.bf16 %v2457, %v2456
        %v2524 = vpack.c.bf16 %v2459, %v2458
        %v2525 = vpack.c.bf16 %v2461, %v2460
        %v2526 = vpack.c.bf16 %v2463, %v2462
        %v2527 = vpack.c.bf16 %v2465, %v2464
        %v2528 = vpack.c.bf16 %v2467, %v2466
        %v2529 = vpack.c.bf16 %v2469, %v2468
        %v2530 = vpack.c.bf16 %v2471, %v2470
        %v2531 = vpack.c.bf16 %v2473, %v2472
        %v2532 = vpack.c.bf16 %v2475, %v2474
        %v2533 = vpack.c.bf16 %v2477, %v2476
        %v2534 = vpack.c.bf16 %v2479, %v2478
        %v2535 = vpack.c.bf16 %v2481, %v2480
        %v2536 = vpack.c.bf16 %v2483, %v2482
        %v2537 = vpack.c.bf16 %v2485, %v2484
        %v2538 = vpack.c.bf16 %v2487, %v2486
        %v2539 = vpack.c.bf16 %v2489, %v2488
        %vm2540 = vcmask 523264
        %2541 = vst.msk [vmem:[#allocation2] sm:$0xff] %vm2540, %v2490
        %2542 = vst.msk [vmem:[#allocation2 + $0x8] sm:$0xff] %vm2540, %v2491
        %2543 = vst.msk [vmem:[#allocation2 + $0x10] sm:$0xff] %vm2540, %v2492
        %2544 = vst.msk [vmem:[#allocation2 + $0x18] sm:$0xff] %vm2540, %v2493
        %2545 = vst.msk [vmem:[#allocation2 + $0x20] sm:$0xff] %vm2540, %v2494
        %2546 = vst.msk [vmem:[#allocation2 + $0x28] sm:$0xff] %vm2540, %v2495
        %2547 = vst.msk [vmem:[#allocation2 + $0x30] sm:$0xff] %vm2540, %v2496
        %2548 = vst.msk [vmem:[#allocation2 + $0x38] sm:$0xff] %vm2540, %v2497
        %2549 = vst.msk [vmem:[#allocation2 + $0x40] sm:$0xff] %vm2540, %v2498
        %2550 = vst.msk [vmem:[#allocation2 + $0x48] sm:$0xff] %vm2540, %v2499
        %2551 = vst.msk [vmem:[#allocation2 + $0x50] sm:$0xff] %vm2540, %v2500
        %2552 = vst.msk [vmem:[#allocation2 + $0x58] sm:$0xff] %vm2540, %v2501
        %2553 = vst.msk [vmem:[#allocation2 + $0x60] sm:$0xff] %vm2540, %v2502
        %2554 = vst.msk [vmem:[#allocation2 + $0x68] sm:$0xff] %vm2540, %v2503
        %2555 = vst.msk [vmem:[#allocation2 + $0x70] sm:$0xff] %vm2540, %v2504
        %2556 = vst.msk [vmem:[#allocation2 + $0x78] sm:$0xff] %vm2540, %v2505
        %2557 = vst.msk [vmem:[#allocation2 + $0x80] sm:$0xff] %vm2540, %v2506
        %2558 = vst.msk [vmem:[#allocation2 + $0x88] sm:$0xff] %vm2540, %v2507
        %2559 = vst.msk [vmem:[#allocation2 + $0x90] sm:$0xff] %vm2540, %v2508
        %2560 = vst.msk [vmem:[#allocation2 + $0x98] sm:$0xff] %vm2540, %v2509
        %2561 = vst.msk [vmem:[#allocation2 + $0xa0] sm:$0xff] %vm2540, %v2510
        %2562 = vst.msk [vmem:[#allocation2 + $0xa8] sm:$0xff] %vm2540, %v2511
        %2563 = vst.msk [vmem:[#allocation2 + $0xb0] sm:$0xff] %vm2540, %v2512
        %2564 = vst.msk [vmem:[#allocation2 + $0xb8] sm:$0xff] %vm2540, %v2513
        %2565 = vst.msk [vmem:[#allocation2 + $0xc0] sm:$0xff] %vm2540, %v2514
        %2566 = vst.msk [vmem:[#allocation2 + $0xc8] sm:$0xff] %vm2540, %v2515
        %2567 = vst.msk [vmem:[#allocation2 + $0xd0] sm:$0xff] %vm2540, %v2516
        %2568 = vst.msk [vmem:[#allocation2 + $0xd8] sm:$0xff] %vm2540, %v2517
        %2569 = vst.msk [vmem:[#allocation2 + $0xe0] sm:$0xff] %vm2540, %v2518
        %2570 = vst.msk [vmem:[#allocation2 + $0xe8] sm:$0xff] %vm2540, %v2519
        %2571 = vst.msk [vmem:[#allocation2 + $0xf0] sm:$0xff] %vm2540, %v2520
        %2572 = vst.msk [vmem:[#allocation2 + $0xf8] sm:$0xff] %vm2540, %v2521
        %2573 = vst.msk [vmem:[#allocation2 + $0x100] sm:$0xff] %vm2540, %v2522
        %2574 = vst.msk [vmem:[#allocation2 + $0x108] sm:$0xff] %vm2540, %v2523
        %2575 = vst.msk [vmem:[#allocation2 + $0x110] sm:$0xff] %vm2540, %v2524
        %2576 = vst.msk [vmem:[#allocation2 + $0x118] sm:$0xff] %vm2540, %v2525
        %2577 = vst.msk [vmem:[#allocation2 + $0x120] sm:$0xff] %vm2540, %v2526
        %2578 = vst.msk [vmem:[#allocation2 + $0x128] sm:$0xff] %vm2540, %v2527
        %2579 = vst.msk [vmem:[#allocation2 + $0x130] sm:$0xff] %vm2540, %v2528
        %2580 = vst.msk [vmem:[#allocation2 + $0x138] sm:$0xff] %vm2540, %v2529
        %2581 = vst.msk [vmem:[#allocation2 + $0x140] sm:$0xff] %vm2540, %v2530
        %2582 = vst.msk [vmem:[#allocation2 + $0x148] sm:$0xff] %vm2540, %v2531
        %2583 = vst.msk [vmem:[#allocation2 + $0x150] sm:$0xff] %vm2540, %v2532
        %2584 = vst.msk [vmem:[#allocation2 + $0x158] sm:$0xff] %vm2540, %v2533
        %2585 = vst.msk [vmem:[#allocation2 + $0x160] sm:$0xff] %vm2540, %v2534
        %2586 = vst.msk [vmem:[#allocation2 + $0x168] sm:$0xff] %vm2540, %v2535
        %2587 = vst.msk [vmem:[#allocation2 + $0x170] sm:$0xff] %vm2540, %v2536
        %2588 = vst.msk [vmem:[#allocation2 + $0x178] sm:$0xff] %vm2540, %v2537
        %2589 = vst.msk [vmem:[#allocation2 + $0x180] sm:$0xff] %vm2540, %v2538
        %2590 = vst.msk [vmem:[#allocation2 + $0x188] sm:$0xff] %vm2540, %v2539
        %v2591 = vld [vmem:[#allocation2] sm:$0xf]
        %v2592 = vld [vmem:[#allocation2 + $0x8] sm:$0xf]
        %v2593 = vld [vmem:[#allocation2 + $0x10] sm:$0xf]
        %v2594 = vld [vmem:[#allocation2 + $0x18] sm:$0xf]
        %v2595 = vld [vmem:[#allocation2 + $0x20] sm:$0xf]
        %v2596 = vld [vmem:[#allocation2 + $0x28] sm:$0xf]
        %v2597 = vld [vmem:[#allocation2 + $0x30] sm:$0xf]
        %v2598 = vld [vmem:[#allocation2 + $0x38] sm:$0xf]
        %v2607 = vunpack.c.l.b16 %v2591
        %v2608 = vunpack.c.l.b16 %v2592
        %v2609 = vunpack.c.l.b16 %v2593
        %v2610 = vunpack.c.l.b16 %v2594
        %v2611 = vunpack.c.l.b16 %v2595
        %v2612 = vunpack.c.l.b16 %v2596
        %v2613 = vunpack.c.l.b16 %v2597
        %v2614 = vunpack.c.l.b16 %v2598
        %v2615 = vpack.c.b16 %v2608, %v2607
        %v2616 = vpack.c.b16 %v2610, %v2609
        %v2617 = vpack.c.b16 %v2612, %v2611
        %v2618 = vpack.c.b16 %v2614, %v2613
        %2623 = vst.msk [vmem:[#allocation3] sm:$0xff] %vm2540, %v2615
        %2624 = vst.msk [vmem:[#allocation3 + $0x70] sm:$0xff] %vm2540, %v2616
        %2625 = vst.msk [vmem:[#allocation3 + $0xe0] sm:$0xff] %vm2540, %v2617
        %2626 = vst.msk [vmem:[#allocation3 + $0x150] sm:$0xff] %vm2540, %v2618
        %v2627 = vld [vmem:[#allocation2] sm:$0x1f]
        %v2628 = vld [vmem:[#allocation2 + $0x8] sm:$0x1f]
        %v2629 = vld [vmem:[#allocation2 + $0x10] sm:$0x1f]
        %v2630 = vld [vmem:[#allocation2 + $0x18] sm:$0x1f]
        %v2631 = vld [vmem:[#allocation2 + $0x20] sm:$0x1f]
        %v2632 = vld [vmem:[#allocation2 + $0x28] sm:$0x1f]
        %v2633 = vld [vmem:[#allocation2 + $0x30] sm:$0x1f]
        %v2634 = vld [vmem:[#allocation2 + $0x38] sm:$0x1f]
        %v2643 = vunpack.c.l.b16 %v2627
        %v2644 = vunpack.c.h.b16 %v2627
        %v2645 = vunpack.c.l.b16 %v2628
        %v2646 = vunpack.c.h.b16 %v2628
        %v2647 = vunpack.c.l.b16 %v2629
        %v2648 = vunpack.c.h.b16 %v2629
        %v2649 = vunpack.c.l.b16 %v2630
        %v2650 = vunpack.c.h.b16 %v2630
        %v2651 = vunpack.c.l.b16 %v2631
        %v2652 = vunpack.c.h.b16 %v2631
        %v2653 = vunpack.c.l.b16 %v2632
        %v2654 = vunpack.c.h.b16 %v2632
        %v2655 = vunpack.c.l.b16 %v2633
        %v2656 = vunpack.c.h.b16 %v2633
        %v2657 = vunpack.c.l.b16 %v2634
        %v2658 = vunpack.c.h.b16 %v2634
        %v2659 = vpack.c.b16 %v2643, %v2643
        %v2660 = vpack.c.b16 %v2644, %v2644
        %v2661 = vpack.c.b16 %v2645, %v2645
        %v2662 = vpack.c.b16 %v2646, %v2646
        %v2663 = vpack.c.b16 %v2647, %v2647
        %v2664 = vpack.c.b16 %v2648, %v2648
        %v2665 = vpack.c.b16 %v2649, %v2649
        %v2666 = vpack.c.b16 %v2650, %v2650
        %v2667 = vpack.c.b16 %v2651, %v2651
        %v2668 = vpack.c.b16 %v2652, %v2652
        %v2669 = vpack.c.b16 %v2653, %v2653
        %v2670 = vpack.c.b16 %v2654, %v2654
        %v2671 = vpack.c.b16 %v2655, %v2655
        %v2672 = vpack.c.b16 %v2656, %v2656
        %v2673 = vpack.c.b16 %v2657, %v2657
        %v2674 = vpack.c.b16 %v2658, %v2658
        %vm2675 = vsmask.f32 3328
        %vm2676 = vsmask.f32 7440
        %vm2677 = vmor %vm2675, %vm2676
        %v2679 = vshrl.u32 %v2659, 16
        %v2681 = vrot.slane %v2679, 4
        %v2682 = vshll.u32 %v2659, 16
        %v2684 = vrot.slane %v2682, 5
        %v2685 = vor.u32 %v2681, %v2684
        %v2686 = vrot.slane %v2685, 4
        %v2688 = vshll.u32 %v2660, 16
        %v2690 = vrot.slane %v2688, 5
        %v2691 = vsel %vm2677, %v2686, %v2690
        %v2693 = vshrl.u32 %v2661, 16
        %v2695 = vrot.slane %v2693, 4
        %v2696 = vshll.u32 %v2661, 16
        %v2698 = vrot.slane %v2696, 5
        %v2699 = vor.u32 %v2695, %v2698
        %v2700 = vrot.slane %v2699, 4
        %v2702 = vshll.u32 %v2662, 16
        %v2704 = vrot.slane %v2702, 5
        %v2705 = vsel %vm2677, %v2700, %v2704
        %v2707 = vshrl.u32 %v2663, 16
        %v2709 = vrot.slane %v2707, 4
        %v2710 = vshll.u32 %v2663, 16
        %v2712 = vrot.slane %v2710, 5
        %v2713 = vor.u32 %v2709, %v2712
        %v2714 = vrot.slane %v2713, 4
        %v2716 = vshll.u32 %v2664, 16
        %v2718 = vrot.slane %v2716, 5
        %v2719 = vsel %vm2677, %v2714, %v2718
        %v2721 = vshrl.u32 %v2665, 16
        %v2723 = vrot.slane %v2721, 4
        %v2724 = vshll.u32 %v2665, 16
        %v2726 = vrot.slane %v2724, 5
        %v2727 = vor.u32 %v2723, %v2726
        %v2728 = vrot.slane %v2727, 4
        %v2730 = vshll.u32 %v2666, 16
        %v2732 = vrot.slane %v2730, 5
        %v2733 = vsel %vm2677, %v2728, %v2732
        %v2735 = vshrl.u32 %v2667, 16
        %v2737 = vrot.slane %v2735, 4
        %v2738 = vshll.u32 %v2667, 16
        %v2740 = vrot.slane %v2738, 5
        %v2741 = vor.u32 %v2737, %v2740
        %v2742 = vrot.slane %v2741, 4
        %v2744 = vshll.u32 %v2668, 16
        %v2746 = vrot.slane %v2744, 5
        %v2747 = vsel %vm2677, %v2742, %v2746
        %v2749 = vshrl.u32 %v2669, 16
        %v2751 = vrot.slane %v2749, 4
        %v2752 = vshll.u32 %v2669, 16
        %v2754 = vrot.slane %v2752, 5
        %v2755 = vor.u32 %v2751, %v2754
        %v2756 = vrot.slane %v2755, 4
        %v2758 = vshll.u32 %v2670, 16
        %v2760 = vrot.slane %v2758, 5
        %v2761 = vsel %vm2677, %v2756, %v2760
        %v2763 = vshrl.u32 %v2671, 16
        %v2765 = vrot.slane %v2763, 4
        %v2766 = vshll.u32 %v2671, 16
        %v2768 = vrot.slane %v2766, 5
        %v2769 = vor.u32 %v2765, %v2768
        %v2770 = vrot.slane %v2769, 4
        %v2772 = vshll.u32 %v2672, 16
        %v2774 = vrot.slane %v2772, 5
        %v2775 = vsel %vm2677, %v2770, %v2774
        %v2777 = vshrl.u32 %v2673, 16
        %v2779 = vrot.slane %v2777, 4
        %v2780 = vshll.u32 %v2673, 16
        %v2782 = vrot.slane %v2780, 5
        %v2783 = vor.u32 %v2779, %v2782
        %v2784 = vrot.slane %v2783, 4
        %v2786 = vshll.u32 %v2674, 16
        %v2788 = vrot.slane %v2786, 5
        %v2789 = vsel %vm2677, %v2784, %v2788
        %v2790 = vunpack.c.l.b16 %v2691
        %v2791 = vunpack.c.l.b16 %v2705
        %v2792 = vunpack.c.l.b16 %v2719
        %v2793 = vunpack.c.l.b16 %v2733
        %v2794 = vunpack.c.l.b16 %v2747
        %v2795 = vunpack.c.l.b16 %v2761
        %v2796 = vunpack.c.l.b16 %v2775
        %v2797 = vunpack.c.l.b16 %v2789
        %v2798 = vpack.c.b16 %v2791, %v2790
        %v2799 = vpack.c.b16 %v2793, %v2792
        %v2800 = vpack.c.b16 %v2795, %v2794
        %v2801 = vpack.c.b16 %v2797, %v2796
        %2802 = vrot.lane.b32.xlu0 %v2798, 64
        %v2803 = vpop.permute.xlu0 %2802
        %2804 = vrot.lane.b32.xlu0 %v2799, 64
        %v2805 = vpop.permute.xlu0 %2804
        %2806 = vrot.lane.b32.xlu0 %v2800, 64
        %v2807 = vpop.permute.xlu0 %2806
        %2808 = vrot.lane.b32.xlu0 %v2801, 64
        %v2809 = vpop.permute.xlu0 %2808
        %vm2814 = vcmask 1048064
        %2815 = vst.msk [vmem:[#allocation3] sm:$0xff] %vm2814, %v2803
        %2816 = vst.msk [vmem:[#allocation3 + $0x70] sm:$0xff] %vm2814, %v2805
        %2817 = vst.msk [vmem:[#allocation3 + $0xe0] sm:$0xff] %vm2814, %v2807
        %2818 = vst.msk [vmem:[#allocation3 + $0x150] sm:$0xff] %vm2814, %v2809
        %v2819 = vld [vmem:[#allocation2] sm:$0x1e]
        %v2820 = vld [vmem:[#allocation2 + $0x8] sm:$0x1e]
        %v2821 = vld [vmem:[#allocation2 + $0x10] sm:$0x1e]
        %v2822 = vld [vmem:[#allocation2 + $0x18] sm:$0x1e]
        %v2823 = vld [vmem:[#allocation2 + $0x20] sm:$0x1e]
        %v2824 = vld [vmem:[#allocation2 + $0x28] sm:$0x1e]
        %v2825 = vld [vmem:[#allocation2 + $0x30] sm:$0x1e]
        %v2826 = vld [vmem:[#allocation2 + $0x38] sm:$0x1e]
        %v2835 = vunpack.c.l.b16 %v2819
        %v2836 = vunpack.c.h.b16 %v2819
        %v2837 = vunpack.c.l.b16 %v2820
        %v2838 = vunpack.c.h.b16 %v2820
        %v2839 = vunpack.c.l.b16 %v2821
        %v2840 = vunpack.c.h.b16 %v2821
        %v2841 = vunpack.c.l.b16 %v2822
        %v2842 = vunpack.c.h.b16 %v2822
        %v2843 = vunpack.c.l.b16 %v2823
        %v2844 = vunpack.c.h.b16 %v2823
        %v2845 = vunpack.c.l.b16 %v2824
        %v2846 = vunpack.c.h.b16 %v2824
        %v2847 = vunpack.c.l.b16 %v2825
        %v2848 = vunpack.c.h.b16 %v2825
        %v2849 = vunpack.c.l.b16 %v2826
        %v2850 = vunpack.c.h.b16 %v2826
        %v2851 = vpack.c.b16 %v2835, %v2835
        %v2852 = vpack.c.b16 %v2836, %v2836
        %v2853 = vpack.c.b16 %v2837, %v2837
        %v2854 = vpack.c.b16 %v2838, %v2838
        %v2855 = vpack.c.b16 %v2839, %v2839
        %v2856 = vpack.c.b16 %v2840, %v2840
        %v2857 = vpack.c.b16 %v2841, %v2841
        %v2858 = vpack.c.b16 %v2842, %v2842
        %v2859 = vpack.c.b16 %v2843, %v2843
        %v2860 = vpack.c.b16 %v2844, %v2844
        %v2861 = vpack.c.b16 %v2845, %v2845
        %v2862 = vpack.c.b16 %v2846, %v2846
        %v2863 = vpack.c.b16 %v2847, %v2847
        %v2864 = vpack.c.b16 %v2848, %v2848
        %v2865 = vpack.c.b16 %v2849, %v2849
        %v2866 = vpack.c.b16 %v2850, %v2850
        %vm2867 = vcmask 1042432
        %vm2868 = vcmask 1046532
        %vm2869 = vmor %vm2867, %vm2868
        %v2870 = vrot.slane %v2851, 5
        %v2871 = vrot.slane %v2870, 4
        %v2872 = vrot.slane %v2852, 5
        %v2873 = vsel %vm2869, %v2871, %v2872
        %v2874 = vrot.slane %v2853, 5
        %v2875 = vrot.slane %v2874, 4
        %v2876 = vrot.slane %v2854, 5
        %v2877 = vsel %vm2869, %v2875, %v2876
        %v2878 = vrot.slane %v2855, 5
        %v2879 = vrot.slane %v2878, 4
        %v2880 = vrot.slane %v2856, 5
        %v2881 = vsel %vm2869, %v2879, %v2880
        %v2882 = vrot.slane %v2857, 5
        %v2883 = vrot.slane %v2882, 4
        %v2884 = vrot.slane %v2858, 5
        %v2885 = vsel %vm2869, %v2883, %v2884
        %v2886 = vrot.slane %v2859, 5
        %v2887 = vrot.slane %v2886, 4
        %v2888 = vrot.slane %v2860, 5
        %v2889 = vsel %vm2869, %v2887, %v2888
        %v2890 = vrot.slane %v2861, 5
        %v2891 = vrot.slane %v2890, 4
        %v2892 = vrot.slane %v2862, 5
        %v2893 = vsel %vm2869, %v2891, %v2892
        %v2894 = vrot.slane %v2863, 5
        %v2895 = vrot.slane %v2894, 4
        %v2896 = vrot.slane %v2864, 5
        %v2897 = vsel %vm2869, %v2895, %v2896
        %v2898 = vrot.slane %v2865, 5
        %v2899 = vrot.slane %v2898, 4
        %v2900 = vrot.slane %v2866, 5
        %v2901 = vsel %vm2869, %v2899, %v2900
        %v2902 = vunpack.c.l.b16 %v2873
        %v2903 = vunpack.c.l.b16 %v2877
        %v2904 = vunpack.c.l.b16 %v2881
        %v2905 = vunpack.c.l.b16 %v2885
        %v2906 = vunpack.c.l.b16 %v2889
        %v2907 = vunpack.c.l.b16 %v2893
        %v2908 = vunpack.c.l.b16 %v2897
        %v2909 = vunpack.c.l.b16 %v2901
        %v2910 = vpack.c.b16 %v2903, %v2902
        %v2911 = vpack.c.b16 %v2905, %v2904
        %v2912 = vpack.c.b16 %v2907, %v2906
        %v2913 = vpack.c.b16 %v2909, %v2908
        %2918 = vst.msk [vmem:[#allocation3 + $0x8] sm:$0xff] %vm2540, %v2910
        %2919 = vst.msk [vmem:[#allocation3 + $0x78] sm:$0xff] %vm2540, %v2911
        %2920 = vst.msk [vmem:[#allocation3 + $0xe8] sm:$0xff] %vm2540, %v2912
        %2921 = vst.msk [vmem:[#allocation3 + $0x158] sm:$0xff] %vm2540, %v2913
        %s2922 = scalar_lea.vmem [#allocation2], 8
        %v2923 = vld [vmem:[%s2922] sm:$0xf]
        %v2924 = vld [vmem:[%s2922 + $0x8] sm:$0xf]
        %v2925 = vld [vmem:[%s2922 + $0x10] sm:$0xf]
        %v2926 = vld [vmem:[%s2922 + $0x18] sm:$0xf]
        %v2927 = vld [vmem:[%s2922 + $0x20] sm:$0xf]
        %v2928 = vld [vmem:[%s2922 + $0x28] sm:$0xf]
        %v2929 = vld [vmem:[%s2922 + $0x30] sm:$0xf]
        %v2930 = vld [vmem:[%s2922 + $0x38] sm:$0xf]
        %v2939 = vunpack.c.l.b16 %v2923
        %v2940 = vunpack.c.l.b16 %v2924
        %v2941 = vunpack.c.l.b16 %v2925
        %v2942 = vunpack.c.l.b16 %v2926
        %v2943 = vunpack.c.l.b16 %v2927
        %v2944 = vunpack.c.l.b16 %v2928
        %v2945 = vunpack.c.l.b16 %v2929
        %v2946 = vunpack.c.l.b16 %v2930
        %v2947 = vpack.c.b16 %v2940, %v2939
        %v2948 = vpack.c.b16 %v2942, %v2941
        %v2949 = vpack.c.b16 %v2944, %v2943
        %v2950 = vpack.c.b16 %v2946, %v2945
        %2951 = vrot.lane.b32.xlu0 %v2947, 64
        %v2952 = vpop.permute.xlu0 %2951
        %2953 = vrot.lane.b32.xlu0 %v2948, 64
        %v2954 = vpop.permute.xlu0 %2953
        %2955 = vrot.lane.b32.xlu0 %v2949, 64
        %v2956 = vpop.permute.xlu0 %2955
        %2957 = vrot.lane.b32.xlu0 %v2950, 64
        %v2958 = vpop.permute.xlu0 %2957
        %2963 = vst.msk [vmem:[#allocation3 + $0x8] sm:$0xff] %vm2814, %v2952
        %2964 = vst.msk [vmem:[#allocation3 + $0x78] sm:$0xff] %vm2814, %v2954
        %2965 = vst.msk [vmem:[#allocation3 + $0xe8] sm:$0xff] %vm2814, %v2956
        %2966 = vst.msk [vmem:[#allocation3 + $0x158] sm:$0xff] %vm2814, %v2958
        %v2967 = vld [vmem:[%s2922] sm:$0x1f]
        %v2968 = vld [vmem:[%s2922 + $0x8] sm:$0x1f]
        %v2969 = vld [vmem:[%s2922 + $0x10] sm:$0x1f]
        %v2970 = vld [vmem:[%s2922 + $0x18] sm:$0x1f]
        %v2971 = vld [vmem:[%s2922 + $0x20] sm:$0x1f]
        %v2972 = vld [vmem:[%s2922 + $0x28] sm:$0x1f]
        %v2973 = vld [vmem:[%s2922 + $0x30] sm:$0x1f]
        %v2974 = vld [vmem:[%s2922 + $0x38] sm:$0x1f]
        %v2983 = vunpack.c.l.b16 %v2967
        %v2984 = vunpack.c.h.b16 %v2967
        %v2985 = vunpack.c.l.b16 %v2968
        %v2986 = vunpack.c.h.b16 %v2968
        %v2987 = vunpack.c.l.b16 %v2969
        %v2988 = vunpack.c.h.b16 %v2969
        %v2989 = vunpack.c.l.b16 %v2970
        %v2990 = vunpack.c.h.b16 %v2970
        %v2991 = vunpack.c.l.b16 %v2971
        %v2992 = vunpack.c.h.b16 %v2971
        %v2993 = vunpack.c.l.b16 %v2972
        %v2994 = vunpack.c.h.b16 %v2972
        %v2995 = vunpack.c.l.b16 %v2973
        %v2996 = vunpack.c.h.b16 %v2973
        %v2997 = vunpack.c.l.b16 %v2974
        %v2998 = vunpack.c.h.b16 %v2974
        %v2999 = vpack.c.b16 %v2983, %v2983
        %v3000 = vpack.c.b16 %v2984, %v2984
        %v3001 = vpack.c.b16 %v2985, %v2985
        %v3002 = vpack.c.b16 %v2986, %v2986
        %v3003 = vpack.c.b16 %v2987, %v2987
        %v3004 = vpack.c.b16 %v2988, %v2988
        %v3005 = vpack.c.b16 %v2989, %v2989
        %v3006 = vpack.c.b16 %v2990, %v2990
        %v3007 = vpack.c.b16 %v2991, %v2991
        %v3008 = vpack.c.b16 %v2992, %v2992
        %v3009 = vpack.c.b16 %v2993, %v2993
        %v3010 = vpack.c.b16 %v2994, %v2994
        %v3011 = vpack.c.b16 %v2995, %v2995
        %v3012 = vpack.c.b16 %v2996, %v2996
        %v3013 = vpack.c.b16 %v2997, %v2997
        %v3014 = vpack.c.b16 %v2998, %v2998
        %v3016 = vshrl.u32 %v2999, 16
        %v3018 = vrot.slane %v3016, 4
        %v3019 = vshll.u32 %v2999, 16
        %v3021 = vrot.slane %v3019, 5
        %v3022 = vor.u32 %v3018, %v3021
        %v3023 = vrot.slane %v3022, 4
        %v3025 = vshll.u32 %v3000, 16
        %v3027 = vrot.slane %v3025, 5
        %v3028 = vsel %vm2677, %v3023, %v3027
        %v3030 = vshrl.u32 %v3001, 16
        %v3032 = vrot.slane %v3030, 4
        %v3033 = vshll.u32 %v3001, 16
        %v3035 = vrot.slane %v3033, 5
        %v3036 = vor.u32 %v3032, %v3035
        %v3037 = vrot.slane %v3036, 4
        %v3039 = vshll.u32 %v3002, 16
        %v3041 = vrot.slane %v3039, 5
        %v3042 = vsel %vm2677, %v3037, %v3041
        %v3044 = vshrl.u32 %v3003, 16
        %v3046 = vrot.slane %v3044, 4
        %v3047 = vshll.u32 %v3003, 16
        %v3049 = vrot.slane %v3047, 5
        %v3050 = vor.u32 %v3046, %v3049
        %v3051 = vrot.slane %v3050, 4
        %v3053 = vshll.u32 %v3004, 16
        %v3055 = vrot.slane %v3053, 5
        %v3056 = vsel %vm2677, %v3051, %v3055
        %v3058 = vshrl.u32 %v3005, 16
        %v3060 = vrot.slane %v3058, 4
        %v3061 = vshll.u32 %v3005, 16
        %v3063 = vrot.slane %v3061, 5
        %v3064 = vor.u32 %v3060, %v3063
        %v3065 = vrot.slane %v3064, 4
        %v3067 = vshll.u32 %v3006, 16
        %v3069 = vrot.slane %v3067, 5
        %v3070 = vsel %vm2677, %v3065, %v3069
        %v3072 = vshrl.u32 %v3007, 16
        %v3074 = vrot.slane %v3072, 4
        %v3075 = vshll.u32 %v3007, 16
        %v3077 = vrot.slane %v3075, 5
        %v3078 = vor.u32 %v3074, %v3077
        %v3079 = vrot.slane %v3078, 4
        %v3081 = vshll.u32 %v3008, 16
        %v3083 = vrot.slane %v3081, 5
        %v3084 = vsel %vm2677, %v3079, %v3083
        %v3086 = vshrl.u32 %v3009, 16
        %v3088 = vrot.slane %v3086, 4
        %v3089 = vshll.u32 %v3009, 16
        %v3091 = vrot.slane %v3089, 5
        %v3092 = vor.u32 %v3088, %v3091
        %v3093 = vrot.slane %v3092, 4
        %v3095 = vshll.u32 %v3010, 16
        %v3097 = vrot.slane %v3095, 5
        %v3098 = vsel %vm2677, %v3093, %v3097
        %v3100 = vshrl.u32 %v3011, 16
        %v3102 = vrot.slane %v3100, 4
        %v3103 = vshll.u32 %v3011, 16
        %v3105 = vrot.slane %v3103, 5
        %v3106 = vor.u32 %v3102, %v3105
        %v3107 = vrot.slane %v3106, 4
        %v3109 = vshll.u32 %v3012, 16
        %v3111 = vrot.slane %v3109, 5
        %v3112 = vsel %vm2677, %v3107, %v3111
        %v3114 = vshrl.u32 %v3013, 16
        %v3116 = vrot.slane %v3114, 4
        %v3117 = vshll.u32 %v3013, 16
        %v3119 = vrot.slane %v3117, 5
        %v3120 = vor.u32 %v3116, %v3119
        %v3121 = vrot.slane %v3120, 4
        %v3123 = vshll.u32 %v3014, 16
        %v3125 = vrot.slane %v3123, 5
        %v3126 = vsel %vm2677, %v3121, %v3125
        %v3127 = vunpack.c.l.b16 %v3028
        %v3128 = vunpack.c.l.b16 %v3042
        %v3129 = vunpack.c.l.b16 %v3056
        %v3130 = vunpack.c.l.b16 %v3070
        %v3131 = vunpack.c.l.b16 %v3084
        %v3132 = vunpack.c.l.b16 %v3098
        %v3133 = vunpack.c.l.b16 %v3112
        %v3134 = vunpack.c.l.b16 %v3126
        %v3135 = vpack.c.b16 %v3128, %v3127
        %v3136 = vpack.c.b16 %v3130, %v3129
        %v3137 = vpack.c.b16 %v3132, %v3131
        %v3138 = vpack.c.b16 %v3134, %v3133
        %3143 = vst.msk [vmem:[#allocation3 + $0x10] sm:$0xff] %vm2540, %v3135
        %3144 = vst.msk [vmem:[#allocation3 + $0x80] sm:$0xff] %vm2540, %v3136
        %3145 = vst.msk [vmem:[#allocation3 + $0xf0] sm:$0xff] %vm2540, %v3137
        %3146 = vst.msk [vmem:[#allocation3 + $0x160] sm:$0xff] %vm2540, %v3138
        %v3147 = vld [vmem:[%s2922] sm:$0x1e]
        %v3148 = vld [vmem:[%s2922 + $0x8] sm:$0x1e]
        %v3149 = vld [vmem:[%s2922 + $0x10] sm:$0x1e]
        %v3150 = vld [vmem:[%s2922 + $0x18] sm:$0x1e]
        %v3151 = vld [vmem:[%s2922 + $0x20] sm:$0x1e]
        %v3152 = vld [vmem:[%s2922 + $0x28] sm:$0x1e]
        %v3153 = vld [vmem:[%s2922 + $0x30] sm:$0x1e]
        %v3154 = vld [vmem:[%s2922 + $0x38] sm:$0x1e]
        %v3163 = vunpack.c.l.b16 %v3147
        %v3164 = vunpack.c.h.b16 %v3147
        %v3165 = vunpack.c.l.b16 %v3148
        %v3166 = vunpack.c.h.b16 %v3148
        %v3167 = vunpack.c.l.b16 %v3149
        %v3168 = vunpack.c.h.b16 %v3149
        %v3169 = vunpack.c.l.b16 %v3150
        %v3170 = vunpack.c.h.b16 %v3150
        %v3171 = vunpack.c.l.b16 %v3151
        %v3172 = vunpack.c.h.b16 %v3151
        %v3173 = vunpack.c.l.b16 %v3152
        %v3174 = vunpack.c.h.b16 %v3152
        %v3175 = vunpack.c.l.b16 %v3153
        %v3176 = vunpack.c.h.b16 %v3153
        %v3177 = vunpack.c.l.b16 %v3154
        %v3178 = vunpack.c.h.b16 %v3154
        %v3179 = vpack.c.b16 %v3163, %v3163
        %v3180 = vpack.c.b16 %v3164, %v3164
        %v3181 = vpack.c.b16 %v3165, %v3165
        %v3182 = vpack.c.b16 %v3166, %v3166
        %v3183 = vpack.c.b16 %v3167, %v3167
        %v3184 = vpack.c.b16 %v3168, %v3168
        %v3185 = vpack.c.b16 %v3169, %v3169
        %v3186 = vpack.c.b16 %v3170, %v3170
        %v3187 = vpack.c.b16 %v3171, %v3171
        %v3188 = vpack.c.b16 %v3172, %v3172
        %v3189 = vpack.c.b16 %v3173, %v3173
        %v3190 = vpack.c.b16 %v3174, %v3174
        %v3191 = vpack.c.b16 %v3175, %v3175
        %v3192 = vpack.c.b16 %v3176, %v3176
        %v3193 = vpack.c.b16 %v3177, %v3177
        %v3194 = vpack.c.b16 %v3178, %v3178
        %v3195 = vrot.slane %v3179, 5
        %v3196 = vrot.slane %v3195, 4
        %v3197 = vrot.slane %v3180, 5
        %v3198 = vsel %vm2869, %v3196, %v3197
        %v3199 = vrot.slane %v3181, 5
        %v3200 = vrot.slane %v3199, 4
        %v3201 = vrot.slane %v3182, 5
        %v3202 = vsel %vm2869, %v3200, %v3201
        %v3203 = vrot.slane %v3183, 5
        %v3204 = vrot.slane %v3203, 4
        %v3205 = vrot.slane %v3184, 5
        %v3206 = vsel %vm2869, %v3204, %v3205
        %v3207 = vrot.slane %v3185, 5
        %v3208 = vrot.slane %v3207, 4
        %v3209 = vrot.slane %v3186, 5
        %v3210 = vsel %vm2869, %v3208, %v3209
        %v3211 = vrot.slane %v3187, 5
        %v3212 = vrot.slane %v3211, 4
        %v3213 = vrot.slane %v3188, 5
        %v3214 = vsel %vm2869, %v3212, %v3213
        %v3215 = vrot.slane %v3189, 5
        %v3216 = vrot.slane %v3215, 4
        %v3217 = vrot.slane %v3190, 5
        %v3218 = vsel %vm2869, %v3216, %v3217
        %v3219 = vrot.slane %v3191, 5
        %v3220 = vrot.slane %v3219, 4
        %v3221 = vrot.slane %v3192, 5
        %v3222 = vsel %vm2869, %v3220, %v3221
        %v3223 = vrot.slane %v3193, 5
        %v3224 = vrot.slane %v3223, 4
        %v3225 = vrot.slane %v3194, 5
        %v3226 = vsel %vm2869, %v3224, %v3225
        %v3227 = vunpack.c.l.b16 %v3198
        %v3228 = vunpack.c.l.b16 %v3202
        %v3229 = vunpack.c.l.b16 %v3206
        %v3230 = vunpack.c.l.b16 %v3210
        %v3231 = vunpack.c.l.b16 %v3214
        %v3232 = vunpack.c.l.b16 %v3218
        %v3233 = vunpack.c.l.b16 %v3222
        %v3234 = vunpack.c.l.b16 %v3226
        %v3235 = vpack.c.b16 %v3228, %v3227
        %v3236 = vpack.c.b16 %v3230, %v3229
        %v3237 = vpack.c.b16 %v3232, %v3231
        %v3238 = vpack.c.b16 %v3234, %v3233
        %3239 = vrot.lane.b32.xlu0 %v3235, 64
        %v3240 = vpop.permute.xlu0 %3239
        %3241 = vrot.lane.b32.xlu0 %v3236, 64
        %v3242 = vpop.permute.xlu0 %3241
        %3243 = vrot.lane.b32.xlu0 %v3237, 64
        %v3244 = vpop.permute.xlu0 %3243
        %3245 = vrot.lane.b32.xlu0 %v3238, 64
        %v3246 = vpop.permute.xlu0 %3245
        %3251 = vst.msk [vmem:[#allocation3 + $0x10] sm:$0xff] %vm2814, %v3240
        %3252 = vst.msk [vmem:[#allocation3 + $0x80] sm:$0xff] %vm2814, %v3242
        %3253 = vst.msk [vmem:[#allocation3 + $0xf0] sm:$0xff] %vm2814, %v3244
        %3254 = vst.msk [vmem:[#allocation3 + $0x160] sm:$0xff] %vm2814, %v3246
        %s3255 = scalar_lea.vmem [#allocation2], 16
        %v3256 = vld [vmem:[%s3255] sm:$0xf]
        %v3257 = vld [vmem:[%s3255 + $0x8] sm:$0xf]
        %v3258 = vld [vmem:[%s3255 + $0x10] sm:$0xf]
        %v3259 = vld [vmem:[%s3255 + $0x18] sm:$0xf]
        %v3260 = vld [vmem:[%s3255 + $0x20] sm:$0xf]
        %v3261 = vld [vmem:[%s3255 + $0x28] sm:$0xf]
        %v3262 = vld [vmem:[%s3255 + $0x30] sm:$0xf]
        %v3263 = vld [vmem:[%s3255 + $0x38] sm:$0xf]
        %v3272 = vunpack.c.l.b16 %v3256
        %v3273 = vunpack.c.l.b16 %v3257
        %v3274 = vunpack.c.l.b16 %v3258
        %v3275 = vunpack.c.l.b16 %v3259
        %v3276 = vunpack.c.l.b16 %v3260
        %v3277 = vunpack.c.l.b16 %v3261
        %v3278 = vunpack.c.l.b16 %v3262
        %v3279 = vunpack.c.l.b16 %v3263
        %v3280 = vpack.c.b16 %v3273, %v3272
        %v3281 = vpack.c.b16 %v3275, %v3274
        %v3282 = vpack.c.b16 %v3277, %v3276
        %v3283 = vpack.c.b16 %v3279, %v3278
        %3288 = vst.msk [vmem:[#allocation3 + $0x18] sm:$0xff] %vm2540, %v3280
        %3289 = vst.msk [vmem:[#allocation3 + $0x88] sm:$0xff] %vm2540, %v3281
        %3290 = vst.msk [vmem:[#allocation3 + $0xf8] sm:$0xff] %vm2540, %v3282
        %3291 = vst.msk [vmem:[#allocation3 + $0x168] sm:$0xff] %vm2540, %v3283
        %v3292 = vld [vmem:[%s3255] sm:$0x1f]
        %v3293 = vld [vmem:[%s3255 + $0x8] sm:$0x1f]
        %v3294 = vld [vmem:[%s3255 + $0x10] sm:$0x1f]
        %v3295 = vld [vmem:[%s3255 + $0x18] sm:$0x1f]
        %v3296 = vld [vmem:[%s3255 + $0x20] sm:$0x1f]
        %v3297 = vld [vmem:[%s3255 + $0x28] sm:$0x1f]
        %v3298 = vld [vmem:[%s3255 + $0x30] sm:$0x1f]
        %v3299 = vld [vmem:[%s3255 + $0x38] sm:$0x1f]
        %v3308 = vunpack.c.l.b16 %v3292
        %v3309 = vunpack.c.h.b16 %v3292
        %v3310 = vunpack.c.l.b16 %v3293
        %v3311 = vunpack.c.h.b16 %v3293
        %v3312 = vunpack.c.l.b16 %v3294
        %v3313 = vunpack.c.h.b16 %v3294
        %v3314 = vunpack.c.l.b16 %v3295
        %v3315 = vunpack.c.h.b16 %v3295
        %v3316 = vunpack.c.l.b16 %v3296
        %v3317 = vunpack.c.h.b16 %v3296
        %v3318 = vunpack.c.l.b16 %v3297
        %v3319 = vunpack.c.h.b16 %v3297
        %v3320 = vunpack.c.l.b16 %v3298
        %v3321 = vunpack.c.h.b16 %v3298
        %v3322 = vunpack.c.l.b16 %v3299
        %v3323 = vunpack.c.h.b16 %v3299
        %v3324 = vpack.c.b16 %v3308, %v3308
        %v3325 = vpack.c.b16 %v3309, %v3309
        %v3326 = vpack.c.b16 %v3310, %v3310
        %v3327 = vpack.c.b16 %v3311, %v3311
        %v3328 = vpack.c.b16 %v3312, %v3312
        %v3329 = vpack.c.b16 %v3313, %v3313
        %v3330 = vpack.c.b16 %v3314, %v3314
        %v3331 = vpack.c.b16 %v3315, %v3315
        %v3332 = vpack.c.b16 %v3316, %v3316
        %v3333 = vpack.c.b16 %v3317, %v3317
        %v3334 = vpack.c.b16 %v3318, %v3318
        %v3335 = vpack.c.b16 %v3319, %v3319
        %v3336 = vpack.c.b16 %v3320, %v3320
        %v3337 = vpack.c.b16 %v3321, %v3321
        %v3338 = vpack.c.b16 %v3322, %v3322
        %v3339 = vpack.c.b16 %v3323, %v3323
        %v3341 = vshrl.u32 %v3324, 16
        %v3343 = vrot.slane %v3341, 4
        %v3344 = vshll.u32 %v3324, 16
        %v3346 = vrot.slane %v3344, 5
        %v3347 = vor.u32 %v3343, %v3346
        %v3348 = vrot.slane %v3347, 4
        %v3350 = vshll.u32 %v3325, 16
        %v3352 = vrot.slane %v3350, 5
        %v3353 = vsel %vm2677, %v3348, %v3352
        %v3355 = vshrl.u32 %v3326, 16
        %v3357 = vrot.slane %v3355, 4
        %v3358 = vshll.u32 %v3326, 16
        %v3360 = vrot.slane %v3358, 5
        %v3361 = vor.u32 %v3357, %v3360
        %v3362 = vrot.slane %v3361, 4
        %v3364 = vshll.u32 %v3327, 16
        %v3366 = vrot.slane %v3364, 5
        %v3367 = vsel %vm2677, %v3362, %v3366
        %v3369 = vshrl.u32 %v3328, 16
        %v3371 = vrot.slane %v3369, 4
        %v3372 = vshll.u32 %v3328, 16
        %v3374 = vrot.slane %v3372, 5
        %v3375 = vor.u32 %v3371, %v3374
        %v3376 = vrot.slane %v3375, 4
        %v3378 = vshll.u32 %v3329, 16
        %v3380 = vrot.slane %v3378, 5
        %v3381 = vsel %vm2677, %v3376, %v3380
        %v3383 = vshrl.u32 %v3330, 16
        %v3385 = vrot.slane %v3383, 4
        %v3386 = vshll.u32 %v3330, 16
        %v3388 = vrot.slane %v3386, 5
        %v3389 = vor.u32 %v3385, %v3388
        %v3390 = vrot.slane %v3389, 4
        %v3392 = vshll.u32 %v3331, 16
        %v3394 = vrot.slane %v3392, 5
        %v3395 = vsel %vm2677, %v3390, %v3394
        %v3397 = vshrl.u32 %v3332, 16
        %v3399 = vrot.slane %v3397, 4
        %v3400 = vshll.u32 %v3332, 16
        %v3402 = vrot.slane %v3400, 5
        %v3403 = vor.u32 %v3399, %v3402
        %v3404 = vrot.slane %v3403, 4
        %v3406 = vshll.u32 %v3333, 16
        %v3408 = vrot.slane %v3406, 5
        %v3409 = vsel %vm2677, %v3404, %v3408
        %v3411 = vshrl.u32 %v3334, 16
        %v3413 = vrot.slane %v3411, 4
        %v3414 = vshll.u32 %v3334, 16
        %v3416 = vrot.slane %v3414, 5
        %v3417 = vor.u32 %v3413, %v3416
        %v3418 = vrot.slane %v3417, 4
        %v3420 = vshll.u32 %v3335, 16
        %v3422 = vrot.slane %v3420, 5
        %v3423 = vsel %vm2677, %v3418, %v3422
        %v3425 = vshrl.u32 %v3336, 16
        %v3427 = vrot.slane %v3425, 4
        %v3428 = vshll.u32 %v3336, 16
        %v3430 = vrot.slane %v3428, 5
        %v3431 = vor.u32 %v3427, %v3430
        %v3432 = vrot.slane %v3431, 4
        %v3434 = vshll.u32 %v3337, 16
        %v3436 = vrot.slane %v3434, 5
        %v3437 = vsel %vm2677, %v3432, %v3436
        %v3439 = vshrl.u32 %v3338, 16
        %v3441 = vrot.slane %v3439, 4
        %v3442 = vshll.u32 %v3338, 16
        %v3444 = vrot.slane %v3442, 5
        %v3445 = vor.u32 %v3441, %v3444
        %v3446 = vrot.slane %v3445, 4
        %v3448 = vshll.u32 %v3339, 16
        %v3450 = vrot.slane %v3448, 5
        %v3451 = vsel %vm2677, %v3446, %v3450
        %v3452 = vunpack.c.l.b16 %v3353
        %v3453 = vunpack.c.l.b16 %v3367
        %v3454 = vunpack.c.l.b16 %v3381
        %v3455 = vunpack.c.l.b16 %v3395
        %v3456 = vunpack.c.l.b16 %v3409
        %v3457 = vunpack.c.l.b16 %v3423
        %v3458 = vunpack.c.l.b16 %v3437
        %v3459 = vunpack.c.l.b16 %v3451
        %v3460 = vpack.c.b16 %v3453, %v3452
        %v3461 = vpack.c.b16 %v3455, %v3454
        %v3462 = vpack.c.b16 %v3457, %v3456
        %v3463 = vpack.c.b16 %v3459, %v3458
        %3464 = vrot.lane.b32.xlu0 %v3460, 64
        %v3465 = vpop.permute.xlu0 %3464
        %3466 = vrot.lane.b32.xlu0 %v3461, 64
        %v3467 = vpop.permute.xlu0 %3466
        %3468 = vrot.lane.b32.xlu0 %v3462, 64
        %v3469 = vpop.permute.xlu0 %3468
        %3470 = vrot.lane.b32.xlu0 %v3463, 64
        %v3471 = vpop.permute.xlu0 %3470
        %3476 = vst.msk [vmem:[#allocation3 + $0x18] sm:$0xff] %vm2814, %v3465
        %3477 = vst.msk [vmem:[#allocation3 + $0x88] sm:$0xff] %vm2814, %v3467
        %3478 = vst.msk [vmem:[#allocation3 + $0xf8] sm:$0xff] %vm2814, %v3469
        %3479 = vst.msk [vmem:[#allocation3 + $0x168] sm:$0xff] %vm2814, %v3471
        %v3480 = vld [vmem:[%s3255] sm:$0x1e]
        %v3481 = vld [vmem:[%s3255 + $0x8] sm:$0x1e]
        %v3482 = vld [vmem:[%s3255 + $0x10] sm:$0x1e]
        %v3483 = vld [vmem:[%s3255 + $0x18] sm:$0x1e]
        %v3484 = vld [vmem:[%s3255 + $0x20] sm:$0x1e]
        %v3485 = vld [vmem:[%s3255 + $0x28] sm:$0x1e]
        %v3486 = vld [vmem:[%s3255 + $0x30] sm:$0x1e]
        %v3487 = vld [vmem:[%s3255 + $0x38] sm:$0x1e]
        %v3496 = vunpack.c.l.b16 %v3480
        %v3497 = vunpack.c.h.b16 %v3480
        %v3498 = vunpack.c.l.b16 %v3481
        %v3499 = vunpack.c.h.b16 %v3481
        %v3500 = vunpack.c.l.b16 %v3482
        %v3501 = vunpack.c.h.b16 %v3482
        %v3502 = vunpack.c.l.b16 %v3483
        %v3503 = vunpack.c.h.b16 %v3483
        %v3504 = vunpack.c.l.b16 %v3484
        %v3505 = vunpack.c.h.b16 %v3484
        %v3506 = vunpack.c.l.b16 %v3485
        %v3507 = vunpack.c.h.b16 %v3485
        %v3508 = vunpack.c.l.b16 %v3486
        %v3509 = vunpack.c.h.b16 %v3486
        %v3510 = vunpack.c.l.b16 %v3487
        %v3511 = vunpack.c.h.b16 %v3487
        %v3512 = vpack.c.b16 %v3496, %v3496
        %v3513 = vpack.c.b16 %v3497, %v3497
        %v3514 = vpack.c.b16 %v3498, %v3498
        %v3515 = vpack.c.b16 %v3499, %v3499
        %v3516 = vpack.c.b16 %v3500, %v3500
        %v3517 = vpack.c.b16 %v3501, %v3501
        %v3518 = vpack.c.b16 %v3502, %v3502
        %v3519 = vpack.c.b16 %v3503, %v3503
        %v3520 = vpack.c.b16 %v3504, %v3504
        %v3521 = vpack.c.b16 %v3505, %v3505
        %v3522 = vpack.c.b16 %v3506, %v3506
        %v3523 = vpack.c.b16 %v3507, %v3507
        %v3524 = vpack.c.b16 %v3508, %v3508
        %v3525 = vpack.c.b16 %v3509, %v3509
        %v3526 = vpack.c.b16 %v3510, %v3510
        %v3527 = vpack.c.b16 %v3511, %v3511
        %v3528 = vrot.slane %v3512, 5
        %v3529 = vrot.slane %v3528, 4
        %v3530 = vrot.slane %v3513, 5
        %v3531 = vsel %vm2869, %v3529, %v3530
        %v3532 = vrot.slane %v3514, 5
        %v3533 = vrot.slane %v3532, 4
        %v3534 = vrot.slane %v3515, 5
        %v3535 = vsel %vm2869, %v3533, %v3534
        %v3536 = vrot.slane %v3516, 5
        %v3537 = vrot.slane %v3536, 4
        %v3538 = vrot.slane %v3517, 5
        %v3539 = vsel %vm2869, %v3537, %v3538
        %v3540 = vrot.slane %v3518, 5
        %v3541 = vrot.slane %v3540, 4
        %v3542 = vrot.slane %v3519, 5
        %v3543 = vsel %vm2869, %v3541, %v3542
        %v3544 = vrot.slane %v3520, 5
        %v3545 = vrot.slane %v3544, 4
        %v3546 = vrot.slane %v3521, 5
        %v3547 = vsel %vm2869, %v3545, %v3546
        %v3548 = vrot.slane %v3522, 5
        %v3549 = vrot.slane %v3548, 4
        %v3550 = vrot.slane %v3523, 5
        %v3551 = vsel %vm2869, %v3549, %v3550
        %v3552 = vrot.slane %v3524, 5
        %v3553 = vrot.slane %v3552, 4
        %v3554 = vrot.slane %v3525, 5
        %v3555 = vsel %vm2869, %v3553, %v3554
        %v3556 = vrot.slane %v3526, 5
        %v3557 = vrot.slane %v3556, 4
        %v3558 = vrot.slane %v3527, 5
        %v3559 = vsel %vm2869, %v3557, %v3558
        %v3560 = vunpack.c.l.b16 %v3531
        %v3561 = vunpack.c.l.b16 %v3535
        %v3562 = vunpack.c.l.b16 %v3539
        %v3563 = vunpack.c.l.b16 %v3543
        %v3564 = vunpack.c.l.b16 %v3547
        %v3565 = vunpack.c.l.b16 %v3551
        %v3566 = vunpack.c.l.b16 %v3555
        %v3567 = vunpack.c.l.b16 %v3559
        %v3568 = vpack.c.b16 %v3561, %v3560
        %v3569 = vpack.c.b16 %v3563, %v3562
        %v3570 = vpack.c.b16 %v3565, %v3564
        %v3571 = vpack.c.b16 %v3567, %v3566
        %3576 = vst.msk [vmem:[#allocation3 + $0x20] sm:$0xff] %vm2540, %v3568
        %3577 = vst.msk [vmem:[#allocation3 + $0x90] sm:$0xff] %vm2540, %v3569
        %3578 = vst.msk [vmem:[#allocation3 + $0x100] sm:$0xff] %vm2540, %v3570
        %3579 = vst.msk [vmem:[#allocation3 + $0x170] sm:$0xff] %vm2540, %v3571
        %s3580 = scalar_lea.vmem [#allocation2], 80
        %v3581 = vld [vmem:[%s3580] sm:$0xf]
        %v3582 = vld [vmem:[%s3580 + $0x8] sm:$0xf]
        %v3583 = vld [vmem:[%s3580 + $0x10] sm:$0xf]
        %v3584 = vld [vmem:[%s3580 + $0x18] sm:$0xf]
        %v3585 = vld [vmem:[%s3580 + $0x20] sm:$0xf]
        %v3586 = vld [vmem:[%s3580 + $0x28] sm:$0xf]
        %v3587 = vld [vmem:[%s3580 + $0x30] sm:$0xf]
        %v3588 = vld [vmem:[%s3580 + $0x38] sm:$0xf]
        %v3597 = vunpack.c.l.b16 %v3581
        %v3598 = vunpack.c.l.b16 %v3582
        %v3599 = vunpack.c.l.b16 %v3583
        %v3600 = vunpack.c.l.b16 %v3584
        %v3601 = vunpack.c.l.b16 %v3585
        %v3602 = vunpack.c.l.b16 %v3586
        %v3603 = vunpack.c.l.b16 %v3587
        %v3604 = vunpack.c.l.b16 %v3588
        %v3605 = vpack.c.b16 %v3598, %v3597
        %v3606 = vpack.c.b16 %v3600, %v3599
        %v3607 = vpack.c.b16 %v3602, %v3601
        %v3608 = vpack.c.b16 %v3604, %v3603
        %3609 = vrot.lane.b32.xlu0 %v3605, 64
        %v3610 = vpop.permute.xlu0 %3609
        %3611 = vrot.lane.b32.xlu0 %v3606, 64
        %v3612 = vpop.permute.xlu0 %3611
        %3613 = vrot.lane.b32.xlu0 %v3607, 64
        %v3614 = vpop.permute.xlu0 %3613
        %3615 = vrot.lane.b32.xlu0 %v3608, 64
        %v3616 = vpop.permute.xlu0 %3615
        %3621 = vst.msk [vmem:[#allocation3 + $0x20] sm:$0xff] %vm2814, %v3610
        %3622 = vst.msk [vmem:[#allocation3 + $0x90] sm:$0xff] %vm2814, %v3612
        %3623 = vst.msk [vmem:[#allocation3 + $0x100] sm:$0xff] %vm2814, %v3614
        %3624 = vst.msk [vmem:[#allocation3 + $0x170] sm:$0xff] %vm2814, %v3616
        %v3625 = vld [vmem:[%s3580] sm:$0x1f]
        %v3626 = vld [vmem:[%s3580 + $0x8] sm:$0x1f]
        %v3627 = vld [vmem:[%s3580 + $0x10] sm:$0x1f]
        %v3628 = vld [vmem:[%s3580 + $0x18] sm:$0x1f]
        %v3629 = vld [vmem:[%s3580 + $0x20] sm:$0x1f]
        %v3630 = vld [vmem:[%s3580 + $0x28] sm:$0x1f]
        %v3631 = vld [vmem:[%s3580 + $0x30] sm:$0x1f]
        %v3632 = vld [vmem:[%s3580 + $0x38] sm:$0x1f]
        %v3641 = vunpack.c.l.b16 %v3625
        %v3642 = vunpack.c.h.b16 %v3625
        %v3643 = vunpack.c.l.b16 %v3626
        %v3644 = vunpack.c.h.b16 %v3626
        %v3645 = vunpack.c.l.b16 %v3627
        %v3646 = vunpack.c.h.b16 %v3627
        %v3647 = vunpack.c.l.b16 %v3628
        %v3648 = vunpack.c.h.b16 %v3628
        %v3649 = vunpack.c.l.b16 %v3629
        %v3650 = vunpack.c.h.b16 %v3629
        %v3651 = vunpack.c.l.b16 %v3630
        %v3652 = vunpack.c.h.b16 %v3630
        %v3653 = vunpack.c.l.b16 %v3631
        %v3654 = vunpack.c.h.b16 %v3631
        %v3655 = vunpack.c.l.b16 %v3632
        %v3656 = vunpack.c.h.b16 %v3632
        %v3657 = vpack.c.b16 %v3641, %v3641
        %v3658 = vpack.c.b16 %v3642, %v3642
        %v3659 = vpack.c.b16 %v3643, %v3643
        %v3660 = vpack.c.b16 %v3644, %v3644
        %v3661 = vpack.c.b16 %v3645, %v3645
        %v3662 = vpack.c.b16 %v3646, %v3646
        %v3663 = vpack.c.b16 %v3647, %v3647
        %v3664 = vpack.c.b16 %v3648, %v3648
        %v3665 = vpack.c.b16 %v3649, %v3649
        %v3666 = vpack.c.b16 %v3650, %v3650
        %v3667 = vpack.c.b16 %v3651, %v3651
        %v3668 = vpack.c.b16 %v3652, %v3652
        %v3669 = vpack.c.b16 %v3653, %v3653
        %v3670 = vpack.c.b16 %v3654, %v3654
        %v3671 = vpack.c.b16 %v3655, %v3655
        %v3672 = vpack.c.b16 %v3656, %v3656
        %v3674 = vshrl.u32 %v3657, 16
        %v3676 = vrot.slane %v3674, 4
        %v3677 = vshll.u32 %v3657, 16
        %v3679 = vrot.slane %v3677, 5
        %v3680 = vor.u32 %v3676, %v3679
        %v3681 = vrot.slane %v3680, 4
        %v3683 = vshll.u32 %v3658, 16
        %v3685 = vrot.slane %v3683, 5
        %v3686 = vsel %vm2677, %v3681, %v3685
        %v3688 = vshrl.u32 %v3659, 16
        %v3690 = vrot.slane %v3688, 4
        %v3691 = vshll.u32 %v3659, 16
        %v3693 = vrot.slane %v3691, 5
        %v3694 = vor.u32 %v3690, %v3693
        %v3695 = vrot.slane %v3694, 4
        %v3697 = vshll.u32 %v3660, 16
        %v3699 = vrot.slane %v3697, 5
        %v3700 = vsel %vm2677, %v3695, %v3699
        %v3702 = vshrl.u32 %v3661, 16
        %v3704 = vrot.slane %v3702, 4
        %v3705 = vshll.u32 %v3661, 16
        %v3707 = vrot.slane %v3705, 5
        %v3708 = vor.u32 %v3704, %v3707
        %v3709 = vrot.slane %v3708, 4
        %v3711 = vshll.u32 %v3662, 16
        %v3713 = vrot.slane %v3711, 5
        %v3714 = vsel %vm2677, %v3709, %v3713
        %v3716 = vshrl.u32 %v3663, 16
        %v3718 = vrot.slane %v3716, 4
        %v3719 = vshll.u32 %v3663, 16
        %v3721 = vrot.slane %v3719, 5
        %v3722 = vor.u32 %v3718, %v3721
        %v3723 = vrot.slane %v3722, 4
        %v3725 = vshll.u32 %v3664, 16
        %v3727 = vrot.slane %v3725, 5
        %v3728 = vsel %vm2677, %v3723, %v3727
        %v3730 = vshrl.u32 %v3665, 16
        %v3732 = vrot.slane %v3730, 4
        %v3733 = vshll.u32 %v3665, 16
        %v3735 = vrot.slane %v3733, 5
        %v3736 = vor.u32 %v3732, %v3735
        %v3737 = vrot.slane %v3736, 4
        %v3739 = vshll.u32 %v3666, 16
        %v3741 = vrot.slane %v3739, 5
        %v3742 = vsel %vm2677, %v3737, %v3741
        %v3744 = vshrl.u32 %v3667, 16
        %v3746 = vrot.slane %v3744, 4
        %v3747 = vshll.u32 %v3667, 16
        %v3749 = vrot.slane %v3747, 5
        %v3750 = vor.u32 %v3746, %v3749
        %v3751 = vrot.slane %v3750, 4
        %v3753 = vshll.u32 %v3668, 16
        %v3755 = vrot.slane %v3753, 5
        %v3756 = vsel %vm2677, %v3751, %v3755
        %v3758 = vshrl.u32 %v3669, 16
        %v3760 = vrot.slane %v3758, 4
        %v3761 = vshll.u32 %v3669, 16
        %v3763 = vrot.slane %v3761, 5
        %v3764 = vor.u32 %v3760, %v3763
        %v3765 = vrot.slane %v3764, 4
        %v3767 = vshll.u32 %v3670, 16
        %v3769 = vrot.slane %v3767, 5
        %v3770 = vsel %vm2677, %v3765, %v3769
        %v3772 = vshrl.u32 %v3671, 16
        %v3774 = vrot.slane %v3772, 4
        %v3775 = vshll.u32 %v3671, 16
        %v3777 = vrot.slane %v3775, 5
        %v3778 = vor.u32 %v3774, %v3777
        %v3779 = vrot.slane %v3778, 4
        %v3781 = vshll.u32 %v3672, 16
        %v3783 = vrot.slane %v3781, 5
        %v3784 = vsel %vm2677, %v3779, %v3783
        %v3785 = vunpack.c.l.b16 %v3686
        %v3786 = vunpack.c.l.b16 %v3700
        %v3787 = vunpack.c.l.b16 %v3714
        %v3788 = vunpack.c.l.b16 %v3728
        %v3789 = vunpack.c.l.b16 %v3742
        %v3790 = vunpack.c.l.b16 %v3756
        %v3791 = vunpack.c.l.b16 %v3770
        %v3792 = vunpack.c.l.b16 %v3784
        %v3793 = vpack.c.b16 %v3786, %v3785
        %v3794 = vpack.c.b16 %v3788, %v3787
        %v3795 = vpack.c.b16 %v3790, %v3789
        %v3796 = vpack.c.b16 %v3792, %v3791
        %3801 = vst.msk [vmem:[#allocation3 + $0x28] sm:$0xff] %vm2540, %v3793
        %3802 = vst.msk [vmem:[#allocation3 + $0x98] sm:$0xff] %vm2540, %v3794
        %3803 = vst.msk [vmem:[#allocation3 + $0x108] sm:$0xff] %vm2540, %v3795
        %3804 = vst.msk [vmem:[#allocation3 + $0x178] sm:$0xff] %vm2540, %v3796
        %v3805 = vld [vmem:[%s3580] sm:$0x1e]
        %v3806 = vld [vmem:[%s3580 + $0x8] sm:$0x1e]
        %v3807 = vld [vmem:[%s3580 + $0x10] sm:$0x1e]
        %v3808 = vld [vmem:[%s3580 + $0x18] sm:$0x1e]
        %v3809 = vld [vmem:[%s3580 + $0x20] sm:$0x1e]
        %v3810 = vld [vmem:[%s3580 + $0x28] sm:$0x1e]
        %v3811 = vld [vmem:[%s3580 + $0x30] sm:$0x1e]
        %v3812 = vld [vmem:[%s3580 + $0x38] sm:$0x1e]
        %v3821 = vunpack.c.l.b16 %v3805
        %v3822 = vunpack.c.h.b16 %v3805
        %v3823 = vunpack.c.l.b16 %v3806
        %v3824 = vunpack.c.h.b16 %v3806
        %v3825 = vunpack.c.l.b16 %v3807
        %v3826 = vunpack.c.h.b16 %v3807
        %v3827 = vunpack.c.l.b16 %v3808
        %v3828 = vunpack.c.h.b16 %v3808
        %v3829 = vunpack.c.l.b16 %v3809
        %v3830 = vunpack.c.h.b16 %v3809
        %v3831 = vunpack.c.l.b16 %v3810
        %v3832 = vunpack.c.h.b16 %v3810
        %v3833 = vunpack.c.l.b16 %v3811
        %v3834 = vunpack.c.h.b16 %v3811
        %v3835 = vunpack.c.l.b16 %v3812
        %v3836 = vunpack.c.h.b16 %v3812
        %v3837 = vpack.c.b16 %v3821, %v3821
        %v3838 = vpack.c.b16 %v3822, %v3822
        %v3839 = vpack.c.b16 %v3823, %v3823
        %v3840 = vpack.c.b16 %v3824, %v3824
        %v3841 = vpack.c.b16 %v3825, %v3825
        %v3842 = vpack.c.b16 %v3826, %v3826
        %v3843 = vpack.c.b16 %v3827, %v3827
        %v3844 = vpack.c.b16 %v3828, %v3828
        %v3845 = vpack.c.b16 %v3829, %v3829
        %v3846 = vpack.c.b16 %v3830, %v3830
        %v3847 = vpack.c.b16 %v3831, %v3831
        %v3848 = vpack.c.b16 %v3832, %v3832
        %v3849 = vpack.c.b16 %v3833, %v3833
        %v3850 = vpack.c.b16 %v3834, %v3834
        %v3851 = vpack.c.b16 %v3835, %v3835
        %v3852 = vpack.c.b16 %v3836, %v3836
        %v3853 = vrot.slane %v3837, 5
        %v3854 = vrot.slane %v3853, 4
        %v3855 = vrot.slane %v3838, 5
        %v3856 = vsel %vm2869, %v3854, %v3855
        %v3857 = vrot.slane %v3839, 5
        %v3858 = vrot.slane %v3857, 4
        %v3859 = vrot.slane %v3840, 5
        %v3860 = vsel %vm2869, %v3858, %v3859
        %v3861 = vrot.slane %v3841, 5
        %v3862 = vrot.slane %v3861, 4
        %v3863 = vrot.slane %v3842, 5
        %v3864 = vsel %vm2869, %v3862, %v3863
        %v3865 = vrot.slane %v3843, 5
        %v3866 = vrot.slane %v3865, 4
        %v3867 = vrot.slane %v3844, 5
        %v3868 = vsel %vm2869, %v3866, %v3867
        %v3869 = vrot.slane %v3845, 5
        %v3870 = vrot.slane %v3869, 4
        %v3871 = vrot.slane %v3846, 5
        %v3872 = vsel %vm2869, %v3870, %v3871
        %v3873 = vrot.slane %v3847, 5
        %v3874 = vrot.slane %v3873, 4
        %v3875 = vrot.slane %v3848, 5
        %v3876 = vsel %vm2869, %v3874, %v3875
        %v3877 = vrot.slane %v3849, 5
        %v3878 = vrot.slane %v3877, 4
        %v3879 = vrot.slane %v3850, 5
        %v3880 = vsel %vm2869, %v3878, %v3879
        %v3881 = vrot.slane %v3851, 5
        %v3882 = vrot.slane %v3881, 4
        %v3883 = vrot.slane %v3852, 5
        %v3884 = vsel %vm2869, %v3882, %v3883
        %v3885 = vunpack.c.l.b16 %v3856
        %v3886 = vunpack.c.l.b16 %v3860
        %v3887 = vunpack.c.l.b16 %v3864
        %v3888 = vunpack.c.l.b16 %v3868
        %v3889 = vunpack.c.l.b16 %v3872
        %v3890 = vunpack.c.l.b16 %v3876
        %v3891 = vunpack.c.l.b16 %v3880
        %v3892 = vunpack.c.l.b16 %v3884
        %v3893 = vpack.c.b16 %v3886, %v3885
        %v3894 = vpack.c.b16 %v3888, %v3887
        %v3895 = vpack.c.b16 %v3890, %v3889
        %v3896 = vpack.c.b16 %v3892, %v3891
        %3897 = vrot.lane.b32.xlu0 %v3893, 64
        %v3898 = vpop.permute.xlu0 %3897
        %3899 = vrot.lane.b32.xlu0 %v3894, 64
        %v3900 = vpop.permute.xlu0 %3899
        %3901 = vrot.lane.b32.xlu0 %v3895, 64
        %v3902 = vpop.permute.xlu0 %3901
        %3903 = vrot.lane.b32.xlu0 %v3896, 64
        %v3904 = vpop.permute.xlu0 %3903
        %3909 = vst.msk [vmem:[#allocation3 + $0x28] sm:$0xff] %vm2814, %v3898
        %3910 = vst.msk [vmem:[#allocation3 + $0x98] sm:$0xff] %vm2814, %v3900
        %3911 = vst.msk [vmem:[#allocation3 + $0x108] sm:$0xff] %vm2814, %v3902
        %3912 = vst.msk [vmem:[#allocation3 + $0x178] sm:$0xff] %vm2814, %v3904
        %s3913 = scalar_lea.vmem [#allocation2], 88
        %v3914 = vld [vmem:[%s3913] sm:$0xf]
        %v3915 = vld [vmem:[%s3913 + $0x8] sm:$0xf]
        %v3916 = vld [vmem:[%s3913 + $0x10] sm:$0xf]
        %v3917 = vld [vmem:[%s3913 + $0x18] sm:$0xf]
        %v3918 = vld [vmem:[%s3913 + $0x20] sm:$0xf]
        %v3919 = vld [vmem:[%s3913 + $0x28] sm:$0xf]
        %v3920 = vld [vmem:[%s3913 + $0x30] sm:$0xf]
        %v3921 = vld [vmem:[%s3913 + $0x38] sm:$0xf]
        %v3930 = vunpack.c.l.b16 %v3914
        %v3931 = vunpack.c.l.b16 %v3915
        %v3932 = vunpack.c.l.b16 %v3916
        %v3933 = vunpack.c.l.b16 %v3917
        %v3934 = vunpack.c.l.b16 %v3918
        %v3935 = vunpack.c.l.b16 %v3919
        %v3936 = vunpack.c.l.b16 %v3920
        %v3937 = vunpack.c.l.b16 %v3921
        %v3938 = vpack.c.b16 %v3931, %v3930
        %v3939 = vpack.c.b16 %v3933, %v3932
        %v3940 = vpack.c.b16 %v3935, %v3934
        %v3941 = vpack.c.b16 %v3937, %v3936
        %3946 = vst.msk [vmem:[#allocation3 + $0x30] sm:$0xff] %vm2540, %v3938
        %3947 = vst.msk [vmem:[#allocation3 + $0xa0] sm:$0xff] %vm2540, %v3939
        %3948 = vst.msk [vmem:[#allocation3 + $0x110] sm:$0xff] %vm2540, %v3940
        %3949 = vst.msk [vmem:[#allocation3 + $0x180] sm:$0xff] %vm2540, %v3941
        %v3950 = vld [vmem:[%s3913] sm:$0x1f]
        %v3951 = vld [vmem:[%s3913 + $0x8] sm:$0x1f]
        %v3952 = vld [vmem:[%s3913 + $0x10] sm:$0x1f]
        %v3953 = vld [vmem:[%s3913 + $0x18] sm:$0x1f]
        %v3954 = vld [vmem:[%s3913 + $0x20] sm:$0x1f]
        %v3955 = vld [vmem:[%s3913 + $0x28] sm:$0x1f]
        %v3956 = vld [vmem:[%s3913 + $0x30] sm:$0x1f]
        %v3957 = vld [vmem:[%s3913 + $0x38] sm:$0x1f]
        %v3966 = vunpack.c.l.b16 %v3950
        %v3967 = vunpack.c.h.b16 %v3950
        %v3968 = vunpack.c.l.b16 %v3951
        %v3969 = vunpack.c.h.b16 %v3951
        %v3970 = vunpack.c.l.b16 %v3952
        %v3971 = vunpack.c.h.b16 %v3952
        %v3972 = vunpack.c.l.b16 %v3953
        %v3973 = vunpack.c.h.b16 %v3953
        %v3974 = vunpack.c.l.b16 %v3954
        %v3975 = vunpack.c.h.b16 %v3954
        %v3976 = vunpack.c.l.b16 %v3955
        %v3977 = vunpack.c.h.b16 %v3955
        %v3978 = vunpack.c.l.b16 %v3956
        %v3979 = vunpack.c.h.b16 %v3956
        %v3980 = vunpack.c.l.b16 %v3957
        %v3981 = vunpack.c.h.b16 %v3957
        %v3982 = vpack.c.b16 %v3966, %v3966
        %v3983 = vpack.c.b16 %v3967, %v3967
        %v3984 = vpack.c.b16 %v3968, %v3968
        %v3985 = vpack.c.b16 %v3969, %v3969
        %v3986 = vpack.c.b16 %v3970, %v3970
        %v3987 = vpack.c.b16 %v3971, %v3971
        %v3988 = vpack.c.b16 %v3972, %v3972
        %v3989 = vpack.c.b16 %v3973, %v3973
        %v3990 = vpack.c.b16 %v3974, %v3974
        %v3991 = vpack.c.b16 %v3975, %v3975
        %v3992 = vpack.c.b16 %v3976, %v3976
        %v3993 = vpack.c.b16 %v3977, %v3977
        %v3994 = vpack.c.b16 %v3978, %v3978
        %v3995 = vpack.c.b16 %v3979, %v3979
        %v3996 = vpack.c.b16 %v3980, %v3980
        %v3997 = vpack.c.b16 %v3981, %v3981
        %v3999 = vshrl.u32 %v3982, 16
        %v4001 = vrot.slane %v3999, 4
        %v4002 = vshll.u32 %v3982, 16
        %v4004 = vrot.slane %v4002, 5
        %v4005 = vor.u32 %v4001, %v4004
        %v4006 = vrot.slane %v4005, 4
        %v4008 = vshll.u32 %v3983, 16
        %v4010 = vrot.slane %v4008, 5
        %v4011 = vsel %vm2677, %v4006, %v4010
        %v4013 = vshrl.u32 %v3984, 16
        %v4015 = vrot.slane %v4013, 4
        %v4016 = vshll.u32 %v3984, 16
        %v4018 = vrot.slane %v4016, 5
        %v4019 = vor.u32 %v4015, %v4018
        %v4020 = vrot.slane %v4019, 4
        %v4022 = vshll.u32 %v3985, 16
        %v4024 = vrot.slane %v4022, 5
        %v4025 = vsel %vm2677, %v4020, %v4024
        %v4027 = vshrl.u32 %v3986, 16
        %v4029 = vrot.slane %v4027, 4
        %v4030 = vshll.u32 %v3986, 16
        %v4032 = vrot.slane %v4030, 5
        %v4033 = vor.u32 %v4029, %v4032
        %v4034 = vrot.slane %v4033, 4
        %v4036 = vshll.u32 %v3987, 16
        %v4038 = vrot.slane %v4036, 5
        %v4039 = vsel %vm2677, %v4034, %v4038
        %v4041 = vshrl.u32 %v3988, 16
        %v4043 = vrot.slane %v4041, 4
        %v4044 = vshll.u32 %v3988, 16
        %v4046 = vrot.slane %v4044, 5
        %v4047 = vor.u32 %v4043, %v4046
        %v4048 = vrot.slane %v4047, 4
        %v4050 = vshll.u32 %v3989, 16
        %v4052 = vrot.slane %v4050, 5
        %v4053 = vsel %vm2677, %v4048, %v4052
        %v4055 = vshrl.u32 %v3990, 16
        %v4057 = vrot.slane %v4055, 4
        %v4058 = vshll.u32 %v3990, 16
        %v4060 = vrot.slane %v4058, 5
        %v4061 = vor.u32 %v4057, %v4060
        %v4062 = vrot.slane %v4061, 4
        %v4064 = vshll.u32 %v3991, 16
        %v4066 = vrot.slane %v4064, 5
        %v4067 = vsel %vm2677, %v4062, %v4066
        %v4069 = vshrl.u32 %v3992, 16
        %v4071 = vrot.slane %v4069, 4
        %v4072 = vshll.u32 %v3992, 16
        %v4074 = vrot.slane %v4072, 5
        %v4075 = vor.u32 %v4071, %v4074
        %v4076 = vrot.slane %v4075, 4
        %v4078 = vshll.u32 %v3993, 16
        %v4080 = vrot.slane %v4078, 5
        %v4081 = vsel %vm2677, %v4076, %v4080
        %v4083 = vshrl.u32 %v3994, 16
        %v4085 = vrot.slane %v4083, 4
        %v4086 = vshll.u32 %v3994, 16
        %v4088 = vrot.slane %v4086, 5
        %v4089 = vor.u32 %v4085, %v4088
        %v4090 = vrot.slane %v4089, 4
        %v4092 = vshll.u32 %v3995, 16
        %v4094 = vrot.slane %v4092, 5
        %v4095 = vsel %vm2677, %v4090, %v4094
        %v4097 = vshrl.u32 %v3996, 16
        %v4099 = vrot.slane %v4097, 4
        %v4100 = vshll.u32 %v3996, 16
        %v4102 = vrot.slane %v4100, 5
        %v4103 = vor.u32 %v4099, %v4102
        %v4104 = vrot.slane %v4103, 4
        %v4106 = vshll.u32 %v3997, 16
        %v4108 = vrot.slane %v4106, 5
        %v4109 = vsel %vm2677, %v4104, %v4108
        %v4110 = vunpack.c.l.b16 %v4011
        %v4111 = vunpack.c.l.b16 %v4025
        %v4112 = vunpack.c.l.b16 %v4039
        %v4113 = vunpack.c.l.b16 %v4053
        %v4114 = vunpack.c.l.b16 %v4067
        %v4115 = vunpack.c.l.b16 %v4081
        %v4116 = vunpack.c.l.b16 %v4095
        %v4117 = vunpack.c.l.b16 %v4109
        %v4118 = vpack.c.b16 %v4111, %v4110
        %v4119 = vpack.c.b16 %v4113, %v4112
        %v4120 = vpack.c.b16 %v4115, %v4114
        %v4121 = vpack.c.b16 %v4117, %v4116
        %4122 = vrot.lane.b32.xlu0 %v4118, 64
        %v4123 = vpop.permute.xlu0 %4122
        %4124 = vrot.lane.b32.xlu0 %v4119, 64
        %v4125 = vpop.permute.xlu0 %4124
        %4126 = vrot.lane.b32.xlu0 %v4120, 64
        %v4127 = vpop.permute.xlu0 %4126
        %4128 = vrot.lane.b32.xlu0 %v4121, 64
        %v4129 = vpop.permute.xlu0 %4128
        %4134 = vst.msk [vmem:[#allocation3 + $0x30] sm:$0xff] %vm2814, %v4123
        %4135 = vst.msk [vmem:[#allocation3 + $0xa0] sm:$0xff] %vm2814, %v4125
        %4136 = vst.msk [vmem:[#allocation3 + $0x110] sm:$0xff] %vm2814, %v4127
        %4137 = vst.msk [vmem:[#allocation3 + $0x180] sm:$0xff] %vm2814, %v4129
        %v4138 = vld [vmem:[%s3913] sm:$0x1e]
        %v4139 = vld [vmem:[%s3913 + $0x8] sm:$0x1e]
        %v4140 = vld [vmem:[%s3913 + $0x10] sm:$0x1e]
        %v4141 = vld [vmem:[%s3913 + $0x18] sm:$0x1e]
        %v4142 = vld [vmem:[%s3913 + $0x20] sm:$0x1e]
        %v4143 = vld [vmem:[%s3913 + $0x28] sm:$0x1e]
        %v4144 = vld [vmem:[%s3913 + $0x30] sm:$0x1e]
        %v4145 = vld [vmem:[%s3913 + $0x38] sm:$0x1e]
        %v4154 = vunpack.c.l.b16 %v4138
        %v4155 = vunpack.c.h.b16 %v4138
        %v4156 = vunpack.c.l.b16 %v4139
        %v4157 = vunpack.c.h.b16 %v4139
        %v4158 = vunpack.c.l.b16 %v4140
        %v4159 = vunpack.c.h.b16 %v4140
        %v4160 = vunpack.c.l.b16 %v4141
        %v4161 = vunpack.c.h.b16 %v4141
        %v4162 = vunpack.c.l.b16 %v4142
        %v4163 = vunpack.c.h.b16 %v4142
        %v4164 = vunpack.c.l.b16 %v4143
        %v4165 = vunpack.c.h.b16 %v4143
        %v4166 = vunpack.c.l.b16 %v4144
        %v4167 = vunpack.c.h.b16 %v4144
        %v4168 = vunpack.c.l.b16 %v4145
        %v4169 = vunpack.c.h.b16 %v4145
        %v4170 = vpack.c.b16 %v4154, %v4154
        %v4171 = vpack.c.b16 %v4155, %v4155
        %v4172 = vpack.c.b16 %v4156, %v4156
        %v4173 = vpack.c.b16 %v4157, %v4157
        %v4174 = vpack.c.b16 %v4158, %v4158
        %v4175 = vpack.c.b16 %v4159, %v4159
        %v4176 = vpack.c.b16 %v4160, %v4160
        %v4177 = vpack.c.b16 %v4161, %v4161
        %v4178 = vpack.c.b16 %v4162, %v4162
        %v4179 = vpack.c.b16 %v4163, %v4163
        %v4180 = vpack.c.b16 %v4164, %v4164
        %v4181 = vpack.c.b16 %v4165, %v4165
        %v4182 = vpack.c.b16 %v4166, %v4166
        %v4183 = vpack.c.b16 %v4167, %v4167
        %v4184 = vpack.c.b16 %v4168, %v4168
        %v4185 = vpack.c.b16 %v4169, %v4169
        %v4186 = vrot.slane %v4170, 5
        %v4187 = vrot.slane %v4186, 4
        %v4188 = vrot.slane %v4171, 5
        %v4189 = vsel %vm2869, %v4187, %v4188
        %v4190 = vrot.slane %v4172, 5
        %v4191 = vrot.slane %v4190, 4
        %v4192 = vrot.slane %v4173, 5
        %v4193 = vsel %vm2869, %v4191, %v4192
        %v4194 = vrot.slane %v4174, 5
        %v4195 = vrot.slane %v4194, 4
        %v4196 = vrot.slane %v4175, 5
        %v4197 = vsel %vm2869, %v4195, %v4196
        %v4198 = vrot.slane %v4176, 5
        %v4199 = vrot.slane %v4198, 4
        %v4200 = vrot.slane %v4177, 5
        %v4201 = vsel %vm2869, %v4199, %v4200
        %v4202 = vrot.slane %v4178, 5
        %v4203 = vrot.slane %v4202, 4
        %v4204 = vrot.slane %v4179, 5
        %v4205 = vsel %vm2869, %v4203, %v4204
        %v4206 = vrot.slane %v4180, 5
        %v4207 = vrot.slane %v4206, 4
        %v4208 = vrot.slane %v4181, 5
        %v4209 = vsel %vm2869, %v4207, %v4208
        %v4210 = vrot.slane %v4182, 5
        %v4211 = vrot.slane %v4210, 4
        %v4212 = vrot.slane %v4183, 5
        %v4213 = vsel %vm2869, %v4211, %v4212
        %v4214 = vrot.slane %v4184, 5
        %v4215 = vrot.slane %v4214, 4
        %v4216 = vrot.slane %v4185, 5
        %v4217 = vsel %vm2869, %v4215, %v4216
        %v4218 = vunpack.c.l.b16 %v4189
        %v4219 = vunpack.c.l.b16 %v4193
        %v4220 = vunpack.c.l.b16 %v4197
        %v4221 = vunpack.c.l.b16 %v4201
        %v4222 = vunpack.c.l.b16 %v4205
        %v4223 = vunpack.c.l.b16 %v4209
        %v4224 = vunpack.c.l.b16 %v4213
        %v4225 = vunpack.c.l.b16 %v4217
        %v4226 = vpack.c.b16 %v4219, %v4218
        %v4227 = vpack.c.b16 %v4221, %v4220
        %v4228 = vpack.c.b16 %v4223, %v4222
        %v4229 = vpack.c.b16 %v4225, %v4224
        %4234 = vst.msk [vmem:[#allocation3 + $0x38] sm:$0xff] %vm2540, %v4226
        %4235 = vst.msk [vmem:[#allocation3 + $0xa8] sm:$0xff] %vm2540, %v4227
        %4236 = vst.msk [vmem:[#allocation3 + $0x118] sm:$0xff] %vm2540, %v4228
        %4237 = vst.msk [vmem:[#allocation3 + $0x188] sm:$0xff] %vm2540, %v4229
        %s4238 = scalar_lea.vmem [#allocation2], 96
        %v4239 = vld [vmem:[%s4238] sm:$0xf]
        %v4240 = vld [vmem:[%s4238 + $0x8] sm:$0xf]
        %v4241 = vld [vmem:[%s4238 + $0x10] sm:$0xf]
        %v4242 = vld [vmem:[%s4238 + $0x18] sm:$0xf]
        %v4243 = vld [vmem:[%s4238 + $0x20] sm:$0xf]
        %v4244 = vld [vmem:[%s4238 + $0x28] sm:$0xf]
        %v4245 = vld [vmem:[%s4238 + $0x30] sm:$0xf]
        %v4246 = vld [vmem:[%s4238 + $0x38] sm:$0xf]
        %v4255 = vunpack.c.l.b16 %v4239
        %v4256 = vunpack.c.l.b16 %v4240
        %v4257 = vunpack.c.l.b16 %v4241
        %v4258 = vunpack.c.l.b16 %v4242
        %v4259 = vunpack.c.l.b16 %v4243
        %v4260 = vunpack.c.l.b16 %v4244
        %v4261 = vunpack.c.l.b16 %v4245
        %v4262 = vunpack.c.l.b16 %v4246
        %v4263 = vpack.c.b16 %v4256, %v4255
        %v4264 = vpack.c.b16 %v4258, %v4257
        %v4265 = vpack.c.b16 %v4260, %v4259
        %v4266 = vpack.c.b16 %v4262, %v4261
        %4267 = vrot.lane.b32.xlu0 %v4263, 64
        %v4268 = vpop.permute.xlu0 %4267
        %4269 = vrot.lane.b32.xlu0 %v4264, 64
        %v4270 = vpop.permute.xlu0 %4269
        %4271 = vrot.lane.b32.xlu0 %v4265, 64
        %v4272 = vpop.permute.xlu0 %4271
        %4273 = vrot.lane.b32.xlu0 %v4266, 64
        %v4274 = vpop.permute.xlu0 %4273
        %4279 = vst.msk [vmem:[#allocation3 + $0x38] sm:$0xff] %vm2814, %v4268
        %4280 = vst.msk [vmem:[#allocation3 + $0xa8] sm:$0xff] %vm2814, %v4270
        %4281 = vst.msk [vmem:[#allocation3 + $0x118] sm:$0xff] %vm2814, %v4272
        %4282 = vst.msk [vmem:[#allocation3 + $0x188] sm:$0xff] %vm2814, %v4274
        %v4283 = vld [vmem:[%s4238] sm:$0x1f]
        %v4284 = vld [vmem:[%s4238 + $0x8] sm:$0x1f]
        %v4285 = vld [vmem:[%s4238 + $0x10] sm:$0x1f]
        %v4286 = vld [vmem:[%s4238 + $0x18] sm:$0x1f]
        %v4287 = vld [vmem:[%s4238 + $0x20] sm:$0x1f]
        %v4288 = vld [vmem:[%s4238 + $0x28] sm:$0x1f]
        %v4289 = vld [vmem:[%s4238 + $0x30] sm:$0x1f]
        %v4290 = vld [vmem:[%s4238 + $0x38] sm:$0x1f]
        %v4299 = vunpack.c.l.b16 %v4283
        %v4300 = vunpack.c.h.b16 %v4283
        %v4301 = vunpack.c.l.b16 %v4284
        %v4302 = vunpack.c.h.b16 %v4284
        %v4303 = vunpack.c.l.b16 %v4285
        %v4304 = vunpack.c.h.b16 %v4285
        %v4305 = vunpack.c.l.b16 %v4286
        %v4306 = vunpack.c.h.b16 %v4286
        %v4307 = vunpack.c.l.b16 %v4287
        %v4308 = vunpack.c.h.b16 %v4287
        %v4309 = vunpack.c.l.b16 %v4288
        %v4310 = vunpack.c.h.b16 %v4288
        %v4311 = vunpack.c.l.b16 %v4289
        %v4312 = vunpack.c.h.b16 %v4289
        %v4313 = vunpack.c.l.b16 %v4290
        %v4314 = vunpack.c.h.b16 %v4290
        %v4315 = vpack.c.b16 %v4299, %v4299
        %v4316 = vpack.c.b16 %v4300, %v4300
        %v4317 = vpack.c.b16 %v4301, %v4301
        %v4318 = vpack.c.b16 %v4302, %v4302
        %v4319 = vpack.c.b16 %v4303, %v4303
        %v4320 = vpack.c.b16 %v4304, %v4304
        %v4321 = vpack.c.b16 %v4305, %v4305
        %v4322 = vpack.c.b16 %v4306, %v4306
        %v4323 = vpack.c.b16 %v4307, %v4307
        %v4324 = vpack.c.b16 %v4308, %v4308
        %v4325 = vpack.c.b16 %v4309, %v4309
        %v4326 = vpack.c.b16 %v4310, %v4310
        %v4327 = vpack.c.b16 %v4311, %v4311
        %v4328 = vpack.c.b16 %v4312, %v4312
        %v4329 = vpack.c.b16 %v4313, %v4313
        %v4330 = vpack.c.b16 %v4314, %v4314
        %v4332 = vshrl.u32 %v4315, 16
        %v4334 = vrot.slane %v4332, 4
        %v4335 = vshll.u32 %v4315, 16
        %v4337 = vrot.slane %v4335, 5
        %v4338 = vor.u32 %v4334, %v4337
        %v4339 = vrot.slane %v4338, 4
        %v4341 = vshll.u32 %v4316, 16
        %v4343 = vrot.slane %v4341, 5
        %v4344 = vsel %vm2677, %v4339, %v4343
        %v4346 = vshrl.u32 %v4317, 16
        %v4348 = vrot.slane %v4346, 4
        %v4349 = vshll.u32 %v4317, 16
        %v4351 = vrot.slane %v4349, 5
        %v4352 = vor.u32 %v4348, %v4351
        %v4353 = vrot.slane %v4352, 4
        %v4355 = vshll.u32 %v4318, 16
        %v4357 = vrot.slane %v4355, 5
        %v4358 = vsel %vm2677, %v4353, %v4357
        %v4360 = vshrl.u32 %v4319, 16
        %v4362 = vrot.slane %v4360, 4
        %v4363 = vshll.u32 %v4319, 16
        %v4365 = vrot.slane %v4363, 5
        %v4366 = vor.u32 %v4362, %v4365
        %v4367 = vrot.slane %v4366, 4
        %v4369 = vshll.u32 %v4320, 16
        %v4371 = vrot.slane %v4369, 5
        %v4372 = vsel %vm2677, %v4367, %v4371
        %v4374 = vshrl.u32 %v4321, 16
        %v4376 = vrot.slane %v4374, 4
        %v4377 = vshll.u32 %v4321, 16
        %v4379 = vrot.slane %v4377, 5
        %v4380 = vor.u32 %v4376, %v4379
        %v4381 = vrot.slane %v4380, 4
        %v4383 = vshll.u32 %v4322, 16
        %v4385 = vrot.slane %v4383, 5
        %v4386 = vsel %vm2677, %v4381, %v4385
        %v4388 = vshrl.u32 %v4323, 16
        %v4390 = vrot.slane %v4388, 4
        %v4391 = vshll.u32 %v4323, 16
        %v4393 = vrot.slane %v4391, 5
        %v4394 = vor.u32 %v4390, %v4393
        %v4395 = vrot.slane %v4394, 4
        %v4397 = vshll.u32 %v4324, 16
        %v4399 = vrot.slane %v4397, 5
        %v4400 = vsel %vm2677, %v4395, %v4399
        %v4402 = vshrl.u32 %v4325, 16
        %v4404 = vrot.slane %v4402, 4
        %v4405 = vshll.u32 %v4325, 16
        %v4407 = vrot.slane %v4405, 5
        %v4408 = vor.u32 %v4404, %v4407
        %v4409 = vrot.slane %v4408, 4
        %v4411 = vshll.u32 %v4326, 16
        %v4413 = vrot.slane %v4411, 5
        %v4414 = vsel %vm2677, %v4409, %v4413
        %v4416 = vshrl.u32 %v4327, 16
        %v4418 = vrot.slane %v4416, 4
        %v4419 = vshll.u32 %v4327, 16
        %v4421 = vrot.slane %v4419, 5
        %v4422 = vor.u32 %v4418, %v4421
        %v4423 = vrot.slane %v4422, 4
        %v4425 = vshll.u32 %v4328, 16
        %v4427 = vrot.slane %v4425, 5
        %v4428 = vsel %vm2677, %v4423, %v4427
        %v4430 = vshrl.u32 %v4329, 16
        %v4432 = vrot.slane %v4430, 4
        %v4433 = vshll.u32 %v4329, 16
        %v4435 = vrot.slane %v4433, 5
        %v4436 = vor.u32 %v4432, %v4435
        %v4437 = vrot.slane %v4436, 4
        %v4439 = vshll.u32 %v4330, 16
        %v4441 = vrot.slane %v4439, 5
        %v4442 = vsel %vm2677, %v4437, %v4441
        %v4443 = vunpack.c.l.b16 %v4344
        %v4444 = vunpack.c.l.b16 %v4358
        %v4445 = vunpack.c.l.b16 %v4372
        %v4446 = vunpack.c.l.b16 %v4386
        %v4447 = vunpack.c.l.b16 %v4400
        %v4448 = vunpack.c.l.b16 %v4414
        %v4449 = vunpack.c.l.b16 %v4428
        %v4450 = vunpack.c.l.b16 %v4442
        %v4451 = vpack.c.b16 %v4444, %v4443
        %v4452 = vpack.c.b16 %v4446, %v4445
        %v4453 = vpack.c.b16 %v4448, %v4447
        %v4454 = vpack.c.b16 %v4450, %v4449
        %4459 = vst.msk [vmem:[#allocation3 + $0x40] sm:$0xff] %vm2540, %v4451
        %4460 = vst.msk [vmem:[#allocation3 + $0xb0] sm:$0xff] %vm2540, %v4452
        %4461 = vst.msk [vmem:[#allocation3 + $0x120] sm:$0xff] %vm2540, %v4453
        %4462 = vst.msk [vmem:[#allocation3 + $0x190] sm:$0xff] %vm2540, %v4454
        %v4463 = vld [vmem:[%s4238] sm:$0x1e]
        %v4464 = vld [vmem:[%s4238 + $0x8] sm:$0x1e]
        %v4465 = vld [vmem:[%s4238 + $0x10] sm:$0x1e]
        %v4466 = vld [vmem:[%s4238 + $0x18] sm:$0x1e]
        %v4467 = vld [vmem:[%s4238 + $0x20] sm:$0x1e]
        %v4468 = vld [vmem:[%s4238 + $0x28] sm:$0x1e]
        %v4469 = vld [vmem:[%s4238 + $0x30] sm:$0x1e]
        %v4470 = vld [vmem:[%s4238 + $0x38] sm:$0x1e]
        %v4479 = vunpack.c.l.b16 %v4463
        %v4480 = vunpack.c.h.b16 %v4463
        %v4481 = vunpack.c.l.b16 %v4464
        %v4482 = vunpack.c.h.b16 %v4464
        %v4483 = vunpack.c.l.b16 %v4465
        %v4484 = vunpack.c.h.b16 %v4465
        %v4485 = vunpack.c.l.b16 %v4466
        %v4486 = vunpack.c.h.b16 %v4466
        %v4487 = vunpack.c.l.b16 %v4467
        %v4488 = vunpack.c.h.b16 %v4467
        %v4489 = vunpack.c.l.b16 %v4468
        %v4490 = vunpack.c.h.b16 %v4468
        %v4491 = vunpack.c.l.b16 %v4469
        %v4492 = vunpack.c.h.b16 %v4469
        %v4493 = vunpack.c.l.b16 %v4470
        %v4494 = vunpack.c.h.b16 %v4470
        %v4495 = vpack.c.b16 %v4479, %v4479
        %v4496 = vpack.c.b16 %v4480, %v4480
        %v4497 = vpack.c.b16 %v4481, %v4481
        %v4498 = vpack.c.b16 %v4482, %v4482
        %v4499 = vpack.c.b16 %v4483, %v4483
        %v4500 = vpack.c.b16 %v4484, %v4484
        %v4501 = vpack.c.b16 %v4485, %v4485
        %v4502 = vpack.c.b16 %v4486, %v4486
        %v4503 = vpack.c.b16 %v4487, %v4487
        %v4504 = vpack.c.b16 %v4488, %v4488
        %v4505 = vpack.c.b16 %v4489, %v4489
        %v4506 = vpack.c.b16 %v4490, %v4490
        %v4507 = vpack.c.b16 %v4491, %v4491
        %v4508 = vpack.c.b16 %v4492, %v4492
        %v4509 = vpack.c.b16 %v4493, %v4493
        %v4510 = vpack.c.b16 %v4494, %v4494
        %v4511 = vrot.slane %v4495, 5
        %v4512 = vrot.slane %v4511, 4
        %v4513 = vrot.slane %v4496, 5
        %v4514 = vsel %vm2869, %v4512, %v4513
        %v4515 = vrot.slane %v4497, 5
        %v4516 = vrot.slane %v4515, 4
        %v4517 = vrot.slane %v4498, 5
        %v4518 = vsel %vm2869, %v4516, %v4517
        %v4519 = vrot.slane %v4499, 5
        %v4520 = vrot.slane %v4519, 4
        %v4521 = vrot.slane %v4500, 5
        %v4522 = vsel %vm2869, %v4520, %v4521
        %v4523 = vrot.slane %v4501, 5
        %v4524 = vrot.slane %v4523, 4
        %v4525 = vrot.slane %v4502, 5
        %v4526 = vsel %vm2869, %v4524, %v4525
        %v4527 = vrot.slane %v4503, 5
        %v4528 = vrot.slane %v4527, 4
        %v4529 = vrot.slane %v4504, 5
        %v4530 = vsel %vm2869, %v4528, %v4529
        %v4531 = vrot.slane %v4505, 5
        %v4532 = vrot.slane %v4531, 4
        %v4533 = vrot.slane %v4506, 5
        %v4534 = vsel %vm2869, %v4532, %v4533
        %v4535 = vrot.slane %v4507, 5
        %v4536 = vrot.slane %v4535, 4
        %v4537 = vrot.slane %v4508, 5
        %v4538 = vsel %vm2869, %v4536, %v4537
        %v4539 = vrot.slane %v4509, 5
        %v4540 = vrot.slane %v4539, 4
        %v4541 = vrot.slane %v4510, 5
        %v4542 = vsel %vm2869, %v4540, %v4541
        %v4543 = vunpack.c.l.b16 %v4514
        %v4544 = vunpack.c.l.b16 %v4518
        %v4545 = vunpack.c.l.b16 %v4522
        %v4546 = vunpack.c.l.b16 %v4526
        %v4547 = vunpack.c.l.b16 %v4530
        %v4548 = vunpack.c.l.b16 %v4534
        %v4549 = vunpack.c.l.b16 %v4538
        %v4550 = vunpack.c.l.b16 %v4542
        %v4551 = vpack.c.b16 %v4544, %v4543
        %v4552 = vpack.c.b16 %v4546, %v4545
        %v4553 = vpack.c.b16 %v4548, %v4547
        %v4554 = vpack.c.b16 %v4550, %v4549
        %4555 = vrot.lane.b32.xlu0 %v4551, 64
        %v4556 = vpop.permute.xlu0 %4555
        %4557 = vrot.lane.b32.xlu0 %v4552, 64
        %v4558 = vpop.permute.xlu0 %4557
        %4559 = vrot.lane.b32.xlu0 %v4553, 64
        %v4560 = vpop.permute.xlu0 %4559
        %4561 = vrot.lane.b32.xlu0 %v4554, 64
        %v4562 = vpop.permute.xlu0 %4561
        %4567 = vst.msk [vmem:[#allocation3 + $0x40] sm:$0xff] %vm2814, %v4556
        %4568 = vst.msk [vmem:[#allocation3 + $0xb0] sm:$0xff] %vm2814, %v4558
        %4569 = vst.msk [vmem:[#allocation3 + $0x120] sm:$0xff] %vm2814, %v4560
        %4570 = vst.msk [vmem:[#allocation3 + $0x190] sm:$0xff] %vm2814, %v4562
        %s4571 = scalar_lea.vmem [#allocation2], 160
        %v4572 = vld [vmem:[%s4571] sm:$0xf]
        %v4573 = vld [vmem:[%s4571 + $0x8] sm:$0xf]
        %v4574 = vld [vmem:[%s4571 + $0x10] sm:$0xf]
        %v4575 = vld [vmem:[%s4571 + $0x18] sm:$0xf]
        %v4576 = vld [vmem:[%s4571 + $0x20] sm:$0xf]
        %v4577 = vld [vmem:[%s4571 + $0x28] sm:$0xf]
        %v4578 = vld [vmem:[%s4571 + $0x30] sm:$0xf]
        %v4579 = vld [vmem:[%s4571 + $0x38] sm:$0xf]
        %v4588 = vunpack.c.l.b16 %v4572
        %v4589 = vunpack.c.l.b16 %v4573
        %v4590 = vunpack.c.l.b16 %v4574
        %v4591 = vunpack.c.l.b16 %v4575
        %v4592 = vunpack.c.l.b16 %v4576
        %v4593 = vunpack.c.l.b16 %v4577
        %v4594 = vunpack.c.l.b16 %v4578
        %v4595 = vunpack.c.l.b16 %v4579
        %v4596 = vpack.c.b16 %v4589, %v4588
        %v4597 = vpack.c.b16 %v4591, %v4590
        %v4598 = vpack.c.b16 %v4593, %v4592
        %v4599 = vpack.c.b16 %v4595, %v4594
        %4604 = vst.msk [vmem:[#allocation3 + $0x48] sm:$0xff] %vm2540, %v4596
        %4605 = vst.msk [vmem:[#allocation3 + $0xb8] sm:$0xff] %vm2540, %v4597
        %4606 = vst.msk [vmem:[#allocation3 + $0x128] sm:$0xff] %vm2540, %v4598
        %4607 = vst.msk [vmem:[#allocation3 + $0x198] sm:$0xff] %vm2540, %v4599
        %v4608 = vld [vmem:[%s4571] sm:$0x1f]
        %v4609 = vld [vmem:[%s4571 + $0x8] sm:$0x1f]
        %v4610 = vld [vmem:[%s4571 + $0x10] sm:$0x1f]
        %v4611 = vld [vmem:[%s4571 + $0x18] sm:$0x1f]
        %v4612 = vld [vmem:[%s4571 + $0x20] sm:$0x1f]
        %v4613 = vld [vmem:[%s4571 + $0x28] sm:$0x1f]
        %v4614 = vld [vmem:[%s4571 + $0x30] sm:$0x1f]
        %v4615 = vld [vmem:[%s4571 + $0x38] sm:$0x1f]
        %v4624 = vunpack.c.l.b16 %v4608
        %v4625 = vunpack.c.h.b16 %v4608
        %v4626 = vunpack.c.l.b16 %v4609
        %v4627 = vunpack.c.h.b16 %v4609
        %v4628 = vunpack.c.l.b16 %v4610
        %v4629 = vunpack.c.h.b16 %v4610
        %v4630 = vunpack.c.l.b16 %v4611
        %v4631 = vunpack.c.h.b16 %v4611
        %v4632 = vunpack.c.l.b16 %v4612
        %v4633 = vunpack.c.h.b16 %v4612
        %v4634 = vunpack.c.l.b16 %v4613
        %v4635 = vunpack.c.h.b16 %v4613
        %v4636 = vunpack.c.l.b16 %v4614
        %v4637 = vunpack.c.h.b16 %v4614
        %v4638 = vunpack.c.l.b16 %v4615
        %v4639 = vunpack.c.h.b16 %v4615
        %v4640 = vpack.c.b16 %v4624, %v4624
        %v4641 = vpack.c.b16 %v4625, %v4625
        %v4642 = vpack.c.b16 %v4626, %v4626
        %v4643 = vpack.c.b16 %v4627, %v4627
        %v4644 = vpack.c.b16 %v4628, %v4628
        %v4645 = vpack.c.b16 %v4629, %v4629
        %v4646 = vpack.c.b16 %v4630, %v4630
        %v4647 = vpack.c.b16 %v4631, %v4631
        %v4648 = vpack.c.b16 %v4632, %v4632
        %v4649 = vpack.c.b16 %v4633, %v4633
        %v4650 = vpack.c.b16 %v4634, %v4634
        %v4651 = vpack.c.b16 %v4635, %v4635
        %v4652 = vpack.c.b16 %v4636, %v4636
        %v4653 = vpack.c.b16 %v4637, %v4637
        %v4654 = vpack.c.b16 %v4638, %v4638
        %v4655 = vpack.c.b16 %v4639, %v4639
        %v4657 = vshrl.u32 %v4640, 16
        %v4659 = vrot.slane %v4657, 4
        %v4660 = vshll.u32 %v4640, 16
        %v4662 = vrot.slane %v4660, 5
        %v4663 = vor.u32 %v4659, %v4662
        %v4664 = vrot.slane %v4663, 4
        %v4666 = vshll.u32 %v4641, 16
        %v4668 = vrot.slane %v4666, 5
        %v4669 = vsel %vm2677, %v4664, %v4668
        %v4671 = vshrl.u32 %v4642, 16
        %v4673 = vrot.slane %v4671, 4
        %v4674 = vshll.u32 %v4642, 16
        %v4676 = vrot.slane %v4674, 5
        %v4677 = vor.u32 %v4673, %v4676
        %v4678 = vrot.slane %v4677, 4
        %v4680 = vshll.u32 %v4643, 16
        %v4682 = vrot.slane %v4680, 5
        %v4683 = vsel %vm2677, %v4678, %v4682
        %v4685 = vshrl.u32 %v4644, 16
        %v4687 = vrot.slane %v4685, 4
        %v4688 = vshll.u32 %v4644, 16
        %v4690 = vrot.slane %v4688, 5
        %v4691 = vor.u32 %v4687, %v4690
        %v4692 = vrot.slane %v4691, 4
        %v4694 = vshll.u32 %v4645, 16
        %v4696 = vrot.slane %v4694, 5
        %v4697 = vsel %vm2677, %v4692, %v4696
        %v4699 = vshrl.u32 %v4646, 16
        %v4701 = vrot.slane %v4699, 4
        %v4702 = vshll.u32 %v4646, 16
        %v4704 = vrot.slane %v4702, 5
        %v4705 = vor.u32 %v4701, %v4704
        %v4706 = vrot.slane %v4705, 4
        %v4708 = vshll.u32 %v4647, 16
        %v4710 = vrot.slane %v4708, 5
        %v4711 = vsel %vm2677, %v4706, %v4710
        %v4713 = vshrl.u32 %v4648, 16
        %v4715 = vrot.slane %v4713, 4
        %v4716 = vshll.u32 %v4648, 16
        %v4718 = vrot.slane %v4716, 5
        %v4719 = vor.u32 %v4715, %v4718
        %v4720 = vrot.slane %v4719, 4
        %v4722 = vshll.u32 %v4649, 16
        %v4724 = vrot.slane %v4722, 5
        %v4725 = vsel %vm2677, %v4720, %v4724
        %v4727 = vshrl.u32 %v4650, 16
        %v4729 = vrot.slane %v4727, 4
        %v4730 = vshll.u32 %v4650, 16
        %v4732 = vrot.slane %v4730, 5
        %v4733 = vor.u32 %v4729, %v4732
        %v4734 = vrot.slane %v4733, 4
        %v4736 = vshll.u32 %v4651, 16
        %v4738 = vrot.slane %v4736, 5
        %v4739 = vsel %vm2677, %v4734, %v4738
        %v4741 = vshrl.u32 %v4652, 16
        %v4743 = vrot.slane %v4741, 4
        %v4744 = vshll.u32 %v4652, 16
        %v4746 = vrot.slane %v4744, 5
        %v4747 = vor.u32 %v4743, %v4746
        %v4748 = vrot.slane %v4747, 4
        %v4750 = vshll.u32 %v4653, 16
        %v4752 = vrot.slane %v4750, 5
        %v4753 = vsel %vm2677, %v4748, %v4752
        %v4755 = vshrl.u32 %v4654, 16
        %v4757 = vrot.slane %v4755, 4
        %v4758 = vshll.u32 %v4654, 16
        %v4760 = vrot.slane %v4758, 5
        %v4761 = vor.u32 %v4757, %v4760
        %v4762 = vrot.slane %v4761, 4
        %v4764 = vshll.u32 %v4655, 16
        %v4766 = vrot.slane %v4764, 5
        %v4767 = vsel %vm2677, %v4762, %v4766
        %v4768 = vunpack.c.l.b16 %v4669
        %v4769 = vunpack.c.l.b16 %v4683
        %v4770 = vunpack.c.l.b16 %v4697
        %v4771 = vunpack.c.l.b16 %v4711
        %v4772 = vunpack.c.l.b16 %v4725
        %v4773 = vunpack.c.l.b16 %v4739
        %v4774 = vunpack.c.l.b16 %v4753
        %v4775 = vunpack.c.l.b16 %v4767
        %v4776 = vpack.c.b16 %v4769, %v4768
        %v4777 = vpack.c.b16 %v4771, %v4770
        %v4778 = vpack.c.b16 %v4773, %v4772
        %v4779 = vpack.c.b16 %v4775, %v4774
        %4780 = vrot.lane.b32.xlu0 %v4776, 64
        %v4781 = vpop.permute.xlu0 %4780
        %4782 = vrot.lane.b32.xlu0 %v4777, 64
        %v4783 = vpop.permute.xlu0 %4782
        %4784 = vrot.lane.b32.xlu0 %v4778, 64
        %v4785 = vpop.permute.xlu0 %4784
        %4786 = vrot.lane.b32.xlu0 %v4779, 64
        %v4787 = vpop.permute.xlu0 %4786
        %4792 = vst.msk [vmem:[#allocation3 + $0x48] sm:$0xff] %vm2814, %v4781
        %4793 = vst.msk [vmem:[#allocation3 + $0xb8] sm:$0xff] %vm2814, %v4783
        %4794 = vst.msk [vmem:[#allocation3 + $0x128] sm:$0xff] %vm2814, %v4785
        %4795 = vst.msk [vmem:[#allocation3 + $0x198] sm:$0xff] %vm2814, %v4787
        %v4796 = vld [vmem:[%s4571] sm:$0x1e]
        %v4797 = vld [vmem:[%s4571 + $0x8] sm:$0x1e]
        %v4798 = vld [vmem:[%s4571 + $0x10] sm:$0x1e]
        %v4799 = vld [vmem:[%s4571 + $0x18] sm:$0x1e]
        %v4800 = vld [vmem:[%s4571 + $0x20] sm:$0x1e]
        %v4801 = vld [vmem:[%s4571 + $0x28] sm:$0x1e]
        %v4802 = vld [vmem:[%s4571 + $0x30] sm:$0x1e]
        %v4803 = vld [vmem:[%s4571 + $0x38] sm:$0x1e]
        %v4812 = vunpack.c.l.b16 %v4796
        %v4813 = vunpack.c.h.b16 %v4796
        %v4814 = vunpack.c.l.b16 %v4797
        %v4815 = vunpack.c.h.b16 %v4797
        %v4816 = vunpack.c.l.b16 %v4798
        %v4817 = vunpack.c.h.b16 %v4798
        %v4818 = vunpack.c.l.b16 %v4799
        %v4819 = vunpack.c.h.b16 %v4799
        %v4820 = vunpack.c.l.b16 %v4800
        %v4821 = vunpack.c.h.b16 %v4800
        %v4822 = vunpack.c.l.b16 %v4801
        %v4823 = vunpack.c.h.b16 %v4801
        %v4824 = vunpack.c.l.b16 %v4802
        %v4825 = vunpack.c.h.b16 %v4802
        %v4826 = vunpack.c.l.b16 %v4803
        %v4827 = vunpack.c.h.b16 %v4803
        %v4828 = vpack.c.b16 %v4812, %v4812
        %v4829 = vpack.c.b16 %v4813, %v4813
        %v4830 = vpack.c.b16 %v4814, %v4814
        %v4831 = vpack.c.b16 %v4815, %v4815
        %v4832 = vpack.c.b16 %v4816, %v4816
        %v4833 = vpack.c.b16 %v4817, %v4817
        %v4834 = vpack.c.b16 %v4818, %v4818
        %v4835 = vpack.c.b16 %v4819, %v4819
        %v4836 = vpack.c.b16 %v4820, %v4820
        %v4837 = vpack.c.b16 %v4821, %v4821
        %v4838 = vpack.c.b16 %v4822, %v4822
        %v4839 = vpack.c.b16 %v4823, %v4823
        %v4840 = vpack.c.b16 %v4824, %v4824
        %v4841 = vpack.c.b16 %v4825, %v4825
        %v4842 = vpack.c.b16 %v4826, %v4826
        %v4843 = vpack.c.b16 %v4827, %v4827
        %v4844 = vrot.slane %v4828, 5
        %v4845 = vrot.slane %v4844, 4
        %v4846 = vrot.slane %v4829, 5
        %v4847 = vsel %vm2869, %v4845, %v4846
        %v4848 = vrot.slane %v4830, 5
        %v4849 = vrot.slane %v4848, 4
        %v4850 = vrot.slane %v4831, 5
        %v4851 = vsel %vm2869, %v4849, %v4850
        %v4852 = vrot.slane %v4832, 5
        %v4853 = vrot.slane %v4852, 4
        %v4854 = vrot.slane %v4833, 5
        %v4855 = vsel %vm2869, %v4853, %v4854
        %v4856 = vrot.slane %v4834, 5
        %v4857 = vrot.slane %v4856, 4
        %v4858 = vrot.slane %v4835, 5
        %v4859 = vsel %vm2869, %v4857, %v4858
        %v4860 = vrot.slane %v4836, 5
        %v4861 = vrot.slane %v4860, 4
        %v4862 = vrot.slane %v4837, 5
        %v4863 = vsel %vm2869, %v4861, %v4862
        %v4864 = vrot.slane %v4838, 5
        %v4865 = vrot.slane %v4864, 4
        %v4866 = vrot.slane %v4839, 5
        %v4867 = vsel %vm2869, %v4865, %v4866
        %v4868 = vrot.slane %v4840, 5
        %v4869 = vrot.slane %v4868, 4
        %v4870 = vrot.slane %v4841, 5
        %v4871 = vsel %vm2869, %v4869, %v4870
        %v4872 = vrot.slane %v4842, 5
        %v4873 = vrot.slane %v4872, 4
        %v4874 = vrot.slane %v4843, 5
        %v4875 = vsel %vm2869, %v4873, %v4874
        %v4876 = vunpack.c.l.b16 %v4847
        %v4877 = vunpack.c.l.b16 %v4851
        %v4878 = vunpack.c.l.b16 %v4855
        %v4879 = vunpack.c.l.b16 %v4859
        %v4880 = vunpack.c.l.b16 %v4863
        %v4881 = vunpack.c.l.b16 %v4867
        %v4882 = vunpack.c.l.b16 %v4871
        %v4883 = vunpack.c.l.b16 %v4875
        %v4884 = vpack.c.b16 %v4877, %v4876
        %v4885 = vpack.c.b16 %v4879, %v4878
        %v4886 = vpack.c.b16 %v4881, %v4880
        %v4887 = vpack.c.b16 %v4883, %v4882
        %4892 = vst.msk [vmem:[#allocation3 + $0x50] sm:$0xff] %vm2540, %v4884
        %4893 = vst.msk [vmem:[#allocation3 + $0xc0] sm:$0xff] %vm2540, %v4885
        %4894 = vst.msk [vmem:[#allocation3 + $0x130] sm:$0xff] %vm2540, %v4886
        %4895 = vst.msk [vmem:[#allocation3 + $0x1a0] sm:$0xff] %vm2540, %v4887
        %s4896 = scalar_lea.vmem [#allocation2], 168
        %v4897 = vld [vmem:[%s4896] sm:$0xf]
        %v4898 = vld [vmem:[%s4896 + $0x8] sm:$0xf]
        %v4899 = vld [vmem:[%s4896 + $0x10] sm:$0xf]
        %v4900 = vld [vmem:[%s4896 + $0x18] sm:$0xf]
        %v4901 = vld [vmem:[%s4896 + $0x20] sm:$0xf]
        %v4902 = vld [vmem:[%s4896 + $0x28] sm:$0xf]
        %v4903 = vld [vmem:[%s4896 + $0x30] sm:$0xf]
        %v4904 = vld [vmem:[%s4896 + $0x38] sm:$0xf]
        %v4913 = vunpack.c.l.b16 %v4897
        %v4914 = vunpack.c.l.b16 %v4898
        %v4915 = vunpack.c.l.b16 %v4899
        %v4916 = vunpack.c.l.b16 %v4900
        %v4917 = vunpack.c.l.b16 %v4901
        %v4918 = vunpack.c.l.b16 %v4902
        %v4919 = vunpack.c.l.b16 %v4903
        %v4920 = vunpack.c.l.b16 %v4904
        %v4921 = vpack.c.b16 %v4914, %v4913
        %v4922 = vpack.c.b16 %v4916, %v4915
        %v4923 = vpack.c.b16 %v4918, %v4917
        %v4924 = vpack.c.b16 %v4920, %v4919
        %4925 = vrot.lane.b32.xlu0 %v4921, 64
        %v4926 = vpop.permute.xlu0 %4925
        %4927 = vrot.lane.b32.xlu0 %v4922, 64
        %v4928 = vpop.permute.xlu0 %4927
        %4929 = vrot.lane.b32.xlu0 %v4923, 64
        %v4930 = vpop.permute.xlu0 %4929
        %4931 = vrot.lane.b32.xlu0 %v4924, 64
        %v4932 = vpop.permute.xlu0 %4931
        %4937 = vst.msk [vmem:[#allocation3 + $0x50] sm:$0xff] %vm2814, %v4926
        %4938 = vst.msk [vmem:[#allocation3 + $0xc0] sm:$0xff] %vm2814, %v4928
        %4939 = vst.msk [vmem:[#allocation3 + $0x130] sm:$0xff] %vm2814, %v4930
        %4940 = vst.msk [vmem:[#allocation3 + $0x1a0] sm:$0xff] %vm2814, %v4932
        %v4941 = vld [vmem:[%s4896] sm:$0x1f]
        %v4942 = vld [vmem:[%s4896 + $0x8] sm:$0x1f]
        %v4943 = vld [vmem:[%s4896 + $0x10] sm:$0x1f]
        %v4944 = vld [vmem:[%s4896 + $0x18] sm:$0x1f]
        %v4945 = vld [vmem:[%s4896 + $0x20] sm:$0x1f]
        %v4946 = vld [vmem:[%s4896 + $0x28] sm:$0x1f]
        %v4947 = vld [vmem:[%s4896 + $0x30] sm:$0x1f]
        %v4948 = vld [vmem:[%s4896 + $0x38] sm:$0x1f]
        %v4957 = vunpack.c.l.b16 %v4941
        %v4958 = vunpack.c.h.b16 %v4941
        %v4959 = vunpack.c.l.b16 %v4942
        %v4960 = vunpack.c.h.b16 %v4942
        %v4961 = vunpack.c.l.b16 %v4943
        %v4962 = vunpack.c.h.b16 %v4943
        %v4963 = vunpack.c.l.b16 %v4944
        %v4964 = vunpack.c.h.b16 %v4944
        %v4965 = vunpack.c.l.b16 %v4945
        %v4966 = vunpack.c.h.b16 %v4945
        %v4967 = vunpack.c.l.b16 %v4946
        %v4968 = vunpack.c.h.b16 %v4946
        %v4969 = vunpack.c.l.b16 %v4947
        %v4970 = vunpack.c.h.b16 %v4947
        %v4971 = vunpack.c.l.b16 %v4948
        %v4972 = vunpack.c.h.b16 %v4948
        %v4973 = vpack.c.b16 %v4957, %v4957
        %v4974 = vpack.c.b16 %v4958, %v4958
        %v4975 = vpack.c.b16 %v4959, %v4959
        %v4976 = vpack.c.b16 %v4960, %v4960
        %v4977 = vpack.c.b16 %v4961, %v4961
        %v4978 = vpack.c.b16 %v4962, %v4962
        %v4979 = vpack.c.b16 %v4963, %v4963
        %v4980 = vpack.c.b16 %v4964, %v4964
        %v4981 = vpack.c.b16 %v4965, %v4965
        %v4982 = vpack.c.b16 %v4966, %v4966
        %v4983 = vpack.c.b16 %v4967, %v4967
        %v4984 = vpack.c.b16 %v4968, %v4968
        %v4985 = vpack.c.b16 %v4969, %v4969
        %v4986 = vpack.c.b16 %v4970, %v4970
        %v4987 = vpack.c.b16 %v4971, %v4971
        %v4988 = vpack.c.b16 %v4972, %v4972
        %v4990 = vshrl.u32 %v4973, 16
        %v4992 = vrot.slane %v4990, 4
        %v4993 = vshll.u32 %v4973, 16
        %v4995 = vrot.slane %v4993, 5
        %v4996 = vor.u32 %v4992, %v4995
        %v4997 = vrot.slane %v4996, 4
        %v4999 = vshll.u32 %v4974, 16
        %v5001 = vrot.slane %v4999, 5
        %v5002 = vsel %vm2677, %v4997, %v5001
        %v5004 = vshrl.u32 %v4975, 16
        %v5006 = vrot.slane %v5004, 4
        %v5007 = vshll.u32 %v4975, 16
        %v5009 = vrot.slane %v5007, 5
        %v5010 = vor.u32 %v5006, %v5009
        %v5011 = vrot.slane %v5010, 4
        %v5013 = vshll.u32 %v4976, 16
        %v5015 = vrot.slane %v5013, 5
        %v5016 = vsel %vm2677, %v5011, %v5015
        %v5018 = vshrl.u32 %v4977, 16
        %v5020 = vrot.slane %v5018, 4
        %v5021 = vshll.u32 %v4977, 16
        %v5023 = vrot.slane %v5021, 5
        %v5024 = vor.u32 %v5020, %v5023
        %v5025 = vrot.slane %v5024, 4
        %v5027 = vshll.u32 %v4978, 16
        %v5029 = vrot.slane %v5027, 5
        %v5030 = vsel %vm2677, %v5025, %v5029
        %v5032 = vshrl.u32 %v4979, 16
        %v5034 = vrot.slane %v5032, 4
        %v5035 = vshll.u32 %v4979, 16
        %v5037 = vrot.slane %v5035, 5
        %v5038 = vor.u32 %v5034, %v5037
        %v5039 = vrot.slane %v5038, 4
        %v5041 = vshll.u32 %v4980, 16
        %v5043 = vrot.slane %v5041, 5
        %v5044 = vsel %vm2677, %v5039, %v5043
        %v5046 = vshrl.u32 %v4981, 16
        %v5048 = vrot.slane %v5046, 4
        %v5049 = vshll.u32 %v4981, 16
        %v5051 = vrot.slane %v5049, 5
        %v5052 = vor.u32 %v5048, %v5051
        %v5053 = vrot.slane %v5052, 4
        %v5055 = vshll.u32 %v4982, 16
        %v5057 = vrot.slane %v5055, 5
        %v5058 = vsel %vm2677, %v5053, %v5057
        %v5060 = vshrl.u32 %v4983, 16
        %v5062 = vrot.slane %v5060, 4
        %v5063 = vshll.u32 %v4983, 16
        %v5065 = vrot.slane %v5063, 5
        %v5066 = vor.u32 %v5062, %v5065
        %v5067 = vrot.slane %v5066, 4
        %v5069 = vshll.u32 %v4984, 16
        %v5071 = vrot.slane %v5069, 5
        %v5072 = vsel %vm2677, %v5067, %v5071
        %v5074 = vshrl.u32 %v4985, 16
        %v5076 = vrot.slane %v5074, 4
        %v5077 = vshll.u32 %v4985, 16
        %v5079 = vrot.slane %v5077, 5
        %v5080 = vor.u32 %v5076, %v5079
        %v5081 = vrot.slane %v5080, 4
        %v5083 = vshll.u32 %v4986, 16
        %v5085 = vrot.slane %v5083, 5
        %v5086 = vsel %vm2677, %v5081, %v5085
        %v5088 = vshrl.u32 %v4987, 16
        %v5090 = vrot.slane %v5088, 4
        %v5091 = vshll.u32 %v4987, 16
        %v5093 = vrot.slane %v5091, 5
        %v5094 = vor.u32 %v5090, %v5093
        %v5095 = vrot.slane %v5094, 4
        %v5097 = vshll.u32 %v4988, 16
        %v5099 = vrot.slane %v5097, 5
        %v5100 = vsel %vm2677, %v5095, %v5099
        %v5101 = vunpack.c.l.b16 %v5002
        %v5102 = vunpack.c.l.b16 %v5016
        %v5103 = vunpack.c.l.b16 %v5030
        %v5104 = vunpack.c.l.b16 %v5044
        %v5105 = vunpack.c.l.b16 %v5058
        %v5106 = vunpack.c.l.b16 %v5072
        %v5107 = vunpack.c.l.b16 %v5086
        %v5108 = vunpack.c.l.b16 %v5100
        %v5109 = vpack.c.b16 %v5102, %v5101
        %v5110 = vpack.c.b16 %v5104, %v5103
        %v5111 = vpack.c.b16 %v5106, %v5105
        %v5112 = vpack.c.b16 %v5108, %v5107
        %5117 = vst.msk [vmem:[#allocation3 + $0x58] sm:$0xff] %vm2540, %v5109
        %5118 = vst.msk [vmem:[#allocation3 + $0xc8] sm:$0xff] %vm2540, %v5110
        %5119 = vst.msk [vmem:[#allocation3 + $0x138] sm:$0xff] %vm2540, %v5111
        %5120 = vst.msk [vmem:[#allocation3 + $0x1a8] sm:$0xff] %vm2540, %v5112
        %v5121 = vld [vmem:[%s4896] sm:$0x1e]
        %v5122 = vld [vmem:[%s4896 + $0x8] sm:$0x1e]
        %v5123 = vld [vmem:[%s4896 + $0x10] sm:$0x1e]
        %v5124 = vld [vmem:[%s4896 + $0x18] sm:$0x1e]
        %v5125 = vld [vmem:[%s4896 + $0x20] sm:$0x1e]
        %v5126 = vld [vmem:[%s4896 + $0x28] sm:$0x1e]
        %v5127 = vld [vmem:[%s4896 + $0x30] sm:$0x1e]
        %v5128 = vld [vmem:[%s4896 + $0x38] sm:$0x1e]
        %v5137 = vunpack.c.l.b16 %v5121
        %v5138 = vunpack.c.h.b16 %v5121
        %v5139 = vunpack.c.l.b16 %v5122
        %v5140 = vunpack.c.h.b16 %v5122
        %v5141 = vunpack.c.l.b16 %v5123
        %v5142 = vunpack.c.h.b16 %v5123
        %v5143 = vunpack.c.l.b16 %v5124
        %v5144 = vunpack.c.h.b16 %v5124
        %v5145 = vunpack.c.l.b16 %v5125
        %v5146 = vunpack.c.h.b16 %v5125
        %v5147 = vunpack.c.l.b16 %v5126
        %v5148 = vunpack.c.h.b16 %v5126
        %v5149 = vunpack.c.l.b16 %v5127
        %v5150 = vunpack.c.h.b16 %v5127
        %v5151 = vunpack.c.l.b16 %v5128
        %v5152 = vunpack.c.h.b16 %v5128
        %v5153 = vpack.c.b16 %v5137, %v5137
        %v5154 = vpack.c.b16 %v5138, %v5138
        %v5155 = vpack.c.b16 %v5139, %v5139
        %v5156 = vpack.c.b16 %v5140, %v5140
        %v5157 = vpack.c.b16 %v5141, %v5141
        %v5158 = vpack.c.b16 %v5142, %v5142
        %v5159 = vpack.c.b16 %v5143, %v5143
        %v5160 = vpack.c.b16 %v5144, %v5144
        %v5161 = vpack.c.b16 %v5145, %v5145
        %v5162 = vpack.c.b16 %v5146, %v5146
        %v5163 = vpack.c.b16 %v5147, %v5147
        %v5164 = vpack.c.b16 %v5148, %v5148
        %v5165 = vpack.c.b16 %v5149, %v5149
        %v5166 = vpack.c.b16 %v5150, %v5150
        %v5167 = vpack.c.b16 %v5151, %v5151
        %v5168 = vpack.c.b16 %v5152, %v5152
        %v5169 = vrot.slane %v5153, 5
        %v5170 = vrot.slane %v5169, 4
        %v5171 = vrot.slane %v5154, 5
        %v5172 = vsel %vm2869, %v5170, %v5171
        %v5173 = vrot.slane %v5155, 5
        %v5174 = vrot.slane %v5173, 4
        %v5175 = vrot.slane %v5156, 5
        %v5176 = vsel %vm2869, %v5174, %v5175
        %v5177 = vrot.slane %v5157, 5
        %v5178 = vrot.slane %v5177, 4
        %v5179 = vrot.slane %v5158, 5
        %v5180 = vsel %vm2869, %v5178, %v5179
        %v5181 = vrot.slane %v5159, 5
        %v5182 = vrot.slane %v5181, 4
        %v5183 = vrot.slane %v5160, 5
        %v5184 = vsel %vm2869, %v5182, %v5183
        %v5185 = vrot.slane %v5161, 5
        %v5186 = vrot.slane %v5185, 4
        %v5187 = vrot.slane %v5162, 5
        %v5188 = vsel %vm2869, %v5186, %v5187
        %v5189 = vrot.slane %v5163, 5
        %v5190 = vrot.slane %v5189, 4
        %v5191 = vrot.slane %v5164, 5
        %v5192 = vsel %vm2869, %v5190, %v5191
        %v5193 = vrot.slane %v5165, 5
        %v5194 = vrot.slane %v5193, 4
        %v5195 = vrot.slane %v5166, 5
        %v5196 = vsel %vm2869, %v5194, %v5195
        %v5197 = vrot.slane %v5167, 5
        %v5198 = vrot.slane %v5197, 4
        %v5199 = vrot.slane %v5168, 5
        %v5200 = vsel %vm2869, %v5198, %v5199
        %v5201 = vunpack.c.l.b16 %v5172
        %v5202 = vunpack.c.l.b16 %v5176
        %v5203 = vunpack.c.l.b16 %v5180
        %v5204 = vunpack.c.l.b16 %v5184
        %v5205 = vunpack.c.l.b16 %v5188
        %v5206 = vunpack.c.l.b16 %v5192
        %v5207 = vunpack.c.l.b16 %v5196
        %v5208 = vunpack.c.l.b16 %v5200
        %v5209 = vpack.c.b16 %v5202, %v5201
        %v5210 = vpack.c.b16 %v5204, %v5203
        %v5211 = vpack.c.b16 %v5206, %v5205
        %v5212 = vpack.c.b16 %v5208, %v5207
        %5213 = vrot.lane.b32.xlu0 %v5209, 64
        %v5214 = vpop.permute.xlu0 %5213
        %5215 = vrot.lane.b32.xlu0 %v5210, 64
        %v5216 = vpop.permute.xlu0 %5215
        %5217 = vrot.lane.b32.xlu0 %v5211, 64
        %v5218 = vpop.permute.xlu0 %5217
        %5219 = vrot.lane.b32.xlu0 %v5212, 64
        %v5220 = vpop.permute.xlu0 %5219
        %5225 = vst.msk [vmem:[#allocation3 + $0x58] sm:$0xff] %vm2814, %v5214
        %5226 = vst.msk [vmem:[#allocation3 + $0xc8] sm:$0xff] %vm2814, %v5216
        %5227 = vst.msk [vmem:[#allocation3 + $0x138] sm:$0xff] %vm2814, %v5218
        %5228 = vst.msk [vmem:[#allocation3 + $0x1a8] sm:$0xff] %vm2814, %v5220
        %s5229 = scalar_lea.vmem [#allocation2], 176
        %v5230 = vld [vmem:[%s5229] sm:$0xf]
        %v5231 = vld [vmem:[%s5229 + $0x8] sm:$0xf]
        %v5232 = vld [vmem:[%s5229 + $0x10] sm:$0xf]
        %v5233 = vld [vmem:[%s5229 + $0x18] sm:$0xf]
        %v5234 = vld [vmem:[%s5229 + $0x20] sm:$0xf]
        %v5235 = vld [vmem:[%s5229 + $0x28] sm:$0xf]
        %v5236 = vld [vmem:[%s5229 + $0x30] sm:$0xf]
        %v5237 = vld [vmem:[%s5229 + $0x38] sm:$0xf]
        %v5246 = vunpack.c.l.b16 %v5230
        %v5247 = vunpack.c.l.b16 %v5231
        %v5248 = vunpack.c.l.b16 %v5232
        %v5249 = vunpack.c.l.b16 %v5233
        %v5250 = vunpack.c.l.b16 %v5234
        %v5251 = vunpack.c.l.b16 %v5235
        %v5252 = vunpack.c.l.b16 %v5236
        %v5253 = vunpack.c.l.b16 %v5237
        %v5254 = vpack.c.b16 %v5247, %v5246
        %v5255 = vpack.c.b16 %v5249, %v5248
        %v5256 = vpack.c.b16 %v5251, %v5250
        %v5257 = vpack.c.b16 %v5253, %v5252
        %5262 = vst.msk [vmem:[#allocation3 + $0x60] sm:$0xff] %vm2540, %v5254
        %5263 = vst.msk [vmem:[#allocation3 + $0xd0] sm:$0xff] %vm2540, %v5255
        %5264 = vst.msk [vmem:[#allocation3 + $0x140] sm:$0xff] %vm2540, %v5256
        %5265 = vst.msk [vmem:[#allocation3 + $0x1b0] sm:$0xff] %vm2540, %v5257
        %v5266 = vld [vmem:[%s5229] sm:$0x1f]
        %v5267 = vld [vmem:[%s5229 + $0x8] sm:$0x1f]
        %v5268 = vld [vmem:[%s5229 + $0x10] sm:$0x1f]
        %v5269 = vld [vmem:[%s5229 + $0x18] sm:$0x1f]
        %v5270 = vld [vmem:[%s5229 + $0x20] sm:$0x1f]
        %v5271 = vld [vmem:[%s5229 + $0x28] sm:$0x1f]
        %v5272 = vld [vmem:[%s5229 + $0x30] sm:$0x1f]
        %v5273 = vld [vmem:[%s5229 + $0x38] sm:$0x1f]
        %v5282 = vunpack.c.l.b16 %v5266
        %v5283 = vunpack.c.h.b16 %v5266
        %v5284 = vunpack.c.l.b16 %v5267
        %v5285 = vunpack.c.h.b16 %v5267
        %v5286 = vunpack.c.l.b16 %v5268
        %v5287 = vunpack.c.h.b16 %v5268
        %v5288 = vunpack.c.l.b16 %v5269
        %v5289 = vunpack.c.h.b16 %v5269
        %v5290 = vunpack.c.l.b16 %v5270
        %v5291 = vunpack.c.h.b16 %v5270
        %v5292 = vunpack.c.l.b16 %v5271
        %v5293 = vunpack.c.h.b16 %v5271
        %v5294 = vunpack.c.l.b16 %v5272
        %v5295 = vunpack.c.h.b16 %v5272
        %v5296 = vunpack.c.l.b16 %v5273
        %v5297 = vunpack.c.h.b16 %v5273
        %v5298 = vpack.c.b16 %v5282, %v5282
        %v5299 = vpack.c.b16 %v5283, %v5283
        %v5300 = vpack.c.b16 %v5284, %v5284
        %v5301 = vpack.c.b16 %v5285, %v5285
        %v5302 = vpack.c.b16 %v5286, %v5286
        %v5303 = vpack.c.b16 %v5287, %v5287
        %v5304 = vpack.c.b16 %v5288, %v5288
        %v5305 = vpack.c.b16 %v5289, %v5289
        %v5306 = vpack.c.b16 %v5290, %v5290
        %v5307 = vpack.c.b16 %v5291, %v5291
        %v5308 = vpack.c.b16 %v5292, %v5292
        %v5309 = vpack.c.b16 %v5293, %v5293
        %v5310 = vpack.c.b16 %v5294, %v5294
        %v5311 = vpack.c.b16 %v5295, %v5295
        %v5312 = vpack.c.b16 %v5296, %v5296
        %v5313 = vpack.c.b16 %v5297, %v5297
        %v5315 = vshrl.u32 %v5298, 16
        %v5317 = vrot.slane %v5315, 4
        %v5318 = vshll.u32 %v5298, 16
        %v5320 = vrot.slane %v5318, 5
        %v5321 = vor.u32 %v5317, %v5320
        %v5322 = vrot.slane %v5321, 4
        %v5324 = vshll.u32 %v5299, 16
        %v5326 = vrot.slane %v5324, 5
        %v5327 = vsel %vm2677, %v5322, %v5326
        %v5329 = vshrl.u32 %v5300, 16
        %v5331 = vrot.slane %v5329, 4
        %v5332 = vshll.u32 %v5300, 16
        %v5334 = vrot.slane %v5332, 5
        %v5335 = vor.u32 %v5331, %v5334
        %v5336 = vrot.slane %v5335, 4
        %v5338 = vshll.u32 %v5301, 16
        %v5340 = vrot.slane %v5338, 5
        %v5341 = vsel %vm2677, %v5336, %v5340
        %v5343 = vshrl.u32 %v5302, 16
        %v5345 = vrot.slane %v5343, 4
        %v5346 = vshll.u32 %v5302, 16
        %v5348 = vrot.slane %v5346, 5
        %v5349 = vor.u32 %v5345, %v5348
        %v5350 = vrot.slane %v5349, 4
        %v5352 = vshll.u32 %v5303, 16
        %v5354 = vrot.slane %v5352, 5
        %v5355 = vsel %vm2677, %v5350, %v5354
        %v5357 = vshrl.u32 %v5304, 16
        %v5359 = vrot.slane %v5357, 4
        %v5360 = vshll.u32 %v5304, 16
        %v5362 = vrot.slane %v5360, 5
        %v5363 = vor.u32 %v5359, %v5362
        %v5364 = vrot.slane %v5363, 4
        %v5366 = vshll.u32 %v5305, 16
        %v5368 = vrot.slane %v5366, 5
        %v5369 = vsel %vm2677, %v5364, %v5368
        %v5371 = vshrl.u32 %v5306, 16
        %v5373 = vrot.slane %v5371, 4
        %v5374 = vshll.u32 %v5306, 16
        %v5376 = vrot.slane %v5374, 5
        %v5377 = vor.u32 %v5373, %v5376
        %v5378 = vrot.slane %v5377, 4
        %v5380 = vshll.u32 %v5307, 16
        %v5382 = vrot.slane %v5380, 5
        %v5383 = vsel %vm2677, %v5378, %v5382
        %v5385 = vshrl.u32 %v5308, 16
        %v5387 = vrot.slane %v5385, 4
        %v5388 = vshll.u32 %v5308, 16
        %v5390 = vrot.slane %v5388, 5
        %v5391 = vor.u32 %v5387, %v5390
        %v5392 = vrot.slane %v5391, 4
        %v5394 = vshll.u32 %v5309, 16
        %v5396 = vrot.slane %v5394, 5
        %v5397 = vsel %vm2677, %v5392, %v5396
        %v5399 = vshrl.u32 %v5310, 16
        %v5401 = vrot.slane %v5399, 4
        %v5402 = vshll.u32 %v5310, 16
        %v5404 = vrot.slane %v5402, 5
        %v5405 = vor.u32 %v5401, %v5404
        %v5406 = vrot.slane %v5405, 4
        %v5408 = vshll.u32 %v5311, 16
        %v5410 = vrot.slane %v5408, 5
        %v5411 = vsel %vm2677, %v5406, %v5410
        %v5413 = vshrl.u32 %v5312, 16
        %v5415 = vrot.slane %v5413, 4
        %v5416 = vshll.u32 %v5312, 16
        %v5418 = vrot.slane %v5416, 5
        %v5419 = vor.u32 %v5415, %v5418
        %v5420 = vrot.slane %v5419, 4
        %v5422 = vshll.u32 %v5313, 16
        %v5424 = vrot.slane %v5422, 5
        %v5425 = vsel %vm2677, %v5420, %v5424
        %v5426 = vunpack.c.l.b16 %v5327
        %v5427 = vunpack.c.l.b16 %v5341
        %v5428 = vunpack.c.l.b16 %v5355
        %v5429 = vunpack.c.l.b16 %v5369
        %v5430 = vunpack.c.l.b16 %v5383
        %v5431 = vunpack.c.l.b16 %v5397
        %v5432 = vunpack.c.l.b16 %v5411
        %v5433 = vunpack.c.l.b16 %v5425
        %v5434 = vpack.c.b16 %v5427, %v5426
        %v5435 = vpack.c.b16 %v5429, %v5428
        %v5436 = vpack.c.b16 %v5431, %v5430
        %v5437 = vpack.c.b16 %v5433, %v5432
        %5438 = vrot.lane.b32.xlu0 %v5434, 64
        %v5439 = vpop.permute.xlu0 %5438
        %5440 = vrot.lane.b32.xlu0 %v5435, 64
        %v5441 = vpop.permute.xlu0 %5440
        %5442 = vrot.lane.b32.xlu0 %v5436, 64
        %v5443 = vpop.permute.xlu0 %5442
        %5444 = vrot.lane.b32.xlu0 %v5437, 64
        %v5445 = vpop.permute.xlu0 %5444
        %5450 = vst.msk [vmem:[#allocation3 + $0x60] sm:$0xff] %vm2814, %v5439
        %5451 = vst.msk [vmem:[#allocation3 + $0xd0] sm:$0xff] %vm2814, %v5441
        %5452 = vst.msk [vmem:[#allocation3 + $0x140] sm:$0xff] %vm2814, %v5443
        %5453 = vst.msk [vmem:[#allocation3 + $0x1b0] sm:$0xff] %vm2814, %v5445
        %v5454 = vld [vmem:[%s5229] sm:$0x1e]
        %v5455 = vld [vmem:[%s5229 + $0x8] sm:$0x1e]
        %v5456 = vld [vmem:[%s5229 + $0x10] sm:$0x1e]
        %v5457 = vld [vmem:[%s5229 + $0x18] sm:$0x1e]
        %v5458 = vld [vmem:[%s5229 + $0x20] sm:$0x1e]
        %v5459 = vld [vmem:[%s5229 + $0x28] sm:$0x1e]
        %v5460 = vld [vmem:[%s5229 + $0x30] sm:$0x1e]
        %v5461 = vld [vmem:[%s5229 + $0x38] sm:$0x1e]
        %v5470 = vunpack.c.l.b16 %v5454
        %v5471 = vunpack.c.h.b16 %v5454
        %v5472 = vunpack.c.l.b16 %v5455
        %v5473 = vunpack.c.h.b16 %v5455
        %v5474 = vunpack.c.l.b16 %v5456
        %v5475 = vunpack.c.h.b16 %v5456
        %v5476 = vunpack.c.l.b16 %v5457
        %v5477 = vunpack.c.h.b16 %v5457
        %v5478 = vunpack.c.l.b16 %v5458
        %v5479 = vunpack.c.h.b16 %v5458
        %v5480 = vunpack.c.l.b16 %v5459
        %v5481 = vunpack.c.h.b16 %v5459
        %v5482 = vunpack.c.l.b16 %v5460
        %v5483 = vunpack.c.h.b16 %v5460
        %v5484 = vunpack.c.l.b16 %v5461
        %v5485 = vunpack.c.h.b16 %v5461
        %v5486 = vpack.c.b16 %v5470, %v5470
        %v5487 = vpack.c.b16 %v5471, %v5471
        %v5488 = vpack.c.b16 %v5472, %v5472
        %v5489 = vpack.c.b16 %v5473, %v5473
        %v5490 = vpack.c.b16 %v5474, %v5474
        %v5491 = vpack.c.b16 %v5475, %v5475
        %v5492 = vpack.c.b16 %v5476, %v5476
        %v5493 = vpack.c.b16 %v5477, %v5477
        %v5494 = vpack.c.b16 %v5478, %v5478
        %v5495 = vpack.c.b16 %v5479, %v5479
        %v5496 = vpack.c.b16 %v5480, %v5480
        %v5497 = vpack.c.b16 %v5481, %v5481
        %v5498 = vpack.c.b16 %v5482, %v5482
        %v5499 = vpack.c.b16 %v5483, %v5483
        %v5500 = vpack.c.b16 %v5484, %v5484
        %v5501 = vpack.c.b16 %v5485, %v5485
        %v5502 = vrot.slane %v5486, 5
        %v5503 = vrot.slane %v5502, 4
        %v5504 = vrot.slane %v5487, 5
        %v5505 = vsel %vm2869, %v5503, %v5504
        %v5506 = vrot.slane %v5488, 5
        %v5507 = vrot.slane %v5506, 4
        %v5508 = vrot.slane %v5489, 5
        %v5509 = vsel %vm2869, %v5507, %v5508
        %v5510 = vrot.slane %v5490, 5
        %v5511 = vrot.slane %v5510, 4
        %v5512 = vrot.slane %v5491, 5
        %v5513 = vsel %vm2869, %v5511, %v5512
        %v5514 = vrot.slane %v5492, 5
        %v5515 = vrot.slane %v5514, 4
        %v5516 = vrot.slane %v5493, 5
        %v5517 = vsel %vm2869, %v5515, %v5516
        %v5518 = vrot.slane %v5494, 5
        %v5519 = vrot.slane %v5518, 4
        %v5520 = vrot.slane %v5495, 5
        %v5521 = vsel %vm2869, %v5519, %v5520
        %v5522 = vrot.slane %v5496, 5
        %v5523 = vrot.slane %v5522, 4
        %v5524 = vrot.slane %v5497, 5
        %v5525 = vsel %vm2869, %v5523, %v5524
        %v5526 = vrot.slane %v5498, 5
        %v5527 = vrot.slane %v5526, 4
        %v5528 = vrot.slane %v5499, 5
        %v5529 = vsel %vm2869, %v5527, %v5528
        %v5530 = vrot.slane %v5500, 5
        %v5531 = vrot.slane %v5530, 4
        %v5532 = vrot.slane %v5501, 5
        %v5533 = vsel %vm2869, %v5531, %v5532
        %v5534 = vunpack.c.l.b16 %v5505
        %v5535 = vunpack.c.l.b16 %v5509
        %v5536 = vunpack.c.l.b16 %v5513
        %v5537 = vunpack.c.l.b16 %v5517
        %v5538 = vunpack.c.l.b16 %v5521
        %v5539 = vunpack.c.l.b16 %v5525
        %v5540 = vunpack.c.l.b16 %v5529
        %v5541 = vunpack.c.l.b16 %v5533
        %v5542 = vpack.c.b16 %v5535, %v5534
        %v5543 = vpack.c.b16 %v5537, %v5536
        %v5544 = vpack.c.b16 %v5539, %v5538
        %v5545 = vpack.c.b16 %v5541, %v5540
        %5550 = vst.msk [vmem:[#allocation3 + $0x68] sm:$0xff] %vm2540, %v5542
        %5551 = vst.msk [vmem:[#allocation3 + $0xd8] sm:$0xff] %vm2540, %v5543
        %5552 = vst.msk [vmem:[#allocation3 + $0x148] sm:$0xff] %vm2540, %v5544
        %5553 = vst.msk [vmem:[#allocation3 + $0x1b8] sm:$0xff] %vm2540, %v5545
        %v5554 = vld [vmem:[%s4571] sm:$0xf]
        %v5555 = vld [vmem:[%s4571 + $0x8] sm:$0xf]
        %v5556 = vld [vmem:[%s4571 + $0x10] sm:$0xf]
        %v5557 = vld [vmem:[%s4571 + $0x18] sm:$0xf]
        %v5558 = vld [vmem:[%s4571 + $0x20] sm:$0xf]
        %v5559 = vld [vmem:[%s4571 + $0x28] sm:$0xf]
        %v5560 = vld [vmem:[%s4571 + $0x30] sm:$0xf]
        %v5561 = vld [vmem:[%s4571 + $0x38] sm:$0xf]
        %v5570 = vunpack.c.l.b16 %v5554
        %v5571 = vunpack.c.l.b16 %v5555
        %v5572 = vunpack.c.l.b16 %v5556
        %v5573 = vunpack.c.l.b16 %v5557
        %v5574 = vunpack.c.l.b16 %v5558
        %v5575 = vunpack.c.l.b16 %v5559
        %v5576 = vunpack.c.l.b16 %v5560
        %v5577 = vunpack.c.l.b16 %v5561
        %v5578 = vpack.c.b16 %v5571, %v5570
        %v5579 = vpack.c.b16 %v5573, %v5572
        %v5580 = vpack.c.b16 %v5575, %v5574
        %v5581 = vpack.c.b16 %v5577, %v5576
        %5586 = vst.msk [vmem:[#allocation3 + $0x1c0] sm:$0xff] %vm2540, %v5578
        %5587 = vst.msk [vmem:[#allocation3 + $0x230] sm:$0xff] %vm2540, %v5579
        %5588 = vst.msk [vmem:[#allocation3 + $0x2a0] sm:$0xff] %vm2540, %v5580
        %5589 = vst.msk [vmem:[#allocation3 + $0x310] sm:$0xff] %vm2540, %v5581
        %v5590 = vld [vmem:[%s4571] sm:$0x1f]
        %v5591 = vld [vmem:[%s4571 + $0x8] sm:$0x1f]
        %v5592 = vld [vmem:[%s4571 + $0x10] sm:$0x1f]
        %v5593 = vld [vmem:[%s4571 + $0x18] sm:$0x1f]
        %v5594 = vld [vmem:[%s4571 + $0x20] sm:$0x1f]
        %v5595 = vld [vmem:[%s4571 + $0x28] sm:$0x1f]
        %v5596 = vld [vmem:[%s4571 + $0x30] sm:$0x1f]
        %v5597 = vld [vmem:[%s4571 + $0x38] sm:$0x1f]
        %v5606 = vunpack.c.l.b16 %v5590
        %v5607 = vunpack.c.h.b16 %v5590
        %v5608 = vunpack.c.l.b16 %v5591
        %v5609 = vunpack.c.h.b16 %v5591
        %v5610 = vunpack.c.l.b16 %v5592
        %v5611 = vunpack.c.h.b16 %v5592
        %v5612 = vunpack.c.l.b16 %v5593
        %v5613 = vunpack.c.h.b16 %v5593
        %v5614 = vunpack.c.l.b16 %v5594
        %v5615 = vunpack.c.h.b16 %v5594
        %v5616 = vunpack.c.l.b16 %v5595
        %v5617 = vunpack.c.h.b16 %v5595
        %v5618 = vunpack.c.l.b16 %v5596
        %v5619 = vunpack.c.h.b16 %v5596
        %v5620 = vunpack.c.l.b16 %v5597
        %v5621 = vunpack.c.h.b16 %v5597
        %v5622 = vpack.c.b16 %v5606, %v5606
        %v5623 = vpack.c.b16 %v5607, %v5607
        %v5624 = vpack.c.b16 %v5608, %v5608
        %v5625 = vpack.c.b16 %v5609, %v5609
        %v5626 = vpack.c.b16 %v5610, %v5610
        %v5627 = vpack.c.b16 %v5611, %v5611
        %v5628 = vpack.c.b16 %v5612, %v5612
        %v5629 = vpack.c.b16 %v5613, %v5613
        %v5630 = vpack.c.b16 %v5614, %v5614
        %v5631 = vpack.c.b16 %v5615, %v5615
        %v5632 = vpack.c.b16 %v5616, %v5616
        %v5633 = vpack.c.b16 %v5617, %v5617
        %v5634 = vpack.c.b16 %v5618, %v5618
        %v5635 = vpack.c.b16 %v5619, %v5619
        %v5636 = vpack.c.b16 %v5620, %v5620
        %v5637 = vpack.c.b16 %v5621, %v5621
        %v5639 = vshrl.u32 %v5622, 16
        %v5641 = vrot.slane %v5639, 4
        %v5642 = vshll.u32 %v5622, 16
        %v5644 = vrot.slane %v5642, 5
        %v5645 = vor.u32 %v5641, %v5644
        %v5646 = vrot.slane %v5645, 4
        %v5648 = vshll.u32 %v5623, 16
        %v5650 = vrot.slane %v5648, 5
        %v5651 = vsel %vm2677, %v5646, %v5650
        %v5653 = vshrl.u32 %v5624, 16
        %v5655 = vrot.slane %v5653, 4
        %v5656 = vshll.u32 %v5624, 16
        %v5658 = vrot.slane %v5656, 5
        %v5659 = vor.u32 %v5655, %v5658
        %v5660 = vrot.slane %v5659, 4
        %v5662 = vshll.u32 %v5625, 16
        %v5664 = vrot.slane %v5662, 5
        %v5665 = vsel %vm2677, %v5660, %v5664
        %v5667 = vshrl.u32 %v5626, 16
        %v5669 = vrot.slane %v5667, 4
        %v5670 = vshll.u32 %v5626, 16
        %v5672 = vrot.slane %v5670, 5
        %v5673 = vor.u32 %v5669, %v5672
        %v5674 = vrot.slane %v5673, 4
        %v5676 = vshll.u32 %v5627, 16
        %v5678 = vrot.slane %v5676, 5
        %v5679 = vsel %vm2677, %v5674, %v5678
        %v5681 = vshrl.u32 %v5628, 16
        %v5683 = vrot.slane %v5681, 4
        %v5684 = vshll.u32 %v5628, 16
        %v5686 = vrot.slane %v5684, 5
        %v5687 = vor.u32 %v5683, %v5686
        %v5688 = vrot.slane %v5687, 4
        %v5690 = vshll.u32 %v5629, 16
        %v5692 = vrot.slane %v5690, 5
        %v5693 = vsel %vm2677, %v5688, %v5692
        %v5695 = vshrl.u32 %v5630, 16
        %v5697 = vrot.slane %v5695, 4
        %v5698 = vshll.u32 %v5630, 16
        %v5700 = vrot.slane %v5698, 5
        %v5701 = vor.u32 %v5697, %v5700
        %v5702 = vrot.slane %v5701, 4
        %v5704 = vshll.u32 %v5631, 16
        %v5706 = vrot.slane %v5704, 5
        %v5707 = vsel %vm2677, %v5702, %v5706
        %v5709 = vshrl.u32 %v5632, 16
        %v5711 = vrot.slane %v5709, 4
        %v5712 = vshll.u32 %v5632, 16
        %v5714 = vrot.slane %v5712, 5
        %v5715 = vor.u32 %v5711, %v5714
        %v5716 = vrot.slane %v5715, 4
        %v5718 = vshll.u32 %v5633, 16
        %v5720 = vrot.slane %v5718, 5
        %v5721 = vsel %vm2677, %v5716, %v5720
        %v5723 = vshrl.u32 %v5634, 16
        %v5725 = vrot.slane %v5723, 4
        %v5726 = vshll.u32 %v5634, 16
        %v5728 = vrot.slane %v5726, 5
        %v5729 = vor.u32 %v5725, %v5728
        %v5730 = vrot.slane %v5729, 4
        %v5732 = vshll.u32 %v5635, 16
        %v5734 = vrot.slane %v5732, 5
        %v5735 = vsel %vm2677, %v5730, %v5734
        %v5737 = vshrl.u32 %v5636, 16
        %v5739 = vrot.slane %v5737, 4
        %v5740 = vshll.u32 %v5636, 16
        %v5742 = vrot.slane %v5740, 5
        %v5743 = vor.u32 %v5739, %v5742
        %v5744 = vrot.slane %v5743, 4
        %v5746 = vshll.u32 %v5637, 16
        %v5748 = vrot.slane %v5746, 5
        %v5749 = vsel %vm2677, %v5744, %v5748
        %v5750 = vunpack.c.l.b16 %v5651
        %v5751 = vunpack.c.l.b16 %v5665
        %v5752 = vunpack.c.l.b16 %v5679
        %v5753 = vunpack.c.l.b16 %v5693
        %v5754 = vunpack.c.l.b16 %v5707
        %v5755 = vunpack.c.l.b16 %v5721
        %v5756 = vunpack.c.l.b16 %v5735
        %v5757 = vunpack.c.l.b16 %v5749
        %v5758 = vpack.c.b16 %v5751, %v5750
        %v5759 = vpack.c.b16 %v5753, %v5752
        %v5760 = vpack.c.b16 %v5755, %v5754
        %v5761 = vpack.c.b16 %v5757, %v5756
        %5762 = vrot.lane.b32.xlu0 %v5758, 64
        %v5763 = vpop.permute.xlu0 %5762
        %5764 = vrot.lane.b32.xlu0 %v5759, 64
        %v5765 = vpop.permute.xlu0 %5764
        %5766 = vrot.lane.b32.xlu0 %v5760, 64
        %v5767 = vpop.permute.xlu0 %5766
        %5768 = vrot.lane.b32.xlu0 %v5761, 64
        %v5769 = vpop.permute.xlu0 %5768
        %5774 = vst.msk [vmem:[#allocation3 + $0x1c0] sm:$0xff] %vm2814, %v5763
        %5775 = vst.msk [vmem:[#allocation3 + $0x230] sm:$0xff] %vm2814, %v5765
        %5776 = vst.msk [vmem:[#allocation3 + $0x2a0] sm:$0xff] %vm2814, %v5767
        %5777 = vst.msk [vmem:[#allocation3 + $0x310] sm:$0xff] %vm2814, %v5769
        %v5778 = vld [vmem:[%s4571] sm:$0x1e]
        %v5779 = vld [vmem:[%s4571 + $0x8] sm:$0x1e]
        %v5780 = vld [vmem:[%s4571 + $0x10] sm:$0x1e]
        %v5781 = vld [vmem:[%s4571 + $0x18] sm:$0x1e]
        %v5782 = vld [vmem:[%s4571 + $0x20] sm:$0x1e]
        %v5783 = vld [vmem:[%s4571 + $0x28] sm:$0x1e]
        %v5784 = vld [vmem:[%s4571 + $0x30] sm:$0x1e]
        %v5785 = vld [vmem:[%s4571 + $0x38] sm:$0x1e]
        %v5794 = vunpack.c.l.b16 %v5778
        %v5795 = vunpack.c.h.b16 %v5778
        %v5796 = vunpack.c.l.b16 %v5779
        %v5797 = vunpack.c.h.b16 %v5779
        %v5798 = vunpack.c.l.b16 %v5780
        %v5799 = vunpack.c.h.b16 %v5780
        %v5800 = vunpack.c.l.b16 %v5781
        %v5801 = vunpack.c.h.b16 %v5781
        %v5802 = vunpack.c.l.b16 %v5782
        %v5803 = vunpack.c.h.b16 %v5782
        %v5804 = vunpack.c.l.b16 %v5783
        %v5805 = vunpack.c.h.b16 %v5783
        %v5806 = vunpack.c.l.b16 %v5784
        %v5807 = vunpack.c.h.b16 %v5784
        %v5808 = vunpack.c.l.b16 %v5785
        %v5809 = vunpack.c.h.b16 %v5785
        %v5810 = vpack.c.b16 %v5794, %v5794
        %v5811 = vpack.c.b16 %v5795, %v5795
        %v5812 = vpack.c.b16 %v5796, %v5796
        %v5813 = vpack.c.b16 %v5797, %v5797
        %v5814 = vpack.c.b16 %v5798, %v5798
        %v5815 = vpack.c.b16 %v5799, %v5799
        %v5816 = vpack.c.b16 %v5800, %v5800
        %v5817 = vpack.c.b16 %v5801, %v5801
        %v5818 = vpack.c.b16 %v5802, %v5802
        %v5819 = vpack.c.b16 %v5803, %v5803
        %v5820 = vpack.c.b16 %v5804, %v5804
        %v5821 = vpack.c.b16 %v5805, %v5805
        %v5822 = vpack.c.b16 %v5806, %v5806
        %v5823 = vpack.c.b16 %v5807, %v5807
        %v5824 = vpack.c.b16 %v5808, %v5808
        %v5825 = vpack.c.b16 %v5809, %v5809
        %v5826 = vrot.slane %v5810, 5
        %v5827 = vrot.slane %v5826, 4
        %v5828 = vrot.slane %v5811, 5
        %v5829 = vsel %vm2869, %v5827, %v5828
        %v5830 = vrot.slane %v5812, 5
        %v5831 = vrot.slane %v5830, 4
        %v5832 = vrot.slane %v5813, 5
        %v5833 = vsel %vm2869, %v5831, %v5832
        %v5834 = vrot.slane %v5814, 5
        %v5835 = vrot.slane %v5834, 4
        %v5836 = vrot.slane %v5815, 5
        %v5837 = vsel %vm2869, %v5835, %v5836
        %v5838 = vrot.slane %v5816, 5
        %v5839 = vrot.slane %v5838, 4
        %v5840 = vrot.slane %v5817, 5
        %v5841 = vsel %vm2869, %v5839, %v5840
        %v5842 = vrot.slane %v5818, 5
        %v5843 = vrot.slane %v5842, 4
        %v5844 = vrot.slane %v5819, 5
        %v5845 = vsel %vm2869, %v5843, %v5844
        %v5846 = vrot.slane %v5820, 5
        %v5847 = vrot.slane %v5846, 4
        %v5848 = vrot.slane %v5821, 5
        %v5849 = vsel %vm2869, %v5847, %v5848
        %v5850 = vrot.slane %v5822, 5
        %v5851 = vrot.slane %v5850, 4
        %v5852 = vrot.slane %v5823, 5
        %v5853 = vsel %vm2869, %v5851, %v5852
        %v5854 = vrot.slane %v5824, 5
        %v5855 = vrot.slane %v5854, 4
        %v5856 = vrot.slane %v5825, 5
        %v5857 = vsel %vm2869, %v5855, %v5856
        %v5858 = vunpack.c.l.b16 %v5829
        %v5859 = vunpack.c.l.b16 %v5833
        %v5860 = vunpack.c.l.b16 %v5837
        %v5861 = vunpack.c.l.b16 %v5841
        %v5862 = vunpack.c.l.b16 %v5845
        %v5863 = vunpack.c.l.b16 %v5849
        %v5864 = vunpack.c.l.b16 %v5853
        %v5865 = vunpack.c.l.b16 %v5857
        %v5866 = vpack.c.b16 %v5859, %v5858
        %v5867 = vpack.c.b16 %v5861, %v5860
        %v5868 = vpack.c.b16 %v5863, %v5862
        %v5869 = vpack.c.b16 %v5865, %v5864
        %5874 = vst.msk [vmem:[#allocation3 + $0x1c8] sm:$0xff] %vm2540, %v5866
        %5875 = vst.msk [vmem:[#allocation3 + $0x238] sm:$0xff] %vm2540, %v5867
        %5876 = vst.msk [vmem:[#allocation3 + $0x2a8] sm:$0xff] %vm2540, %v5868
        %5877 = vst.msk [vmem:[#allocation3 + $0x318] sm:$0xff] %vm2540, %v5869
        %v5878 = vld [vmem:[%s4896] sm:$0xf]
        %v5879 = vld [vmem:[%s4896 + $0x8] sm:$0xf]
        %v5880 = vld [vmem:[%s4896 + $0x10] sm:$0xf]
        %v5881 = vld [vmem:[%s4896 + $0x18] sm:$0xf]
        %v5882 = vld [vmem:[%s4896 + $0x20] sm:$0xf]
        %v5883 = vld [vmem:[%s4896 + $0x28] sm:$0xf]
        %v5884 = vld [vmem:[%s4896 + $0x30] sm:$0xf]
        %v5885 = vld [vmem:[%s4896 + $0x38] sm:$0xf]
        %v5894 = vunpack.c.l.b16 %v5878
        %v5895 = vunpack.c.l.b16 %v5879
        %v5896 = vunpack.c.l.b16 %v5880
        %v5897 = vunpack.c.l.b16 %v5881
        %v5898 = vunpack.c.l.b16 %v5882
        %v5899 = vunpack.c.l.b16 %v5883
        %v5900 = vunpack.c.l.b16 %v5884
        %v5901 = vunpack.c.l.b16 %v5885
        %v5902 = vpack.c.b16 %v5895, %v5894
        %v5903 = vpack.c.b16 %v5897, %v5896
        %v5904 = vpack.c.b16 %v5899, %v5898
        %v5905 = vpack.c.b16 %v5901, %v5900
        %5906 = vrot.lane.b32.xlu0 %v5902, 64
        %v5907 = vpop.permute.xlu0 %5906
        %5908 = vrot.lane.b32.xlu0 %v5903, 64
        %v5909 = vpop.permute.xlu0 %5908
        %5910 = vrot.lane.b32.xlu0 %v5904, 64
        %v5911 = vpop.permute.xlu0 %5910
        %5912 = vrot.lane.b32.xlu0 %v5905, 64
        %v5913 = vpop.permute.xlu0 %5912
        %5918 = vst.msk [vmem:[#allocation3 + $0x1c8] sm:$0xff] %vm2814, %v5907
        %5919 = vst.msk [vmem:[#allocation3 + $0x238] sm:$0xff] %vm2814, %v5909
        %5920 = vst.msk [vmem:[#allocation3 + $0x2a8] sm:$0xff] %vm2814, %v5911
        %5921 = vst.msk [vmem:[#allocation3 + $0x318] sm:$0xff] %vm2814, %v5913
        %v5922 = vld [vmem:[%s4896] sm:$0x1f]
        %v5923 = vld [vmem:[%s4896 + $0x8] sm:$0x1f]
        %v5924 = vld [vmem:[%s4896 + $0x10] sm:$0x1f]
        %v5925 = vld [vmem:[%s4896 + $0x18] sm:$0x1f]
        %v5926 = vld [vmem:[%s4896 + $0x20] sm:$0x1f]
        %v5927 = vld [vmem:[%s4896 + $0x28] sm:$0x1f]
        %v5928 = vld [vmem:[%s4896 + $0x30] sm:$0x1f]
        %v5929 = vld [vmem:[%s4896 + $0x38] sm:$0x1f]
        %v5938 = vunpack.c.l.b16 %v5922
        %v5939 = vunpack.c.h.b16 %v5922
        %v5940 = vunpack.c.l.b16 %v5923
        %v5941 = vunpack.c.h.b16 %v5923
        %v5942 = vunpack.c.l.b16 %v5924
        %v5943 = vunpack.c.h.b16 %v5924
        %v5944 = vunpack.c.l.b16 %v5925
        %v5945 = vunpack.c.h.b16 %v5925
        %v5946 = vunpack.c.l.b16 %v5926
        %v5947 = vunpack.c.h.b16 %v5926
        %v5948 = vunpack.c.l.b16 %v5927
        %v5949 = vunpack.c.h.b16 %v5927
        %v5950 = vunpack.c.l.b16 %v5928
        %v5951 = vunpack.c.h.b16 %v5928
        %v5952 = vunpack.c.l.b16 %v5929
        %v5953 = vunpack.c.h.b16 %v5929
        %v5954 = vpack.c.b16 %v5938, %v5938
        %v5955 = vpack.c.b16 %v5939, %v5939
        %v5956 = vpack.c.b16 %v5940, %v5940
        %v5957 = vpack.c.b16 %v5941, %v5941
        %v5958 = vpack.c.b16 %v5942, %v5942
        %v5959 = vpack.c.b16 %v5943, %v5943
        %v5960 = vpack.c.b16 %v5944, %v5944
        %v5961 = vpack.c.b16 %v5945, %v5945
        %v5962 = vpack.c.b16 %v5946, %v5946
        %v5963 = vpack.c.b16 %v5947, %v5947
        %v5964 = vpack.c.b16 %v5948, %v5948
        %v5965 = vpack.c.b16 %v5949, %v5949
        %v5966 = vpack.c.b16 %v5950, %v5950
        %v5967 = vpack.c.b16 %v5951, %v5951
        %v5968 = vpack.c.b16 %v5952, %v5952
        %v5969 = vpack.c.b16 %v5953, %v5953
        %v5971 = vshrl.u32 %v5954, 16
        %v5973 = vrot.slane %v5971, 4
        %v5974 = vshll.u32 %v5954, 16
        %v5976 = vrot.slane %v5974, 5
        %v5977 = vor.u32 %v5973, %v5976
        %v5978 = vrot.slane %v5977, 4
        %v5980 = vshll.u32 %v5955, 16
        %v5982 = vrot.slane %v5980, 5
        %v5983 = vsel %vm2677, %v5978, %v5982
        %v5985 = vshrl.u32 %v5956, 16
        %v5987 = vrot.slane %v5985, 4
        %v5988 = vshll.u32 %v5956, 16
        %v5990 = vrot.slane %v5988, 5
        %v5991 = vor.u32 %v5987, %v5990
        %v5992 = vrot.slane %v5991, 4
        %v5994 = vshll.u32 %v5957, 16
        %v5996 = vrot.slane %v5994, 5
        %v5997 = vsel %vm2677, %v5992, %v5996
        %v5999 = vshrl.u32 %v5958, 16
        %v6001 = vrot.slane %v5999, 4
        %v6002 = vshll.u32 %v5958, 16
        %v6004 = vrot.slane %v6002, 5
        %v6005 = vor.u32 %v6001, %v6004
        %v6006 = vrot.slane %v6005, 4
        %v6008 = vshll.u32 %v5959, 16
        %v6010 = vrot.slane %v6008, 5
        %v6011 = vsel %vm2677, %v6006, %v6010
        %v6013 = vshrl.u32 %v5960, 16
        %v6015 = vrot.slane %v6013, 4
        %v6016 = vshll.u32 %v5960, 16
        %v6018 = vrot.slane %v6016, 5
        %v6019 = vor.u32 %v6015, %v6018
        %v6020 = vrot.slane %v6019, 4
        %v6022 = vshll.u32 %v5961, 16
        %v6024 = vrot.slane %v6022, 5
        %v6025 = vsel %vm2677, %v6020, %v6024
        %v6027 = vshrl.u32 %v5962, 16
        %v6029 = vrot.slane %v6027, 4
        %v6030 = vshll.u32 %v5962, 16
        %v6032 = vrot.slane %v6030, 5
        %v6033 = vor.u32 %v6029, %v6032
        %v6034 = vrot.slane %v6033, 4
        %v6036 = vshll.u32 %v5963, 16
        %v6038 = vrot.slane %v6036, 5
        %v6039 = vsel %vm2677, %v6034, %v6038
        %v6041 = vshrl.u32 %v5964, 16
        %v6043 = vrot.slane %v6041, 4
        %v6044 = vshll.u32 %v5964, 16
        %v6046 = vrot.slane %v6044, 5
        %v6047 = vor.u32 %v6043, %v6046
        %v6048 = vrot.slane %v6047, 4
        %v6050 = vshll.u32 %v5965, 16
        %v6052 = vrot.slane %v6050, 5
        %v6053 = vsel %vm2677, %v6048, %v6052
        %v6055 = vshrl.u32 %v5966, 16
        %v6057 = vrot.slane %v6055, 4
        %v6058 = vshll.u32 %v5966, 16
        %v6060 = vrot.slane %v6058, 5
        %v6061 = vor.u32 %v6057, %v6060
        %v6062 = vrot.slane %v6061, 4
        %v6064 = vshll.u32 %v5967, 16
        %v6066 = vrot.slane %v6064, 5
        %v6067 = vsel %vm2677, %v6062, %v6066
        %v6069 = vshrl.u32 %v5968, 16
        %v6071 = vrot.slane %v6069, 4
        %v6072 = vshll.u32 %v5968, 16
        %v6074 = vrot.slane %v6072, 5
        %v6075 = vor.u32 %v6071, %v6074
        %v6076 = vrot.slane %v6075, 4
        %v6078 = vshll.u32 %v5969, 16
        %v6080 = vrot.slane %v6078, 5
        %v6081 = vsel %vm2677, %v6076, %v6080
        %v6082 = vunpack.c.l.b16 %v5983
        %v6083 = vunpack.c.l.b16 %v5997
        %v6084 = vunpack.c.l.b16 %v6011
        %v6085 = vunpack.c.l.b16 %v6025
        %v6086 = vunpack.c.l.b16 %v6039
        %v6087 = vunpack.c.l.b16 %v6053
        %v6088 = vunpack.c.l.b16 %v6067
        %v6089 = vunpack.c.l.b16 %v6081
        %v6090 = vpack.c.b16 %v6083, %v6082
        %v6091 = vpack.c.b16 %v6085, %v6084
        %v6092 = vpack.c.b16 %v6087, %v6086
        %v6093 = vpack.c.b16 %v6089, %v6088
        %6098 = vst.msk [vmem:[#allocation3 + $0x1d0] sm:$0xff] %vm2540, %v6090
        %6099 = vst.msk [vmem:[#allocation3 + $0x240] sm:$0xff] %vm2540, %v6091
        %6100 = vst.msk [vmem:[#allocation3 + $0x2b0] sm:$0xff] %vm2540, %v6092
        %6101 = vst.msk [vmem:[#allocation3 + $0x320] sm:$0xff] %vm2540, %v6093
        %v6102 = vld [vmem:[%s4896] sm:$0x1e]
        %v6103 = vld [vmem:[%s4896 + $0x8] sm:$0x1e]
        %v6104 = vld [vmem:[%s4896 + $0x10] sm:$0x1e]
        %v6105 = vld [vmem:[%s4896 + $0x18] sm:$0x1e]
        %v6106 = vld [vmem:[%s4896 + $0x20] sm:$0x1e]
        %v6107 = vld [vmem:[%s4896 + $0x28] sm:$0x1e]
        %v6108 = vld [vmem:[%s4896 + $0x30] sm:$0x1e]
        %v6109 = vld [vmem:[%s4896 + $0x38] sm:$0x1e]
        %v6118 = vunpack.c.l.b16 %v6102
        %v6119 = vunpack.c.h.b16 %v6102
        %v6120 = vunpack.c.l.b16 %v6103
        %v6121 = vunpack.c.h.b16 %v6103
        %v6122 = vunpack.c.l.b16 %v6104
        %v6123 = vunpack.c.h.b16 %v6104
        %v6124 = vunpack.c.l.b16 %v6105
        %v6125 = vunpack.c.h.b16 %v6105
        %v6126 = vunpack.c.l.b16 %v6106
        %v6127 = vunpack.c.h.b16 %v6106
        %v6128 = vunpack.c.l.b16 %v6107
        %v6129 = vunpack.c.h.b16 %v6107
        %v6130 = vunpack.c.l.b16 %v6108
        %v6131 = vunpack.c.h.b16 %v6108
        %v6132 = vunpack.c.l.b16 %v6109
        %v6133 = vunpack.c.h.b16 %v6109
        %v6134 = vpack.c.b16 %v6118, %v6118
        %v6135 = vpack.c.b16 %v6119, %v6119
        %v6136 = vpack.c.b16 %v6120, %v6120
        %v6137 = vpack.c.b16 %v6121, %v6121
        %v6138 = vpack.c.b16 %v6122, %v6122
        %v6139 = vpack.c.b16 %v6123, %v6123
        %v6140 = vpack.c.b16 %v6124, %v6124
        %v6141 = vpack.c.b16 %v6125, %v6125
        %v6142 = vpack.c.b16 %v6126, %v6126
        %v6143 = vpack.c.b16 %v6127, %v6127
        %v6144 = vpack.c.b16 %v6128, %v6128
        %v6145 = vpack.c.b16 %v6129, %v6129
        %v6146 = vpack.c.b16 %v6130, %v6130
        %v6147 = vpack.c.b16 %v6131, %v6131
        %v6148 = vpack.c.b16 %v6132, %v6132
        %v6149 = vpack.c.b16 %v6133, %v6133
        %v6150 = vrot.slane %v6134, 5
        %v6151 = vrot.slane %v6150, 4
        %v6152 = vrot.slane %v6135, 5
        %v6153 = vsel %vm2869, %v6151, %v6152
        %v6154 = vrot.slane %v6136, 5
        %v6155 = vrot.slane %v6154, 4
        %v6156 = vrot.slane %v6137, 5
        %v6157 = vsel %vm2869, %v6155, %v6156
        %v6158 = vrot.slane %v6138, 5
        %v6159 = vrot.slane %v6158, 4
        %v6160 = vrot.slane %v6139, 5
        %v6161 = vsel %vm2869, %v6159, %v6160
        %v6162 = vrot.slane %v6140, 5
        %v6163 = vrot.slane %v6162, 4
        %v6164 = vrot.slane %v6141, 5
        %v6165 = vsel %vm2869, %v6163, %v6164
        %v6166 = vrot.slane %v6142, 5
        %v6167 = vrot.slane %v6166, 4
        %v6168 = vrot.slane %v6143, 5
        %v6169 = vsel %vm2869, %v6167, %v6168
        %v6170 = vrot.slane %v6144, 5
        %v6171 = vrot.slane %v6170, 4
        %v6172 = vrot.slane %v6145, 5
        %v6173 = vsel %vm2869, %v6171, %v6172
        %v6174 = vrot.slane %v6146, 5
        %v6175 = vrot.slane %v6174, 4
        %v6176 = vrot.slane %v6147, 5
        %v6177 = vsel %vm2869, %v6175, %v6176
        %v6178 = vrot.slane %v6148, 5
        %v6179 = vrot.slane %v6178, 4
        %v6180 = vrot.slane %v6149, 5
        %v6181 = vsel %vm2869, %v6179, %v6180
        %v6182 = vunpack.c.l.b16 %v6153
        %v6183 = vunpack.c.l.b16 %v6157
        %v6184 = vunpack.c.l.b16 %v6161
        %v6185 = vunpack.c.l.b16 %v6165
        %v6186 = vunpack.c.l.b16 %v6169
        %v6187 = vunpack.c.l.b16 %v6173
        %v6188 = vunpack.c.l.b16 %v6177
        %v6189 = vunpack.c.l.b16 %v6181
        %v6190 = vpack.c.b16 %v6183, %v6182
        %v6191 = vpack.c.b16 %v6185, %v6184
        %v6192 = vpack.c.b16 %v6187, %v6186
        %v6193 = vpack.c.b16 %v6189, %v6188
        %6194 = vrot.lane.b32.xlu0 %v6190, 64
        %v6195 = vpop.permute.xlu0 %6194
        %6196 = vrot.lane.b32.xlu0 %v6191, 64
        %v6197 = vpop.permute.xlu0 %6196
        %6198 = vrot.lane.b32.xlu0 %v6192, 64
        %v6199 = vpop.permute.xlu0 %6198
        %6200 = vrot.lane.b32.xlu0 %v6193, 64
        %v6201 = vpop.permute.xlu0 %6200
        %6206 = vst.msk [vmem:[#allocation3 + $0x1d0] sm:$0xff] %vm2814, %v6195
        %6207 = vst.msk [vmem:[#allocation3 + $0x240] sm:$0xff] %vm2814, %v6197
        %6208 = vst.msk [vmem:[#allocation3 + $0x2b0] sm:$0xff] %vm2814, %v6199
        %6209 = vst.msk [vmem:[#allocation3 + $0x320] sm:$0xff] %vm2814, %v6201
        %v6210 = vld [vmem:[%s5229] sm:$0xf]
        %v6211 = vld [vmem:[%s5229 + $0x8] sm:$0xf]
        %v6212 = vld [vmem:[%s5229 + $0x10] sm:$0xf]
        %v6213 = vld [vmem:[%s5229 + $0x18] sm:$0xf]
        %v6214 = vld [vmem:[%s5229 + $0x20] sm:$0xf]
        %v6215 = vld [vmem:[%s5229 + $0x28] sm:$0xf]
        %v6216 = vld [vmem:[%s5229 + $0x30] sm:$0xf]
        %v6217 = vld [vmem:[%s5229 + $0x38] sm:$0xf]
        %v6226 = vunpack.c.l.b16 %v6210
        %v6227 = vunpack.c.l.b16 %v6211
        %v6228 = vunpack.c.l.b16 %v6212
        %v6229 = vunpack.c.l.b16 %v6213
        %v6230 = vunpack.c.l.b16 %v6214
        %v6231 = vunpack.c.l.b16 %v6215
        %v6232 = vunpack.c.l.b16 %v6216
        %v6233 = vunpack.c.l.b16 %v6217
        %v6234 = vpack.c.b16 %v6227, %v6226
        %v6235 = vpack.c.b16 %v6229, %v6228
        %v6236 = vpack.c.b16 %v6231, %v6230
        %v6237 = vpack.c.b16 %v6233, %v6232
        %6242 = vst.msk [vmem:[#allocation3 + $0x1d8] sm:$0xff] %vm2540, %v6234
        %6243 = vst.msk [vmem:[#allocation3 + $0x248] sm:$0xff] %vm2540, %v6235
        %6244 = vst.msk [vmem:[#allocation3 + $0x2b8] sm:$0xff] %vm2540, %v6236
        %6245 = vst.msk [vmem:[#allocation3 + $0x328] sm:$0xff] %vm2540, %v6237
        %v6246 = vld [vmem:[%s5229] sm:$0x1f]
        %v6247 = vld [vmem:[%s5229 + $0x8] sm:$0x1f]
        %v6248 = vld [vmem:[%s5229 + $0x10] sm:$0x1f]
        %v6249 = vld [vmem:[%s5229 + $0x18] sm:$0x1f]
        %v6250 = vld [vmem:[%s5229 + $0x20] sm:$0x1f]
        %v6251 = vld [vmem:[%s5229 + $0x28] sm:$0x1f]
        %v6252 = vld [vmem:[%s5229 + $0x30] sm:$0x1f]
        %v6253 = vld [vmem:[%s5229 + $0x38] sm:$0x1f]
        %v6262 = vunpack.c.l.b16 %v6246
        %v6263 = vunpack.c.h.b16 %v6246
        %v6264 = vunpack.c.l.b16 %v6247
        %v6265 = vunpack.c.h.b16 %v6247
        %v6266 = vunpack.c.l.b16 %v6248
        %v6267 = vunpack.c.h.b16 %v6248
        %v6268 = vunpack.c.l.b16 %v6249
        %v6269 = vunpack.c.h.b16 %v6249
        %v6270 = vunpack.c.l.b16 %v6250
        %v6271 = vunpack.c.h.b16 %v6250
        %v6272 = vunpack.c.l.b16 %v6251
        %v6273 = vunpack.c.h.b16 %v6251
        %v6274 = vunpack.c.l.b16 %v6252
        %v6275 = vunpack.c.h.b16 %v6252
        %v6276 = vunpack.c.l.b16 %v6253
        %v6277 = vunpack.c.h.b16 %v6253
        %v6278 = vpack.c.b16 %v6262, %v6262
        %v6279 = vpack.c.b16 %v6263, %v6263
        %v6280 = vpack.c.b16 %v6264, %v6264
        %v6281 = vpack.c.b16 %v6265, %v6265
        %v6282 = vpack.c.b16 %v6266, %v6266
        %v6283 = vpack.c.b16 %v6267, %v6267
        %v6284 = vpack.c.b16 %v6268, %v6268
        %v6285 = vpack.c.b16 %v6269, %v6269
        %v6286 = vpack.c.b16 %v6270, %v6270
        %v6287 = vpack.c.b16 %v6271, %v6271
        %v6288 = vpack.c.b16 %v6272, %v6272
        %v6289 = vpack.c.b16 %v6273, %v6273
        %v6290 = vpack.c.b16 %v6274, %v6274
        %v6291 = vpack.c.b16 %v6275, %v6275
        %v6292 = vpack.c.b16 %v6276, %v6276
        %v6293 = vpack.c.b16 %v6277, %v6277
        %v6295 = vshrl.u32 %v6278, 16
        %v6297 = vrot.slane %v6295, 4
        %v6298 = vshll.u32 %v6278, 16
        %v6300 = vrot.slane %v6298, 5
        %v6301 = vor.u32 %v6297, %v6300
        %v6302 = vrot.slane %v6301, 4
        %v6304 = vshll.u32 %v6279, 16
        %v6306 = vrot.slane %v6304, 5
        %v6307 = vsel %vm2677, %v6302, %v6306
        %v6309 = vshrl.u32 %v6280, 16
        %v6311 = vrot.slane %v6309, 4
        %v6312 = vshll.u32 %v6280, 16
        %v6314 = vrot.slane %v6312, 5
        %v6315 = vor.u32 %v6311, %v6314
        %v6316 = vrot.slane %v6315, 4
        %v6318 = vshll.u32 %v6281, 16
        %v6320 = vrot.slane %v6318, 5
        %v6321 = vsel %vm2677, %v6316, %v6320
        %v6323 = vshrl.u32 %v6282, 16
        %v6325 = vrot.slane %v6323, 4
        %v6326 = vshll.u32 %v6282, 16
        %v6328 = vrot.slane %v6326, 5
        %v6329 = vor.u32 %v6325, %v6328
        %v6330 = vrot.slane %v6329, 4
        %v6332 = vshll.u32 %v6283, 16
        %v6334 = vrot.slane %v6332, 5
        %v6335 = vsel %vm2677, %v6330, %v6334
        %v6337 = vshrl.u32 %v6284, 16
        %v6339 = vrot.slane %v6337, 4
        %v6340 = vshll.u32 %v6284, 16
        %v6342 = vrot.slane %v6340, 5
        %v6343 = vor.u32 %v6339, %v6342
        %v6344 = vrot.slane %v6343, 4
        %v6346 = vshll.u32 %v6285, 16
        %v6348 = vrot.slane %v6346, 5
        %v6349 = vsel %vm2677, %v6344, %v6348
        %v6351 = vshrl.u32 %v6286, 16
        %v6353 = vrot.slane %v6351, 4
        %v6354 = vshll.u32 %v6286, 16
        %v6356 = vrot.slane %v6354, 5
        %v6357 = vor.u32 %v6353, %v6356
        %v6358 = vrot.slane %v6357, 4
        %v6360 = vshll.u32 %v6287, 16
        %v6362 = vrot.slane %v6360, 5
        %v6363 = vsel %vm2677, %v6358, %v6362
        %v6365 = vshrl.u32 %v6288, 16
        %v6367 = vrot.slane %v6365, 4
        %v6368 = vshll.u32 %v6288, 16
        %v6370 = vrot.slane %v6368, 5
        %v6371 = vor.u32 %v6367, %v6370
        %v6372 = vrot.slane %v6371, 4
        %v6374 = vshll.u32 %v6289, 16
        %v6376 = vrot.slane %v6374, 5
        %v6377 = vsel %vm2677, %v6372, %v6376
        %v6379 = vshrl.u32 %v6290, 16
        %v6381 = vrot.slane %v6379, 4
        %v6382 = vshll.u32 %v6290, 16
        %v6384 = vrot.slane %v6382, 5
        %v6385 = vor.u32 %v6381, %v6384
        %v6386 = vrot.slane %v6385, 4
        %v6388 = vshll.u32 %v6291, 16
        %v6390 = vrot.slane %v6388, 5
        %v6391 = vsel %vm2677, %v6386, %v6390
        %v6393 = vshrl.u32 %v6292, 16
        %v6395 = vrot.slane %v6393, 4
        %v6396 = vshll.u32 %v6292, 16
        %v6398 = vrot.slane %v6396, 5
        %v6399 = vor.u32 %v6395, %v6398
        %v6400 = vrot.slane %v6399, 4
        %v6402 = vshll.u32 %v6293, 16
        %v6404 = vrot.slane %v6402, 5
        %v6405 = vsel %vm2677, %v6400, %v6404
        %v6406 = vunpack.c.l.b16 %v6307
        %v6407 = vunpack.c.l.b16 %v6321
        %v6408 = vunpack.c.l.b16 %v6335
        %v6409 = vunpack.c.l.b16 %v6349
        %v6410 = vunpack.c.l.b16 %v6363
        %v6411 = vunpack.c.l.b16 %v6377
        %v6412 = vunpack.c.l.b16 %v6391
        %v6413 = vunpack.c.l.b16 %v6405
        %v6414 = vpack.c.b16 %v6407, %v6406
        %v6415 = vpack.c.b16 %v6409, %v6408
        %v6416 = vpack.c.b16 %v6411, %v6410
        %v6417 = vpack.c.b16 %v6413, %v6412
        %6418 = vrot.lane.b32.xlu0 %v6414, 64
        %v6419 = vpop.permute.xlu0 %6418
        %6420 = vrot.lane.b32.xlu0 %v6415, 64
        %v6421 = vpop.permute.xlu0 %6420
        %6422 = vrot.lane.b32.xlu0 %v6416, 64
        %v6423 = vpop.permute.xlu0 %6422
        %6424 = vrot.lane.b32.xlu0 %v6417, 64
        %v6425 = vpop.permute.xlu0 %6424
        %6430 = vst.msk [vmem:[#allocation3 + $0x1d8] sm:$0xff] %vm2814, %v6419
        %6431 = vst.msk [vmem:[#allocation3 + $0x248] sm:$0xff] %vm2814, %v6421
        %6432 = vst.msk [vmem:[#allocation3 + $0x2b8] sm:$0xff] %vm2814, %v6423
        %6433 = vst.msk [vmem:[#allocation3 + $0x328] sm:$0xff] %vm2814, %v6425
        %v6434 = vld [vmem:[%s5229] sm:$0x1e]
        %v6435 = vld [vmem:[%s5229 + $0x8] sm:$0x1e]
        %v6436 = vld [vmem:[%s5229 + $0x10] sm:$0x1e]
        %v6437 = vld [vmem:[%s5229 + $0x18] sm:$0x1e]
        %v6438 = vld [vmem:[%s5229 + $0x20] sm:$0x1e]
        %v6439 = vld [vmem:[%s5229 + $0x28] sm:$0x1e]
        %v6440 = vld [vmem:[%s5229 + $0x30] sm:$0x1e]
        %v6441 = vld [vmem:[%s5229 + $0x38] sm:$0x1e]
        %v6450 = vunpack.c.l.b16 %v6434
        %v6451 = vunpack.c.h.b16 %v6434
        %v6452 = vunpack.c.l.b16 %v6435
        %v6453 = vunpack.c.h.b16 %v6435
        %v6454 = vunpack.c.l.b16 %v6436
        %v6455 = vunpack.c.h.b16 %v6436
        %v6456 = vunpack.c.l.b16 %v6437
        %v6457 = vunpack.c.h.b16 %v6437
        %v6458 = vunpack.c.l.b16 %v6438
        %v6459 = vunpack.c.h.b16 %v6438
        %v6460 = vunpack.c.l.b16 %v6439
        %v6461 = vunpack.c.h.b16 %v6439
        %v6462 = vunpack.c.l.b16 %v6440
        %v6463 = vunpack.c.h.b16 %v6440
        %v6464 = vunpack.c.l.b16 %v6441
        %v6465 = vunpack.c.h.b16 %v6441
        %v6466 = vpack.c.b16 %v6450, %v6450
        %v6467 = vpack.c.b16 %v6451, %v6451
        %v6468 = vpack.c.b16 %v6452, %v6452
        %v6469 = vpack.c.b16 %v6453, %v6453
        %v6470 = vpack.c.b16 %v6454, %v6454
        %v6471 = vpack.c.b16 %v6455, %v6455
        %v6472 = vpack.c.b16 %v6456, %v6456
        %v6473 = vpack.c.b16 %v6457, %v6457
        %v6474 = vpack.c.b16 %v6458, %v6458
        %v6475 = vpack.c.b16 %v6459, %v6459
        %v6476 = vpack.c.b16 %v6460, %v6460
        %v6477 = vpack.c.b16 %v6461, %v6461
        %v6478 = vpack.c.b16 %v6462, %v6462
        %v6479 = vpack.c.b16 %v6463, %v6463
        %v6480 = vpack.c.b16 %v6464, %v6464
        %v6481 = vpack.c.b16 %v6465, %v6465
        %v6482 = vrot.slane %v6466, 5
        %v6483 = vrot.slane %v6482, 4
        %v6484 = vrot.slane %v6467, 5
        %v6485 = vsel %vm2869, %v6483, %v6484
        %v6486 = vrot.slane %v6468, 5
        %v6487 = vrot.slane %v6486, 4
        %v6488 = vrot.slane %v6469, 5
        %v6489 = vsel %vm2869, %v6487, %v6488
        %v6490 = vrot.slane %v6470, 5
        %v6491 = vrot.slane %v6490, 4
        %v6492 = vrot.slane %v6471, 5
        %v6493 = vsel %vm2869, %v6491, %v6492
        %v6494 = vrot.slane %v6472, 5
        %v6495 = vrot.slane %v6494, 4
        %v6496 = vrot.slane %v6473, 5
        %v6497 = vsel %vm2869, %v6495, %v6496
        %v6498 = vrot.slane %v6474, 5
        %v6499 = vrot.slane %v6498, 4
        %v6500 = vrot.slane %v6475, 5
        %v6501 = vsel %vm2869, %v6499, %v6500
        %v6502 = vrot.slane %v6476, 5
        %v6503 = vrot.slane %v6502, 4
        %v6504 = vrot.slane %v6477, 5
        %v6505 = vsel %vm2869, %v6503, %v6504
        %v6506 = vrot.slane %v6478, 5
        %v6507 = vrot.slane %v6506, 4
        %v6508 = vrot.slane %v6479, 5
        %v6509 = vsel %vm2869, %v6507, %v6508
        %v6510 = vrot.slane %v6480, 5
        %v6511 = vrot.slane %v6510, 4
        %v6512 = vrot.slane %v6481, 5
        %v6513 = vsel %vm2869, %v6511, %v6512
        %v6514 = vunpack.c.l.b16 %v6485
        %v6515 = vunpack.c.l.b16 %v6489
        %v6516 = vunpack.c.l.b16 %v6493
        %v6517 = vunpack.c.l.b16 %v6497
        %v6518 = vunpack.c.l.b16 %v6501
        %v6519 = vunpack.c.l.b16 %v6505
        %v6520 = vunpack.c.l.b16 %v6509
        %v6521 = vunpack.c.l.b16 %v6513
        %v6522 = vpack.c.b16 %v6515, %v6514
        %v6523 = vpack.c.b16 %v6517, %v6516
        %v6524 = vpack.c.b16 %v6519, %v6518
        %v6525 = vpack.c.b16 %v6521, %v6520
        %6530 = vst.msk [vmem:[#allocation3 + $0x1e0] sm:$0xff] %vm2540, %v6522
        %6531 = vst.msk [vmem:[#allocation3 + $0x250] sm:$0xff] %vm2540, %v6523
        %6532 = vst.msk [vmem:[#allocation3 + $0x2c0] sm:$0xff] %vm2540, %v6524
        %6533 = vst.msk [vmem:[#allocation3 + $0x330] sm:$0xff] %vm2540, %v6525
        %s6534 = scalar_lea.vmem [#allocation2], 240
        %v6535 = vld [vmem:[%s6534] sm:$0xf]
        %v6536 = vld [vmem:[%s6534 + $0x8] sm:$0xf]
        %v6537 = vld [vmem:[%s6534 + $0x10] sm:$0xf]
        %v6538 = vld [vmem:[%s6534 + $0x18] sm:$0xf]
        %v6539 = vld [vmem:[%s6534 + $0x20] sm:$0xf]
        %v6540 = vld [vmem:[%s6534 + $0x28] sm:$0xf]
        %v6541 = vld [vmem:[%s6534 + $0x30] sm:$0xf]
        %v6542 = vld [vmem:[%s6534 + $0x38] sm:$0xf]
        %v6551 = vunpack.c.l.b16 %v6535
        %v6552 = vunpack.c.l.b16 %v6536
        %v6553 = vunpack.c.l.b16 %v6537
        %v6554 = vunpack.c.l.b16 %v6538
        %v6555 = vunpack.c.l.b16 %v6539
        %v6556 = vunpack.c.l.b16 %v6540
        %v6557 = vunpack.c.l.b16 %v6541
        %v6558 = vunpack.c.l.b16 %v6542
        %v6559 = vpack.c.b16 %v6552, %v6551
        %v6560 = vpack.c.b16 %v6554, %v6553
        %v6561 = vpack.c.b16 %v6556, %v6555
        %v6562 = vpack.c.b16 %v6558, %v6557
        %6563 = vrot.lane.b32.xlu0 %v6559, 64
        %v6564 = vpop.permute.xlu0 %6563
        %6565 = vrot.lane.b32.xlu0 %v6560, 64
        %v6566 = vpop.permute.xlu0 %6565
        %6567 = vrot.lane.b32.xlu0 %v6561, 64
        %v6568 = vpop.permute.xlu0 %6567
        %6569 = vrot.lane.b32.xlu0 %v6562, 64
        %v6570 = vpop.permute.xlu0 %6569
        %6575 = vst.msk [vmem:[#allocation3 + $0x1e0] sm:$0xff] %vm2814, %v6564
        %6576 = vst.msk [vmem:[#allocation3 + $0x250] sm:$0xff] %vm2814, %v6566
        %6577 = vst.msk [vmem:[#allocation3 + $0x2c0] sm:$0xff] %vm2814, %v6568
        %6578 = vst.msk [vmem:[#allocation3 + $0x330] sm:$0xff] %vm2814, %v6570
        %v6579 = vld [vmem:[%s6534] sm:$0x1f]
        %v6580 = vld [vmem:[%s6534 + $0x8] sm:$0x1f]
        %v6581 = vld [vmem:[%s6534 + $0x10] sm:$0x1f]
        %v6582 = vld [vmem:[%s6534 + $0x18] sm:$0x1f]
        %v6583 = vld [vmem:[%s6534 + $0x20] sm:$0x1f]
        %v6584 = vld [vmem:[%s6534 + $0x28] sm:$0x1f]
        %v6585 = vld [vmem:[%s6534 + $0x30] sm:$0x1f]
        %v6586 = vld [vmem:[%s6534 + $0x38] sm:$0x1f]
        %v6595 = vunpack.c.l.b16 %v6579
        %v6596 = vunpack.c.h.b16 %v6579
        %v6597 = vunpack.c.l.b16 %v6580
        %v6598 = vunpack.c.h.b16 %v6580
        %v6599 = vunpack.c.l.b16 %v6581
        %v6600 = vunpack.c.h.b16 %v6581
        %v6601 = vunpack.c.l.b16 %v6582
        %v6602 = vunpack.c.h.b16 %v6582
        %v6603 = vunpack.c.l.b16 %v6583
        %v6604 = vunpack.c.h.b16 %v6583
        %v6605 = vunpack.c.l.b16 %v6584
        %v6606 = vunpack.c.h.b16 %v6584
        %v6607 = vunpack.c.l.b16 %v6585
        %v6608 = vunpack.c.h.b16 %v6585
        %v6609 = vunpack.c.l.b16 %v6586
        %v6610 = vunpack.c.h.b16 %v6586
        %v6611 = vpack.c.b16 %v6595, %v6595
        %v6612 = vpack.c.b16 %v6596, %v6596
        %v6613 = vpack.c.b16 %v6597, %v6597
        %v6614 = vpack.c.b16 %v6598, %v6598
        %v6615 = vpack.c.b16 %v6599, %v6599
        %v6616 = vpack.c.b16 %v6600, %v6600
        %v6617 = vpack.c.b16 %v6601, %v6601
        %v6618 = vpack.c.b16 %v6602, %v6602
        %v6619 = vpack.c.b16 %v6603, %v6603
        %v6620 = vpack.c.b16 %v6604, %v6604
        %v6621 = vpack.c.b16 %v6605, %v6605
        %v6622 = vpack.c.b16 %v6606, %v6606
        %v6623 = vpack.c.b16 %v6607, %v6607
        %v6624 = vpack.c.b16 %v6608, %v6608
        %v6625 = vpack.c.b16 %v6609, %v6609
        %v6626 = vpack.c.b16 %v6610, %v6610
        %v6628 = vshrl.u32 %v6611, 16
        %v6630 = vrot.slane %v6628, 4
        %v6631 = vshll.u32 %v6611, 16
        %v6633 = vrot.slane %v6631, 5
        %v6634 = vor.u32 %v6630, %v6633
        %v6635 = vrot.slane %v6634, 4
        %v6637 = vshll.u32 %v6612, 16
        %v6639 = vrot.slane %v6637, 5
        %v6640 = vsel %vm2677, %v6635, %v6639
        %v6642 = vshrl.u32 %v6613, 16
        %v6644 = vrot.slane %v6642, 4
        %v6645 = vshll.u32 %v6613, 16
        %v6647 = vrot.slane %v6645, 5
        %v6648 = vor.u32 %v6644, %v6647
        %v6649 = vrot.slane %v6648, 4
        %v6651 = vshll.u32 %v6614, 16
        %v6653 = vrot.slane %v6651, 5
        %v6654 = vsel %vm2677, %v6649, %v6653
        %v6656 = vshrl.u32 %v6615, 16
        %v6658 = vrot.slane %v6656, 4
        %v6659 = vshll.u32 %v6615, 16
        %v6661 = vrot.slane %v6659, 5
        %v6662 = vor.u32 %v6658, %v6661
        %v6663 = vrot.slane %v6662, 4
        %v6665 = vshll.u32 %v6616, 16
        %v6667 = vrot.slane %v6665, 5
        %v6668 = vsel %vm2677, %v6663, %v6667
        %v6670 = vshrl.u32 %v6617, 16
        %v6672 = vrot.slane %v6670, 4
        %v6673 = vshll.u32 %v6617, 16
        %v6675 = vrot.slane %v6673, 5
        %v6676 = vor.u32 %v6672, %v6675
        %v6677 = vrot.slane %v6676, 4
        %v6679 = vshll.u32 %v6618, 16
        %v6681 = vrot.slane %v6679, 5
        %v6682 = vsel %vm2677, %v6677, %v6681
        %v6684 = vshrl.u32 %v6619, 16
        %v6686 = vrot.slane %v6684, 4
        %v6687 = vshll.u32 %v6619, 16
        %v6689 = vrot.slane %v6687, 5
        %v6690 = vor.u32 %v6686, %v6689
        %v6691 = vrot.slane %v6690, 4
        %v6693 = vshll.u32 %v6620, 16
        %v6695 = vrot.slane %v6693, 5
        %v6696 = vsel %vm2677, %v6691, %v6695
        %v6698 = vshrl.u32 %v6621, 16
        %v6700 = vrot.slane %v6698, 4
        %v6701 = vshll.u32 %v6621, 16
        %v6703 = vrot.slane %v6701, 5
        %v6704 = vor.u32 %v6700, %v6703
        %v6705 = vrot.slane %v6704, 4
        %v6707 = vshll.u32 %v6622, 16
        %v6709 = vrot.slane %v6707, 5
        %v6710 = vsel %vm2677, %v6705, %v6709
        %v6712 = vshrl.u32 %v6623, 16
        %v6714 = vrot.slane %v6712, 4
        %v6715 = vshll.u32 %v6623, 16
        %v6717 = vrot.slane %v6715, 5
        %v6718 = vor.u32 %v6714, %v6717
        %v6719 = vrot.slane %v6718, 4
        %v6721 = vshll.u32 %v6624, 16
        %v6723 = vrot.slane %v6721, 5
        %v6724 = vsel %vm2677, %v6719, %v6723
        %v6726 = vshrl.u32 %v6625, 16
        %v6728 = vrot.slane %v6726, 4
        %v6729 = vshll.u32 %v6625, 16
        %v6731 = vrot.slane %v6729, 5
        %v6732 = vor.u32 %v6728, %v6731
        %v6733 = vrot.slane %v6732, 4
        %v6735 = vshll.u32 %v6626, 16
        %v6737 = vrot.slane %v6735, 5
        %v6738 = vsel %vm2677, %v6733, %v6737
        %v6739 = vunpack.c.l.b16 %v6640
        %v6740 = vunpack.c.l.b16 %v6654
        %v6741 = vunpack.c.l.b16 %v6668
        %v6742 = vunpack.c.l.b16 %v6682
        %v6743 = vunpack.c.l.b16 %v6696
        %v6744 = vunpack.c.l.b16 %v6710
        %v6745 = vunpack.c.l.b16 %v6724
        %v6746 = vunpack.c.l.b16 %v6738
        %v6747 = vpack.c.b16 %v6740, %v6739
        %v6748 = vpack.c.b16 %v6742, %v6741
        %v6749 = vpack.c.b16 %v6744, %v6743
        %v6750 = vpack.c.b16 %v6746, %v6745
        %6755 = vst.msk [vmem:[#allocation3 + $0x1e8] sm:$0xff] %vm2540, %v6747
        %6756 = vst.msk [vmem:[#allocation3 + $0x258] sm:$0xff] %vm2540, %v6748
        %6757 = vst.msk [vmem:[#allocation3 + $0x2c8] sm:$0xff] %vm2540, %v6749
        %6758 = vst.msk [vmem:[#allocation3 + $0x338] sm:$0xff] %vm2540, %v6750
        %v6759 = vld [vmem:[%s6534] sm:$0x1e]
        %v6760 = vld [vmem:[%s6534 + $0x8] sm:$0x1e]
        %v6761 = vld [vmem:[%s6534 + $0x10] sm:$0x1e]
        %v6762 = vld [vmem:[%s6534 + $0x18] sm:$0x1e]
        %v6763 = vld [vmem:[%s6534 + $0x20] sm:$0x1e]
        %v6764 = vld [vmem:[%s6534 + $0x28] sm:$0x1e]
        %v6765 = vld [vmem:[%s6534 + $0x30] sm:$0x1e]
        %v6766 = vld [vmem:[%s6534 + $0x38] sm:$0x1e]
        %v6775 = vunpack.c.l.b16 %v6759
        %v6776 = vunpack.c.h.b16 %v6759
        %v6777 = vunpack.c.l.b16 %v6760
        %v6778 = vunpack.c.h.b16 %v6760
        %v6779 = vunpack.c.l.b16 %v6761
        %v6780 = vunpack.c.h.b16 %v6761
        %v6781 = vunpack.c.l.b16 %v6762
        %v6782 = vunpack.c.h.b16 %v6762
        %v6783 = vunpack.c.l.b16 %v6763
        %v6784 = vunpack.c.h.b16 %v6763
        %v6785 = vunpack.c.l.b16 %v6764
        %v6786 = vunpack.c.h.b16 %v6764
        %v6787 = vunpack.c.l.b16 %v6765
        %v6788 = vunpack.c.h.b16 %v6765
        %v6789 = vunpack.c.l.b16 %v6766
        %v6790 = vunpack.c.h.b16 %v6766
        %v6791 = vpack.c.b16 %v6775, %v6775
        %v6792 = vpack.c.b16 %v6776, %v6776
        %v6793 = vpack.c.b16 %v6777, %v6777
        %v6794 = vpack.c.b16 %v6778, %v6778
        %v6795 = vpack.c.b16 %v6779, %v6779
        %v6796 = vpack.c.b16 %v6780, %v6780
        %v6797 = vpack.c.b16 %v6781, %v6781
        %v6798 = vpack.c.b16 %v6782, %v6782
        %v6799 = vpack.c.b16 %v6783, %v6783
        %v6800 = vpack.c.b16 %v6784, %v6784
        %v6801 = vpack.c.b16 %v6785, %v6785
        %v6802 = vpack.c.b16 %v6786, %v6786
        %v6803 = vpack.c.b16 %v6787, %v6787
        %v6804 = vpack.c.b16 %v6788, %v6788
        %v6805 = vpack.c.b16 %v6789, %v6789
        %v6806 = vpack.c.b16 %v6790, %v6790
        %v6807 = vrot.slane %v6791, 5
        %v6808 = vrot.slane %v6807, 4
        %v6809 = vrot.slane %v6792, 5
        %v6810 = vsel %vm2869, %v6808, %v6809
        %v6811 = vrot.slane %v6793, 5
        %v6812 = vrot.slane %v6811, 4
        %v6813 = vrot.slane %v6794, 5
        %v6814 = vsel %vm2869, %v6812, %v6813
        %v6815 = vrot.slane %v6795, 5
        %v6816 = vrot.slane %v6815, 4
        %v6817 = vrot.slane %v6796, 5
        %v6818 = vsel %vm2869, %v6816, %v6817
        %v6819 = vrot.slane %v6797, 5
        %v6820 = vrot.slane %v6819, 4
        %v6821 = vrot.slane %v6798, 5
        %v6822 = vsel %vm2869, %v6820, %v6821
        %v6823 = vrot.slane %v6799, 5
        %v6824 = vrot.slane %v6823, 4
        %v6825 = vrot.slane %v6800, 5
        %v6826 = vsel %vm2869, %v6824, %v6825
        %v6827 = vrot.slane %v6801, 5
        %v6828 = vrot.slane %v6827, 4
        %v6829 = vrot.slane %v6802, 5
        %v6830 = vsel %vm2869, %v6828, %v6829
        %v6831 = vrot.slane %v6803, 5
        %v6832 = vrot.slane %v6831, 4
        %v6833 = vrot.slane %v6804, 5
        %v6834 = vsel %vm2869, %v6832, %v6833
        %v6835 = vrot.slane %v6805, 5
        %v6836 = vrot.slane %v6835, 4
        %v6837 = vrot.slane %v6806, 5
        %v6838 = vsel %vm2869, %v6836, %v6837
        %v6839 = vunpack.c.l.b16 %v6810
        %v6840 = vunpack.c.l.b16 %v6814
        %v6841 = vunpack.c.l.b16 %v6818
        %v6842 = vunpack.c.l.b16 %v6822
        %v6843 = vunpack.c.l.b16 %v6826
        %v6844 = vunpack.c.l.b16 %v6830
        %v6845 = vunpack.c.l.b16 %v6834
        %v6846 = vunpack.c.l.b16 %v6838
        %v6847 = vpack.c.b16 %v6840, %v6839
        %v6848 = vpack.c.b16 %v6842, %v6841
        %v6849 = vpack.c.b16 %v6844, %v6843
        %v6850 = vpack.c.b16 %v6846, %v6845
        %6851 = vrot.lane.b32.xlu0 %v6847, 64
        %v6852 = vpop.permute.xlu0 %6851
        %6853 = vrot.lane.b32.xlu0 %v6848, 64
        %v6854 = vpop.permute.xlu0 %6853
        %6855 = vrot.lane.b32.xlu0 %v6849, 64
        %v6856 = vpop.permute.xlu0 %6855
        %6857 = vrot.lane.b32.xlu0 %v6850, 64
        %v6858 = vpop.permute.xlu0 %6857
        %6863 = vst.msk [vmem:[#allocation3 + $0x1e8] sm:$0xff] %vm2814, %v6852
        %6864 = vst.msk [vmem:[#allocation3 + $0x258] sm:$0xff] %vm2814, %v6854
        %6865 = vst.msk [vmem:[#allocation3 + $0x2c8] sm:$0xff] %vm2814, %v6856
        %6866 = vst.msk [vmem:[#allocation3 + $0x338] sm:$0xff] %vm2814, %v6858
        %s6867 = scalar_lea.vmem [#allocation2], 248
        %v6868 = vld [vmem:[%s6867] sm:$0xf]
        %v6869 = vld [vmem:[%s6867 + $0x8] sm:$0xf]
        %v6870 = vld [vmem:[%s6867 + $0x10] sm:$0xf]
        %v6871 = vld [vmem:[%s6867 + $0x18] sm:$0xf]
        %v6872 = vld [vmem:[%s6867 + $0x20] sm:$0xf]
        %v6873 = vld [vmem:[%s6867 + $0x28] sm:$0xf]
        %v6874 = vld [vmem:[%s6867 + $0x30] sm:$0xf]
        %v6875 = vld [vmem:[%s6867 + $0x38] sm:$0xf]
        %v6884 = vunpack.c.l.b16 %v6868
        %v6885 = vunpack.c.l.b16 %v6869
        %v6886 = vunpack.c.l.b16 %v6870
        %v6887 = vunpack.c.l.b16 %v6871
        %v6888 = vunpack.c.l.b16 %v6872
        %v6889 = vunpack.c.l.b16 %v6873
        %v6890 = vunpack.c.l.b16 %v6874
        %v6891 = vunpack.c.l.b16 %v6875
        %v6892 = vpack.c.b16 %v6885, %v6884
        %v6893 = vpack.c.b16 %v6887, %v6886
        %v6894 = vpack.c.b16 %v6889, %v6888
        %v6895 = vpack.c.b16 %v6891, %v6890
        %6900 = vst.msk [vmem:[#allocation3 + $0x1f0] sm:$0xff] %vm2540, %v6892
        %6901 = vst.msk [vmem:[#allocation3 + $0x260] sm:$0xff] %vm2540, %v6893
        %6902 = vst.msk [vmem:[#allocation3 + $0x2d0] sm:$0xff] %vm2540, %v6894
        %6903 = vst.msk [vmem:[#allocation3 + $0x340] sm:$0xff] %vm2540, %v6895
        %v6904 = vld [vmem:[%s6867] sm:$0x1f]
        %v6905 = vld [vmem:[%s6867 + $0x8] sm:$0x1f]
        %v6906 = vld [vmem:[%s6867 + $0x10] sm:$0x1f]
        %v6907 = vld [vmem:[%s6867 + $0x18] sm:$0x1f]
        %v6908 = vld [vmem:[%s6867 + $0x20] sm:$0x1f]
        %v6909 = vld [vmem:[%s6867 + $0x28] sm:$0x1f]
        %v6910 = vld [vmem:[%s6867 + $0x30] sm:$0x1f]
        %v6911 = vld [vmem:[%s6867 + $0x38] sm:$0x1f]
        %v6920 = vunpack.c.l.b16 %v6904
        %v6921 = vunpack.c.h.b16 %v6904
        %v6922 = vunpack.c.l.b16 %v6905
        %v6923 = vunpack.c.h.b16 %v6905
        %v6924 = vunpack.c.l.b16 %v6906
        %v6925 = vunpack.c.h.b16 %v6906
        %v6926 = vunpack.c.l.b16 %v6907
        %v6927 = vunpack.c.h.b16 %v6907
        %v6928 = vunpack.c.l.b16 %v6908
        %v6929 = vunpack.c.h.b16 %v6908
        %v6930 = vunpack.c.l.b16 %v6909
        %v6931 = vunpack.c.h.b16 %v6909
        %v6932 = vunpack.c.l.b16 %v6910
        %v6933 = vunpack.c.h.b16 %v6910
        %v6934 = vunpack.c.l.b16 %v6911
        %v6935 = vunpack.c.h.b16 %v6911
        %v6936 = vpack.c.b16 %v6920, %v6920
        %v6937 = vpack.c.b16 %v6921, %v6921
        %v6938 = vpack.c.b16 %v6922, %v6922
        %v6939 = vpack.c.b16 %v6923, %v6923
        %v6940 = vpack.c.b16 %v6924, %v6924
        %v6941 = vpack.c.b16 %v6925, %v6925
        %v6942 = vpack.c.b16 %v6926, %v6926
        %v6943 = vpack.c.b16 %v6927, %v6927
        %v6944 = vpack.c.b16 %v6928, %v6928
        %v6945 = vpack.c.b16 %v6929, %v6929
        %v6946 = vpack.c.b16 %v6930, %v6930
        %v6947 = vpack.c.b16 %v6931, %v6931
        %v6948 = vpack.c.b16 %v6932, %v6932
        %v6949 = vpack.c.b16 %v6933, %v6933
        %v6950 = vpack.c.b16 %v6934, %v6934
        %v6951 = vpack.c.b16 %v6935, %v6935
        %v6953 = vshrl.u32 %v6936, 16
        %v6955 = vrot.slane %v6953, 4
        %v6956 = vshll.u32 %v6936, 16
        %v6958 = vrot.slane %v6956, 5
        %v6959 = vor.u32 %v6955, %v6958
        %v6960 = vrot.slane %v6959, 4
        %v6962 = vshll.u32 %v6937, 16
        %v6964 = vrot.slane %v6962, 5
        %v6965 = vsel %vm2677, %v6960, %v6964
        %v6967 = vshrl.u32 %v6938, 16
        %v6969 = vrot.slane %v6967, 4
        %v6970 = vshll.u32 %v6938, 16
        %v6972 = vrot.slane %v6970, 5
        %v6973 = vor.u32 %v6969, %v6972
        %v6974 = vrot.slane %v6973, 4
        %v6976 = vshll.u32 %v6939, 16
        %v6978 = vrot.slane %v6976, 5
        %v6979 = vsel %vm2677, %v6974, %v6978
        %v6981 = vshrl.u32 %v6940, 16
        %v6983 = vrot.slane %v6981, 4
        %v6984 = vshll.u32 %v6940, 16
        %v6986 = vrot.slane %v6984, 5
        %v6987 = vor.u32 %v6983, %v6986
        %v6988 = vrot.slane %v6987, 4
        %v6990 = vshll.u32 %v6941, 16
        %v6992 = vrot.slane %v6990, 5
        %v6993 = vsel %vm2677, %v6988, %v6992
        %v6995 = vshrl.u32 %v6942, 16
        %v6997 = vrot.slane %v6995, 4
        %v6998 = vshll.u32 %v6942, 16
        %v7000 = vrot.slane %v6998, 5
        %v7001 = vor.u32 %v6997, %v7000
        %v7002 = vrot.slane %v7001, 4
        %v7004 = vshll.u32 %v6943, 16
        %v7006 = vrot.slane %v7004, 5
        %v7007 = vsel %vm2677, %v7002, %v7006
        %v7009 = vshrl.u32 %v6944, 16
        %v7011 = vrot.slane %v7009, 4
        %v7012 = vshll.u32 %v6944, 16
        %v7014 = vrot.slane %v7012, 5
        %v7015 = vor.u32 %v7011, %v7014
        %v7016 = vrot.slane %v7015, 4
        %v7018 = vshll.u32 %v6945, 16
        %v7020 = vrot.slane %v7018, 5
        %v7021 = vsel %vm2677, %v7016, %v7020
        %v7023 = vshrl.u32 %v6946, 16
        %v7025 = vrot.slane %v7023, 4
        %v7026 = vshll.u32 %v6946, 16
        %v7028 = vrot.slane %v7026, 5
        %v7029 = vor.u32 %v7025, %v7028
        %v7030 = vrot.slane %v7029, 4
        %v7032 = vshll.u32 %v6947, 16
        %v7034 = vrot.slane %v7032, 5
        %v7035 = vsel %vm2677, %v7030, %v7034
        %v7037 = vshrl.u32 %v6948, 16
        %v7039 = vrot.slane %v7037, 4
        %v7040 = vshll.u32 %v6948, 16
        %v7042 = vrot.slane %v7040, 5
        %v7043 = vor.u32 %v7039, %v7042
        %v7044 = vrot.slane %v7043, 4
        %v7046 = vshll.u32 %v6949, 16
        %v7048 = vrot.slane %v7046, 5
        %v7049 = vsel %vm2677, %v7044, %v7048
        %v7051 = vshrl.u32 %v6950, 16
        %v7053 = vrot.slane %v7051, 4
        %v7054 = vshll.u32 %v6950, 16
        %v7056 = vrot.slane %v7054, 5
        %v7057 = vor.u32 %v7053, %v7056
        %v7058 = vrot.slane %v7057, 4
        %v7060 = vshll.u32 %v6951, 16
        %v7062 = vrot.slane %v7060, 5
        %v7063 = vsel %vm2677, %v7058, %v7062
        %v7064 = vunpack.c.l.b16 %v6965
        %v7065 = vunpack.c.l.b16 %v6979
        %v7066 = vunpack.c.l.b16 %v6993
        %v7067 = vunpack.c.l.b16 %v7007
        %v7068 = vunpack.c.l.b16 %v7021
        %v7069 = vunpack.c.l.b16 %v7035
        %v7070 = vunpack.c.l.b16 %v7049
        %v7071 = vunpack.c.l.b16 %v7063
        %v7072 = vpack.c.b16 %v7065, %v7064
        %v7073 = vpack.c.b16 %v7067, %v7066
        %v7074 = vpack.c.b16 %v7069, %v7068
        %v7075 = vpack.c.b16 %v7071, %v7070
        %7076 = vrot.lane.b32.xlu0 %v7072, 64
        %v7077 = vpop.permute.xlu0 %7076
        %7078 = vrot.lane.b32.xlu0 %v7073, 64
        %v7079 = vpop.permute.xlu0 %7078
        %7080 = vrot.lane.b32.xlu0 %v7074, 64
        %v7081 = vpop.permute.xlu0 %7080
        %7082 = vrot.lane.b32.xlu0 %v7075, 64
        %v7083 = vpop.permute.xlu0 %7082
        %7088 = vst.msk [vmem:[#allocation3 + $0x1f0] sm:$0xff] %vm2814, %v7077
        %7089 = vst.msk [vmem:[#allocation3 + $0x260] sm:$0xff] %vm2814, %v7079
        %7090 = vst.msk [vmem:[#allocation3 + $0x2d0] sm:$0xff] %vm2814, %v7081
        %7091 = vst.msk [vmem:[#allocation3 + $0x340] sm:$0xff] %vm2814, %v7083
        %v7092 = vld [vmem:[%s6867] sm:$0x1e]
        %v7093 = vld [vmem:[%s6867 + $0x8] sm:$0x1e]
        %v7094 = vld [vmem:[%s6867 + $0x10] sm:$0x1e]
        %v7095 = vld [vmem:[%s6867 + $0x18] sm:$0x1e]
        %v7096 = vld [vmem:[%s6867 + $0x20] sm:$0x1e]
        %v7097 = vld [vmem:[%s6867 + $0x28] sm:$0x1e]
        %v7098 = vld [vmem:[%s6867 + $0x30] sm:$0x1e]
        %v7099 = vld [vmem:[%s6867 + $0x38] sm:$0x1e]
        %v7108 = vunpack.c.l.b16 %v7092
        %v7109 = vunpack.c.h.b16 %v7092
        %v7110 = vunpack.c.l.b16 %v7093
        %v7111 = vunpack.c.h.b16 %v7093
        %v7112 = vunpack.c.l.b16 %v7094
        %v7113 = vunpack.c.h.b16 %v7094
        %v7114 = vunpack.c.l.b16 %v7095
        %v7115 = vunpack.c.h.b16 %v7095
        %v7116 = vunpack.c.l.b16 %v7096
        %v7117 = vunpack.c.h.b16 %v7096
        %v7118 = vunpack.c.l.b16 %v7097
        %v7119 = vunpack.c.h.b16 %v7097
        %v7120 = vunpack.c.l.b16 %v7098
        %v7121 = vunpack.c.h.b16 %v7098
        %v7122 = vunpack.c.l.b16 %v7099
        %v7123 = vunpack.c.h.b16 %v7099
        %v7124 = vpack.c.b16 %v7108, %v7108
        %v7125 = vpack.c.b16 %v7109, %v7109
        %v7126 = vpack.c.b16 %v7110, %v7110
        %v7127 = vpack.c.b16 %v7111, %v7111
        %v7128 = vpack.c.b16 %v7112, %v7112
        %v7129 = vpack.c.b16 %v7113, %v7113
        %v7130 = vpack.c.b16 %v7114, %v7114
        %v7131 = vpack.c.b16 %v7115, %v7115
        %v7132 = vpack.c.b16 %v7116, %v7116
        %v7133 = vpack.c.b16 %v7117, %v7117
        %v7134 = vpack.c.b16 %v7118, %v7118
        %v7135 = vpack.c.b16 %v7119, %v7119
        %v7136 = vpack.c.b16 %v7120, %v7120
        %v7137 = vpack.c.b16 %v7121, %v7121
        %v7138 = vpack.c.b16 %v7122, %v7122
        %v7139 = vpack.c.b16 %v7123, %v7123
        %v7140 = vrot.slane %v7124, 5
        %v7141 = vrot.slane %v7140, 4
        %v7142 = vrot.slane %v7125, 5
        %v7143 = vsel %vm2869, %v7141, %v7142
        %v7144 = vrot.slane %v7126, 5
        %v7145 = vrot.slane %v7144, 4
        %v7146 = vrot.slane %v7127, 5
        %v7147 = vsel %vm2869, %v7145, %v7146
        %v7148 = vrot.slane %v7128, 5
        %v7149 = vrot.slane %v7148, 4
        %v7150 = vrot.slane %v7129, 5
        %v7151 = vsel %vm2869, %v7149, %v7150
        %v7152 = vrot.slane %v7130, 5
        %v7153 = vrot.slane %v7152, 4
        %v7154 = vrot.slane %v7131, 5
        %v7155 = vsel %vm2869, %v7153, %v7154
        %v7156 = vrot.slane %v7132, 5
        %v7157 = vrot.slane %v7156, 4
        %v7158 = vrot.slane %v7133, 5
        %v7159 = vsel %vm2869, %v7157, %v7158
        %v7160 = vrot.slane %v7134, 5
        %v7161 = vrot.slane %v7160, 4
        %v7162 = vrot.slane %v7135, 5
        %v7163 = vsel %vm2869, %v7161, %v7162
        %v7164 = vrot.slane %v7136, 5
        %v7165 = vrot.slane %v7164, 4
        %v7166 = vrot.slane %v7137, 5
        %v7167 = vsel %vm2869, %v7165, %v7166
        %v7168 = vrot.slane %v7138, 5
        %v7169 = vrot.slane %v7168, 4
        %v7170 = vrot.slane %v7139, 5
        %v7171 = vsel %vm2869, %v7169, %v7170
        %v7172 = vunpack.c.l.b16 %v7143
        %v7173 = vunpack.c.l.b16 %v7147
        %v7174 = vunpack.c.l.b16 %v7151
        %v7175 = vunpack.c.l.b16 %v7155
        %v7176 = vunpack.c.l.b16 %v7159
        %v7177 = vunpack.c.l.b16 %v7163
        %v7178 = vunpack.c.l.b16 %v7167
        %v7179 = vunpack.c.l.b16 %v7171
        %v7180 = vpack.c.b16 %v7173, %v7172
        %v7181 = vpack.c.b16 %v7175, %v7174
        %v7182 = vpack.c.b16 %v7177, %v7176
        %v7183 = vpack.c.b16 %v7179, %v7178
        %7188 = vst.msk [vmem:[#allocation3 + $0x1f8] sm:$0xff] %vm2540, %v7180
        %7189 = vst.msk [vmem:[#allocation3 + $0x268] sm:$0xff] %vm2540, %v7181
        %7190 = vst.msk [vmem:[#allocation3 + $0x2d8] sm:$0xff] %vm2540, %v7182
        %7191 = vst.msk [vmem:[#allocation3 + $0x348] sm:$0xff] %vm2540, %v7183
        %s7192 = scalar_lea.vmem [#allocation2], 256
        %v7193 = vld [vmem:[%s7192] sm:$0xf]
        %v7194 = vld [vmem:[%s7192 + $0x8] sm:$0xf]
        %v7195 = vld [vmem:[%s7192 + $0x10] sm:$0xf]
        %v7196 = vld [vmem:[%s7192 + $0x18] sm:$0xf]
        %v7197 = vld [vmem:[%s7192 + $0x20] sm:$0xf]
        %v7198 = vld [vmem:[%s7192 + $0x28] sm:$0xf]
        %v7199 = vld [vmem:[%s7192 + $0x30] sm:$0xf]
        %v7200 = vld [vmem:[%s7192 + $0x38] sm:$0xf]
        %v7209 = vunpack.c.l.b16 %v7193
        %v7210 = vunpack.c.l.b16 %v7194
        %v7211 = vunpack.c.l.b16 %v7195
        %v7212 = vunpack.c.l.b16 %v7196
        %v7213 = vunpack.c.l.b16 %v7197
        %v7214 = vunpack.c.l.b16 %v7198
        %v7215 = vunpack.c.l.b16 %v7199
        %v7216 = vunpack.c.l.b16 %v7200
        %v7217 = vpack.c.b16 %v7210, %v7209
        %v7218 = vpack.c.b16 %v7212, %v7211
        %v7219 = vpack.c.b16 %v7214, %v7213
        %v7220 = vpack.c.b16 %v7216, %v7215
        %7221 = vrot.lane.b32.xlu0 %v7217, 64
        %v7222 = vpop.permute.xlu0 %7221
        %7223 = vrot.lane.b32.xlu0 %v7218, 64
        %v7224 = vpop.permute.xlu0 %7223
        %7225 = vrot.lane.b32.xlu0 %v7219, 64
        %v7226 = vpop.permute.xlu0 %7225
        %7227 = vrot.lane.b32.xlu0 %v7220, 64
        %v7228 = vpop.permute.xlu0 %7227
        %7233 = vst.msk [vmem:[#allocation3 + $0x1f8] sm:$0xff] %vm2814, %v7222
        %7234 = vst.msk [vmem:[#allocation3 + $0x268] sm:$0xff] %vm2814, %v7224
        %7235 = vst.msk [vmem:[#allocation3 + $0x2d8] sm:$0xff] %vm2814, %v7226
        %7236 = vst.msk [vmem:[#allocation3 + $0x348] sm:$0xff] %vm2814, %v7228
        %v7237 = vld [vmem:[%s7192] sm:$0x1f]
        %v7238 = vld [vmem:[%s7192 + $0x8] sm:$0x1f]
        %v7239 = vld [vmem:[%s7192 + $0x10] sm:$0x1f]
        %v7240 = vld [vmem:[%s7192 + $0x18] sm:$0x1f]
        %v7241 = vld [vmem:[%s7192 + $0x20] sm:$0x1f]
        %v7242 = vld [vmem:[%s7192 + $0x28] sm:$0x1f]
        %v7243 = vld [vmem:[%s7192 + $0x30] sm:$0x1f]
        %v7244 = vld [vmem:[%s7192 + $0x38] sm:$0x1f]
        %v7253 = vunpack.c.l.b16 %v7237
        %v7254 = vunpack.c.h.b16 %v7237
        %v7255 = vunpack.c.l.b16 %v7238
        %v7256 = vunpack.c.h.b16 %v7238
        %v7257 = vunpack.c.l.b16 %v7239
        %v7258 = vunpack.c.h.b16 %v7239
        %v7259 = vunpack.c.l.b16 %v7240
        %v7260 = vunpack.c.h.b16 %v7240
        %v7261 = vunpack.c.l.b16 %v7241
        %v7262 = vunpack.c.h.b16 %v7241
        %v7263 = vunpack.c.l.b16 %v7242
        %v7264 = vunpack.c.h.b16 %v7242
        %v7265 = vunpack.c.l.b16 %v7243
        %v7266 = vunpack.c.h.b16 %v7243
        %v7267 = vunpack.c.l.b16 %v7244
        %v7268 = vunpack.c.h.b16 %v7244
        %v7269 = vpack.c.b16 %v7253, %v7253
        %v7270 = vpack.c.b16 %v7254, %v7254
        %v7271 = vpack.c.b16 %v7255, %v7255
        %v7272 = vpack.c.b16 %v7256, %v7256
        %v7273 = vpack.c.b16 %v7257, %v7257
        %v7274 = vpack.c.b16 %v7258, %v7258
        %v7275 = vpack.c.b16 %v7259, %v7259
        %v7276 = vpack.c.b16 %v7260, %v7260
        %v7277 = vpack.c.b16 %v7261, %v7261
        %v7278 = vpack.c.b16 %v7262, %v7262
        %v7279 = vpack.c.b16 %v7263, %v7263
        %v7280 = vpack.c.b16 %v7264, %v7264
        %v7281 = vpack.c.b16 %v7265, %v7265
        %v7282 = vpack.c.b16 %v7266, %v7266
        %v7283 = vpack.c.b16 %v7267, %v7267
        %v7284 = vpack.c.b16 %v7268, %v7268
        %v7286 = vshrl.u32 %v7269, 16
        %v7288 = vrot.slane %v7286, 4
        %v7289 = vshll.u32 %v7269, 16
        %v7291 = vrot.slane %v7289, 5
        %v7292 = vor.u32 %v7288, %v7291
        %v7293 = vrot.slane %v7292, 4
        %v7295 = vshll.u32 %v7270, 16
        %v7297 = vrot.slane %v7295, 5
        %v7298 = vsel %vm2677, %v7293, %v7297
        %v7300 = vshrl.u32 %v7271, 16
        %v7302 = vrot.slane %v7300, 4
        %v7303 = vshll.u32 %v7271, 16
        %v7305 = vrot.slane %v7303, 5
        %v7306 = vor.u32 %v7302, %v7305
        %v7307 = vrot.slane %v7306, 4
        %v7309 = vshll.u32 %v7272, 16
        %v7311 = vrot.slane %v7309, 5
        %v7312 = vsel %vm2677, %v7307, %v7311
        %v7314 = vshrl.u32 %v7273, 16
        %v7316 = vrot.slane %v7314, 4
        %v7317 = vshll.u32 %v7273, 16
        %v7319 = vrot.slane %v7317, 5
        %v7320 = vor.u32 %v7316, %v7319
        %v7321 = vrot.slane %v7320, 4
        %v7323 = vshll.u32 %v7274, 16
        %v7325 = vrot.slane %v7323, 5
        %v7326 = vsel %vm2677, %v7321, %v7325
        %v7328 = vshrl.u32 %v7275, 16
        %v7330 = vrot.slane %v7328, 4
        %v7331 = vshll.u32 %v7275, 16
        %v7333 = vrot.slane %v7331, 5
        %v7334 = vor.u32 %v7330, %v7333
        %v7335 = vrot.slane %v7334, 4
        %v7337 = vshll.u32 %v7276, 16
        %v7339 = vrot.slane %v7337, 5
        %v7340 = vsel %vm2677, %v7335, %v7339
        %v7342 = vshrl.u32 %v7277, 16
        %v7344 = vrot.slane %v7342, 4
        %v7345 = vshll.u32 %v7277, 16
        %v7347 = vrot.slane %v7345, 5
        %v7348 = vor.u32 %v7344, %v7347
        %v7349 = vrot.slane %v7348, 4
        %v7351 = vshll.u32 %v7278, 16
        %v7353 = vrot.slane %v7351, 5
        %v7354 = vsel %vm2677, %v7349, %v7353
        %v7356 = vshrl.u32 %v7279, 16
        %v7358 = vrot.slane %v7356, 4
        %v7359 = vshll.u32 %v7279, 16
        %v7361 = vrot.slane %v7359, 5
        %v7362 = vor.u32 %v7358, %v7361
        %v7363 = vrot.slane %v7362, 4
        %v7365 = vshll.u32 %v7280, 16
        %v7367 = vrot.slane %v7365, 5
        %v7368 = vsel %vm2677, %v7363, %v7367
        %v7370 = vshrl.u32 %v7281, 16
        %v7372 = vrot.slane %v7370, 4
        %v7373 = vshll.u32 %v7281, 16
        %v7375 = vrot.slane %v7373, 5
        %v7376 = vor.u32 %v7372, %v7375
        %v7377 = vrot.slane %v7376, 4
        %v7379 = vshll.u32 %v7282, 16
        %v7381 = vrot.slane %v7379, 5
        %v7382 = vsel %vm2677, %v7377, %v7381
        %v7384 = vshrl.u32 %v7283, 16
        %v7386 = vrot.slane %v7384, 4
        %v7387 = vshll.u32 %v7283, 16
        %v7389 = vrot.slane %v7387, 5
        %v7390 = vor.u32 %v7386, %v7389
        %v7391 = vrot.slane %v7390, 4
        %v7393 = vshll.u32 %v7284, 16
        %v7395 = vrot.slane %v7393, 5
        %v7396 = vsel %vm2677, %v7391, %v7395
        %v7397 = vunpack.c.l.b16 %v7298
        %v7398 = vunpack.c.l.b16 %v7312
        %v7399 = vunpack.c.l.b16 %v7326
        %v7400 = vunpack.c.l.b16 %v7340
        %v7401 = vunpack.c.l.b16 %v7354
        %v7402 = vunpack.c.l.b16 %v7368
        %v7403 = vunpack.c.l.b16 %v7382
        %v7404 = vunpack.c.l.b16 %v7396
        %v7405 = vpack.c.b16 %v7398, %v7397
        %v7406 = vpack.c.b16 %v7400, %v7399
        %v7407 = vpack.c.b16 %v7402, %v7401
        %v7408 = vpack.c.b16 %v7404, %v7403
        %7413 = vst.msk [vmem:[#allocation3 + $0x200] sm:$0xff] %vm2540, %v7405
        %7414 = vst.msk [vmem:[#allocation3 + $0x270] sm:$0xff] %vm2540, %v7406
        %7415 = vst.msk [vmem:[#allocation3 + $0x2e0] sm:$0xff] %vm2540, %v7407
        %7416 = vst.msk [vmem:[#allocation3 + $0x350] sm:$0xff] %vm2540, %v7408
        %v7417 = vld [vmem:[%s7192] sm:$0x1e]
        %v7418 = vld [vmem:[%s7192 + $0x8] sm:$0x1e]
        %v7419 = vld [vmem:[%s7192 + $0x10] sm:$0x1e]
        %v7420 = vld [vmem:[%s7192 + $0x18] sm:$0x1e]
        %v7421 = vld [vmem:[%s7192 + $0x20] sm:$0x1e]
        %v7422 = vld [vmem:[%s7192 + $0x28] sm:$0x1e]
        %v7423 = vld [vmem:[%s7192 + $0x30] sm:$0x1e]
        %v7424 = vld [vmem:[%s7192 + $0x38] sm:$0x1e]
        %v7433 = vunpack.c.l.b16 %v7417
        %v7434 = vunpack.c.h.b16 %v7417
        %v7435 = vunpack.c.l.b16 %v7418
        %v7436 = vunpack.c.h.b16 %v7418
        %v7437 = vunpack.c.l.b16 %v7419
        %v7438 = vunpack.c.h.b16 %v7419
        %v7439 = vunpack.c.l.b16 %v7420
        %v7440 = vunpack.c.h.b16 %v7420
        %v7441 = vunpack.c.l.b16 %v7421
        %v7442 = vunpack.c.h.b16 %v7421
        %v7443 = vunpack.c.l.b16 %v7422
        %v7444 = vunpack.c.h.b16 %v7422
        %v7445 = vunpack.c.l.b16 %v7423
        %v7446 = vunpack.c.h.b16 %v7423
        %v7447 = vunpack.c.l.b16 %v7424
        %v7448 = vunpack.c.h.b16 %v7424
        %v7449 = vpack.c.b16 %v7433, %v7433
        %v7450 = vpack.c.b16 %v7434, %v7434
        %v7451 = vpack.c.b16 %v7435, %v7435
        %v7452 = vpack.c.b16 %v7436, %v7436
        %v7453 = vpack.c.b16 %v7437, %v7437
        %v7454 = vpack.c.b16 %v7438, %v7438
        %v7455 = vpack.c.b16 %v7439, %v7439
        %v7456 = vpack.c.b16 %v7440, %v7440
        %v7457 = vpack.c.b16 %v7441, %v7441
        %v7458 = vpack.c.b16 %v7442, %v7442
        %v7459 = vpack.c.b16 %v7443, %v7443
        %v7460 = vpack.c.b16 %v7444, %v7444
        %v7461 = vpack.c.b16 %v7445, %v7445
        %v7462 = vpack.c.b16 %v7446, %v7446
        %v7463 = vpack.c.b16 %v7447, %v7447
        %v7464 = vpack.c.b16 %v7448, %v7448
        %v7465 = vrot.slane %v7449, 5
        %v7466 = vrot.slane %v7465, 4
        %v7467 = vrot.slane %v7450, 5
        %v7468 = vsel %vm2869, %v7466, %v7467
        %v7469 = vrot.slane %v7451, 5
        %v7470 = vrot.slane %v7469, 4
        %v7471 = vrot.slane %v7452, 5
        %v7472 = vsel %vm2869, %v7470, %v7471
        %v7473 = vrot.slane %v7453, 5
        %v7474 = vrot.slane %v7473, 4
        %v7475 = vrot.slane %v7454, 5
        %v7476 = vsel %vm2869, %v7474, %v7475
        %v7477 = vrot.slane %v7455, 5
        %v7478 = vrot.slane %v7477, 4
        %v7479 = vrot.slane %v7456, 5
        %v7480 = vsel %vm2869, %v7478, %v7479
        %v7481 = vrot.slane %v7457, 5
        %v7482 = vrot.slane %v7481, 4
        %v7483 = vrot.slane %v7458, 5
        %v7484 = vsel %vm2869, %v7482, %v7483
        %v7485 = vrot.slane %v7459, 5
        %v7486 = vrot.slane %v7485, 4
        %v7487 = vrot.slane %v7460, 5
        %v7488 = vsel %vm2869, %v7486, %v7487
        %v7489 = vrot.slane %v7461, 5
        %v7490 = vrot.slane %v7489, 4
        %v7491 = vrot.slane %v7462, 5
        %v7492 = vsel %vm2869, %v7490, %v7491
        %v7493 = vrot.slane %v7463, 5
        %v7494 = vrot.slane %v7493, 4
        %v7495 = vrot.slane %v7464, 5
        %v7496 = vsel %vm2869, %v7494, %v7495
        %v7497 = vunpack.c.l.b16 %v7468
        %v7498 = vunpack.c.l.b16 %v7472
        %v7499 = vunpack.c.l.b16 %v7476
        %v7500 = vunpack.c.l.b16 %v7480
        %v7501 = vunpack.c.l.b16 %v7484
        %v7502 = vunpack.c.l.b16 %v7488
        %v7503 = vunpack.c.l.b16 %v7492
        %v7504 = vunpack.c.l.b16 %v7496
        %v7505 = vpack.c.b16 %v7498, %v7497
        %v7506 = vpack.c.b16 %v7500, %v7499
        %v7507 = vpack.c.b16 %v7502, %v7501
        %v7508 = vpack.c.b16 %v7504, %v7503
        %7509 = vrot.lane.b32.xlu0 %v7505, 64
        %v7510 = vpop.permute.xlu0 %7509
        %7511 = vrot.lane.b32.xlu0 %v7506, 64
        %v7512 = vpop.permute.xlu0 %7511
        %7513 = vrot.lane.b32.xlu0 %v7507, 64
        %v7514 = vpop.permute.xlu0 %7513
        %7515 = vrot.lane.b32.xlu0 %v7508, 64
        %v7516 = vpop.permute.xlu0 %7515
        %7521 = vst.msk [vmem:[#allocation3 + $0x200] sm:$0xff] %vm2814, %v7510
        %7522 = vst.msk [vmem:[#allocation3 + $0x270] sm:$0xff] %vm2814, %v7512
        %7523 = vst.msk [vmem:[#allocation3 + $0x2e0] sm:$0xff] %vm2814, %v7514
        %7524 = vst.msk [vmem:[#allocation3 + $0x350] sm:$0xff] %vm2814, %v7516
        %s7525 = scalar_lea.vmem [#allocation2], 320
        %v7526 = vld [vmem:[%s7525] sm:$0xf]
        %v7527 = vld [vmem:[%s7525 + $0x8] sm:$0xf]
        %v7528 = vld [vmem:[%s7525 + $0x10] sm:$0xf]
        %v7529 = vld [vmem:[%s7525 + $0x18] sm:$0xf]
        %v7530 = vld [vmem:[%s7525 + $0x20] sm:$0xf]
        %v7531 = vld [vmem:[%s7525 + $0x28] sm:$0xf]
        %v7532 = vld [vmem:[%s7525 + $0x30] sm:$0xf]
        %v7533 = vld [vmem:[%s7525 + $0x38] sm:$0xf]
        %v7542 = vunpack.c.l.b16 %v7526
        %v7543 = vunpack.c.l.b16 %v7527
        %v7544 = vunpack.c.l.b16 %v7528
        %v7545 = vunpack.c.l.b16 %v7529
        %v7546 = vunpack.c.l.b16 %v7530
        %v7547 = vunpack.c.l.b16 %v7531
        %v7548 = vunpack.c.l.b16 %v7532
        %v7549 = vunpack.c.l.b16 %v7533
        %v7550 = vpack.c.b16 %v7543, %v7542
        %v7551 = vpack.c.b16 %v7545, %v7544
        %v7552 = vpack.c.b16 %v7547, %v7546
        %v7553 = vpack.c.b16 %v7549, %v7548
        %7558 = vst.msk [vmem:[#allocation3 + $0x208] sm:$0xff] %vm2540, %v7550
        %7559 = vst.msk [vmem:[#allocation3 + $0x278] sm:$0xff] %vm2540, %v7551
        %7560 = vst.msk [vmem:[#allocation3 + $0x2e8] sm:$0xff] %vm2540, %v7552
        %7561 = vst.msk [vmem:[#allocation3 + $0x358] sm:$0xff] %vm2540, %v7553
        %v7562 = vld [vmem:[%s7525] sm:$0x1f]
        %v7563 = vld [vmem:[%s7525 + $0x8] sm:$0x1f]
        %v7564 = vld [vmem:[%s7525 + $0x10] sm:$0x1f]
        %v7565 = vld [vmem:[%s7525 + $0x18] sm:$0x1f]
        %v7566 = vld [vmem:[%s7525 + $0x20] sm:$0x1f]
        %v7567 = vld [vmem:[%s7525 + $0x28] sm:$0x1f]
        %v7568 = vld [vmem:[%s7525 + $0x30] sm:$0x1f]
        %v7569 = vld [vmem:[%s7525 + $0x38] sm:$0x1f]
        %v7578 = vunpack.c.l.b16 %v7562
        %v7579 = vunpack.c.h.b16 %v7562
        %v7580 = vunpack.c.l.b16 %v7563
        %v7581 = vunpack.c.h.b16 %v7563
        %v7582 = vunpack.c.l.b16 %v7564
        %v7583 = vunpack.c.h.b16 %v7564
        %v7584 = vunpack.c.l.b16 %v7565
        %v7585 = vunpack.c.h.b16 %v7565
        %v7586 = vunpack.c.l.b16 %v7566
        %v7587 = vunpack.c.h.b16 %v7566
        %v7588 = vunpack.c.l.b16 %v7567
        %v7589 = vunpack.c.h.b16 %v7567
        %v7590 = vunpack.c.l.b16 %v7568
        %v7591 = vunpack.c.h.b16 %v7568
        %v7592 = vunpack.c.l.b16 %v7569
        %v7593 = vunpack.c.h.b16 %v7569
        %v7594 = vpack.c.b16 %v7578, %v7578
        %v7595 = vpack.c.b16 %v7579, %v7579
        %v7596 = vpack.c.b16 %v7580, %v7580
        %v7597 = vpack.c.b16 %v7581, %v7581
        %v7598 = vpack.c.b16 %v7582, %v7582
        %v7599 = vpack.c.b16 %v7583, %v7583
        %v7600 = vpack.c.b16 %v7584, %v7584
        %v7601 = vpack.c.b16 %v7585, %v7585
        %v7602 = vpack.c.b16 %v7586, %v7586
        %v7603 = vpack.c.b16 %v7587, %v7587
        %v7604 = vpack.c.b16 %v7588, %v7588
        %v7605 = vpack.c.b16 %v7589, %v7589
        %v7606 = vpack.c.b16 %v7590, %v7590
        %v7607 = vpack.c.b16 %v7591, %v7591
        %v7608 = vpack.c.b16 %v7592, %v7592
        %v7609 = vpack.c.b16 %v7593, %v7593
        %v7611 = vshrl.u32 %v7594, 16
        %v7613 = vrot.slane %v7611, 4
        %v7614 = vshll.u32 %v7594, 16
        %v7616 = vrot.slane %v7614, 5
        %v7617 = vor.u32 %v7613, %v7616
        %v7618 = vrot.slane %v7617, 4
        %v7620 = vshll.u32 %v7595, 16
        %v7622 = vrot.slane %v7620, 5
        %v7623 = vsel %vm2677, %v7618, %v7622
        %v7625 = vshrl.u32 %v7596, 16
        %v7627 = vrot.slane %v7625, 4
        %v7628 = vshll.u32 %v7596, 16
        %v7630 = vrot.slane %v7628, 5
        %v7631 = vor.u32 %v7627, %v7630
        %v7632 = vrot.slane %v7631, 4
        %v7634 = vshll.u32 %v7597, 16
        %v7636 = vrot.slane %v7634, 5
        %v7637 = vsel %vm2677, %v7632, %v7636
        %v7639 = vshrl.u32 %v7598, 16
        %v7641 = vrot.slane %v7639, 4
        %v7642 = vshll.u32 %v7598, 16
        %v7644 = vrot.slane %v7642, 5
        %v7645 = vor.u32 %v7641, %v7644
        %v7646 = vrot.slane %v7645, 4
        %v7648 = vshll.u32 %v7599, 16
        %v7650 = vrot.slane %v7648, 5
        %v7651 = vsel %vm2677, %v7646, %v7650
        %v7653 = vshrl.u32 %v7600, 16
        %v7655 = vrot.slane %v7653, 4
        %v7656 = vshll.u32 %v7600, 16
        %v7658 = vrot.slane %v7656, 5
        %v7659 = vor.u32 %v7655, %v7658
        %v7660 = vrot.slane %v7659, 4
        %v7662 = vshll.u32 %v7601, 16
        %v7664 = vrot.slane %v7662, 5
        %v7665 = vsel %vm2677, %v7660, %v7664
        %v7667 = vshrl.u32 %v7602, 16
        %v7669 = vrot.slane %v7667, 4
        %v7670 = vshll.u32 %v7602, 16
        %v7672 = vrot.slane %v7670, 5
        %v7673 = vor.u32 %v7669, %v7672
        %v7674 = vrot.slane %v7673, 4
        %v7676 = vshll.u32 %v7603, 16
        %v7678 = vrot.slane %v7676, 5
        %v7679 = vsel %vm2677, %v7674, %v7678
        %v7681 = vshrl.u32 %v7604, 16
        %v7683 = vrot.slane %v7681, 4
        %v7684 = vshll.u32 %v7604, 16
        %v7686 = vrot.slane %v7684, 5
        %v7687 = vor.u32 %v7683, %v7686
        %v7688 = vrot.slane %v7687, 4
        %v7690 = vshll.u32 %v7605, 16
        %v7692 = vrot.slane %v7690, 5
        %v7693 = vsel %vm2677, %v7688, %v7692
        %v7695 = vshrl.u32 %v7606, 16
        %v7697 = vrot.slane %v7695, 4
        %v7698 = vshll.u32 %v7606, 16
        %v7700 = vrot.slane %v7698, 5
        %v7701 = vor.u32 %v7697, %v7700
        %v7702 = vrot.slane %v7701, 4
        %v7704 = vshll.u32 %v7607, 16
        %v7706 = vrot.slane %v7704, 5
        %v7707 = vsel %vm2677, %v7702, %v7706
        %v7709 = vshrl.u32 %v7608, 16
        %v7711 = vrot.slane %v7709, 4
        %v7712 = vshll.u32 %v7608, 16
        %v7714 = vrot.slane %v7712, 5
        %v7715 = vor.u32 %v7711, %v7714
        %v7716 = vrot.slane %v7715, 4
        %v7718 = vshll.u32 %v7609, 16
        %v7720 = vrot.slane %v7718, 5
        %v7721 = vsel %vm2677, %v7716, %v7720
        %v7722 = vunpack.c.l.b16 %v7623
        %v7723 = vunpack.c.l.b16 %v7637
        %v7724 = vunpack.c.l.b16 %v7651
        %v7725 = vunpack.c.l.b16 %v7665
        %v7726 = vunpack.c.l.b16 %v7679
        %v7727 = vunpack.c.l.b16 %v7693
        %v7728 = vunpack.c.l.b16 %v7707
        %v7729 = vunpack.c.l.b16 %v7721
        %v7730 = vpack.c.b16 %v7723, %v7722
        %v7731 = vpack.c.b16 %v7725, %v7724
        %v7732 = vpack.c.b16 %v7727, %v7726
        %v7733 = vpack.c.b16 %v7729, %v7728
        %7734 = vrot.lane.b32.xlu0 %v7730, 64
        %v7735 = vpop.permute.xlu0 %7734
        %7736 = vrot.lane.b32.xlu0 %v7731, 64
        %v7737 = vpop.permute.xlu0 %7736
        %7738 = vrot.lane.b32.xlu0 %v7732, 64
        %v7739 = vpop.permute.xlu0 %7738
        %7740 = vrot.lane.b32.xlu0 %v7733, 64
        %v7741 = vpop.permute.xlu0 %7740
        %7746 = vst.msk [vmem:[#allocation3 + $0x208] sm:$0xff] %vm2814, %v7735
        %7747 = vst.msk [vmem:[#allocation3 + $0x278] sm:$0xff] %vm2814, %v7737
        %7748 = vst.msk [vmem:[#allocation3 + $0x2e8] sm:$0xff] %vm2814, %v7739
        %7749 = vst.msk [vmem:[#allocation3 + $0x358] sm:$0xff] %vm2814, %v7741
        %v7750 = vld [vmem:[%s7525] sm:$0x1e]
        %v7751 = vld [vmem:[%s7525 + $0x8] sm:$0x1e]
        %v7752 = vld [vmem:[%s7525 + $0x10] sm:$0x1e]
        %v7753 = vld [vmem:[%s7525 + $0x18] sm:$0x1e]
        %v7754 = vld [vmem:[%s7525 + $0x20] sm:$0x1e]
        %v7755 = vld [vmem:[%s7525 + $0x28] sm:$0x1e]
        %v7756 = vld [vmem:[%s7525 + $0x30] sm:$0x1e]
        %v7757 = vld [vmem:[%s7525 + $0x38] sm:$0x1e]
        %v7766 = vunpack.c.l.b16 %v7750
        %v7767 = vunpack.c.h.b16 %v7750
        %v7768 = vunpack.c.l.b16 %v7751
        %v7769 = vunpack.c.h.b16 %v7751
        %v7770 = vunpack.c.l.b16 %v7752
        %v7771 = vunpack.c.h.b16 %v7752
        %v7772 = vunpack.c.l.b16 %v7753
        %v7773 = vunpack.c.h.b16 %v7753
        %v7774 = vunpack.c.l.b16 %v7754
        %v7775 = vunpack.c.h.b16 %v7754
        %v7776 = vunpack.c.l.b16 %v7755
        %v7777 = vunpack.c.h.b16 %v7755
        %v7778 = vunpack.c.l.b16 %v7756
        %v7779 = vunpack.c.h.b16 %v7756
        %v7780 = vunpack.c.l.b16 %v7757
        %v7781 = vunpack.c.h.b16 %v7757
        %v7782 = vpack.c.b16 %v7766, %v7766
        %v7783 = vpack.c.b16 %v7767, %v7767
        %v7784 = vpack.c.b16 %v7768, %v7768
        %v7785 = vpack.c.b16 %v7769, %v7769
        %v7786 = vpack.c.b16 %v7770, %v7770
        %v7787 = vpack.c.b16 %v7771, %v7771
        %v7788 = vpack.c.b16 %v7772, %v7772
        %v7789 = vpack.c.b16 %v7773, %v7773
        %v7790 = vpack.c.b16 %v7774, %v7774
        %v7791 = vpack.c.b16 %v7775, %v7775
        %v7792 = vpack.c.b16 %v7776, %v7776
        %v7793 = vpack.c.b16 %v7777, %v7777
        %v7794 = vpack.c.b16 %v7778, %v7778
        %v7795 = vpack.c.b16 %v7779, %v7779
        %v7796 = vpack.c.b16 %v7780, %v7780
        %v7797 = vpack.c.b16 %v7781, %v7781
        %v7798 = vrot.slane %v7782, 5
        %v7799 = vrot.slane %v7798, 4
        %v7800 = vrot.slane %v7783, 5
        %v7801 = vsel %vm2869, %v7799, %v7800
        %v7802 = vrot.slane %v7784, 5
        %v7803 = vrot.slane %v7802, 4
        %v7804 = vrot.slane %v7785, 5
        %v7805 = vsel %vm2869, %v7803, %v7804
        %v7806 = vrot.slane %v7786, 5
        %v7807 = vrot.slane %v7806, 4
        %v7808 = vrot.slane %v7787, 5
        %v7809 = vsel %vm2869, %v7807, %v7808
        %v7810 = vrot.slane %v7788, 5
        %v7811 = vrot.slane %v7810, 4
        %v7812 = vrot.slane %v7789, 5
        %v7813 = vsel %vm2869, %v7811, %v7812
        %v7814 = vrot.slane %v7790, 5
        %v7815 = vrot.slane %v7814, 4
        %v7816 = vrot.slane %v7791, 5
        %v7817 = vsel %vm2869, %v7815, %v7816
        %v7818 = vrot.slane %v7792, 5
        %v7819 = vrot.slane %v7818, 4
        %v7820 = vrot.slane %v7793, 5
        %v7821 = vsel %vm2869, %v7819, %v7820
        %v7822 = vrot.slane %v7794, 5
        %v7823 = vrot.slane %v7822, 4
        %v7824 = vrot.slane %v7795, 5
        %v7825 = vsel %vm2869, %v7823, %v7824
        %v7826 = vrot.slane %v7796, 5
        %v7827 = vrot.slane %v7826, 4
        %v7828 = vrot.slane %v7797, 5
        %v7829 = vsel %vm2869, %v7827, %v7828
        %v7830 = vunpack.c.l.b16 %v7801
        %v7831 = vunpack.c.l.b16 %v7805
        %v7832 = vunpack.c.l.b16 %v7809
        %v7833 = vunpack.c.l.b16 %v7813
        %v7834 = vunpack.c.l.b16 %v7817
        %v7835 = vunpack.c.l.b16 %v7821
        %v7836 = vunpack.c.l.b16 %v7825
        %v7837 = vunpack.c.l.b16 %v7829
        %v7838 = vpack.c.b16 %v7831, %v7830
        %v7839 = vpack.c.b16 %v7833, %v7832
        %v7840 = vpack.c.b16 %v7835, %v7834
        %v7841 = vpack.c.b16 %v7837, %v7836
        %7846 = vst.msk [vmem:[#allocation3 + $0x210] sm:$0xff] %vm2540, %v7838
        %7847 = vst.msk [vmem:[#allocation3 + $0x280] sm:$0xff] %vm2540, %v7839
        %7848 = vst.msk [vmem:[#allocation3 + $0x2f0] sm:$0xff] %vm2540, %v7840
        %7849 = vst.msk [vmem:[#allocation3 + $0x360] sm:$0xff] %vm2540, %v7841
        %s7850 = scalar_lea.vmem [#allocation2], 328
        %v7851 = vld [vmem:[%s7850] sm:$0xf]
        %v7852 = vld [vmem:[%s7850 + $0x8] sm:$0xf]
        %v7853 = vld [vmem:[%s7850 + $0x10] sm:$0xf]
        %v7854 = vld [vmem:[%s7850 + $0x18] sm:$0xf]
        %v7855 = vld [vmem:[%s7850 + $0x20] sm:$0xf]
        %v7856 = vld [vmem:[%s7850 + $0x28] sm:$0xf]
        %v7857 = vld [vmem:[%s7850 + $0x30] sm:$0xf]
        %v7858 = vld [vmem:[%s7850 + $0x38] sm:$0xf]
        %v7867 = vunpack.c.l.b16 %v7851
        %v7868 = vunpack.c.l.b16 %v7852
        %v7869 = vunpack.c.l.b16 %v7853
        %v7870 = vunpack.c.l.b16 %v7854
        %v7871 = vunpack.c.l.b16 %v7855
        %v7872 = vunpack.c.l.b16 %v7856
        %v7873 = vunpack.c.l.b16 %v7857
        %v7874 = vunpack.c.l.b16 %v7858
        %v7875 = vpack.c.b16 %v7868, %v7867
        %v7876 = vpack.c.b16 %v7870, %v7869
        %v7877 = vpack.c.b16 %v7872, %v7871
        %v7878 = vpack.c.b16 %v7874, %v7873
        %7879 = vrot.lane.b32.xlu0 %v7875, 64
        %v7880 = vpop.permute.xlu0 %7879
        %7881 = vrot.lane.b32.xlu0 %v7876, 64
        %v7882 = vpop.permute.xlu0 %7881
        %7883 = vrot.lane.b32.xlu0 %v7877, 64
        %v7884 = vpop.permute.xlu0 %7883
        %7885 = vrot.lane.b32.xlu0 %v7878, 64
        %v7886 = vpop.permute.xlu0 %7885
        %7891 = vst.msk [vmem:[#allocation3 + $0x210] sm:$0xff] %vm2814, %v7880
        %7892 = vst.msk [vmem:[#allocation3 + $0x280] sm:$0xff] %vm2814, %v7882
        %7893 = vst.msk [vmem:[#allocation3 + $0x2f0] sm:$0xff] %vm2814, %v7884
        %7894 = vst.msk [vmem:[#allocation3 + $0x360] sm:$0xff] %vm2814, %v7886
        %v7895 = vld [vmem:[%s7850] sm:$0x1f]
        %v7896 = vld [vmem:[%s7850 + $0x8] sm:$0x1f]
        %v7897 = vld [vmem:[%s7850 + $0x10] sm:$0x1f]
        %v7898 = vld [vmem:[%s7850 + $0x18] sm:$0x1f]
        %v7899 = vld [vmem:[%s7850 + $0x20] sm:$0x1f]
        %v7900 = vld [vmem:[%s7850 + $0x28] sm:$0x1f]
        %v7901 = vld [vmem:[%s7850 + $0x30] sm:$0x1f]
        %v7902 = vld [vmem:[%s7850 + $0x38] sm:$0x1f]
        %v7911 = vunpack.c.l.b16 %v7895
        %v7912 = vunpack.c.h.b16 %v7895
        %v7913 = vunpack.c.l.b16 %v7896
        %v7914 = vunpack.c.h.b16 %v7896
        %v7915 = vunpack.c.l.b16 %v7897
        %v7916 = vunpack.c.h.b16 %v7897
        %v7917 = vunpack.c.l.b16 %v7898
        %v7918 = vunpack.c.h.b16 %v7898
        %v7919 = vunpack.c.l.b16 %v7899
        %v7920 = vunpack.c.h.b16 %v7899
        %v7921 = vunpack.c.l.b16 %v7900
        %v7922 = vunpack.c.h.b16 %v7900
        %v7923 = vunpack.c.l.b16 %v7901
        %v7924 = vunpack.c.h.b16 %v7901
        %v7925 = vunpack.c.l.b16 %v7902
        %v7926 = vunpack.c.h.b16 %v7902
        %v7927 = vpack.c.b16 %v7911, %v7911
        %v7928 = vpack.c.b16 %v7912, %v7912
        %v7929 = vpack.c.b16 %v7913, %v7913
        %v7930 = vpack.c.b16 %v7914, %v7914
        %v7931 = vpack.c.b16 %v7915, %v7915
        %v7932 = vpack.c.b16 %v7916, %v7916
        %v7933 = vpack.c.b16 %v7917, %v7917
        %v7934 = vpack.c.b16 %v7918, %v7918
        %v7935 = vpack.c.b16 %v7919, %v7919
        %v7936 = vpack.c.b16 %v7920, %v7920
        %v7937 = vpack.c.b16 %v7921, %v7921
        %v7938 = vpack.c.b16 %v7922, %v7922
        %v7939 = vpack.c.b16 %v7923, %v7923
        %v7940 = vpack.c.b16 %v7924, %v7924
        %v7941 = vpack.c.b16 %v7925, %v7925
        %v7942 = vpack.c.b16 %v7926, %v7926
        %v7944 = vshrl.u32 %v7927, 16
        %v7946 = vrot.slane %v7944, 4
        %v7947 = vshll.u32 %v7927, 16
        %v7949 = vrot.slane %v7947, 5
        %v7950 = vor.u32 %v7946, %v7949
        %v7951 = vrot.slane %v7950, 4
        %v7953 = vshll.u32 %v7928, 16
        %v7955 = vrot.slane %v7953, 5
        %v7956 = vsel %vm2677, %v7951, %v7955
        %v7958 = vshrl.u32 %v7929, 16
        %v7960 = vrot.slane %v7958, 4
        %v7961 = vshll.u32 %v7929, 16
        %v7963 = vrot.slane %v7961, 5
        %v7964 = vor.u32 %v7960, %v7963
        %v7965 = vrot.slane %v7964, 4
        %v7967 = vshll.u32 %v7930, 16
        %v7969 = vrot.slane %v7967, 5
        %v7970 = vsel %vm2677, %v7965, %v7969
        %v7972 = vshrl.u32 %v7931, 16
        %v7974 = vrot.slane %v7972, 4
        %v7975 = vshll.u32 %v7931, 16
        %v7977 = vrot.slane %v7975, 5
        %v7978 = vor.u32 %v7974, %v7977
        %v7979 = vrot.slane %v7978, 4
        %v7981 = vshll.u32 %v7932, 16
        %v7983 = vrot.slane %v7981, 5
        %v7984 = vsel %vm2677, %v7979, %v7983
        %v7986 = vshrl.u32 %v7933, 16
        %v7988 = vrot.slane %v7986, 4
        %v7989 = vshll.u32 %v7933, 16
        %v7991 = vrot.slane %v7989, 5
        %v7992 = vor.u32 %v7988, %v7991
        %v7993 = vrot.slane %v7992, 4
        %v7995 = vshll.u32 %v7934, 16
        %v7997 = vrot.slane %v7995, 5
        %v7998 = vsel %vm2677, %v7993, %v7997
        %v8000 = vshrl.u32 %v7935, 16
        %v8002 = vrot.slane %v8000, 4
        %v8003 = vshll.u32 %v7935, 16
        %v8005 = vrot.slane %v8003, 5
        %v8006 = vor.u32 %v8002, %v8005
        %v8007 = vrot.slane %v8006, 4
        %v8009 = vshll.u32 %v7936, 16
        %v8011 = vrot.slane %v8009, 5
        %v8012 = vsel %vm2677, %v8007, %v8011
        %v8014 = vshrl.u32 %v7937, 16
        %v8016 = vrot.slane %v8014, 4
        %v8017 = vshll.u32 %v7937, 16
        %v8019 = vrot.slane %v8017, 5
        %v8020 = vor.u32 %v8016, %v8019
        %v8021 = vrot.slane %v8020, 4
        %v8023 = vshll.u32 %v7938, 16
        %v8025 = vrot.slane %v8023, 5
        %v8026 = vsel %vm2677, %v8021, %v8025
        %v8028 = vshrl.u32 %v7939, 16
        %v8030 = vrot.slane %v8028, 4
        %v8031 = vshll.u32 %v7939, 16
        %v8033 = vrot.slane %v8031, 5
        %v8034 = vor.u32 %v8030, %v8033
        %v8035 = vrot.slane %v8034, 4
        %v8037 = vshll.u32 %v7940, 16
        %v8039 = vrot.slane %v8037, 5
        %v8040 = vsel %vm2677, %v8035, %v8039
        %v8042 = vshrl.u32 %v7941, 16
        %v8044 = vrot.slane %v8042, 4
        %v8045 = vshll.u32 %v7941, 16
        %v8047 = vrot.slane %v8045, 5
        %v8048 = vor.u32 %v8044, %v8047
        %v8049 = vrot.slane %v8048, 4
        %v8051 = vshll.u32 %v7942, 16
        %v8053 = vrot.slane %v8051, 5
        %v8054 = vsel %vm2677, %v8049, %v8053
        %v8055 = vunpack.c.l.b16 %v7956
        %v8056 = vunpack.c.l.b16 %v7970
        %v8057 = vunpack.c.l.b16 %v7984
        %v8058 = vunpack.c.l.b16 %v7998
        %v8059 = vunpack.c.l.b16 %v8012
        %v8060 = vunpack.c.l.b16 %v8026
        %v8061 = vunpack.c.l.b16 %v8040
        %v8062 = vunpack.c.l.b16 %v8054
        %v8063 = vpack.c.b16 %v8056, %v8055
        %v8064 = vpack.c.b16 %v8058, %v8057
        %v8065 = vpack.c.b16 %v8060, %v8059
        %v8066 = vpack.c.b16 %v8062, %v8061
        %8071 = vst.msk [vmem:[#allocation3 + $0x218] sm:$0xff] %vm2540, %v8063
        %8072 = vst.msk [vmem:[#allocation3 + $0x288] sm:$0xff] %vm2540, %v8064
        %8073 = vst.msk [vmem:[#allocation3 + $0x2f8] sm:$0xff] %vm2540, %v8065
        %8074 = vst.msk [vmem:[#allocation3 + $0x368] sm:$0xff] %vm2540, %v8066
        %v8075 = vld [vmem:[%s7850] sm:$0x1e]
        %v8076 = vld [vmem:[%s7850 + $0x8] sm:$0x1e]
        %v8077 = vld [vmem:[%s7850 + $0x10] sm:$0x1e]
        %v8078 = vld [vmem:[%s7850 + $0x18] sm:$0x1e]
        %v8079 = vld [vmem:[%s7850 + $0x20] sm:$0x1e]
        %v8080 = vld [vmem:[%s7850 + $0x28] sm:$0x1e]
        %v8081 = vld [vmem:[%s7850 + $0x30] sm:$0x1e]
        %v8082 = vld [vmem:[%s7850 + $0x38] sm:$0x1e]
        %v8091 = vunpack.c.l.b16 %v8075
        %v8092 = vunpack.c.h.b16 %v8075
        %v8093 = vunpack.c.l.b16 %v8076
        %v8094 = vunpack.c.h.b16 %v8076
        %v8095 = vunpack.c.l.b16 %v8077
        %v8096 = vunpack.c.h.b16 %v8077
        %v8097 = vunpack.c.l.b16 %v8078
        %v8098 = vunpack.c.h.b16 %v8078
        %v8099 = vunpack.c.l.b16 %v8079
        %v8100 = vunpack.c.h.b16 %v8079
        %v8101 = vunpack.c.l.b16 %v8080
        %v8102 = vunpack.c.h.b16 %v8080
        %v8103 = vunpack.c.l.b16 %v8081
        %v8104 = vunpack.c.h.b16 %v8081
        %v8105 = vunpack.c.l.b16 %v8082
        %v8106 = vunpack.c.h.b16 %v8082
        %v8107 = vpack.c.b16 %v8091, %v8091
        %v8108 = vpack.c.b16 %v8092, %v8092
        %v8109 = vpack.c.b16 %v8093, %v8093
        %v8110 = vpack.c.b16 %v8094, %v8094
        %v8111 = vpack.c.b16 %v8095, %v8095
        %v8112 = vpack.c.b16 %v8096, %v8096
        %v8113 = vpack.c.b16 %v8097, %v8097
        %v8114 = vpack.c.b16 %v8098, %v8098
        %v8115 = vpack.c.b16 %v8099, %v8099
        %v8116 = vpack.c.b16 %v8100, %v8100
        %v8117 = vpack.c.b16 %v8101, %v8101
        %v8118 = vpack.c.b16 %v8102, %v8102
        %v8119 = vpack.c.b16 %v8103, %v8103
        %v8120 = vpack.c.b16 %v8104, %v8104
        %v8121 = vpack.c.b16 %v8105, %v8105
        %v8122 = vpack.c.b16 %v8106, %v8106
        %v8123 = vrot.slane %v8107, 5
        %v8124 = vrot.slane %v8123, 4
        %v8125 = vrot.slane %v8108, 5
        %v8126 = vsel %vm2869, %v8124, %v8125
        %v8127 = vrot.slane %v8109, 5
        %v8128 = vrot.slane %v8127, 4
        %v8129 = vrot.slane %v8110, 5
        %v8130 = vsel %vm2869, %v8128, %v8129
        %v8131 = vrot.slane %v8111, 5
        %v8132 = vrot.slane %v8131, 4
        %v8133 = vrot.slane %v8112, 5
        %v8134 = vsel %vm2869, %v8132, %v8133
        %v8135 = vrot.slane %v8113, 5
        %v8136 = vrot.slane %v8135, 4
        %v8137 = vrot.slane %v8114, 5
        %v8138 = vsel %vm2869, %v8136, %v8137
        %v8139 = vrot.slane %v8115, 5
        %v8140 = vrot.slane %v8139, 4
        %v8141 = vrot.slane %v8116, 5
        %v8142 = vsel %vm2869, %v8140, %v8141
        %v8143 = vrot.slane %v8117, 5
        %v8144 = vrot.slane %v8143, 4
        %v8145 = vrot.slane %v8118, 5
        %v8146 = vsel %vm2869, %v8144, %v8145
        %v8147 = vrot.slane %v8119, 5
        %v8148 = vrot.slane %v8147, 4
        %v8149 = vrot.slane %v8120, 5
        %v8150 = vsel %vm2869, %v8148, %v8149
        %v8151 = vrot.slane %v8121, 5
        %v8152 = vrot.slane %v8151, 4
        %v8153 = vrot.slane %v8122, 5
        %v8154 = vsel %vm2869, %v8152, %v8153
        %v8155 = vunpack.c.l.b16 %v8126
        %v8156 = vunpack.c.l.b16 %v8130
        %v8157 = vunpack.c.l.b16 %v8134
        %v8158 = vunpack.c.l.b16 %v8138
        %v8159 = vunpack.c.l.b16 %v8142
        %v8160 = vunpack.c.l.b16 %v8146
        %v8161 = vunpack.c.l.b16 %v8150
        %v8162 = vunpack.c.l.b16 %v8154
        %v8163 = vpack.c.b16 %v8156, %v8155
        %v8164 = vpack.c.b16 %v8158, %v8157
        %v8165 = vpack.c.b16 %v8160, %v8159
        %v8166 = vpack.c.b16 %v8162, %v8161
        %8167 = vrot.lane.b32.xlu0 %v8163, 64
        %v8168 = vpop.permute.xlu0 %8167
        %8169 = vrot.lane.b32.xlu0 %v8164, 64
        %v8170 = vpop.permute.xlu0 %8169
        %8171 = vrot.lane.b32.xlu0 %v8165, 64
        %v8172 = vpop.permute.xlu0 %8171
        %8173 = vrot.lane.b32.xlu0 %v8166, 64
        %v8174 = vpop.permute.xlu0 %8173
        %8179 = vst.msk [vmem:[#allocation3 + $0x218] sm:$0xff] %vm2814, %v8168
        %8180 = vst.msk [vmem:[#allocation3 + $0x288] sm:$0xff] %vm2814, %v8170
        %8181 = vst.msk [vmem:[#allocation3 + $0x2f8] sm:$0xff] %vm2814, %v8172
        %8182 = vst.msk [vmem:[#allocation3 + $0x368] sm:$0xff] %vm2814, %v8174
        %s8183 = scalar_lea.vmem [#allocation2], 336
        %v8184 = vld [vmem:[%s8183] sm:$0xf]
        %v8185 = vld [vmem:[%s8183 + $0x8] sm:$0xf]
        %v8186 = vld [vmem:[%s8183 + $0x10] sm:$0xf]
        %v8187 = vld [vmem:[%s8183 + $0x18] sm:$0xf]
        %v8188 = vld [vmem:[%s8183 + $0x20] sm:$0xf]
        %v8189 = vld [vmem:[%s8183 + $0x28] sm:$0xf]
        %v8190 = vld [vmem:[%s8183 + $0x30] sm:$0xf]
        %v8191 = vld [vmem:[%s8183 + $0x38] sm:$0xf]
        %v8200 = vunpack.c.l.b16 %v8184
        %v8201 = vunpack.c.l.b16 %v8185
        %v8202 = vunpack.c.l.b16 %v8186
        %v8203 = vunpack.c.l.b16 %v8187
        %v8204 = vunpack.c.l.b16 %v8188
        %v8205 = vunpack.c.l.b16 %v8189
        %v8206 = vunpack.c.l.b16 %v8190
        %v8207 = vunpack.c.l.b16 %v8191
        %v8208 = vpack.c.b16 %v8201, %v8200
        %v8209 = vpack.c.b16 %v8203, %v8202
        %v8210 = vpack.c.b16 %v8205, %v8204
        %v8211 = vpack.c.b16 %v8207, %v8206
        %8216 = vst.msk [vmem:[#allocation3 + $0x220] sm:$0xff] %vm2540, %v8208
        %8217 = vst.msk [vmem:[#allocation3 + $0x290] sm:$0xff] %vm2540, %v8209
        %8218 = vst.msk [vmem:[#allocation3 + $0x300] sm:$0xff] %vm2540, %v8210
        %8219 = vst.msk [vmem:[#allocation3 + $0x370] sm:$0xff] %vm2540, %v8211
        %v8220 = vld [vmem:[%s8183] sm:$0x1f]
        %v8221 = vld [vmem:[%s8183 + $0x8] sm:$0x1f]
        %v8222 = vld [vmem:[%s8183 + $0x10] sm:$0x1f]
        %v8223 = vld [vmem:[%s8183 + $0x18] sm:$0x1f]
        %v8224 = vld [vmem:[%s8183 + $0x20] sm:$0x1f]
        %v8225 = vld [vmem:[%s8183 + $0x28] sm:$0x1f]
        %v8226 = vld [vmem:[%s8183 + $0x30] sm:$0x1f]
        %v8227 = vld [vmem:[%s8183 + $0x38] sm:$0x1f]
        %v8236 = vunpack.c.l.b16 %v8220
        %v8237 = vunpack.c.h.b16 %v8220
        %v8238 = vunpack.c.l.b16 %v8221
        %v8239 = vunpack.c.h.b16 %v8221
        %v8240 = vunpack.c.l.b16 %v8222
        %v8241 = vunpack.c.h.b16 %v8222
        %v8242 = vunpack.c.l.b16 %v8223
        %v8243 = vunpack.c.h.b16 %v8223
        %v8244 = vunpack.c.l.b16 %v8224
        %v8245 = vunpack.c.h.b16 %v8224
        %v8246 = vunpack.c.l.b16 %v8225
        %v8247 = vunpack.c.h.b16 %v8225
        %v8248 = vunpack.c.l.b16 %v8226
        %v8249 = vunpack.c.h.b16 %v8226
        %v8250 = vunpack.c.l.b16 %v8227
        %v8251 = vunpack.c.h.b16 %v8227
        %v8252 = vpack.c.b16 %v8236, %v8236
        %v8253 = vpack.c.b16 %v8237, %v8237
        %v8254 = vpack.c.b16 %v8238, %v8238
        %v8255 = vpack.c.b16 %v8239, %v8239
        %v8256 = vpack.c.b16 %v8240, %v8240
        %v8257 = vpack.c.b16 %v8241, %v8241
        %v8258 = vpack.c.b16 %v8242, %v8242
        %v8259 = vpack.c.b16 %v8243, %v8243
        %v8260 = vpack.c.b16 %v8244, %v8244
        %v8261 = vpack.c.b16 %v8245, %v8245
        %v8262 = vpack.c.b16 %v8246, %v8246
        %v8263 = vpack.c.b16 %v8247, %v8247
        %v8264 = vpack.c.b16 %v8248, %v8248
        %v8265 = vpack.c.b16 %v8249, %v8249
        %v8266 = vpack.c.b16 %v8250, %v8250
        %v8267 = vpack.c.b16 %v8251, %v8251
        %v8269 = vshrl.u32 %v8252, 16
        %v8271 = vrot.slane %v8269, 4
        %v8272 = vshll.u32 %v8252, 16
        %v8274 = vrot.slane %v8272, 5
        %v8275 = vor.u32 %v8271, %v8274
        %v8276 = vrot.slane %v8275, 4
        %v8278 = vshll.u32 %v8253, 16
        %v8280 = vrot.slane %v8278, 5
        %v8281 = vsel %vm2677, %v8276, %v8280
        %v8283 = vshrl.u32 %v8254, 16
        %v8285 = vrot.slane %v8283, 4
        %v8286 = vshll.u32 %v8254, 16
        %v8288 = vrot.slane %v8286, 5
        %v8289 = vor.u32 %v8285, %v8288
        %v8290 = vrot.slane %v8289, 4
        %v8292 = vshll.u32 %v8255, 16
        %v8294 = vrot.slane %v8292, 5
        %v8295 = vsel %vm2677, %v8290, %v8294
        %v8297 = vshrl.u32 %v8256, 16
        %v8299 = vrot.slane %v8297, 4
        %v8300 = vshll.u32 %v8256, 16
        %v8302 = vrot.slane %v8300, 5
        %v8303 = vor.u32 %v8299, %v8302
        %v8304 = vrot.slane %v8303, 4
        %v8306 = vshll.u32 %v8257, 16
        %v8308 = vrot.slane %v8306, 5
        %v8309 = vsel %vm2677, %v8304, %v8308
        %v8311 = vshrl.u32 %v8258, 16
        %v8313 = vrot.slane %v8311, 4
        %v8314 = vshll.u32 %v8258, 16
        %v8316 = vrot.slane %v8314, 5
        %v8317 = vor.u32 %v8313, %v8316
        %v8318 = vrot.slane %v8317, 4
        %v8320 = vshll.u32 %v8259, 16
        %v8322 = vrot.slane %v8320, 5
        %v8323 = vsel %vm2677, %v8318, %v8322
        %v8325 = vshrl.u32 %v8260, 16
        %v8327 = vrot.slane %v8325, 4
        %v8328 = vshll.u32 %v8260, 16
        %v8330 = vrot.slane %v8328, 5
        %v8331 = vor.u32 %v8327, %v8330
        %v8332 = vrot.slane %v8331, 4
        %v8334 = vshll.u32 %v8261, 16
        %v8336 = vrot.slane %v8334, 5
        %v8337 = vsel %vm2677, %v8332, %v8336
        %v8339 = vshrl.u32 %v8262, 16
        %v8341 = vrot.slane %v8339, 4
        %v8342 = vshll.u32 %v8262, 16
        %v8344 = vrot.slane %v8342, 5
        %v8345 = vor.u32 %v8341, %v8344
        %v8346 = vrot.slane %v8345, 4
        %v8348 = vshll.u32 %v8263, 16
        %v8350 = vrot.slane %v8348, 5
        %v8351 = vsel %vm2677, %v8346, %v8350
        %v8353 = vshrl.u32 %v8264, 16
        %v8355 = vrot.slane %v8353, 4
        %v8356 = vshll.u32 %v8264, 16
        %v8358 = vrot.slane %v8356, 5
        %v8359 = vor.u32 %v8355, %v8358
        %v8360 = vrot.slane %v8359, 4
        %v8362 = vshll.u32 %v8265, 16
        %v8364 = vrot.slane %v8362, 5
        %v8365 = vsel %vm2677, %v8360, %v8364
        %v8367 = vshrl.u32 %v8266, 16
        %v8369 = vrot.slane %v8367, 4
        %v8370 = vshll.u32 %v8266, 16
        %v8372 = vrot.slane %v8370, 5
        %v8373 = vor.u32 %v8369, %v8372
        %v8374 = vrot.slane %v8373, 4
        %v8376 = vshll.u32 %v8267, 16
        %v8378 = vrot.slane %v8376, 5
        %v8379 = vsel %vm2677, %v8374, %v8378
        %v8380 = vunpack.c.l.b16 %v8281
        %v8381 = vunpack.c.l.b16 %v8295
        %v8382 = vunpack.c.l.b16 %v8309
        %v8383 = vunpack.c.l.b16 %v8323
        %v8384 = vunpack.c.l.b16 %v8337
        %v8385 = vunpack.c.l.b16 %v8351
        %v8386 = vunpack.c.l.b16 %v8365
        %v8387 = vunpack.c.l.b16 %v8379
        %v8388 = vpack.c.b16 %v8381, %v8380
        %v8389 = vpack.c.b16 %v8383, %v8382
        %v8390 = vpack.c.b16 %v8385, %v8384
        %v8391 = vpack.c.b16 %v8387, %v8386
        %8392 = vrot.lane.b32.xlu0 %v8388, 64
        %v8393 = vpop.permute.xlu0 %8392
        %8394 = vrot.lane.b32.xlu0 %v8389, 64
        %v8395 = vpop.permute.xlu0 %8394
        %8396 = vrot.lane.b32.xlu0 %v8390, 64
        %v8397 = vpop.permute.xlu0 %8396
        %8398 = vrot.lane.b32.xlu0 %v8391, 64
        %v8399 = vpop.permute.xlu0 %8398
        %8404 = vst.msk [vmem:[#allocation3 + $0x220] sm:$0xff] %vm2814, %v8393
        %8405 = vst.msk [vmem:[#allocation3 + $0x290] sm:$0xff] %vm2814, %v8395
        %8406 = vst.msk [vmem:[#allocation3 + $0x300] sm:$0xff] %vm2814, %v8397
        %8407 = vst.msk [vmem:[#allocation3 + $0x370] sm:$0xff] %vm2814, %v8399
        %v8408 = vld [vmem:[%s8183] sm:$0x1e]
        %v8409 = vld [vmem:[%s8183 + $0x8] sm:$0x1e]
        %v8410 = vld [vmem:[%s8183 + $0x10] sm:$0x1e]
        %v8411 = vld [vmem:[%s8183 + $0x18] sm:$0x1e]
        %v8412 = vld [vmem:[%s8183 + $0x20] sm:$0x1e]
        %v8413 = vld [vmem:[%s8183 + $0x28] sm:$0x1e]
        %v8414 = vld [vmem:[%s8183 + $0x30] sm:$0x1e]
        %v8415 = vld [vmem:[%s8183 + $0x38] sm:$0x1e]
        %v8424 = vunpack.c.l.b16 %v8408
        %v8425 = vunpack.c.h.b16 %v8408
        %v8426 = vunpack.c.l.b16 %v8409
        %v8427 = vunpack.c.h.b16 %v8409
        %v8428 = vunpack.c.l.b16 %v8410
        %v8429 = vunpack.c.h.b16 %v8410
        %v8430 = vunpack.c.l.b16 %v8411
        %v8431 = vunpack.c.h.b16 %v8411
        %v8432 = vunpack.c.l.b16 %v8412
        %v8433 = vunpack.c.h.b16 %v8412
        %v8434 = vunpack.c.l.b16 %v8413
        %v8435 = vunpack.c.h.b16 %v8413
        %v8436 = vunpack.c.l.b16 %v8414
        %v8437 = vunpack.c.h.b16 %v8414
        %v8438 = vunpack.c.l.b16 %v8415
        %v8439 = vunpack.c.h.b16 %v8415
        %v8440 = vpack.c.b16 %v8424, %v8424
        %v8441 = vpack.c.b16 %v8425, %v8425
        %v8442 = vpack.c.b16 %v8426, %v8426
        %v8443 = vpack.c.b16 %v8427, %v8427
        %v8444 = vpack.c.b16 %v8428, %v8428
        %v8445 = vpack.c.b16 %v8429, %v8429
        %v8446 = vpack.c.b16 %v8430, %v8430
        %v8447 = vpack.c.b16 %v8431, %v8431
        %v8448 = vpack.c.b16 %v8432, %v8432
        %v8449 = vpack.c.b16 %v8433, %v8433
        %v8450 = vpack.c.b16 %v8434, %v8434
        %v8451 = vpack.c.b16 %v8435, %v8435
        %v8452 = vpack.c.b16 %v8436, %v8436
        %v8453 = vpack.c.b16 %v8437, %v8437
        %v8454 = vpack.c.b16 %v8438, %v8438
        %v8455 = vpack.c.b16 %v8439, %v8439
        %v8456 = vrot.slane %v8440, 5
        %v8457 = vrot.slane %v8456, 4
        %v8458 = vrot.slane %v8441, 5
        %v8459 = vsel %vm2869, %v8457, %v8458
        %v8460 = vrot.slane %v8442, 5
        %v8461 = vrot.slane %v8460, 4
        %v8462 = vrot.slane %v8443, 5
        %v8463 = vsel %vm2869, %v8461, %v8462
        %v8464 = vrot.slane %v8444, 5
        %v8465 = vrot.slane %v8464, 4
        %v8466 = vrot.slane %v8445, 5
        %v8467 = vsel %vm2869, %v8465, %v8466
        %v8468 = vrot.slane %v8446, 5
        %v8469 = vrot.slane %v8468, 4
        %v8470 = vrot.slane %v8447, 5
        %v8471 = vsel %vm2869, %v8469, %v8470
        %v8472 = vrot.slane %v8448, 5
        %v8473 = vrot.slane %v8472, 4
        %v8474 = vrot.slane %v8449, 5
        %v8475 = vsel %vm2869, %v8473, %v8474
        %v8476 = vrot.slane %v8450, 5
        %v8477 = vrot.slane %v8476, 4
        %v8478 = vrot.slane %v8451, 5
        %v8479 = vsel %vm2869, %v8477, %v8478
        %v8480 = vrot.slane %v8452, 5
        %v8481 = vrot.slane %v8480, 4
        %v8482 = vrot.slane %v8453, 5
        %v8483 = vsel %vm2869, %v8481, %v8482
        %v8484 = vrot.slane %v8454, 5
        %v8485 = vrot.slane %v8484, 4
        %v8486 = vrot.slane %v8455, 5
        %v8487 = vsel %vm2869, %v8485, %v8486
        %v8488 = vunpack.c.l.b16 %v8459
        %v8489 = vunpack.c.l.b16 %v8463
        %v8490 = vunpack.c.l.b16 %v8467
        %v8491 = vunpack.c.l.b16 %v8471
        %v8492 = vunpack.c.l.b16 %v8475
        %v8493 = vunpack.c.l.b16 %v8479
        %v8494 = vunpack.c.l.b16 %v8483
        %v8495 = vunpack.c.l.b16 %v8487
        %v8496 = vpack.c.b16 %v8489, %v8488
        %v8497 = vpack.c.b16 %v8491, %v8490
        %v8498 = vpack.c.b16 %v8493, %v8492
        %v8499 = vpack.c.b16 %v8495, %v8494
        %8504 = vst.msk [vmem:[#allocation3 + $0x228] sm:$0xff] %vm2540, %v8496
        %8505 = vst.msk [vmem:[#allocation3 + $0x298] sm:$0xff] %vm2540, %v8497
        %8506 = vst.msk [vmem:[#allocation3 + $0x308] sm:$0xff] %vm2540, %v8498
        %8507 = vst.msk [vmem:[#allocation3 + $0x378] sm:$0xff] %vm2540, %v8499
        %v8508 = vld [vmem:[#allocation3] sm:$0xff]
        %v8509 = vld [vmem:[#allocation3 + $0x8] sm:$0xff]
        %v8510 = vld [vmem:[#allocation3 + $0x10] sm:$0xff]
        %v8511 = vld [vmem:[#allocation3 + $0x18] sm:$0xff]
        %v8512 = vld [vmem:[#allocation3 + $0x20] sm:$0xff]
        %v8513 = vld [vmem:[#allocation3 + $0x28] sm:$0xff]
        %v8514 = vld [vmem:[#allocation3 + $0x30] sm:$0xff]
        %v8515 = vld [vmem:[#allocation3 + $0x38] sm:$0xff]
        %v8516 = vld [vmem:[#allocation3 + $0x40] sm:$0xff]
        %v8517 = vld [vmem:[#allocation3 + $0x48] sm:$0xff]
        %v8518 = vld [vmem:[#allocation3 + $0x50] sm:$0xff]
        %v8519 = vld [vmem:[#allocation3 + $0x58] sm:$0xff]
        %v8520 = vld [vmem:[#allocation3 + $0x60] sm:$0xff]
        %v8521 = vld [vmem:[#allocation3 + $0x68] sm:$0xff]
        %v8522 = vld [vmem:[#allocation3 + $0x70] sm:$0xff]
        %v8523 = vld [vmem:[#allocation3 + $0x78] sm:$0xff]
        %v8524 = vld [vmem:[#allocation3 + $0x80] sm:$0xff]
        %v8525 = vld [vmem:[#allocation3 + $0x88] sm:$0xff]
        %v8526 = vld [vmem:[#allocation3 + $0x90] sm:$0xff]
        %v8527 = vld [vmem:[#allocation3 + $0x98] sm:$0xff]
        %v8528 = vld [vmem:[#allocation3 + $0xa0] sm:$0xff]
        %v8529 = vld [vmem:[#allocation3 + $0xa8] sm:$0xff]
        %v8530 = vld [vmem:[#allocation3 + $0xb0] sm:$0xff]
        %v8531 = vld [vmem:[#allocation3 + $0xb8] sm:$0xff]
        %v8532 = vld [vmem:[#allocation3 + $0xc0] sm:$0xff]
        %v8533 = vld [vmem:[#allocation3 + $0xc8] sm:$0xff]
        %v8534 = vld [vmem:[#allocation3 + $0xd0] sm:$0xff]
        %v8535 = vld [vmem:[#allocation3 + $0xd8] sm:$0xff]
        %v8536 = vld [vmem:[#allocation3 + $0xe0] sm:$0xff]
        %v8537 = vld [vmem:[#allocation3 + $0xe8] sm:$0xff]
        %v8538 = vld [vmem:[#allocation3 + $0xf0] sm:$0xff]
        %v8539 = vld [vmem:[#allocation3 + $0xf8] sm:$0xff]
        %v8540 = vld [vmem:[#allocation3 + $0x100] sm:$0xff]
        %v8541 = vld [vmem:[#allocation3 + $0x108] sm:$0xff]
        %v8542 = vld [vmem:[#allocation3 + $0x110] sm:$0xff]
        %v8543 = vld [vmem:[#allocation3 + $0x118] sm:$0xff]
        %v8544 = vld [vmem:[#allocation3 + $0x120] sm:$0xff]
        %v8545 = vld [vmem:[#allocation3 + $0x128] sm:$0xff]
        %v8546 = vld [vmem:[#allocation3 + $0x130] sm:$0xff]
        %v8547 = vld [vmem:[#allocation3 + $0x138] sm:$0xff]
        %v8548 = vld [vmem:[#allocation3 + $0x140] sm:$0xff]
        %v8549 = vld [vmem:[#allocation3 + $0x148] sm:$0xff]
        %v8550 = vld [vmem:[#allocation3 + $0x150] sm:$0xff]
        %v8551 = vld [vmem:[#allocation3 + $0x158] sm:$0xff]
        %v8552 = vld [vmem:[#allocation3 + $0x160] sm:$0xff]
        %v8553 = vld [vmem:[#allocation3 + $0x168] sm:$0xff]
        %v8554 = vld [vmem:[#allocation3 + $0x170] sm:$0xff]
        %v8555 = vld [vmem:[#allocation3 + $0x178] sm:$0xff]
        %v8556 = vld [vmem:[#allocation3 + $0x180] sm:$0xff]
        %v8557 = vld [vmem:[#allocation3 + $0x188] sm:$0xff]
        %v8558 = vld [vmem:[#allocation3 + $0x190] sm:$0xff]
        %v8559 = vld [vmem:[#allocation3 + $0x198] sm:$0xff]
        %v8560 = vld [vmem:[#allocation3 + $0x1a0] sm:$0xff]
        %v8561 = vld [vmem:[#allocation3 + $0x1a8] sm:$0xff]
        %v8562 = vld [vmem:[#allocation3 + $0x1b0] sm:$0xff]
        %v8563 = vld [vmem:[#allocation3 + $0x1b8] sm:$0xff]
        %v8564 = vld [vmem:[#allocation3 + $0x1c0] sm:$0xff]
        %v8565 = vld [vmem:[#allocation3 + $0x1c8] sm:$0xff]
        %v8566 = vld [vmem:[#allocation3 + $0x1d0] sm:$0xff]
        %v8567 = vld [vmem:[#allocation3 + $0x1d8] sm:$0xff]
        %v8568 = vld [vmem:[#allocation3 + $0x1e0] sm:$0xff]
        %v8569 = vld [vmem:[#allocation3 + $0x1e8] sm:$0xff]
        %v8570 = vld [vmem:[#allocation3 + $0x1f0] sm:$0xff]
        %v8571 = vld [vmem:[#allocation3 + $0x1f8] sm:$0xff]
        %v8572 = vld [vmem:[#allocation3 + $0x200] sm:$0xff]
        %v8573 = vld [vmem:[#allocation3 + $0x208] sm:$0xff]
        %v8574 = vld [vmem:[#allocation3 + $0x210] sm:$0xff]
        %v8575 = vld [vmem:[#allocation3 + $0x218] sm:$0xff]
        %v8576 = vld [vmem:[#allocation3 + $0x220] sm:$0xff]
        %v8577 = vld [vmem:[#allocation3 + $0x228] sm:$0xff]
        %v8578 = vld [vmem:[#allocation3 + $0x230] sm:$0xff]
        %v8579 = vld [vmem:[#allocation3 + $0x238] sm:$0xff]
        %v8580 = vld [vmem:[#allocation3 + $0x240] sm:$0xff]
        %v8581 = vld [vmem:[#allocation3 + $0x248] sm:$0xff]
        %v8582 = vld [vmem:[#allocation3 + $0x250] sm:$0xff]
        %v8583 = vld [vmem:[#allocation3 + $0x258] sm:$0xff]
        %v8584 = vld [vmem:[#allocation3 + $0x260] sm:$0xff]
        %v8585 = vld [vmem:[#allocation3 + $0x268] sm:$0xff]
        %v8586 = vld [vmem:[#allocation3 + $0x270] sm:$0xff]
        %v8587 = vld [vmem:[#allocation3 + $0x278] sm:$0xff]
        %v8588 = vld [vmem:[#allocation3 + $0x280] sm:$0xff]
        %v8589 = vld [vmem:[#allocation3 + $0x288] sm:$0xff]
        %v8590 = vld [vmem:[#allocation3 + $0x290] sm:$0xff]
        %v8591 = vld [vmem:[#allocation3 + $0x298] sm:$0xff]
        %v8592 = vld [vmem:[#allocation3 + $0x2a0] sm:$0xff]
        %v8593 = vld [vmem:[#allocation3 + $0x2a8] sm:$0xff]
        %v8594 = vld [vmem:[#allocation3 + $0x2b0] sm:$0xff]
        %v8595 = vld [vmem:[#allocation3 + $0x2b8] sm:$0xff]
        %v8596 = vld [vmem:[#allocation3 + $0x2c0] sm:$0xff]
        %v8597 = vld [vmem:[#allocation3 + $0x2c8] sm:$0xff]
        %v8598 = vld [vmem:[#allocation3 + $0x2d0] sm:$0xff]
        %v8599 = vld [vmem:[#allocation3 + $0x2d8] sm:$0xff]
        %v8600 = vld [vmem:[#allocation3 + $0x2e0] sm:$0xff]
        %v8601 = vld [vmem:[#allocation3 + $0x2e8] sm:$0xff]
        %v8602 = vld [vmem:[#allocation3 + $0x2f0] sm:$0xff]
        %v8603 = vld [vmem:[#allocation3 + $0x2f8] sm:$0xff]
        %v8604 = vld [vmem:[#allocation3 + $0x300] sm:$0xff]
        %v8605 = vld [vmem:[#allocation3 + $0x308] sm:$0xff]
        %v8606 = vld [vmem:[#allocation3 + $0x310] sm:$0xff]
        %v8607 = vld [vmem:[#allocation3 + $0x318] sm:$0xff]
        %v8608 = vld [vmem:[#allocation3 + $0x320] sm:$0xff]
        %v8609 = vld [vmem:[#allocation3 + $0x328] sm:$0xff]
        %v8610 = vld [vmem:[#allocation3 + $0x330] sm:$0xff]
        %v8611 = vld [vmem:[#allocation3 + $0x338] sm:$0xff]
        %v8612 = vld [vmem:[#allocation3 + $0x340] sm:$0xff]
        %v8613 = vld [vmem:[#allocation3 + $0x348] sm:$0xff]
        %v8614 = vld [vmem:[#allocation3 + $0x350] sm:$0xff]
        %v8615 = vld [vmem:[#allocation3 + $0x358] sm:$0xff]
        %v8616 = vld [vmem:[#allocation3 + $0x360] sm:$0xff]
        %v8617 = vld [vmem:[#allocation3 + $0x368] sm:$0xff]
        %v8618 = vld [vmem:[#allocation3 + $0x370] sm:$0xff]
        %v8619 = vld [vmem:[#allocation3 + $0x378] sm:$0xff]
        %v8620 = vld [vmem:[%s3] sm:$0xf]
        %v8621 = vld [vmem:[%s3 + $0x4] sm:$0xf]
        %v8622 = vld [vmem:[%s3 + $0x8] sm:$0xf]
        %v8623 = vld [vmem:[%s3 + $0xc] sm:$0xf]
        %v8624 = vld [vmem:[%s3 + $0x10] sm:$0xf]
        %v8625 = vld [vmem:[%s3 + $0x14] sm:$0xf]
        %v8626 = vld [vmem:[%s3 + $0x18] sm:$0xf]
        %v8627 = vld [vmem:[%s3 + $0x1c] sm:$0xf]
        %v8628 = vld [vmem:[%s3 + $0x20] sm:$0xf]
        %v8629 = vld [vmem:[%s3 + $0x24] sm:$0xf]
        %v8630 = vld [vmem:[%s3 + $0x28] sm:$0xf]
        %v8631 = vld [vmem:[%s3 + $0x2c] sm:$0xf]
        %v8632 = vld [vmem:[%s3 + $0x30] sm:$0xf]
        %v8633 = vld [vmem:[%s3 + $0x34] sm:$0xf]
        %v8634 = vld [vmem:[%s3 + $0x38] sm:$0xf]
        %v8635 = vld [vmem:[%s3 + $0x3c] sm:$0xf]
        %v8636 = vld [vmem:[%s3 + $0x40] sm:$0xf]
        %v8637 = vld [vmem:[%s3 + $0x44] sm:$0xf]
        %v8638 = vld [vmem:[%s3 + $0x48] sm:$0xf]
        %v8639 = vld [vmem:[%s3 + $0x4c] sm:$0xf]
        %v8640 = vld [vmem:[%s3 + $0x50] sm:$0xf]
        %v8641 = vld [vmem:[%s3 + $0x54] sm:$0xf]
        %v8642 = vld [vmem:[%s3 + $0x58] sm:$0xf]
        %v8643 = vld [vmem:[%s3 + $0x5c] sm:$0xf]
        %v8644 = vld [vmem:[%s3 + $0x60] sm:$0xf]
        %v8645 = vld [vmem:[%s3 + $0x64] sm:$0xf]
        %v8646 = vld [vmem:[%s3 + $0x68] sm:$0xf]
        %v8647 = vld [vmem:[%s3 + $0x6c] sm:$0xf]
        %v8648 = vld [vmem:[%s3 + $0x70] sm:$0xf]
        %v8649 = vld [vmem:[%s3 + $0x74] sm:$0xf]
        %v8650 = vld [vmem:[%s3 + $0x78] sm:$0xf]
        %v8651 = vld [vmem:[%s3 + $0x7c] sm:$0xf]
        %v8652 = vld [vmem:[%s3 + $0x80] sm:$0xf]
        %v8653 = vld [vmem:[%s3 + $0x84] sm:$0xf]
        %v8654 = vld [vmem:[%s3 + $0x88] sm:$0xf]
        %v8655 = vld [vmem:[%s3 + $0x8c] sm:$0xf]
        %v8656 = vld [vmem:[%s3 + $0x90] sm:$0xf]
        %v8657 = vld [vmem:[%s3 + $0x94] sm:$0xf]
        %v8658 = vld [vmem:[%s3 + $0x98] sm:$0xf]
        %v8659 = vld [vmem:[%s3 + $0x9c] sm:$0xf]
        %v8660 = vld [vmem:[%s3 + $0xa0] sm:$0xf]
        %v8661 = vld [vmem:[%s3 + $0xa4] sm:$0xf]
        %v8662 = vld [vmem:[%s3 + $0xa8] sm:$0xf]
        %v8663 = vld [vmem:[%s3 + $0xac] sm:$0xf]
        %v8664 = vld [vmem:[%s3 + $0xb0] sm:$0xf]
        %v8665 = vld [vmem:[%s3 + $0xb4] sm:$0xf]
        %v8666 = vld [vmem:[%s3 + $0xb8] sm:$0xf]
        %v8667 = vld [vmem:[%s3 + $0xbc] sm:$0xf]
        %v8668 = vld [vmem:[%s3 + $0xc0] sm:$0xf]
        %v8669 = vld [vmem:[%s3 + $0xc4] sm:$0xf]
        %v8670 = vld [vmem:[%s3 + $0xc8] sm:$0xf]
        %v8671 = vld [vmem:[%s3 + $0xcc] sm:$0xf]
        %v8672 = vld [vmem:[%s3 + $0xd0] sm:$0xf]
        %v8673 = vld [vmem:[%s3 + $0xd4] sm:$0xf]
        %v8674 = vld [vmem:[%s3 + $0xd8] sm:$0xf]
        %v8675 = vld [vmem:[%s3 + $0xdc] sm:$0xf]
        %v8676 = vld [vmem:[%s3 + $0xe0] sm:$0xf]
        %v8677 = vld [vmem:[%s3 + $0xe4] sm:$0xf]
        %v8678 = vld [vmem:[%s3 + $0xe8] sm:$0xf]
        %v8679 = vld [vmem:[%s3 + $0xec] sm:$0xf]
        %v8680 = vld [vmem:[%s3 + $0xf0] sm:$0xf]
        %v8681 = vld [vmem:[%s3 + $0xf4] sm:$0xf]
        %v8682 = vld [vmem:[%s3 + $0xf8] sm:$0xf]
        %v8683 = vld [vmem:[%s3 + $0xfc] sm:$0xf]
        %v8684 = vld [vmem:[%s3 + $0x100] sm:$0xf]
        %v8685 = vld [vmem:[%s3 + $0x104] sm:$0xf]
        %v8686 = vld [vmem:[%s3 + $0x108] sm:$0xf]
        %v8687 = vld [vmem:[%s3 + $0x10c] sm:$0xf]
        %v8688 = vld [vmem:[%s3 + $0x110] sm:$0xf]
        %v8689 = vld [vmem:[%s3 + $0x114] sm:$0xf]
        %v8690 = vld [vmem:[%s3 + $0x118] sm:$0xf]
        %v8691 = vld [vmem:[%s3 + $0x11c] sm:$0xf]
        %v8692 = vld [vmem:[%s3 + $0x120] sm:$0xf]
        %v8693 = vld [vmem:[%s3 + $0x124] sm:$0xf]
        %v8694 = vld [vmem:[%s3 + $0x128] sm:$0xf]
        %v8695 = vld [vmem:[%s3 + $0x12c] sm:$0xf]
        %v8696 = vld [vmem:[%s3 + $0x130] sm:$0xf]
        %v8697 = vld [vmem:[%s3 + $0x134] sm:$0xf]
        %v8698 = vld [vmem:[%s3 + $0x138] sm:$0xf]
        %v8699 = vld [vmem:[%s3 + $0x13c] sm:$0xf]
        %v8700 = vld [vmem:[%s3 + $0x140] sm:$0xf]
        %v8701 = vld [vmem:[%s3 + $0x144] sm:$0xf]
        %v8702 = vld [vmem:[%s3 + $0x148] sm:$0xf]
        %v8703 = vld [vmem:[%s3 + $0x14c] sm:$0xf]
        %v8704 = vld [vmem:[%s3 + $0x150] sm:$0xf]
        %v8705 = vld [vmem:[%s3 + $0x154] sm:$0xf]
        %v8706 = vld [vmem:[%s3 + $0x158] sm:$0xf]
        %v8707 = vld [vmem:[%s3 + $0x15c] sm:$0xf]
        %v8708 = vld [vmem:[%s3 + $0x160] sm:$0xf]
        %v8709 = vld [vmem:[%s3 + $0x164] sm:$0xf]
        %v8710 = vld [vmem:[%s3 + $0x168] sm:$0xf]
        %v8711 = vld [vmem:[%s3 + $0x16c] sm:$0xf]
        %v8712 = vld [vmem:[%s3 + $0x170] sm:$0xf]
        %v8713 = vld [vmem:[%s3 + $0x174] sm:$0xf]
        %v8714 = vld [vmem:[%s3 + $0x178] sm:$0xf]
        %v8715 = vld [vmem:[%s3 + $0x17c] sm:$0xf]
        %v8716 = vld [vmem:[%s3 + $0x180] sm:$0xf]
        %v8717 = vld [vmem:[%s3 + $0x184] sm:$0xf]
        %v8718 = vld [vmem:[%s3 + $0x188] sm:$0xf]
        %v8719 = vld [vmem:[%s3 + $0x18c] sm:$0xf]
        %v8720 = vld [vmem:[%s3 + $0x190] sm:$0xf]
        %v8721 = vld [vmem:[%s3 + $0x194] sm:$0xf]
        %v8722 = vld [vmem:[%s3 + $0x198] sm:$0xf]
        %v8723 = vld [vmem:[%s3 + $0x19c] sm:$0xf]
        %v8724 = vld [vmem:[%s3 + $0x1a0] sm:$0xf]
        %v8725 = vld [vmem:[%s3 + $0x1a4] sm:$0xf]
        %v8726 = vld [vmem:[%s3 + $0x1a8] sm:$0xf]
        %v8727 = vld [vmem:[%s3 + $0x1ac] sm:$0xf]
        %v8728 = vld [vmem:[%s3 + $0x1b0] sm:$0xf]
        %v8729 = vld [vmem:[%s3 + $0x1b4] sm:$0xf]
        %v8730 = vld [vmem:[%s3 + $0x1b8] sm:$0xf]
        %v8731 = vld [vmem:[%s3 + $0x1bc] sm:$0xf]
        %v8732 = vld [vmem:[%s3 + $0x1c0] sm:$0xf]
        %v8733 = vld [vmem:[%s3 + $0x1c4] sm:$0xf]
        %v8734 = vld [vmem:[%s3 + $0x1c8] sm:$0xf]
        %v8735 = vld [vmem:[%s3 + $0x1cc] sm:$0xf]
        %v8736 = vld [vmem:[%s3 + $0x1d0] sm:$0xf]
        %v8737 = vld [vmem:[%s3 + $0x1d4] sm:$0xf]
        %v8738 = vld [vmem:[%s3 + $0x1d8] sm:$0xf]
        %v8739 = vld [vmem:[%s3 + $0x1dc] sm:$0xf]
        %v8740 = vld [vmem:[%s3 + $0x1e0] sm:$0xf]
        %v8741 = vld [vmem:[%s3 + $0x1e4] sm:$0xf]
        %v8742 = vld [vmem:[%s3 + $0x1e8] sm:$0xf]
        %v8743 = vld [vmem:[%s3 + $0x1ec] sm:$0xf]
        %v8744 = vld [vmem:[%s3 + $0x1f0] sm:$0xf]
        %v8745 = vld [vmem:[%s3 + $0x1f4] sm:$0xf]
        %v8746 = vld [vmem:[%s3 + $0x1f8] sm:$0xf]
        %v8747 = vld [vmem:[%s3 + $0x1fc] sm:$0xf]
        %v8748 = vld [vmem:[%s3 + $0x200] sm:$0xf]
        %v8749 = vld [vmem:[%s3 + $0x204] sm:$0xf]
        %v8750 = vld [vmem:[%s3 + $0x208] sm:$0xf]
        %v8751 = vld [vmem:[%s3 + $0x20c] sm:$0xf]
        %v8752 = vld [vmem:[%s3 + $0x210] sm:$0xf]
        %v8753 = vld [vmem:[%s3 + $0x214] sm:$0xf]
        %v8754 = vld [vmem:[%s3 + $0x218] sm:$0xf]
        %v8755 = vld [vmem:[%s3 + $0x21c] sm:$0xf]
        %v8756 = vld [vmem:[%s3 + $0x220] sm:$0xf]
        %v8757 = vld [vmem:[%s3 + $0x224] sm:$0xf]
        %v8758 = vld [vmem:[%s3 + $0x228] sm:$0xf]
        %v8759 = vld [vmem:[%s3 + $0x22c] sm:$0xf]
        %v8760 = vld [vmem:[%s3 + $0x230] sm:$0xf]
        %v8761 = vld [vmem:[%s3 + $0x234] sm:$0xf]
        %v8762 = vld [vmem:[%s3 + $0x238] sm:$0xf]
        %v8763 = vld [vmem:[%s3 + $0x23c] sm:$0xf]
        %v8764 = vld [vmem:[%s3 + $0x240] sm:$0xf]
        %v8765 = vld [vmem:[%s3 + $0x244] sm:$0xf]
        %v8766 = vld [vmem:[%s3 + $0x248] sm:$0xf]
        %v8767 = vld [vmem:[%s3 + $0x24c] sm:$0xf]
        %v8768 = vld [vmem:[%s3 + $0x250] sm:$0xf]
        %v8769 = vld [vmem:[%s3 + $0x254] sm:$0xf]
        %v8770 = vld [vmem:[%s3 + $0x258] sm:$0xf]
        %v8771 = vld [vmem:[%s3 + $0x25c] sm:$0xf]
        %v8772 = vld [vmem:[%s3 + $0x260] sm:$0xf]
        %v8773 = vld [vmem:[%s3 + $0x264] sm:$0xf]
        %v8774 = vld [vmem:[%s3 + $0x268] sm:$0xf]
        %v8775 = vld [vmem:[%s3 + $0x26c] sm:$0xf]
        %v8776 = vld [vmem:[%s3 + $0x270] sm:$0xf]
        %v8777 = vld [vmem:[%s3 + $0x274] sm:$0xf]
        %v8778 = vld [vmem:[%s3 + $0x278] sm:$0xf]
        %v8779 = vld [vmem:[%s3 + $0x27c] sm:$0xf]
        %v8780 = vld [vmem:[%s3 + $0x280] sm:$0xf]
        %v8781 = vld [vmem:[%s3 + $0x284] sm:$0xf]
        %v8782 = vld [vmem:[%s3 + $0x288] sm:$0xf]
        %v8783 = vld [vmem:[%s3 + $0x28c] sm:$0xf]
        %v8784 = vld [vmem:[%s3 + $0x290] sm:$0xf]
        %v8785 = vld [vmem:[%s3 + $0x294] sm:$0xf]
        %v8786 = vld [vmem:[%s3 + $0x298] sm:$0xf]
        %v8787 = vld [vmem:[%s3 + $0x29c] sm:$0xf]
        %v8788 = vld [vmem:[%s3 + $0x2a0] sm:$0xf]
        %v8789 = vld [vmem:[%s3 + $0x2a4] sm:$0xf]
        %v8790 = vld [vmem:[%s3 + $0x2a8] sm:$0xf]
        %v8791 = vld [vmem:[%s3 + $0x2ac] sm:$0xf]
        %v8792 = vld [vmem:[%s3 + $0x2b0] sm:$0xf]
        %v8793 = vld [vmem:[%s3 + $0x2b4] sm:$0xf]
        %v8794 = vld [vmem:[%s3 + $0x2b8] sm:$0xf]
        %v8795 = vld [vmem:[%s3 + $0x2bc] sm:$0xf]
        %v8796 = vld [vmem:[%s3 + $0x2c0] sm:$0xf]
        %v8797 = vld [vmem:[%s3 + $0x2c4] sm:$0xf]
        %v8798 = vld [vmem:[%s3 + $0x2c8] sm:$0xf]
        %v8799 = vld [vmem:[%s3 + $0x2cc] sm:$0xf]
        %v8800 = vld [vmem:[%s3 + $0x2d0] sm:$0xf]
        %v8801 = vld [vmem:[%s3 + $0x2d4] sm:$0xf]
        %v8802 = vld [vmem:[%s3 + $0x2d8] sm:$0xf]
        %v8803 = vld [vmem:[%s3 + $0x2dc] sm:$0xf]
        %v8804 = vld [vmem:[%s3 + $0x2e0] sm:$0xf]
        %v8805 = vld [vmem:[%s3 + $0x2e4] sm:$0xf]
        %v8806 = vld [vmem:[%s3 + $0x2e8] sm:$0xf]
        %v8807 = vld [vmem:[%s3 + $0x2ec] sm:$0xf]
        %v8808 = vld [vmem:[%s3 + $0x2f0] sm:$0xf]
        %v8809 = vld [vmem:[%s3 + $0x2f4] sm:$0xf]
        %v8810 = vld [vmem:[%s3 + $0x2f8] sm:$0xf]
        %v8811 = vld [vmem:[%s3 + $0x2fc] sm:$0xf]
        %v8812 = vld [vmem:[%s3 + $0x300] sm:$0xf]
        %v8813 = vld [vmem:[%s3 + $0x304] sm:$0xf]
        %v8814 = vld [vmem:[%s3 + $0x308] sm:$0xf]
        %v8815 = vld [vmem:[%s3 + $0x30c] sm:$0xf]
        %v8816 = vld [vmem:[%s3 + $0x310] sm:$0xf]
        %v8817 = vld [vmem:[%s3 + $0x314] sm:$0xf]
        %v8818 = vld [vmem:[%s3 + $0x318] sm:$0xf]
        %v8819 = vld [vmem:[%s3 + $0x31c] sm:$0xf]
        %v8820 = vld [vmem:[%s3 + $0x320] sm:$0xf]
        %v8821 = vld [vmem:[%s3 + $0x324] sm:$0xf]
        %v8822 = vld [vmem:[%s3 + $0x328] sm:$0xf]
        %v8823 = vld [vmem:[%s3 + $0x32c] sm:$0xf]
        %v8824 = vld [vmem:[%s3 + $0x330] sm:$0xf]
        %v8825 = vld [vmem:[%s3 + $0x334] sm:$0xf]
        %v8826 = vld [vmem:[%s3 + $0x338] sm:$0xf]
        %v8827 = vld [vmem:[%s3 + $0x33c] sm:$0xf]
        %v8828 = vld [vmem:[%s3 + $0x340] sm:$0xf]
        %v8829 = vld [vmem:[%s3 + $0x344] sm:$0xf]
        %v8830 = vld [vmem:[%s3 + $0x348] sm:$0xf]
        %v8831 = vld [vmem:[%s3 + $0x34c] sm:$0xf]
        %v8832 = vld [vmem:[%s3 + $0x350] sm:$0xf]
        %v8833 = vld [vmem:[%s3 + $0x354] sm:$0xf]
        %v8834 = vld [vmem:[%s3 + $0x358] sm:$0xf]
        %v8835 = vld [vmem:[%s3 + $0x35c] sm:$0xf]
        %v8836 = vld [vmem:[%s4] sm:$0x1]
        %v8838 = vlaneseq
        %v8839 = vshrl.u32 %v8838, 7
        %v8840 = vsub.s32 0, %v8839
        %v8841 = vrot.slane %v8836, %v8840
        %v9059 = vunpack.c.l.b16 %v8620
        %v9060 = vunpack.c.l.b16 %v8621
        %v9061 = vunpack.c.l.b16 %v8622
        %v9062 = vunpack.c.l.b16 %v8623
        %v9063 = vunpack.c.l.b16 %v8624
        %v9064 = vunpack.c.l.b16 %v8625
        %v9065 = vunpack.c.l.b16 %v8626
        %v9066 = vunpack.c.l.b16 %v8627
        %v9067 = vunpack.c.l.b16 %v8628
        %v9068 = vunpack.c.l.b16 %v8629
        %v9069 = vunpack.c.l.b16 %v8630
        %v9070 = vunpack.c.l.b16 %v8631
        %v9071 = vunpack.c.l.b16 %v8632
        %v9072 = vunpack.c.l.b16 %v8633
        %v9073 = vunpack.c.l.b16 %v8634
        %v9074 = vunpack.c.l.b16 %v8635
        %v9075 = vunpack.c.l.b16 %v8636
        %v9076 = vunpack.c.l.b16 %v8637
        %v9077 = vunpack.c.l.b16 %v8638
        %v9078 = vunpack.c.l.b16 %v8639
        %v9079 = vunpack.c.l.b16 %v8640
        %v9080 = vunpack.c.l.b16 %v8641
        %v9081 = vunpack.c.l.b16 %v8642
        %v9082 = vunpack.c.l.b16 %v8643
        %v9083 = vunpack.c.l.b16 %v8644
        %v9084 = vunpack.c.l.b16 %v8645
        %v9085 = vunpack.c.l.b16 %v8646
        %v9086 = vunpack.c.l.b16 %v8647
        %v9087 = vunpack.c.l.b16 %v8648
        %v9088 = vunpack.c.l.b16 %v8649
        %v9089 = vunpack.c.l.b16 %v8650
        %v9090 = vunpack.c.l.b16 %v8651
        %v9091 = vunpack.c.l.b16 %v8652
        %v9092 = vunpack.c.l.b16 %v8653
        %v9093 = vunpack.c.l.b16 %v8654
        %v9094 = vunpack.c.l.b16 %v8655
        %v9095 = vunpack.c.l.b16 %v8656
        %v9096 = vunpack.c.l.b16 %v8657
        %v9097 = vunpack.c.l.b16 %v8658
        %v9098 = vunpack.c.l.b16 %v8659
        %v9099 = vunpack.c.l.b16 %v8660
        %v9100 = vunpack.c.l.b16 %v8661
        %v9101 = vunpack.c.l.b16 %v8662
        %v9102 = vunpack.c.l.b16 %v8663
        %v9103 = vunpack.c.l.b16 %v8664
        %v9104 = vunpack.c.l.b16 %v8665
        %v9105 = vunpack.c.l.b16 %v8666
        %v9106 = vunpack.c.l.b16 %v8667
        %v9107 = vunpack.c.l.b16 %v8668
        %v9108 = vunpack.c.l.b16 %v8669
        %v9109 = vunpack.c.l.b16 %v8670
        %v9110 = vunpack.c.l.b16 %v8671
        %v9111 = vunpack.c.l.b16 %v8672
        %v9112 = vunpack.c.l.b16 %v8673
        %v9113 = vunpack.c.l.b16 %v8674
        %v9114 = vunpack.c.l.b16 %v8675
        %v9115 = vunpack.c.l.b16 %v8676
        %v9116 = vunpack.c.l.b16 %v8677
        %v9117 = vunpack.c.l.b16 %v8678
        %v9118 = vunpack.c.l.b16 %v8679
        %v9119 = vunpack.c.l.b16 %v8680
        %v9120 = vunpack.c.l.b16 %v8681
        %v9121 = vunpack.c.l.b16 %v8682
        %v9122 = vunpack.c.l.b16 %v8683
        %v9123 = vunpack.c.l.b16 %v8684
        %v9124 = vunpack.c.l.b16 %v8685
        %v9125 = vunpack.c.l.b16 %v8686
        %v9126 = vunpack.c.l.b16 %v8687
        %v9127 = vunpack.c.l.b16 %v8688
        %v9128 = vunpack.c.l.b16 %v8689
        %v9129 = vunpack.c.l.b16 %v8690
        %v9130 = vunpack.c.l.b16 %v8691
        %v9131 = vunpack.c.l.b16 %v8692
        %v9132 = vunpack.c.l.b16 %v8693
        %v9133 = vunpack.c.l.b16 %v8694
        %v9134 = vunpack.c.l.b16 %v8695
        %v9135 = vunpack.c.l.b16 %v8696
        %v9136 = vunpack.c.l.b16 %v8697
        %v9137 = vunpack.c.l.b16 %v8698
        %v9138 = vunpack.c.l.b16 %v8699
        %v9139 = vunpack.c.l.b16 %v8700
        %v9140 = vunpack.c.l.b16 %v8701
        %v9141 = vunpack.c.l.b16 %v8702
        %v9142 = vunpack.c.l.b16 %v8703
        %v9143 = vunpack.c.l.b16 %v8704
        %v9144 = vunpack.c.l.b16 %v8705
        %v9145 = vunpack.c.l.b16 %v8706
        %v9146 = vunpack.c.l.b16 %v8707
        %v9147 = vunpack.c.l.b16 %v8708
        %v9148 = vunpack.c.l.b16 %v8709
        %v9149 = vunpack.c.l.b16 %v8710
        %v9150 = vunpack.c.l.b16 %v8711
        %v9151 = vunpack.c.l.b16 %v8712
        %v9152 = vunpack.c.l.b16 %v8713
        %v9153 = vunpack.c.l.b16 %v8714
        %v9154 = vunpack.c.l.b16 %v8715
        %v9155 = vunpack.c.l.b16 %v8716
        %v9156 = vunpack.c.l.b16 %v8717
        %v9157 = vunpack.c.l.b16 %v8718
        %v9158 = vunpack.c.l.b16 %v8719
        %v9159 = vunpack.c.l.b16 %v8720
        %v9160 = vunpack.c.l.b16 %v8721
        %v9161 = vunpack.c.l.b16 %v8722
        %v9162 = vunpack.c.l.b16 %v8723
        %v9163 = vunpack.c.l.b16 %v8724
        %v9164 = vunpack.c.l.b16 %v8725
        %v9165 = vunpack.c.l.b16 %v8726
        %v9166 = vunpack.c.l.b16 %v8727
        %v9167 = vunpack.c.l.b16 %v8728
        %v9168 = vunpack.c.l.b16 %v8729
        %v9169 = vunpack.c.l.b16 %v8730
        %v9170 = vunpack.c.l.b16 %v8731
        %v9171 = vunpack.c.l.b16 %v8732
        %v9172 = vunpack.c.l.b16 %v8733
        %v9173 = vunpack.c.l.b16 %v8734
        %v9174 = vunpack.c.l.b16 %v8735
        %v9175 = vunpack.c.l.b16 %v8736
        %v9176 = vunpack.c.l.b16 %v8737
        %v9177 = vunpack.c.l.b16 %v8738
        %v9178 = vunpack.c.l.b16 %v8739
        %v9179 = vunpack.c.l.b16 %v8740
        %v9180 = vunpack.c.l.b16 %v8741
        %v9181 = vunpack.c.l.b16 %v8742
        %v9182 = vunpack.c.l.b16 %v8743
        %v9183 = vunpack.c.l.b16 %v8744
        %v9184 = vunpack.c.l.b16 %v8745
        %v9185 = vunpack.c.l.b16 %v8746
        %v9186 = vunpack.c.l.b16 %v8747
        %v9187 = vunpack.c.l.b16 %v8748
        %v9188 = vunpack.c.l.b16 %v8749
        %v9189 = vunpack.c.l.b16 %v8750
        %v9190 = vunpack.c.l.b16 %v8751
        %v9191 = vunpack.c.l.b16 %v8752
        %v9192 = vunpack.c.l.b16 %v8753
        %v9193 = vunpack.c.l.b16 %v8754
        %v9194 = vunpack.c.l.b16 %v8755
        %v9195 = vunpack.c.l.b16 %v8756
        %v9196 = vunpack.c.l.b16 %v8757
        %v9197 = vunpack.c.l.b16 %v8758
        %v9198 = vunpack.c.l.b16 %v8759
        %v9199 = vunpack.c.l.b16 %v8760
        %v9200 = vunpack.c.l.b16 %v8761
        %v9201 = vunpack.c.l.b16 %v8762
        %v9202 = vunpack.c.l.b16 %v8763
        %v9203 = vunpack.c.l.b16 %v8764
        %v9204 = vunpack.c.l.b16 %v8765
        %v9205 = vunpack.c.l.b16 %v8766
        %v9206 = vunpack.c.l.b16 %v8767
        %v9207 = vunpack.c.l.b16 %v8768
        %v9208 = vunpack.c.l.b16 %v8769
        %v9209 = vunpack.c.l.b16 %v8770
        %v9210 = vunpack.c.l.b16 %v8771
        %v9211 = vunpack.c.l.b16 %v8772
        %v9212 = vunpack.c.l.b16 %v8773
        %v9213 = vunpack.c.l.b16 %v8774
        %v9214 = vunpack.c.l.b16 %v8775
        %v9215 = vunpack.c.l.b16 %v8776
        %v9216 = vunpack.c.l.b16 %v8777
        %v9217 = vunpack.c.l.b16 %v8778
        %v9218 = vunpack.c.l.b16 %v8779
        %v9219 = vunpack.c.l.b16 %v8780
        %v9220 = vunpack.c.l.b16 %v8781
        %v9221 = vunpack.c.l.b16 %v8782
        %v9222 = vunpack.c.l.b16 %v8783
        %v9223 = vunpack.c.l.b16 %v8784
        %v9224 = vunpack.c.l.b16 %v8785
        %v9225 = vunpack.c.l.b16 %v8786
        %v9226 = vunpack.c.l.b16 %v8787
        %v9227 = vunpack.c.l.b16 %v8788
        %v9228 = vunpack.c.l.b16 %v8789
        %v9229 = vunpack.c.l.b16 %v8790
        %v9230 = vunpack.c.l.b16 %v8791
        %v9231 = vunpack.c.l.b16 %v8792
        %v9232 = vunpack.c.l.b16 %v8793
        %v9233 = vunpack.c.l.b16 %v8794
        %v9234 = vunpack.c.l.b16 %v8795
        %v9235 = vunpack.c.l.b16 %v8796
        %v9236 = vunpack.c.l.b16 %v8797
        %v9237 = vunpack.c.l.b16 %v8798
        %v9238 = vunpack.c.l.b16 %v8799
        %v9239 = vunpack.c.l.b16 %v8800
        %v9240 = vunpack.c.l.b16 %v8801
        %v9241 = vunpack.c.l.b16 %v8802
        %v9242 = vunpack.c.l.b16 %v8803
        %v9243 = vunpack.c.l.b16 %v8804
        %v9244 = vunpack.c.l.b16 %v8805
        %v9245 = vunpack.c.l.b16 %v8806
        %v9246 = vunpack.c.l.b16 %v8807
        %v9247 = vunpack.c.l.b16 %v8808
        %v9248 = vunpack.c.l.b16 %v8809
        %v9249 = vunpack.c.l.b16 %v8810
        %v9250 = vunpack.c.l.b16 %v8811
        %v9251 = vunpack.c.l.b16 %v8812
        %v9252 = vunpack.c.l.b16 %v8813
        %v9253 = vunpack.c.l.b16 %v8814
        %v9254 = vunpack.c.l.b16 %v8815
        %v9255 = vunpack.c.l.b16 %v8816
        %v9256 = vunpack.c.l.b16 %v8817
        %v9257 = vunpack.c.l.b16 %v8818
        %v9258 = vunpack.c.l.b16 %v8819
        %v9259 = vunpack.c.l.b16 %v8820
        %v9260 = vunpack.c.l.b16 %v8821
        %v9261 = vunpack.c.l.b16 %v8822
        %v9262 = vunpack.c.l.b16 %v8823
        %v9263 = vunpack.c.l.b16 %v8824
        %v9264 = vunpack.c.l.b16 %v8825
        %v9265 = vunpack.c.l.b16 %v8826
        %v9266 = vunpack.c.l.b16 %v8827
        %v9267 = vunpack.c.l.b16 %v8828
        %v9268 = vunpack.c.l.b16 %v8829
        %v9269 = vunpack.c.l.b16 %v8830
        %v9270 = vunpack.c.l.b16 %v8831
        %v9271 = vunpack.c.l.b16 %v8832
        %v9272 = vunpack.c.l.b16 %v8833
        %v9273 = vunpack.c.l.b16 %v8834
        %v9274 = vunpack.c.l.b16 %v8835
        %v9275 = vpack.c.b16 %v9060, %v9059
        %v9276 = vpack.c.b16 %v9062, %v9061
        %v9277 = vpack.c.b16 %v9064, %v9063
        %v9278 = vpack.c.b16 %v9066, %v9065
        %v9279 = vpack.c.b16 %v9068, %v9067
        %v9280 = vpack.c.b16 %v9070, %v9069
        %v9281 = vpack.c.b16 %v9072, %v9071
        %v9282 = vpack.c.b16 %v9074, %v9073
        %v9283 = vpack.c.b16 %v9076, %v9075
        %v9284 = vpack.c.b16 %v9078, %v9077
        %v9285 = vpack.c.b16 %v9080, %v9079
        %v9286 = vpack.c.b16 %v9082, %v9081
        %v9287 = vpack.c.b16 %v9084, %v9083
        %v9288 = vpack.c.b16 %v9086, %v9085
        %v9289 = vpack.c.b16 %v9088, %v9087
        %v9290 = vpack.c.b16 %v9090, %v9089
        %v9291 = vpack.c.b16 %v9092, %v9091
        %v9292 = vpack.c.b16 %v9094, %v9093
        %v9293 = vpack.c.b16 %v9096, %v9095
        %v9294 = vpack.c.b16 %v9098, %v9097
        %v9295 = vpack.c.b16 %v9100, %v9099
        %v9296 = vpack.c.b16 %v9102, %v9101
        %v9297 = vpack.c.b16 %v9104, %v9103
        %v9298 = vpack.c.b16 %v9106, %v9105
        %v9299 = vpack.c.b16 %v9108, %v9107
        %v9300 = vpack.c.b16 %v9110, %v9109
        %v9301 = vpack.c.b16 %v9112, %v9111
        %v9302 = vpack.c.b16 %v9114, %v9113
        %v9303 = vpack.c.b16 %v9116, %v9115
        %v9304 = vpack.c.b16 %v9118, %v9117
        %v9305 = vpack.c.b16 %v9120, %v9119
        %v9306 = vpack.c.b16 %v9122, %v9121
        %v9307 = vpack.c.b16 %v9124, %v9123
        %v9308 = vpack.c.b16 %v9126, %v9125
        %v9309 = vpack.c.b16 %v9128, %v9127
        %v9310 = vpack.c.b16 %v9130, %v9129
        %v9311 = vpack.c.b16 %v9132, %v9131
        %v9312 = vpack.c.b16 %v9134, %v9133
        %v9313 = vpack.c.b16 %v9136, %v9135
        %v9314 = vpack.c.b16 %v9138, %v9137
        %v9315 = vpack.c.b16 %v9140, %v9139
        %v9316 = vpack.c.b16 %v9142, %v9141
        %v9317 = vpack.c.b16 %v9144, %v9143
        %v9318 = vpack.c.b16 %v9146, %v9145
        %v9319 = vpack.c.b16 %v9148, %v9147
        %v9320 = vpack.c.b16 %v9150, %v9149
        %v9321 = vpack.c.b16 %v9152, %v9151
        %v9322 = vpack.c.b16 %v9154, %v9153
        %v9323 = vpack.c.b16 %v9156, %v9155
        %v9324 = vpack.c.b16 %v9158, %v9157
        %v9325 = vpack.c.b16 %v9160, %v9159
        %v9326 = vpack.c.b16 %v9162, %v9161
        %v9327 = vpack.c.b16 %v9164, %v9163
        %v9328 = vpack.c.b16 %v9166, %v9165
        %v9329 = vpack.c.b16 %v9168, %v9167
        %v9330 = vpack.c.b16 %v9170, %v9169
        %v9331 = vpack.c.b16 %v9172, %v9171
        %v9332 = vpack.c.b16 %v9174, %v9173
        %v9333 = vpack.c.b16 %v9176, %v9175
        %v9334 = vpack.c.b16 %v9178, %v9177
        %v9335 = vpack.c.b16 %v9180, %v9179
        %v9336 = vpack.c.b16 %v9182, %v9181
        %v9337 = vpack.c.b16 %v9184, %v9183
        %v9338 = vpack.c.b16 %v9186, %v9185
        %v9339 = vpack.c.b16 %v9188, %v9187
        %v9340 = vpack.c.b16 %v9190, %v9189
        %v9341 = vpack.c.b16 %v9192, %v9191
        %v9342 = vpack.c.b16 %v9194, %v9193
        %v9343 = vpack.c.b16 %v9196, %v9195
        %v9344 = vpack.c.b16 %v9198, %v9197
        %v9345 = vpack.c.b16 %v9200, %v9199
        %v9346 = vpack.c.b16 %v9202, %v9201
        %v9347 = vpack.c.b16 %v9204, %v9203
        %v9348 = vpack.c.b16 %v9206, %v9205
        %v9349 = vpack.c.b16 %v9208, %v9207
        %v9350 = vpack.c.b16 %v9210, %v9209
        %v9351 = vpack.c.b16 %v9212, %v9211
        %v9352 = vpack.c.b16 %v9214, %v9213
        %v9353 = vpack.c.b16 %v9216, %v9215
        %v9354 = vpack.c.b16 %v9218, %v9217
        %v9355 = vpack.c.b16 %v9220, %v9219
        %v9356 = vpack.c.b16 %v9222, %v9221
        %v9357 = vpack.c.b16 %v9224, %v9223
        %v9358 = vpack.c.b16 %v9226, %v9225
        %v9359 = vpack.c.b16 %v9228, %v9227
        %v9360 = vpack.c.b16 %v9230, %v9229
        %v9361 = vpack.c.b16 %v9232, %v9231
        %v9362 = vpack.c.b16 %v9234, %v9233
        %v9363 = vpack.c.b16 %v9236, %v9235
        %v9364 = vpack.c.b16 %v9238, %v9237
        %v9365 = vpack.c.b16 %v9240, %v9239
        %v9366 = vpack.c.b16 %v9242, %v9241
        %v9367 = vpack.c.b16 %v9244, %v9243
        %v9368 = vpack.c.b16 %v9246, %v9245
        %v9369 = vpack.c.b16 %v9248, %v9247
        %v9370 = vpack.c.b16 %v9250, %v9249
        %v9371 = vpack.c.b16 %v9252, %v9251
        %v9372 = vpack.c.b16 %v9254, %v9253
        %v9373 = vpack.c.b16 %v9256, %v9255
        %v9374 = vpack.c.b16 %v9258, %v9257
        %v9375 = vpack.c.b16 %v9260, %v9259
        %v9376 = vpack.c.b16 %v9262, %v9261
        %v9377 = vpack.c.b16 %v9264, %v9263
        %v9378 = vpack.c.b16 %v9266, %v9265
        %v9379 = vpack.c.b16 %v9268, %v9267
        %v9380 = vpack.c.b16 %v9270, %v9269
        %v9381 = vpack.c.b16 %v9272, %v9271
        %v9382 = vpack.c.b16 %v9274, %v9273
        %v9492 = vsel %vm2540, %v8521, 0
        %v9495 = vsel %vm2540, %v8535, 0
        %v9498 = vsel %vm2540, %v8549, 0
        %v9501 = vsel %vm2540, %v8563, 0
        %v9504 = vsel %vm2540, %v8577, 0
        %v9507 = vsel %vm2540, %v8591, 0
        %v9510 = vsel %vm2540, %v8605, 0
        %v9513 = vsel %vm2540, %v8619, 0
        %9515 = vmatprep.subr.bf16.mxu0 0
        %9516 = vmatpush1.bf16.msra.mxu0 %v9275
        %9517 = vmatprep.subr.bf16.mxu0 0
        %9518 = vmatpush1.bf16.msra.mxu0 %v9276
        %9519 = vmatprep.subr.bf16.mxu0 0
        %9520 = vmatpush1.bf16.msra.mxu0 %v9277
        %9521 = vmatprep.subr.bf16.mxu0 0
        %9522 = vmatpush1.bf16.msra.mxu0 %v9278
        %9523 = vmatprep.subr.bf16.mxu0 0
        %9524 = vmatpush1.bf16.msra.mxu0 %v9279
        %9525 = vmatprep.subr.bf16.mxu0 0
        %9526 = vmatpush1.bf16.msra.mxu0 %v9280
        %9527 = vmatprep.subr.bf16.mxu0 0
        %9528 = vmatpush1.bf16.msra.mxu0 %v9281
        %9529 = vmatprep.subr.bf16.mxu0 0
        %9530 = vmatpush1.bf16.msra.mxu0 %v9282
        %9531 = vmatprep.subr.bf16.mxu0 0
        %9532 = vmatpush1.bf16.msra.mxu0 %v9283
        %9533 = vmatprep.subr.bf16.mxu0 0
        %9534 = vmatpush1.bf16.msra.mxu0 %v9284
        %9535 = vmatprep.subr.bf16.mxu0 0
        %9536 = vmatpush1.bf16.msra.mxu0 %v9285
        %9537 = vmatprep.subr.bf16.mxu0 0
        %9538 = vmatpush1.bf16.msra.mxu0 %v9286
        %9539 = vmatprep.subr.bf16.mxu0 0
        %9540 = vmatpush1.bf16.msra.mxu0 %v9287
        %9541 = vmatprep.subr.bf16.mxu0 0
        %9542 = vmatpush1.bf16.msra.mxu0 %v9288
        %9543 = vmatprep.subr.bf16.mxu0 0
        %9544 = vmatpush1.bf16.msra.mxu0 %v9289
        %9545 = vmatprep.subr.bf16.mxu0 0
        %9546 = vmatpush1.bf16.msra.mxu0 %v9290
        %9547 = vmatprep.mubr.bf16.mxu0 %v8509
        %9548 = vmatmul.mubr.bf16.gmra.mrb[0].mxu0 %v8508
        %v9549 = vpop.f32.mrb[0].mxu0
        %v9550 = vadd.f32 %v8841, %v9549
        %v9551 = vpop.f32.mrb[0].mxu0
        %v9552 = vpop.f32.mrb[0].mxu0
        %v9553 = vadd.f32 %v8841, %v9552
        %v9554 = vpop.f32.mrb[0].mxu0
        %9555 = vmatprep.mubr.bf16.mxu0 %v8523
        %9556 = vmatmul.mubr.bf16.gmra.mrb[0].mxu0 %v8522
        %v9557 = vpop.f32.mrb[0].mxu0
        %v9558 = vadd.f32 %v8841, %v9557
        %v9559 = vpop.f32.mrb[0].mxu0
        %v9560 = vpop.f32.mrb[0].mxu0
        %v9561 = vadd.f32 %v8841, %v9560
        %v9562 = vpop.f32.mrb[0].mxu0
        %9563 = vmatprep.mubr.bf16.mxu0 %v8537
        %9564 = vmatmul.mubr.bf16.gmra.mrb[0].mxu0 %v8536
        %v9565 = vpop.f32.mrb[0].mxu0
        %v9566 = vadd.f32 %v8841, %v9565
        %v9567 = vpop.f32.mrb[0].mxu0
        %v9568 = vpop.f32.mrb[0].mxu0
        %v9569 = vadd.f32 %v8841, %v9568
        %v9570 = vpop.f32.mrb[0].mxu0
        %9571 = vmatprep.mubr.bf16.mxu0 %v8551
        %9572 = vmatmul.mubr.bf16.gmra.mrb[0].mxu0 %v8550
        %v9573 = vpop.f32.mrb[0].mxu0
        %v9574 = vadd.f32 %v8841, %v9573
        %v9575 = vpop.f32.mrb[0].mxu0
        %v9576 = vpop.f32.mrb[0].mxu0
        %v9577 = vadd.f32 %v8841, %v9576
        %v9578 = vpop.f32.mrb[0].mxu0
        %9579 = vmatprep.mubr.bf16.mxu0 %v8565
        %9580 = vmatmul.mubr.bf16.gmra.mrb[0].mxu0 %v8564
        %v9581 = vpop.f32.mrb[0].mxu0
        %v9582 = vadd.f32 %v8841, %v9581
        %v9583 = vpop.f32.mrb[0].mxu0
        %v9584 = vpop.f32.mrb[0].mxu0
        %v9585 = vadd.f32 %v8841, %v9584
        %v9586 = vpop.f32.mrb[0].mxu0
        %9587 = vmatprep.mubr.bf16.mxu0 %v8579
        %9588 = vmatmul.mubr.bf16.gmra.mrb[0].mxu0 %v8578
        %v9589 = vpop.f32.mrb[0].mxu0
        %v9590 = vadd.f32 %v8841, %v9589
        %v9591 = vpop.f32.mrb[0].mxu0
        %v9592 = vpop.f32.mrb[0].mxu0
        %v9593 = vadd.f32 %v8841, %v9592
        %v9594 = vpop.f32.mrb[0].mxu0
        %9595 = vmatprep.mubr.bf16.mxu0 %v8593
        %9596 = vmatmul.mubr.bf16.gmra.mrb[0].mxu0 %v8592
        %v9597 = vpop.f32.mrb[0].mxu0
        %v9598 = vadd.f32 %v8841, %v9597
        %v9599 = vpop.f32.mrb[0].mxu0
        %v9600 = vpop.f32.mrb[0].mxu0
        %v9601 = vadd.f32 %v8841, %v9600
        %v9602 = vpop.f32.mrb[0].mxu0
        %9603 = vmatprep.mubr.bf16.mxu0 %v8607
        %9604 = vmatmul.mubr.bf16.gmra.mrb[0].mxu0 %v8606
        %v9605 = vpop.f32.mrb[0].mxu0
        %v9606 = vadd.f32 %v8841, %v9605
        %v9607 = vpop.f32.mrb[0].mxu0
        %v9608 = vpop.f32.mrb[0].mxu0
        %v9609 = vadd.f32 %v8841, %v9608
        %v9610 = vpop.f32.mrb[0].mxu0
        %9611 = vdwg.mxu0
        %9612 = vmatprep.subr.bf16.mxu0 0
        %9613 = vmatpush1.bf16.msra.mxu0 %v9291
        %9614 = vmatprep.subr.bf16.mxu0 0
        %9615 = vmatpush1.bf16.msra.mxu0 %v9292
        %9616 = vmatprep.subr.bf16.mxu0 0
        %9617 = vmatpush1.bf16.msra.mxu0 %v9293
        %9618 = vmatprep.subr.bf16.mxu0 0
        %9619 = vmatpush1.bf16.msra.mxu0 %v9294
        %9620 = vmatprep.subr.bf16.mxu0 0
        %9621 = vmatpush1.bf16.msra.mxu0 %v9295
        %9622 = vmatprep.subr.bf16.mxu0 0
        %9623 = vmatpush1.bf16.msra.mxu0 %v9296
        %9624 = vmatprep.subr.bf16.mxu0 0
        %9625 = vmatpush1.bf16.msra.mxu0 %v9297
        %9626 = vmatprep.subr.bf16.mxu0 0
        %9627 = vmatpush1.bf16.msra.mxu0 %v9298
        %9628 = vmatprep.subr.bf16.mxu0 0
        %9629 = vmatpush1.bf16.msra.mxu0 %v9299
        %9630 = vmatprep.subr.bf16.mxu0 0
        %9631 = vmatpush1.bf16.msra.mxu0 %v9300
        %9632 = vmatprep.subr.bf16.mxu0 0
        %9633 = vmatpush1.bf16.msra.mxu0 %v9301
        %9634 = vmatprep.subr.bf16.mxu0 0
        %9635 = vmatpush1.bf16.msra.mxu0 %v9302
        %9636 = vmatprep.subr.bf16.mxu0 0
        %9637 = vmatpush1.bf16.msra.mxu0 %v9303
        %9638 = vmatprep.subr.bf16.mxu0 0
        %9639 = vmatpush1.bf16.msra.mxu0 %v9304
        %9640 = vmatprep.subr.bf16.mxu0 0
        %9641 = vmatpush1.bf16.msra.mxu0 %v9305
        %9642 = vmatprep.subr.bf16.mxu0 0
        %9643 = vmatpush1.bf16.msra.mxu0 %v9306
        %9644 = vmatprep.mubr.bf16.mxu0 %v8511
        %9645 = vmatmul.mubr.bf16.gmra.mrb[0].mxu0 %v8510
        %v9646 = vpop.f32.mrb[0].mxu0
        %v9647 = vadd.f32 %v9550, %v9646
        %v9648 = vpop.f32.mrb[0].mxu0
        %v9649 = vpop.f32.mrb[0].mxu0
        %v9650 = vadd.f32 %v9553, %v9649
        %v9651 = vpop.f32.mrb[0].mxu0
        %9652 = vmatprep.mubr.bf16.mxu0 %v8525
        %9653 = vmatmul.mubr.bf16.gmra.mrb[0].mxu0 %v8524
        %v9654 = vpop.f32.mrb[0].mxu0
        %v9655 = vadd.f32 %v9558, %v9654
        %v9656 = vpop.f32.mrb[0].mxu0
        %v9657 = vpop.f32.mrb[0].mxu0
        %v9658 = vadd.f32 %v9561, %v9657
        %v9659 = vpop.f32.mrb[0].mxu0
        %9660 = vmatprep.mubr.bf16.mxu0 %v8539
        %9661 = vmatmul.mubr.bf16.gmra.mrb[0].mxu0 %v8538
        %v9662 = vpop.f32.mrb[0].mxu0
        %v9663 = vadd.f32 %v9566, %v9662
        %v9664 = vpop.f32.mrb[0].mxu0
        %v9665 = vpop.f32.mrb[0].mxu0
        %v9666 = vadd.f32 %v9569, %v9665
        %v9667 = vpop.f32.mrb[0].mxu0
        %9668 = vmatprep.mubr.bf16.mxu0 %v8553
        %9669 = vmatmul.mubr.bf16.gmra.mrb[0].mxu0 %v8552
        %v9670 = vpop.f32.mrb[0].mxu0
        %v9671 = vadd.f32 %v9574, %v9670
        %v9672 = vpop.f32.mrb[0].mxu0
        %v9673 = vpop.f32.mrb[0].mxu0
        %v9674 = vadd.f32 %v9577, %v9673
        %v9675 = vpop.f32.mrb[0].mxu0
        %9676 = vmatprep.mubr.bf16.mxu0 %v8567
        %9677 = vmatmul.mubr.bf16.gmra.mrb[0].mxu0 %v8566
        %v9678 = vpop.f32.mrb[0].mxu0
        %v9679 = vadd.f32 %v9582, %v9678
        %v9680 = vpop.f32.mrb[0].mxu0
        %v9681 = vpop.f32.mrb[0].mxu0
        %v9682 = vadd.f32 %v9585, %v9681
        %v9683 = vpop.f32.mrb[0].mxu0
        %9684 = vmatprep.mubr.bf16.mxu0 %v8581
        %9685 = vmatmul.mubr.bf16.gmra.mrb[0].mxu0 %v8580
        %v9686 = vpop.f32.mrb[0].mxu0
        %v9687 = vadd.f32 %v9590, %v9686
        %v9688 = vpop.f32.mrb[0].mxu0
        %v9689 = vpop.f32.mrb[0].mxu0
        %v9690 = vadd.f32 %v9593, %v9689
        %v9691 = vpop.f32.mrb[0].mxu0
        %9692 = vmatprep.mubr.bf16.mxu0 %v8595
        %9693 = vmatmul.mubr.bf16.gmra.mrb[0].mxu0 %v8594
        %v9694 = vpop.f32.mrb[0].mxu0
        %v9695 = vadd.f32 %v9598, %v9694
        %v9696 = vpop.f32.mrb[0].mxu0
        %v9697 = vpop.f32.mrb[0].mxu0
        %v9698 = vadd.f32 %v9601, %v9697
        %v9699 = vpop.f32.mrb[0].mxu0
        %9700 = vmatprep.mubr.bf16.mxu0 %v8609
        %9701 = vmatmul.mubr.bf16.gmra.mrb[0].mxu0 %v8608
        %v9702 = vpop.f32.mrb[0].mxu0
        %v9703 = vadd.f32 %v9606, %v9702
        %v9704 = vpop.f32.mrb[0].mxu0
        %v9705 = vpop.f32.mrb[0].mxu0
        %v9706 = vadd.f32 %v9609, %v9705
        %v9707 = vpop.f32.mrb[0].mxu0
        %9708 = vdwg.mxu0
        %9709 = vmatprep.subr.bf16.mxu0 0
        %9710 = vmatpush1.bf16.msra.mxu0 %v9307
        %9711 = vmatprep.subr.bf16.mxu0 0
        %9712 = vmatpush1.bf16.msra.mxu0 %v9308
        %9713 = vmatprep.subr.bf16.mxu0 0
        %9714 = vmatpush1.bf16.msra.mxu0 %v9309
        %9715 = vmatprep.subr.bf16.mxu0 0
        %9716 = vmatpush1.bf16.msra.mxu0 %v9310
        %9717 = vmatprep.subr.bf16.mxu0 0
        %9718 = vmatpush1.bf16.msra.mxu0 %v9311
        %9719 = vmatprep.subr.bf16.mxu0 0
        %9720 = vmatpush1.bf16.msra.mxu0 %v9312
        %9721 = vmatprep.subr.bf16.mxu0 0
        %9722 = vmatpush1.bf16.msra.mxu0 %v9313
        %9723 = vmatprep.subr.bf16.mxu0 0
        %9724 = vmatpush1.bf16.msra.mxu0 %v9314
        %9725 = vmatprep.subr.bf16.mxu0 0
        %9726 = vmatpush1.bf16.msra.mxu0 %v9315
        %9727 = vmatprep.subr.bf16.mxu0 0
        %9728 = vmatpush1.bf16.msra.mxu0 %v9316
        %9729 = vmatprep.subr.bf16.mxu0 0
        %9730 = vmatpush1.bf16.msra.mxu0 %v9317
        %9731 = vmatprep.subr.bf16.mxu0 0
        %9732 = vmatpush1.bf16.msra.mxu0 %v9318
        %9733 = vmatprep.subr.bf16.mxu0 0
        %9734 = vmatpush1.bf16.msra.mxu0 %v9319
        %9735 = vmatprep.subr.bf16.mxu0 0
        %9736 = vmatpush1.bf16.msra.mxu0 %v9320
        %9737 = vmatprep.subr.bf16.mxu0 0
        %9738 = vmatpush1.bf16.msra.mxu0 %v9321
        %9739 = vmatprep.subr.bf16.mxu0 0
        %9740 = vmatpush1.bf16.msra.mxu0 %v9322
        %9741 = vmatprep.mubr.bf16.mxu0 %v8513
        %9742 = vmatmul.mubr.bf16.gmra.mrb[0].mxu0 %v8512
        %v9743 = vpop.f32.mrb[0].mxu0
        %v9744 = vadd.f32 %v9647, %v9743
        %v9745 = vpop.f32.mrb[0].mxu0
        %v9746 = vpop.f32.mrb[0].mxu0
        %v9747 = vadd.f32 %v9650, %v9746
        %v9748 = vpop.f32.mrb[0].mxu0
        %9749 = vmatprep.mubr.bf16.mxu0 %v8527
        %9750 = vmatmul.mubr.bf16.gmra.mrb[0].mxu0 %v8526
        %v9751 = vpop.f32.mrb[0].mxu0
        %v9752 = vadd.f32 %v9655, %v9751
        %v9753 = vpop.f32.mrb[0].mxu0
        %v9754 = vpop.f32.mrb[0].mxu0
        %v9755 = vadd.f32 %v9658, %v9754
        %v9756 = vpop.f32.mrb[0].mxu0
        %9757 = vmatprep.mubr.bf16.mxu0 %v8541
        %9758 = vmatmul.mubr.bf16.gmra.mrb[0].mxu0 %v8540
        %v9759 = vpop.f32.mrb[0].mxu0
        %v9760 = vadd.f32 %v9663, %v9759
        %v9761 = vpop.f32.mrb[0].mxu0
        %v9762 = vpop.f32.mrb[0].mxu0
        %v9763 = vadd.f32 %v9666, %v9762
        %v9764 = vpop.f32.mrb[0].mxu0
        %9765 = vmatprep.mubr.bf16.mxu0 %v8555
        %9766 = vmatmul.mubr.bf16.gmra.mrb[0].mxu0 %v8554
        %v9767 = vpop.f32.mrb[0].mxu0
        %v9768 = vadd.f32 %v9671, %v9767
        %v9769 = vpop.f32.mrb[0].mxu0
        %v9770 = vpop.f32.mrb[0].mxu0
        %v9771 = vadd.f32 %v9674, %v9770
        %v9772 = vpop.f32.mrb[0].mxu0
        %9773 = vmatprep.mubr.bf16.mxu0 %v8569
        %9774 = vmatmul.mubr.bf16.gmra.mrb[0].mxu0 %v8568
        %v9775 = vpop.f32.mrb[0].mxu0
        %v9776 = vadd.f32 %v9679, %v9775
        %v9777 = vpop.f32.mrb[0].mxu0
        %v9778 = vpop.f32.mrb[0].mxu0
        %v9779 = vadd.f32 %v9682, %v9778
        %v9780 = vpop.f32.mrb[0].mxu0
        %9781 = vmatprep.mubr.bf16.mxu0 %v8583
        %9782 = vmatmul.mubr.bf16.gmra.mrb[0].mxu0 %v8582
        %v9783 = vpop.f32.mrb[0].mxu0
        %v9784 = vadd.f32 %v9687, %v9783
        %v9785 = vpop.f32.mrb[0].mxu0
        %v9786 = vpop.f32.mrb[0].mxu0
        %v9787 = vadd.f32 %v9690, %v9786
        %v9788 = vpop.f32.mrb[0].mxu0
        %9789 = vmatprep.mubr.bf16.mxu0 %v8597
        %9790 = vmatmul.mubr.bf16.gmra.mrb[0].mxu0 %v8596
        %v9791 = vpop.f32.mrb[0].mxu0
        %v9792 = vadd.f32 %v9695, %v9791
        %v9793 = vpop.f32.mrb[0].mxu0
        %v9794 = vpop.f32.mrb[0].mxu0
        %v9795 = vadd.f32 %v9698, %v9794
        %v9796 = vpop.f32.mrb[0].mxu0
        %9797 = vmatprep.mubr.bf16.mxu0 %v8611
        %9798 = vmatmul.mubr.bf16.gmra.mrb[0].mxu0 %v8610
        %v9799 = vpop.f32.mrb[0].mxu0
        %v9800 = vadd.f32 %v9703, %v9799
        %v9801 = vpop.f32.mrb[0].mxu0
        %v9802 = vpop.f32.mrb[0].mxu0
        %v9803 = vadd.f32 %v9706, %v9802
        %v9804 = vpop.f32.mrb[0].mxu0
        %9805 = vdwg.mxu0
        %9806 = vmatprep.subr.bf16.mxu0 0
        %9807 = vmatpush1.bf16.msra.mxu0 %v9323
        %9808 = vmatprep.subr.bf16.mxu0 0
        %9809 = vmatpush1.bf16.msra.mxu0 %v9324
        %9810 = vmatprep.subr.bf16.mxu0 0
        %9811 = vmatpush1.bf16.msra.mxu0 %v9325
        %9812 = vmatprep.subr.bf16.mxu0 0
        %9813 = vmatpush1.bf16.msra.mxu0 %v9326
        %9814 = vmatprep.subr.bf16.mxu0 0
        %9815 = vmatpush1.bf16.msra.mxu0 %v9327
        %9816 = vmatprep.subr.bf16.mxu0 0
        %9817 = vmatpush1.bf16.msra.mxu0 %v9328
        %9818 = vmatprep.subr.bf16.mxu0 0
        %9819 = vmatpush1.bf16.msra.mxu0 %v9329
        %9820 = vmatprep.subr.bf16.mxu0 0
        %9821 = vmatpush1.bf16.msra.mxu0 %v9330
        %9822 = vmatprep.subr.bf16.mxu0 0
        %9823 = vmatpush1.bf16.msra.mxu0 %v9331
        %9824 = vmatprep.subr.bf16.mxu0 0
        %9825 = vmatpush1.bf16.msra.mxu0 %v9332
        %9826 = vmatprep.subr.bf16.mxu0 0
        %9827 = vmatpush1.bf16.msra.mxu0 %v9333
        %9828 = vmatprep.subr.bf16.mxu0 0
        %9829 = vmatpush1.bf16.msra.mxu0 %v9334
        %9830 = vmatprep.subr.bf16.mxu0 0
        %9831 = vmatpush1.bf16.msra.mxu0 %v9335
        %9832 = vmatprep.subr.bf16.mxu0 0
        %9833 = vmatpush1.bf16.msra.mxu0 %v9336
        %9834 = vmatprep.subr.bf16.mxu0 0
        %9835 = vmatpush1.bf16.msra.mxu0 %v9337
        %9836 = vmatprep.subr.bf16.mxu0 0
        %9837 = vmatpush1.bf16.msra.mxu0 %v9338
        %9838 = vmatprep.mubr.bf16.mxu0 %v8515
        %9839 = vmatmul.mubr.bf16.gmra.mrb[0].mxu0 %v8514
        %v9840 = vpop.f32.mrb[0].mxu0
        %v9841 = vadd.f32 %v9744, %v9840
        %v9842 = vpop.f32.mrb[0].mxu0
        %v9843 = vpop.f32.mrb[0].mxu0
        %v9844 = vadd.f32 %v9747, %v9843
        %v9845 = vpop.f32.mrb[0].mxu0
        %9846 = vmatprep.mubr.bf16.mxu0 %v8529
        %9847 = vmatmul.mubr.bf16.gmra.mrb[0].mxu0 %v8528
        %v9848 = vpop.f32.mrb[0].mxu0
        %v9849 = vadd.f32 %v9752, %v9848
        %v9850 = vpop.f32.mrb[0].mxu0
        %v9851 = vpop.f32.mrb[0].mxu0
        %v9852 = vadd.f32 %v9755, %v9851
        %v9853 = vpop.f32.mrb[0].mxu0
        %9854 = vmatprep.mubr.bf16.mxu0 %v8543
        %9855 = vmatmul.mubr.bf16.gmra.mrb[0].mxu0 %v8542
        %v9856 = vpop.f32.mrb[0].mxu0
        %v9857 = vadd.f32 %v9760, %v9856
        %v9858 = vpop.f32.mrb[0].mxu0
        %v9859 = vpop.f32.mrb[0].mxu0
        %v9860 = vadd.f32 %v9763, %v9859
        %v9861 = vpop.f32.mrb[0].mxu0
        %9862 = vmatprep.mubr.bf16.mxu0 %v8557
        %9863 = vmatmul.mubr.bf16.gmra.mrb[0].mxu0 %v8556
        %v9864 = vpop.f32.mrb[0].mxu0
        %v9865 = vadd.f32 %v9768, %v9864
        %v9866 = vpop.f32.mrb[0].mxu0
        %v9867 = vpop.f32.mrb[0].mxu0
        %v9868 = vadd.f32 %v9771, %v9867
        %v9869 = vpop.f32.mrb[0].mxu0
        %9870 = vmatprep.mubr.bf16.mxu0 %v8571
        %9871 = vmatmul.mubr.bf16.gmra.mrb[0].mxu0 %v8570
        %v9872 = vpop.f32.mrb[0].mxu0
        %v9873 = vadd.f32 %v9776, %v9872
        %v9874 = vpop.f32.mrb[0].mxu0
        %v9875 = vpop.f32.mrb[0].mxu0
        %v9876 = vadd.f32 %v9779, %v9875
        %v9877 = vpop.f32.mrb[0].mxu0
        %9878 = vmatprep.mubr.bf16.mxu0 %v8585
        %9879 = vmatmul.mubr.bf16.gmra.mrb[0].mxu0 %v8584
        %v9880 = vpop.f32.mrb[0].mxu0
        %v9881 = vadd.f32 %v9784, %v9880
        %v9882 = vpop.f32.mrb[0].mxu0
        %v9883 = vpop.f32.mrb[0].mxu0
        %v9884 = vadd.f32 %v9787, %v9883
        %v9885 = vpop.f32.mrb[0].mxu0
        %9886 = vmatprep.mubr.bf16.mxu0 %v8599
        %9887 = vmatmul.mubr.bf16.gmra.mrb[0].mxu0 %v8598
        %v9888 = vpop.f32.mrb[0].mxu0
        %v9889 = vadd.f32 %v9792, %v9888
        %v9890 = vpop.f32.mrb[0].mxu0
        %v9891 = vpop.f32.mrb[0].mxu0
        %v9892 = vadd.f32 %v9795, %v9891
        %v9893 = vpop.f32.mrb[0].mxu0
        %9894 = vmatprep.mubr.bf16.mxu0 %v8613
        %9895 = vmatmul.mubr.bf16.gmra.mrb[0].mxu0 %v8612
        %v9896 = vpop.f32.mrb[0].mxu0
        %v9897 = vadd.f32 %v9800, %v9896
        %v9898 = vpop.f32.mrb[0].mxu0
        %v9899 = vpop.f32.mrb[0].mxu0
        %v9900 = vadd.f32 %v9803, %v9899
        %v9901 = vpop.f32.mrb[0].mxu0
        %9902 = vdwg.mxu0
        %9903 = vmatprep.subr.bf16.mxu0 0
        %9904 = vmatpush1.bf16.msra.mxu0 %v9339
        %9905 = vmatprep.subr.bf16.mxu0 0
        %9906 = vmatpush1.bf16.msra.mxu0 %v9340
        %9907 = vmatprep.subr.bf16.mxu0 0
        %9908 = vmatpush1.bf16.msra.mxu0 %v9341
        %9909 = vmatprep.subr.bf16.mxu0 0
        %9910 = vmatpush1.bf16.msra.mxu0 %v9342
        %9911 = vmatprep.subr.bf16.mxu0 0
        %9912 = vmatpush1.bf16.msra.mxu0 %v9343
        %9913 = vmatprep.subr.bf16.mxu0 0
        %9914 = vmatpush1.bf16.msra.mxu0 %v9344
        %9915 = vmatprep.subr.bf16.mxu0 0
        %9916 = vmatpush1.bf16.msra.mxu0 %v9345
        %9917 = vmatprep.subr.bf16.mxu0 0
        %9918 = vmatpush1.bf16.msra.mxu0 %v9346
        %9919 = vmatprep.subr.bf16.mxu0 0
        %9920 = vmatpush1.bf16.msra.mxu0 %v9347
        %9921 = vmatprep.subr.bf16.mxu0 0
        %9922 = vmatpush1.bf16.msra.mxu0 %v9348
        %9923 = vmatprep.subr.bf16.mxu0 0
        %9924 = vmatpush1.bf16.msra.mxu0 %v9349
        %9925 = vmatprep.subr.bf16.mxu0 0
        %9926 = vmatpush1.bf16.msra.mxu0 %v9350
        %9927 = vmatprep.subr.bf16.mxu0 0
        %9928 = vmatpush1.bf16.msra.mxu0 %v9351
        %9929 = vmatprep.subr.bf16.mxu0 0
        %9930 = vmatpush1.bf16.msra.mxu0 %v9352
        %9931 = vmatprep.subr.bf16.mxu0 0
        %9932 = vmatpush1.bf16.msra.mxu0 %v9353
        %9933 = vmatprep.subr.bf16.mxu0 0
        %9934 = vmatpush1.bf16.msra.mxu0 %v9354
        %9935 = vmatprep.mubr.bf16.mxu0 %v8517
        %9936 = vmatmul.mubr.bf16.gmra.mrb[0].mxu0 %v8516
        %v9937 = vpop.f32.mrb[0].mxu0
        %v9938 = vadd.f32 %v9841, %v9937
        %v9939 = vpop.f32.mrb[0].mxu0
        %v9940 = vpop.f32.mrb[0].mxu0
        %v9941 = vadd.f32 %v9844, %v9940
        %v9942 = vpop.f32.mrb[0].mxu0
        %9943 = vmatprep.mubr.bf16.mxu0 %v8531
        %9944 = vmatmul.mubr.bf16.gmra.mrb[0].mxu0 %v8530
        %v9945 = vpop.f32.mrb[0].mxu0
        %v9946 = vadd.f32 %v9849, %v9945
        %v9947 = vpop.f32.mrb[0].mxu0
        %v9948 = vpop.f32.mrb[0].mxu0
        %v9949 = vadd.f32 %v9852, %v9948
        %v9950 = vpop.f32.mrb[0].mxu0
        %9951 = vmatprep.mubr.bf16.mxu0 %v8545
        %9952 = vmatmul.mubr.bf16.gmra.mrb[0].mxu0 %v8544
        %v9953 = vpop.f32.mrb[0].mxu0
        %v9954 = vadd.f32 %v9857, %v9953
        %v9955 = vpop.f32.mrb[0].mxu0
        %v9956 = vpop.f32.mrb[0].mxu0
        %v9957 = vadd.f32 %v9860, %v9956
        %v9958 = vpop.f32.mrb[0].mxu0
        %9959 = vmatprep.mubr.bf16.mxu0 %v8559
        %9960 = vmatmul.mubr.bf16.gmra.mrb[0].mxu0 %v8558
        %v9961 = vpop.f32.mrb[0].mxu0
        %v9962 = vadd.f32 %v9865, %v9961
        %v9963 = vpop.f32.mrb[0].mxu0
        %v9964 = vpop.f32.mrb[0].mxu0
        %v9965 = vadd.f32 %v9868, %v9964
        %v9966 = vpop.f32.mrb[0].mxu0
        %9967 = vmatprep.mubr.bf16.mxu0 %v8573
        %9968 = vmatmul.mubr.bf16.gmra.mrb[0].mxu0 %v8572
        %v9969 = vpop.f32.mrb[0].mxu0
        %v9970 = vadd.f32 %v9873, %v9969
        %v9971 = vpop.f32.mrb[0].mxu0
        %v9972 = vpop.f32.mrb[0].mxu0
        %v9973 = vadd.f32 %v9876, %v9972
        %v9974 = vpop.f32.mrb[0].mxu0
        %9975 = vmatprep.mubr.bf16.mxu0 %v8587
        %9976 = vmatmul.mubr.bf16.gmra.mrb[0].mxu0 %v8586
        %v9977 = vpop.f32.mrb[0].mxu0
        %v9978 = vadd.f32 %v9881, %v9977
        %v9979 = vpop.f32.mrb[0].mxu0
        %v9980 = vpop.f32.mrb[0].mxu0
        %v9981 = vadd.f32 %v9884, %v9980
        %v9982 = vpop.f32.mrb[0].mxu0
        %9983 = vmatprep.mubr.bf16.mxu0 %v8601
        %9984 = vmatmul.mubr.bf16.gmra.mrb[0].mxu0 %v8600
        %v9985 = vpop.f32.mrb[0].mxu0
        %v9986 = vadd.f32 %v9889, %v9985
        %v9987 = vpop.f32.mrb[0].mxu0
        %v9988 = vpop.f32.mrb[0].mxu0
        %v9989 = vadd.f32 %v9892, %v9988
        %v9990 = vpop.f32.mrb[0].mxu0
        %9991 = vmatprep.mubr.bf16.mxu0 %v8615
        %9992 = vmatmul.mubr.bf16.gmra.mrb[0].mxu0 %v8614
        %v9993 = vpop.f32.mrb[0].mxu0
        %v9994 = vadd.f32 %v9897, %v9993
        %v9995 = vpop.f32.mrb[0].mxu0
        %v9996 = vpop.f32.mrb[0].mxu0
        %v9997 = vadd.f32 %v9900, %v9996
        %v9998 = vpop.f32.mrb[0].mxu0
        %9999 = vdwg.mxu0
        %10000 = vmatprep.subr.bf16.mxu0 0
        %10001 = vmatpush1.bf16.msra.mxu0 %v9355
        %10002 = vmatprep.subr.bf16.mxu0 0
        %10003 = vmatpush1.bf16.msra.mxu0 %v9356
        %10004 = vmatprep.subr.bf16.mxu0 0
        %10005 = vmatpush1.bf16.msra.mxu0 %v9357
        %10006 = vmatprep.subr.bf16.mxu0 0
        %10007 = vmatpush1.bf16.msra.mxu0 %v9358
        %10008 = vmatprep.subr.bf16.mxu0 0
        %10009 = vmatpush1.bf16.msra.mxu0 %v9359
        %10010 = vmatprep.subr.bf16.mxu0 0
        %10011 = vmatpush1.bf16.msra.mxu0 %v9360
        %10012 = vmatprep.subr.bf16.mxu0 0
        %10013 = vmatpush1.bf16.msra.mxu0 %v9361
        %10014 = vmatprep.subr.bf16.mxu0 0
        %10015 = vmatpush1.bf16.msra.mxu0 %v9362
        %10016 = vmatprep.subr.bf16.mxu0 0
        %10017 = vmatpush1.bf16.msra.mxu0 %v9363
        %10018 = vmatprep.subr.bf16.mxu0 0
        %10019 = vmatpush1.bf16.msra.mxu0 %v9364
        %10020 = vmatprep.subr.bf16.mxu0 0
        %10021 = vmatpush1.bf16.msra.mxu0 %v9365
        %10022 = vmatprep.subr.bf16.mxu0 0
        %10023 = vmatpush1.bf16.msra.mxu0 %v9366
        %10024 = vmatprep.subr.bf16.mxu0 0
        %10025 = vmatpush1.bf16.msra.mxu0 %v9367
        %10026 = vmatprep.subr.bf16.mxu0 0
        %10027 = vmatpush1.bf16.msra.mxu0 %v9368
        %10028 = vmatprep.subr.bf16.mxu0 0
        %10029 = vmatpush1.bf16.msra.mxu0 %v9369
        %10030 = vmatprep.subr.bf16.mxu0 0
        %10031 = vmatpush1.bf16.msra.mxu0 %v9370
        %10032 = vmatprep.mubr.bf16.mxu0 %v8519
        %10033 = vmatmul.mubr.bf16.gmra.mrb[0].mxu0 %v8518
        %v10034 = vpop.f32.mrb[0].mxu0
        %v10035 = vadd.f32 %v9938, %v10034
        %v10036 = vpop.f32.mrb[0].mxu0
        %v10037 = vpop.f32.mrb[0].mxu0
        %v10038 = vadd.f32 %v9941, %v10037
        %v10039 = vpop.f32.mrb[0].mxu0
        %10040 = vmatprep.mubr.bf16.mxu0 %v8533
        %10041 = vmatmul.mubr.bf16.gmra.mrb[0].mxu0 %v8532
        %v10042 = vpop.f32.mrb[0].mxu0
        %v10043 = vadd.f32 %v9946, %v10042
        %v10044 = vpop.f32.mrb[0].mxu0
        %v10045 = vpop.f32.mrb[0].mxu0
        %v10046 = vadd.f32 %v9949, %v10045
        %v10047 = vpop.f32.mrb[0].mxu0
        %10048 = vmatprep.mubr.bf16.mxu0 %v8547
        %10049 = vmatmul.mubr.bf16.gmra.mrb[0].mxu0 %v8546
        %v10050 = vpop.f32.mrb[0].mxu0
        %v10051 = vadd.f32 %v9954, %v10050
        %v10052 = vpop.f32.mrb[0].mxu0
        %v10053 = vpop.f32.mrb[0].mxu0
        %v10054 = vadd.f32 %v9957, %v10053
        %v10055 = vpop.f32.mrb[0].mxu0
        %10056 = vmatprep.mubr.bf16.mxu0 %v8561
        %10057 = vmatmul.mubr.bf16.gmra.mrb[0].mxu0 %v8560
        %v10058 = vpop.f32.mrb[0].mxu0
        %v10059 = vadd.f32 %v9962, %v10058
        %v10060 = vpop.f32.mrb[0].mxu0
        %v10061 = vpop.f32.mrb[0].mxu0
        %v10062 = vadd.f32 %v9965, %v10061
        %v10063 = vpop.f32.mrb[0].mxu0
        %10064 = vmatprep.mubr.bf16.mxu0 %v8575
        %10065 = vmatmul.mubr.bf16.gmra.mrb[0].mxu0 %v8574
        %v10066 = vpop.f32.mrb[0].mxu0
        %v10067 = vadd.f32 %v9970, %v10066
        %v10068 = vpop.f32.mrb[0].mxu0
        %v10069 = vpop.f32.mrb[0].mxu0
        %v10070 = vadd.f32 %v9973, %v10069
        %v10071 = vpop.f32.mrb[0].mxu0
        %10072 = vmatprep.mubr.bf16.mxu0 %v8589
        %10073 = vmatmul.mubr.bf16.gmra.mrb[0].mxu0 %v8588
        %v10074 = vpop.f32.mrb[0].mxu0
        %v10075 = vadd.f32 %v9978, %v10074
        %v10076 = vpop.f32.mrb[0].mxu0
        %v10077 = vpop.f32.mrb[0].mxu0
        %v10078 = vadd.f32 %v9981, %v10077
        %v10079 = vpop.f32.mrb[0].mxu0
        %10080 = vmatprep.mubr.bf16.mxu0 %v8603
        %10081 = vmatmul.mubr.bf16.gmra.mrb[0].mxu0 %v8602
        %v10082 = vpop.f32.mrb[0].mxu0
        %v10083 = vadd.f32 %v9986, %v10082
        %v10084 = vpop.f32.mrb[0].mxu0
        %v10085 = vpop.f32.mrb[0].mxu0
        %v10086 = vadd.f32 %v9989, %v10085
        %v10087 = vpop.f32.mrb[0].mxu0
        %10088 = vmatprep.mubr.bf16.mxu0 %v8617
        %10089 = vmatmul.mubr.bf16.gmra.mrb[0].mxu0 %v8616
        %v10090 = vpop.f32.mrb[0].mxu0
        %v10091 = vadd.f32 %v9994, %v10090
        %v10092 = vpop.f32.mrb[0].mxu0
        %v10093 = vpop.f32.mrb[0].mxu0
        %v10094 = vadd.f32 %v9997, %v10093
        %v10095 = vpop.f32.mrb[0].mxu0
        %10096 = vdwg.mxu0
        %10097 = vmatprep.subr.bf16.mxu0 0
        %10098 = vmatpush1.bf16.msra.mxu0 %v9371
        %10099 = vmatprep.subr.bf16.mxu0 0
        %10100 = vmatpush1.bf16.msra.mxu0 %v9372
        %10101 = vmatprep.subr.bf16.mxu0 0
        %10102 = vmatpush1.bf16.msra.mxu0 %v9373
        %10103 = vmatprep.subr.bf16.mxu0 0
        %10104 = vmatpush1.bf16.msra.mxu0 %v9374
        %10105 = vmatprep.subr.bf16.mxu0 0
        %10106 = vmatpush1.bf16.msra.mxu0 %v9375
        %10107 = vmatprep.subr.bf16.mxu0 0
        %10108 = vmatpush1.bf16.msra.mxu0 %v9376
        %10109 = vmatprep.subr.bf16.mxu0 0
        %10110 = vmatpush1.bf16.msra.mxu0 %v9377
        %10111 = vmatprep.subr.bf16.mxu0 0
        %10112 = vmatpush1.bf16.msra.mxu0 %v9378
        %10113 = vmatprep.subr.bf16.mxu0 0
        %10114 = vmatpush1.bf16.msra.mxu0 %v9379
        %10115 = vmatprep.subr.bf16.mxu0 0
        %10116 = vmatpush1.bf16.msra.mxu0 %v9380
        %10117 = vmatprep.subr.bf16.mxu0 0
        %10118 = vmatpush1.bf16.msra.mxu0 %v9381
        %10119 = vmatprep.subr.bf16.mxu0 0
        %10120 = vmatpush1.bf16.msra.mxu0 %v9382
        %10121 = vmatprep.subr.bf16.mxu0 0
        %10122 = vmatpush1.bf16.msra.mxu0 0
        %10123 = vmatprep.subr.bf16.mxu0 0
        %10124 = vmatpush1.bf16.msra.mxu0 0
        %10125 = vmatprep.subr.bf16.mxu0 0
        %10126 = vmatpush1.bf16.msra.mxu0 0
        %10127 = vmatprep.subr.bf16.mxu0 0
        %10128 = vmatpush1.bf16.msra.mxu0 0
        %10129 = vmatprep.mubr.bf16.mxu0 %v9492
        %10130 = vmatmul.mubr.bf16.gmra.mrb[0].mxu0 %v8520
        %v10131 = vpop.f32.mrb[0].mxu0
        %v10132 = vadd.f32 %v10035, %v10131
        %v10133 = vpop.f32.mrb[0].mxu0
        %v10134 = vpop.f32.mrb[0].mxu0
        %v10135 = vadd.f32 %v10038, %v10134
        %v10136 = vpop.f32.mrb[0].mxu0
        %10137 = vmatprep.mubr.bf16.mxu0 %v9495
        %10138 = vmatmul.mubr.bf16.gmra.mrb[0].mxu0 %v8534
        %v10139 = vpop.f32.mrb[0].mxu0
        %v10140 = vadd.f32 %v10043, %v10139
        %v10141 = vpop.f32.mrb[0].mxu0
        %v10142 = vpop.f32.mrb[0].mxu0
        %v10143 = vadd.f32 %v10046, %v10142
        %v10144 = vpop.f32.mrb[0].mxu0
        %10145 = vmatprep.mubr.bf16.mxu0 %v9498
        %10146 = vmatmul.mubr.bf16.gmra.mrb[0].mxu0 %v8548
        %v10147 = vpop.f32.mrb[0].mxu0
        %v10148 = vadd.f32 %v10051, %v10147
        %v10149 = vpop.f32.mrb[0].mxu0
        %v10150 = vpop.f32.mrb[0].mxu0
        %v10151 = vadd.f32 %v10054, %v10150
        %v10152 = vpop.f32.mrb[0].mxu0
        %10153 = vmatprep.mubr.bf16.mxu0 %v9501
        %10154 = vmatmul.mubr.bf16.gmra.mrb[0].mxu0 %v8562
        %v10155 = vpop.f32.mrb[0].mxu0
        %v10156 = vadd.f32 %v10059, %v10155
        %v10157 = vpop.f32.mrb[0].mxu0
        %v10158 = vpop.f32.mrb[0].mxu0
        %v10159 = vadd.f32 %v10062, %v10158
        %v10160 = vpop.f32.mrb[0].mxu0
        %10161 = vmatprep.mubr.bf16.mxu0 %v9504
        %10162 = vmatmul.mubr.bf16.gmra.mrb[0].mxu0 %v8576
        %v10163 = vpop.f32.mrb[0].mxu0
        %v10164 = vadd.f32 %v10067, %v10163
        %v10165 = vpop.f32.mrb[0].mxu0
        %v10166 = vpop.f32.mrb[0].mxu0
        %v10167 = vadd.f32 %v10070, %v10166
        %v10168 = vpop.f32.mrb[0].mxu0
        %10169 = vmatprep.mubr.bf16.mxu0 %v9507
        %10170 = vmatmul.mubr.bf16.gmra.mrb[0].mxu0 %v8590
        %v10171 = vpop.f32.mrb[0].mxu0
        %v10172 = vadd.f32 %v10075, %v10171
        %v10173 = vpop.f32.mrb[0].mxu0
        %v10174 = vpop.f32.mrb[0].mxu0
        %v10175 = vadd.f32 %v10078, %v10174
        %v10176 = vpop.f32.mrb[0].mxu0
        %10177 = vmatprep.mubr.bf16.mxu0 %v9510
        %10178 = vmatmul.mubr.bf16.gmra.mrb[0].mxu0 %v8604
        %v10179 = vpop.f32.mrb[0].mxu0
        %v10180 = vadd.f32 %v10083, %v10179
        %v10181 = vpop.f32.mrb[0].mxu0
        %v10182 = vpop.f32.mrb[0].mxu0
        %v10183 = vadd.f32 %v10086, %v10182
        %v10184 = vpop.f32.mrb[0].mxu0
        %10185 = vmatprep.mubr.bf16.mxu0 %v9513
        %10186 = vmatmul.mubr.bf16.gmra.mrb[0].mxu0 %v8618
        %v10187 = vpop.f32.mrb[0].mxu0
        %v10188 = vadd.f32 %v10091, %v10187
        %v10189 = vpop.f32.mrb[0].mxu0
        %v10190 = vpop.f32.mrb[0].mxu0
        %v10191 = vadd.f32 %v10094, %v10190
        %v10192 = vpop.f32.mrb[0].mxu0
        %10193 = vdwg.mxu0
        %v10194 = vmax.f32 %v10132, 0.0
        %v10195 = vmax.f32 %v10135, 0.0
        %v10196 = vmax.f32 %v10140, 0.0
        %v10197 = vmax.f32 %v10143, 0.0
        %v10198 = vmax.f32 %v10148, 0.0
        %v10199 = vmax.f32 %v10151, 0.0
        %v10200 = vmax.f32 %v10156, 0.0
        %v10201 = vmax.f32 %v10159, 0.0
        %v10202 = vmax.f32 %v10164, 0.0
        %v10203 = vmax.f32 %v10167, 0.0
        %v10204 = vmax.f32 %v10172, 0.0
        %v10205 = vmax.f32 %v10175, 0.0
        %v10206 = vmax.f32 %v10180, 0.0
        %v10207 = vmax.f32 %v10183, 0.0
        %v10208 = vmax.f32 %v10188, 0.0
        %v10209 = vmax.f32 %v10191, 0.0
        %v10210 = vld [vmem:[%s5] sm:$0xff]
        %v10211 = vld [vmem:[%s5 + $0x8] sm:$0xff]
        %v10212 = vld [vmem:[%s5 + $0x10] sm:$0xff]
        %v10213 = vld [vmem:[%s5 + $0x18] sm:$0xff]
        %v10214 = vld [vmem:[%s5 + $0x20] sm:$0xff]
        %v10215 = vld [vmem:[%s5 + $0x28] sm:$0xff]
        %v10216 = vld [vmem:[%s5 + $0x30] sm:$0xff]
        %v10217 = vld [vmem:[%s5 + $0x38] sm:$0xff]
        %v10218 = vld [vmem:[%s5 + $0x40] sm:$0xff]
        %v10219 = vld [vmem:[%s5 + $0x48] sm:$0xff]
        %v10220 = vld [vmem:[%s5 + $0x50] sm:$0xff]
        %v10221 = vld [vmem:[%s5 + $0x58] sm:$0xff]
        %v10222 = vld [vmem:[%s5 + $0x60] sm:$0xff]
        %v10223 = vld [vmem:[%s5 + $0x68] sm:$0xff]
        %v10224 = vld [vmem:[%s5 + $0x70] sm:$0xff]
        %v10225 = vld [vmem:[%s5 + $0x78] sm:$0xff]
        %v10226 = vmul.f32 %v10194, %v10210
        %v10227 = vmul.f32 %v10195, %v10211
        %v10228 = vmul.f32 %v10196, %v10212
        %v10229 = vmul.f32 %v10197, %v10213
        %v10230 = vmul.f32 %v10198, %v10214
        %v10231 = vmul.f32 %v10199, %v10215
        %v10232 = vmul.f32 %v10200, %v10216
        %v10233 = vmul.f32 %v10201, %v10217
        %v10234 = vmul.f32 %v10202, %v10218
        %v10235 = vmul.f32 %v10203, %v10219
        %v10236 = vmul.f32 %v10204, %v10220
        %v10237 = vmul.f32 %v10205, %v10221
        %v10238 = vmul.f32 %v10206, %v10222
        %v10239 = vmul.f32 %v10207, %v10223
        %v10240 = vmul.f32 %v10208, %v10224
        %v10241 = vmul.f32 %v10209, %v10225
        %10242 = vadd.xlane.f32.xlu0 %v10226
        %v10243 = vpop.xlane.xlu0 %10242
        %10244 = vadd.xlane.f32.xlu0 %v10227
        %v10245 = vpop.xlane.xlu0 %10244
        %10246 = vadd.xlane.f32.xlu0 %v10228
        %v10247 = vpop.xlane.xlu0 %10246
        %10248 = vadd.xlane.f32.xlu0 %v10229
        %v10249 = vpop.xlane.xlu0 %10248
        %10250 = vadd.xlane.f32.xlu0 %v10230
        %v10251 = vpop.xlane.xlu0 %10250
        %10252 = vadd.xlane.f32.xlu0 %v10231
        %v10253 = vpop.xlane.xlu0 %10252
        %10254 = vadd.xlane.f32.xlu0 %v10232
        %v10255 = vpop.xlane.xlu0 %10254
        %10256 = vadd.xlane.f32.xlu0 %v10233
        %v10257 = vpop.xlane.xlu0 %10256
        %10258 = vadd.xlane.f32.xlu0 %v10234
        %v10259 = vpop.xlane.xlu0 %10258
        %10260 = vadd.xlane.f32.xlu0 %v10235
        %v10261 = vpop.xlane.xlu0 %10260
        %10262 = vadd.xlane.f32.xlu0 %v10236
        %v10263 = vpop.xlane.xlu0 %10262
        %10264 = vadd.xlane.f32.xlu0 %v10237
        %v10265 = vpop.xlane.xlu0 %10264
        %10266 = vadd.xlane.f32.xlu0 %v10238
        %v10267 = vpop.xlane.xlu0 %10266
        %10268 = vadd.xlane.f32.xlu0 %v10239
        %v10269 = vpop.xlane.xlu0 %10268
        %10270 = vadd.xlane.f32.xlu0 %v10240
        %v10271 = vpop.xlane.xlu0 %10270
        %10272 = vadd.xlane.f32.xlu0 %v10241
        %v10273 = vpop.xlane.xlu0 %10272
        %v10274 = vadd.f32 %v10243, %v10245
        %v10275 = vadd.f32 %v10274, %v10247
        %v10276 = vadd.f32 %v10275, %v10249
        %v10277 = vadd.f32 %v10276, %v10251
        %v10278 = vadd.f32 %v10277, %v10253
        %v10279 = vadd.f32 %v10278, %v10255
        %v10280 = vadd.f32 %v10279, %v10257
        %v10281 = vadd.f32 %v10280, %v10259
        %v10282 = vadd.f32 %v10281, %v10261
        %v10283 = vadd.f32 %v10282, %v10263
        %v10284 = vadd.f32 %v10283, %v10265
        %v10285 = vadd.f32 %v10284, %v10267
        %v10286 = vadd.f32 %v10285, %v10269
        %v10287 = vadd.f32 %v10286, %v10271
        %v10288 = vadd.f32 %v10287, %v10273
        %v10289 = vrot.slane %v10288, 4
        %v10290 = vadd.f32 %v10288, %v10289
        %v10291 = vrot.slane %v10290, 2
        %v10292 = vadd.f32 %v10290, %v10291
        %v10293 = vrot.slane %v10292, 1
        %v10294 = vadd.f32 %v10292, %v10293
        %v10295 = vld [vmem:[%s6] sm:$0x1]
        %v10296 = vadd.f32 %v10294, %v10295
        %vm10297 = vcmask 0
        %10298 = vst.msk [vmem:[%s270] sm:$0x1] %vm10297, %v10296
        %s10299 = scalar_lea.vmem %s5, 128
        %v10300 = vld [vmem:[%s10299] sm:$0xff]
        %v10301 = vld [vmem:[%s10299 + $0x8] sm:$0xff]
        %v10302 = vld [vmem:[%s10299 + $0x10] sm:$0xff]
        %v10303 = vld [vmem:[%s10299 + $0x18] sm:$0xff]
        %v10304 = vld [vmem:[%s10299 + $0x20] sm:$0xff]
        %v10305 = vld [vmem:[%s10299 + $0x28] sm:$0xff]
        %v10306 = vld [vmem:[%s10299 + $0x30] sm:$0xff]
        %v10307 = vld [vmem:[%s10299 + $0x38] sm:$0xff]
        %v10308 = vld [vmem:[%s10299 + $0x40] sm:$0xff]
        %v10309 = vld [vmem:[%s10299 + $0x48] sm:$0xff]
        %v10310 = vld [vmem:[%s10299 + $0x50] sm:$0xff]
        %v10311 = vld [vmem:[%s10299 + $0x58] sm:$0xff]
        %v10312 = vld [vmem:[%s10299 + $0x60] sm:$0xff]
        %v10313 = vld [vmem:[%s10299 + $0x68] sm:$0xff]
        %v10314 = vld [vmem:[%s10299 + $0x70] sm:$0xff]
        %v10315 = vld [vmem:[%s10299 + $0x78] sm:$0xff]
        %v10316 = vmul.f32 %v10194, %v10300
        %v10317 = vmul.f32 %v10195, %v10301
        %v10318 = vmul.f32 %v10196, %v10302
        %v10319 = vmul.f32 %v10197, %v10303
        %v10320 = vmul.f32 %v10198, %v10304
        %v10321 = vmul.f32 %v10199, %v10305
        %v10322 = vmul.f32 %v10200, %v10306
        %v10323 = vmul.f32 %v10201, %v10307
        %v10324 = vmul.f32 %v10202, %v10308
        %v10325 = vmul.f32 %v10203, %v10309
        %v10326 = vmul.f32 %v10204, %v10310
        %v10327 = vmul.f32 %v10205, %v10311
        %v10328 = vmul.f32 %v10206, %v10312
        %v10329 = vmul.f32 %v10207, %v10313
        %v10330 = vmul.f32 %v10208, %v10314
        %v10331 = vmul.f32 %v10209, %v10315
        %10332 = vadd.xlane.f32.xlu0 %v10316
        %v10333 = vpop.xlane.xlu0 %10332
        %10334 = vadd.xlane.f32.xlu0 %v10317
        %v10335 = vpop.xlane.xlu0 %10334
        %10336 = vadd.xlane.f32.xlu0 %v10318
        %v10337 = vpop.xlane.xlu0 %10336
        %10338 = vadd.xlane.f32.xlu0 %v10319
        %v10339 = vpop.xlane.xlu0 %10338
        %10340 = vadd.xlane.f32.xlu0 %v10320
        %v10341 = vpop.xlane.xlu0 %10340
        %10342 = vadd.xlane.f32.xlu0 %v10321
        %v10343 = vpop.xlane.xlu0 %10342
        %10344 = vadd.xlane.f32.xlu0 %v10322
        %v10345 = vpop.xlane.xlu0 %10344
        %10346 = vadd.xlane.f32.xlu0 %v10323
        %v10347 = vpop.xlane.xlu0 %10346
        %10348 = vadd.xlane.f32.xlu0 %v10324
        %v10349 = vpop.xlane.xlu0 %10348
        %10350 = vadd.xlane.f32.xlu0 %v10325
        %v10351 = vpop.xlane.xlu0 %10350
        %10352 = vadd.xlane.f32.xlu0 %v10326
        %v10353 = vpop.xlane.xlu0 %10352
        %10354 = vadd.xlane.f32.xlu0 %v10327
        %v10355 = vpop.xlane.xlu0 %10354
        %10356 = vadd.xlane.f32.xlu0 %v10328
        %v10357 = vpop.xlane.xlu0 %10356
        %10358 = vadd.xlane.f32.xlu0 %v10329
        %v10359 = vpop.xlane.xlu0 %10358
        %10360 = vadd.xlane.f32.xlu0 %v10330
        %v10361 = vpop.xlane.xlu0 %10360
        %10362 = vadd.xlane.f32.xlu0 %v10331
        %v10363 = vpop.xlane.xlu0 %10362
        %v10364 = vadd.f32 %v10333, %v10335
        %v10365 = vadd.f32 %v10364, %v10337
        %v10366 = vadd.f32 %v10365, %v10339
        %v10367 = vadd.f32 %v10366, %v10341
        %v10368 = vadd.f32 %v10367, %v10343
        %v10369 = vadd.f32 %v10368, %v10345
        %v10370 = vadd.f32 %v10369, %v10347
        %v10371 = vadd.f32 %v10370, %v10349
        %v10372 = vadd.f32 %v10371, %v10351
        %v10373 = vadd.f32 %v10372, %v10353
        %v10374 = vadd.f32 %v10373, %v10355
        %v10375 = vadd.f32 %v10374, %v10357
        %v10376 = vadd.f32 %v10375, %v10359
        %v10377 = vadd.f32 %v10376, %v10361
        %v10378 = vadd.f32 %v10377, %v10363
        %v10379 = vrot.slane %v10378, 4
        %v10380 = vadd.f32 %v10378, %v10379
        %v10381 = vrot.slane %v10380, 2
        %v10382 = vadd.f32 %v10380, %v10381
        %v10383 = vrot.slane %v10382, 1
        %v10384 = vadd.f32 %v10382, %v10383
        %v10385 = vld [vmem:[%s6] sm:$0x1]
        %v10386 = vadd.f32 %v10384, %v10385
        %vm10387 = vcmask 8200
        %10388 = vst.msk [vmem:[%s270] sm:$0x1] %vm10387, %v10386
        %s10389 = scalar_lea.vmem %s5, 256
        %v10390 = vld [vmem:[%s10389] sm:$0xff]
        %v10391 = vld [vmem:[%s10389 + $0x8] sm:$0xff]
        %v10392 = vld [vmem:[%s10389 + $0x10] sm:$0xff]
        %v10393 = vld [vmem:[%s10389 + $0x18] sm:$0xff]
        %v10394 = vld [vmem:[%s10389 + $0x20] sm:$0xff]
        %v10395 = vld [vmem:[%s10389 + $0x28] sm:$0xff]
        %v10396 = vld [vmem:[%s10389 + $0x30] sm:$0xff]
        %v10397 = vld [vmem:[%s10389 + $0x38] sm:$0xff]
        %v10398 = vld [vmem:[%s10389 + $0x40] sm:$0xff]
        %v10399 = vld [vmem:[%s10389 + $0x48] sm:$0xff]
        %v10400 = vld [vmem:[%s10389 + $0x50] sm:$0xff]
        %v10401 = vld [vmem:[%s10389 + $0x58] sm:$0xff]
        %v10402 = vld [vmem:[%s10389 + $0x60] sm:$0xff]
        %v10403 = vld [vmem:[%s10389 + $0x68] sm:$0xff]
        %v10404 = vld [vmem:[%s10389 + $0x70] sm:$0xff]
        %v10405 = vld [vmem:[%s10389 + $0x78] sm:$0xff]
        %v10406 = vmul.f32 %v10194, %v10390
        %v10407 = vmul.f32 %v10195, %v10391
        %v10408 = vmul.f32 %v10196, %v10392
        %v10409 = vmul.f32 %v10197, %v10393
        %v10410 = vmul.f32 %v10198, %v10394
        %v10411 = vmul.f32 %v10199, %v10395
        %v10412 = vmul.f32 %v10200, %v10396
        %v10413 = vmul.f32 %v10201, %v10397
        %v10414 = vmul.f32 %v10202, %v10398
        %v10415 = vmul.f32 %v10203, %v10399
        %v10416 = vmul.f32 %v10204, %v10400
        %v10417 = vmul.f32 %v10205, %v10401
        %v10418 = vmul.f32 %v10206, %v10402
        %v10419 = vmul.f32 %v10207, %v10403
        %v10420 = vmul.f32 %v10208, %v10404
        %v10421 = vmul.f32 %v10209, %v10405
        %10422 = vadd.xlane.f32.xlu0 %v10406
        %v10423 = vpop.xlane.xlu0 %10422
        %10424 = vadd.xlane.f32.xlu0 %v10407
        %v10425 = vpop.xlane.xlu0 %10424
        %10426 = vadd.xlane.f32.xlu0 %v10408
        %v10427 = vpop.xlane.xlu0 %10426
        %10428 = vadd.xlane.f32.xlu0 %v10409
        %v10429 = vpop.xlane.xlu0 %10428
        %10430 = vadd.xlane.f32.xlu0 %v10410
        %v10431 = vpop.xlane.xlu0 %10430
        %10432 = vadd.xlane.f32.xlu0 %v10411
        %v10433 = vpop.xlane.xlu0 %10432
        %10434 = vadd.xlane.f32.xlu0 %v10412
        %v10435 = vpop.xlane.xlu0 %10434
        %10436 = vadd.xlane.f32.xlu0 %v10413
        %v10437 = vpop.xlane.xlu0 %10436
        %10438 = vadd.xlane.f32.xlu0 %v10414
        %v10439 = vpop.xlane.xlu0 %10438
        %10440 = vadd.xlane.f32.xlu0 %v10415
        %v10441 = vpop.xlane.xlu0 %10440
        %10442 = vadd.xlane.f32.xlu0 %v10416
        %v10443 = vpop.xlane.xlu0 %10442
        %10444 = vadd.xlane.f32.xlu0 %v10417
        %v10445 = vpop.xlane.xlu0 %10444
        %10446 = vadd.xlane.f32.xlu0 %v10418
        %v10447 = vpop.xlane.xlu0 %10446
        %10448 = vadd.xlane.f32.xlu0 %v10419
        %v10449 = vpop.xlane.xlu0 %10448
        %10450 = vadd.xlane.f32.xlu0 %v10420
        %v10451 = vpop.xlane.xlu0 %10450
        %10452 = vadd.xlane.f32.xlu0 %v10421
        %v10453 = vpop.xlane.xlu0 %10452
        %v10454 = vadd.f32 %v10423, %v10425
        %v10455 = vadd.f32 %v10454, %v10427
        %v10456 = vadd.f32 %v10455, %v10429
        %v10457 = vadd.f32 %v10456, %v10431
        %v10458 = vadd.f32 %v10457, %v10433
        %v10459 = vadd.f32 %v10458, %v10435
        %v10460 = vadd.f32 %v10459, %v10437
        %v10461 = vadd.f32 %v10460, %v10439
        %v10462 = vadd.f32 %v10461, %v10441
        %v10463 = vadd.f32 %v10462, %v10443
        %v10464 = vadd.f32 %v10463, %v10445
        %v10465 = vadd.f32 %v10464, %v10447
        %v10466 = vadd.f32 %v10465, %v10449
        %v10467 = vadd.f32 %v10466, %v10451
        %v10468 = vadd.f32 %v10467, %v10453
        %v10469 = vrot.slane %v10468, 4
        %v10470 = vadd.f32 %v10468, %v10469
        %v10471 = vrot.slane %v10470, 2
        %v10472 = vadd.f32 %v10470, %v10471
        %v10473 = vrot.slane %v10472, 1
        %v10474 = vadd.f32 %v10472, %v10473
        %v10475 = vld [vmem:[%s6] sm:$0x1]
        %v10476 = vadd.f32 %v10474, %v10475
        %vm10477 = vcmask 16400
        %10478 = vst.msk [vmem:[%s270] sm:$0x1] %vm10477, %v10476
        %s10479 = scalar_lea.vmem %s5, 384
        %v10480 = vld [vmem:[%s10479] sm:$0xff]
        %v10481 = vld [vmem:[%s10479 + $0x8] sm:$0xff]
        %v10482 = vld [vmem:[%s10479 + $0x10] sm:$0xff]
        %v10483 = vld [vmem:[%s10479 + $0x18] sm:$0xff]
        %v10484 = vld [vmem:[%s10479 + $0x20] sm:$0xff]
        %v10485 = vld [vmem:[%s10479 + $0x28] sm:$0xff]
        %v10486 = vld [vmem:[%s10479 + $0x30] sm:$0xff]
        %v10487 = vld [vmem:[%s10479 + $0x38] sm:$0xff]
        %v10488 = vld [vmem:[%s10479 + $0x40] sm:$0xff]
        %v10489 = vld [vmem:[%s10479 + $0x48] sm:$0xff]
        %v10490 = vld [vmem:[%s10479 + $0x50] sm:$0xff]
        %v10491 = vld [vmem:[%s10479 + $0x58] sm:$0xff]
        %v10492 = vld [vmem:[%s10479 + $0x60] sm:$0xff]
        %v10493 = vld [vmem:[%s10479 + $0x68] sm:$0xff]
        %v10494 = vld [vmem:[%s10479 + $0x70] sm:$0xff]
        %v10495 = vld [vmem:[%s10479 + $0x78] sm:$0xff]
        %v10496 = vmul.f32 %v10194, %v10480
        %v10497 = vmul.f32 %v10195, %v10481
        %v10498 = vmul.f32 %v10196, %v10482
        %v10499 = vmul.f32 %v10197, %v10483
        %v10500 = vmul.f32 %v10198, %v10484
        %v10501 = vmul.f32 %v10199, %v10485
        %v10502 = vmul.f32 %v10200, %v10486
        %v10503 = vmul.f32 %v10201, %v10487
        %v10504 = vmul.f32 %v10202, %v10488
        %v10505 = vmul.f32 %v10203, %v10489
        %v10506 = vmul.f32 %v10204, %v10490
        %v10507 = vmul.f32 %v10205, %v10491
        %v10508 = vmul.f32 %v10206, %v10492
        %v10509 = vmul.f32 %v10207, %v10493
        %v10510 = vmul.f32 %v10208, %v10494
        %v10511 = vmul.f32 %v10209, %v10495
        %10512 = vadd.xlane.f32.xlu0 %v10496
        %v10513 = vpop.xlane.xlu0 %10512
        %10514 = vadd.xlane.f32.xlu0 %v10497
        %v10515 = vpop.xlane.xlu0 %10514
        %10516 = vadd.xlane.f32.xlu0 %v10498
        %v10517 = vpop.xlane.xlu0 %10516
        %10518 = vadd.xlane.f32.xlu0 %v10499
        %v10519 = vpop.xlane.xlu0 %10518
        %10520 = vadd.xlane.f32.xlu0 %v10500
        %v10521 = vpop.xlane.xlu0 %10520
        %10522 = vadd.xlane.f32.xlu0 %v10501
        %v10523 = vpop.xlane.xlu0 %10522
        %10524 = vadd.xlane.f32.xlu0 %v10502
        %v10525 = vpop.xlane.xlu0 %10524
        %10526 = vadd.xlane.f32.xlu0 %v10503
        %v10527 = vpop.xlane.xlu0 %10526
        %10528 = vadd.xlane.f32.xlu0 %v10504
        %v10529 = vpop.xlane.xlu0 %10528
        %10530 = vadd.xlane.f32.xlu0 %v10505
        %v10531 = vpop.xlane.xlu0 %10530
        %10532 = vadd.xlane.f32.xlu0 %v10506
        %v10533 = vpop.xlane.xlu0 %10532
        %10534 = vadd.xlane.f32.xlu0 %v10507
        %v10535 = vpop.xlane.xlu0 %10534
        %10536 = vadd.xlane.f32.xlu0 %v10508
        %v10537 = vpop.xlane.xlu0 %10536
        %10538 = vadd.xlane.f32.xlu0 %v10509
        %v10539 = vpop.xlane.xlu0 %10538
        %10540 = vadd.xlane.f32.xlu0 %v10510
        %v10541 = vpop.xlane.xlu0 %10540
        %10542 = vadd.xlane.f32.xlu0 %v10511
        %v10543 = vpop.xlane.xlu0 %10542
        %v10544 = vadd.f32 %v10513, %v10515
        %v10545 = vadd.f32 %v10544, %v10517
        %v10546 = vadd.f32 %v10545, %v10519
        %v10547 = vadd.f32 %v10546, %v10521
        %v10548 = vadd.f32 %v10547, %v10523
        %v10549 = vadd.f32 %v10548, %v10525
        %v10550 = vadd.f32 %v10549, %v10527
        %v10551 = vadd.f32 %v10550, %v10529
        %v10552 = vadd.f32 %v10551, %v10531
        %v10553 = vadd.f32 %v10552, %v10533
        %v10554 = vadd.f32 %v10553, %v10535
        %v10555 = vadd.f32 %v10554, %v10537
        %v10556 = vadd.f32 %v10555, %v10539
        %v10557 = vadd.f32 %v10556, %v10541
        %v10558 = vadd.f32 %v10557, %v10543
        %v10559 = vrot.slane %v10558, 4
        %v10560 = vadd.f32 %v10558, %v10559
        %v10561 = vrot.slane %v10560, 2
        %v10562 = vadd.f32 %v10560, %v10561
        %v10563 = vrot.slane %v10562, 1
        %v10564 = vadd.f32 %v10562, %v10563
        %v10565 = vld [vmem:[%s6] sm:$0x1]
        %v10566 = vadd.f32 %v10564, %v10565
        %vm10567 = vcmask 24600
        %10568 = vst.msk [vmem:[%s270] sm:$0x1] %vm10567, %v10566
        %s10569 = scalar_lea.vmem %s5, 512
        %v10570 = vld [vmem:[%s10569] sm:$0xff]
        %v10571 = vld [vmem:[%s10569 + $0x8] sm:$0xff]
        %v10572 = vld [vmem:[%s10569 + $0x10] sm:$0xff]
        %v10573 = vld [vmem:[%s10569 + $0x18] sm:$0xff]
        %v10574 = vld [vmem:[%s10569 + $0x20] sm:$0xff]
        %v10575 = vld [vmem:[%s10569 + $0x28] sm:$0xff]
        %v10576 = vld [vmem:[%s10569 + $0x30] sm:$0xff]
        %v10577 = vld [vmem:[%s10569 + $0x38] sm:$0xff]
        %v10578 = vld [vmem:[%s10569 + $0x40] sm:$0xff]
        %v10579 = vld [vmem:[%s10569 + $0x48] sm:$0xff]
        %v10580 = vld [vmem:[%s10569 + $0x50] sm:$0xff]
        %v10581 = vld [vmem:[%s10569 + $0x58] sm:$0xff]
        %v10582 = vld [vmem:[%s10569 + $0x60] sm:$0xff]
        %v10583 = vld [vmem:[%s10569 + $0x68] sm:$0xff]
        %v10584 = vld [vmem:[%s10569 + $0x70] sm:$0xff]
        %v10585 = vld [vmem:[%s10569 + $0x78] sm:$0xff]
        %v10586 = vmul.f32 %v10194, %v10570
        %v10587 = vmul.f32 %v10195, %v10571
        %v10588 = vmul.f32 %v10196, %v10572
        %v10589 = vmul.f32 %v10197, %v10573
        %v10590 = vmul.f32 %v10198, %v10574
        %v10591 = vmul.f32 %v10199, %v10575
        %v10592 = vmul.f32 %v10200, %v10576
        %v10593 = vmul.f32 %v10201, %v10577
        %v10594 = vmul.f32 %v10202, %v10578
        %v10595 = vmul.f32 %v10203, %v10579
        %v10596 = vmul.f32 %v10204, %v10580
        %v10597 = vmul.f32 %v10205, %v10581
        %v10598 = vmul.f32 %v10206, %v10582
        %v10599 = vmul.f32 %v10207, %v10583
        %v10600 = vmul.f32 %v10208, %v10584
        %v10601 = vmul.f32 %v10209, %v10585
        %10602 = vadd.xlane.f32.xlu0 %v10586
        %v10603 = vpop.xlane.xlu0 %10602
        %10604 = vadd.xlane.f32.xlu0 %v10587
        %v10605 = vpop.xlane.xlu0 %10604
        %10606 = vadd.xlane.f32.xlu0 %v10588
        %v10607 = vpop.xlane.xlu0 %10606
        %10608 = vadd.xlane.f32.xlu0 %v10589
        %v10609 = vpop.xlane.xlu0 %10608
        %10610 = vadd.xlane.f32.xlu0 %v10590
        %v10611 = vpop.xlane.xlu0 %10610
        %10612 = vadd.xlane.f32.xlu0 %v10591
        %v10613 = vpop.xlane.xlu0 %10612
        %10614 = vadd.xlane.f32.xlu0 %v10592
        %v10615 = vpop.xlane.xlu0 %10614
        %10616 = vadd.xlane.f32.xlu0 %v10593
        %v10617 = vpop.xlane.xlu0 %10616
        %10618 = vadd.xlane.f32.xlu0 %v10594
        %v10619 = vpop.xlane.xlu0 %10618
        %10620 = vadd.xlane.f32.xlu0 %v10595
        %v10621 = vpop.xlane.xlu0 %10620
        %10622 = vadd.xlane.f32.xlu0 %v10596
        %v10623 = vpop.xlane.xlu0 %10622
        %10624 = vadd.xlane.f32.xlu0 %v10597
        %v10625 = vpop.xlane.xlu0 %10624
        %10626 = vadd.xlane.f32.xlu0 %v10598
        %v10627 = vpop.xlane.xlu0 %10626
        %10628 = vadd.xlane.f32.xlu0 %v10599
        %v10629 = vpop.xlane.xlu0 %10628
        %10630 = vadd.xlane.f32.xlu0 %v10600
        %v10631 = vpop.xlane.xlu0 %10630
        %10632 = vadd.xlane.f32.xlu0 %v10601
        %v10633 = vpop.xlane.xlu0 %10632
        %v10634 = vadd.f32 %v10603, %v10605
        %v10635 = vadd.f32 %v10634, %v10607
        %v10636 = vadd.f32 %v10635, %v10609
        %v10637 = vadd.f32 %v10636, %v10611
        %v10638 = vadd.f32 %v10637, %v10613
        %v10639 = vadd.f32 %v10638, %v10615
        %v10640 = vadd.f32 %v10639, %v10617
        %v10641 = vadd.f32 %v10640, %v10619
        %v10642 = vadd.f32 %v10641, %v10621
        %v10643 = vadd.f32 %v10642, %v10623
        %v10644 = vadd.f32 %v10643, %v10625
        %v10645 = vadd.f32 %v10644, %v10627
        %v10646 = vadd.f32 %v10645, %v10629
        %v10647 = vadd.f32 %v10646, %v10631
        %v10648 = vadd.f32 %v10647, %v10633
        %v10649 = vrot.slane %v10648, 4
        %v10650 = vadd.f32 %v10648, %v10649
        %v10651 = vrot.slane %v10650, 2
        %v10652 = vadd.f32 %v10650, %v10651
        %v10653 = vrot.slane %v10652, 1
        %v10654 = vadd.f32 %v10652, %v10653
        %v10655 = vld [vmem:[%s6] sm:$0x1]
        %v10656 = vadd.f32 %v10654, %v10655
        %vm10657 = vcmask 32800
        %10658 = vst.msk [vmem:[%s270] sm:$0x1] %vm10657, %v10656
        %s10659 = scalar_lea.vmem %s5, 640
        %v10660 = vld [vmem:[%s10659] sm:$0xff]
        %v10661 = vld [vmem:[%s10659 + $0x8] sm:$0xff]
        %v10662 = vld [vmem:[%s10659 + $0x10] sm:$0xff]
        %v10663 = vld [vmem:[%s10659 + $0x18] sm:$0xff]
        %v10664 = vld [vmem:[%s10659 + $0x20] sm:$0xff]
        %v10665 = vld [vmem:[%s10659 + $0x28] sm:$0xff]
        %v10666 = vld [vmem:[%s10659 + $0x30] sm:$0xff]
        %v10667 = vld [vmem:[%s10659 + $0x38] sm:$0xff]
        %v10668 = vld [vmem:[%s10659 + $0x40] sm:$0xff]
        %v10669 = vld [vmem:[%s10659 + $0x48] sm:$0xff]
        %v10670 = vld [vmem:[%s10659 + $0x50] sm:$0xff]
        %v10671 = vld [vmem:[%s10659 + $0x58] sm:$0xff]
        %v10672 = vld [vmem:[%s10659 + $0x60] sm:$0xff]
        %v10673 = vld [vmem:[%s10659 + $0x68] sm:$0xff]
        %v10674 = vld [vmem:[%s10659 + $0x70] sm:$0xff]
        %v10675 = vld [vmem:[%s10659 + $0x78] sm:$0xff]
        %v10676 = vmul.f32 %v10194, %v10660
        %v10677 = vmul.f32 %v10195, %v10661
        %v10678 = vmul.f32 %v10196, %v10662
        %v10679 = vmul.f32 %v10197, %v10663
        %v10680 = vmul.f32 %v10198, %v10664
        %v10681 = vmul.f32 %v10199, %v10665
        %v10682 = vmul.f32 %v10200, %v10666
        %v10683 = vmul.f32 %v10201, %v10667
        %v10684 = vmul.f32 %v10202, %v10668
        %v10685 = vmul.f32 %v10203, %v10669
        %v10686 = vmul.f32 %v10204, %v10670
        %v10687 = vmul.f32 %v10205, %v10671
        %v10688 = vmul.f32 %v10206, %v10672
        %v10689 = vmul.f32 %v10207, %v10673
        %v10690 = vmul.f32 %v10208, %v10674
        %v10691 = vmul.f32 %v10209, %v10675
        %10692 = vadd.xlane.f32.xlu0 %v10676
        %v10693 = vpop.xlane.xlu0 %10692
        %10694 = vadd.xlane.f32.xlu0 %v10677
        %v10695 = vpop.xlane.xlu0 %10694
        %10696 = vadd.xlane.f32.xlu0 %v10678
        %v10697 = vpop.xlane.xlu0 %10696
        %10698 = vadd.xlane.f32.xlu0 %v10679
        %v10699 = vpop.xlane.xlu0 %10698
        %10700 = vadd.xlane.f32.xlu0 %v10680
        %v10701 = vpop.xlane.xlu0 %10700
        %10702 = vadd.xlane.f32.xlu0 %v10681
        %v10703 = vpop.xlane.xlu0 %10702
        %10704 = vadd.xlane.f32.xlu0 %v10682
        %v10705 = vpop.xlane.xlu0 %10704
        %10706 = vadd.xlane.f32.xlu0 %v10683
        %v10707 = vpop.xlane.xlu0 %10706
        %10708 = vadd.xlane.f32.xlu0 %v10684
        %v10709 = vpop.xlane.xlu0 %10708
        %10710 = vadd.xlane.f32.xlu0 %v10685
        %v10711 = vpop.xlane.xlu0 %10710
        %10712 = vadd.xlane.f32.xlu0 %v10686
        %v10713 = vpop.xlane.xlu0 %10712
        %10714 = vadd.xlane.f32.xlu0 %v10687
        %v10715 = vpop.xlane.xlu0 %10714
        %10716 = vadd.xlane.f32.xlu0 %v10688
        %v10717 = vpop.xlane.xlu0 %10716
        %10718 = vadd.xlane.f32.xlu0 %v10689
        %v10719 = vpop.xlane.xlu0 %10718
        %10720 = vadd.xlane.f32.xlu0 %v10690
        %v10721 = vpop.xlane.xlu0 %10720
        %10722 = vadd.xlane.f32.xlu0 %v10691
        %v10723 = vpop.xlane.xlu0 %10722
        %v10724 = vadd.f32 %v10693, %v10695
        %v10725 = vadd.f32 %v10724, %v10697
        %v10726 = vadd.f32 %v10725, %v10699
        %v10727 = vadd.f32 %v10726, %v10701
        %v10728 = vadd.f32 %v10727, %v10703
        %v10729 = vadd.f32 %v10728, %v10705
        %v10730 = vadd.f32 %v10729, %v10707
        %v10731 = vadd.f32 %v10730, %v10709
        %v10732 = vadd.f32 %v10731, %v10711
        %v10733 = vadd.f32 %v10732, %v10713
        %v10734 = vadd.f32 %v10733, %v10715
        %v10735 = vadd.f32 %v10734, %v10717
        %v10736 = vadd.f32 %v10735, %v10719
        %v10737 = vadd.f32 %v10736, %v10721
        %v10738 = vadd.f32 %v10737, %v10723
        %v10739 = vrot.slane %v10738, 4
        %v10740 = vadd.f32 %v10738, %v10739
        %v10741 = vrot.slane %v10740, 2
        %v10742 = vadd.f32 %v10740, %v10741
        %v10743 = vrot.slane %v10742, 1
        %v10744 = vadd.f32 %v10742, %v10743
        %v10745 = vld [vmem:[%s6] sm:$0x1]
        %v10746 = vadd.f32 %v10744, %v10745
        %vm10747 = vcmask 41000
        %10748 = vst.msk [vmem:[%s270] sm:$0x1] %vm10747, %v10746
        %s10749 = scalar_lea.vmem %s5, 768
        %v10750 = vld [vmem:[%s10749] sm:$0xff]
        %v10751 = vld [vmem:[%s10749 + $0x8] sm:$0xff]
        %v10752 = vld [vmem:[%s10749 + $0x10] sm:$0xff]
        %v10753 = vld [vmem:[%s10749 + $0x18] sm:$0xff]
        %v10754 = vld [vmem:[%s10749 + $0x20] sm:$0xff]
        %v10755 = vld [vmem:[%s10749 + $0x28] sm:$0xff]
        %v10756 = vld [vmem:[%s10749 + $0x30] sm:$0xff]
        %v10757 = vld [vmem:[%s10749 + $0x38] sm:$0xff]
        %v10758 = vld [vmem:[%s10749 + $0x40] sm:$0xff]
        %v10759 = vld [vmem:[%s10749 + $0x48] sm:$0xff]
        %v10760 = vld [vmem:[%s10749 + $0x50] sm:$0xff]
        %v10761 = vld [vmem:[%s10749 + $0x58] sm:$0xff]
        %v10762 = vld [vmem:[%s10749 + $0x60] sm:$0xff]
        %v10763 = vld [vmem:[%s10749 + $0x68] sm:$0xff]
        %v10764 = vld [vmem:[%s10749 + $0x70] sm:$0xff]
        %v10765 = vld [vmem:[%s10749 + $0x78] sm:$0xff]
        %v10766 = vmul.f32 %v10194, %v10750
        %v10767 = vmul.f32 %v10195, %v10751
        %v10768 = vmul.f32 %v10196, %v10752
        %v10769 = vmul.f32 %v10197, %v10753
        %v10770 = vmul.f32 %v10198, %v10754
        %v10771 = vmul.f32 %v10199, %v10755
        %v10772 = vmul.f32 %v10200, %v10756
        %v10773 = vmul.f32 %v10201, %v10757
        %v10774 = vmul.f32 %v10202, %v10758
        %v10775 = vmul.f32 %v10203, %v10759
        %v10776 = vmul.f32 %v10204, %v10760
        %v10777 = vmul.f32 %v10205, %v10761
        %v10778 = vmul.f32 %v10206, %v10762
        %v10779 = vmul.f32 %v10207, %v10763
        %v10780 = vmul.f32 %v10208, %v10764
        %v10781 = vmul.f32 %v10209, %v10765
        %10782 = vadd.xlane.f32.xlu0 %v10766
        %v10783 = vpop.xlane.xlu0 %10782
        %10784 = vadd.xlane.f32.xlu0 %v10767
        %v10785 = vpop.xlane.xlu0 %10784
        %10786 = vadd.xlane.f32.xlu0 %v10768
        %v10787 = vpop.xlane.xlu0 %10786
        %10788 = vadd.xlane.f32.xlu0 %v10769
        %v10789 = vpop.xlane.xlu0 %10788
        %10790 = vadd.xlane.f32.xlu0 %v10770
        %v10791 = vpop.xlane.xlu0 %10790
        %10792 = vadd.xlane.f32.xlu0 %v10771
        %v10793 = vpop.xlane.xlu0 %10792
        %10794 = vadd.xlane.f32.xlu0 %v10772
        %v10795 = vpop.xlane.xlu0 %10794
        %10796 = vadd.xlane.f32.xlu0 %v10773
        %v10797 = vpop.xlane.xlu0 %10796
        %10798 = vadd.xlane.f32.xlu0 %v10774
        %v10799 = vpop.xlane.xlu0 %10798
        %10800 = vadd.xlane.f32.xlu0 %v10775
        %v10801 = vpop.xlane.xlu0 %10800
        %10802 = vadd.xlane.f32.xlu0 %v10776
        %v10803 = vpop.xlane.xlu0 %10802
        %10804 = vadd.xlane.f32.xlu0 %v10777
        %v10805 = vpop.xlane.xlu0 %10804
        %10806 = vadd.xlane.f32.xlu0 %v10778
        %v10807 = vpop.xlane.xlu0 %10806
        %10808 = vadd.xlane.f32.xlu0 %v10779
        %v10809 = vpop.xlane.xlu0 %10808
        %10810 = vadd.xlane.f32.xlu0 %v10780
        %v10811 = vpop.xlane.xlu0 %10810
        %10812 = vadd.xlane.f32.xlu0 %v10781
        %v10813 = vpop.xlane.xlu0 %10812
        %v10814 = vadd.f32 %v10783, %v10785
        %v10815 = vadd.f32 %v10814, %v10787
        %v10816 = vadd.f32 %v10815, %v10789
        %v10817 = vadd.f32 %v10816, %v10791
        %v10818 = vadd.f32 %v10817, %v10793
        %v10819 = vadd.f32 %v10818, %v10795
        %v10820 = vadd.f32 %v10819, %v10797
        %v10821 = vadd.f32 %v10820, %v10799
        %v10822 = vadd.f32 %v10821, %v10801
        %v10823 = vadd.f32 %v10822, %v10803
        %v10824 = vadd.f32 %v10823, %v10805
        %v10825 = vadd.f32 %v10824, %v10807
        %v10826 = vadd.f32 %v10825, %v10809
        %v10827 = vadd.f32 %v10826, %v10811
        %v10828 = vadd.f32 %v10827, %v10813
        %v10829 = vrot.slane %v10828, 4
        %v10830 = vadd.f32 %v10828, %v10829
        %v10831 = vrot.slane %v10830, 2
        %v10832 = vadd.f32 %v10830, %v10831
        %v10833 = vrot.slane %v10832, 1
        %v10834 = vadd.f32 %v10832, %v10833
        %v10835 = vld [vmem:[%s6] sm:$0x1]
        %v10836 = vadd.f32 %v10834, %v10835
        %vm10837 = vcmask 49200
        %10838 = vst.msk [vmem:[%s270] sm:$0x1] %vm10837, %v10836
        %s10839 = scalar_lea.vmem %s5, 896
        %v10840 = vld [vmem:[%s10839] sm:$0xff]
        %v10841 = vld [vmem:[%s10839 + $0x8] sm:$0xff]
        %v10842 = vld [vmem:[%s10839 + $0x10] sm:$0xff]
        %v10843 = vld [vmem:[%s10839 + $0x18] sm:$0xff]
        %v10844 = vld [vmem:[%s10839 + $0x20] sm:$0xff]
        %v10845 = vld [vmem:[%s10839 + $0x28] sm:$0xff]
        %v10846 = vld [vmem:[%s10839 + $0x30] sm:$0xff]
        %v10847 = vld [vmem:[%s10839 + $0x38] sm:$0xff]
        %v10848 = vld [vmem:[%s10839 + $0x40] sm:$0xff]
        %v10849 = vld [vmem:[%s10839 + $0x48] sm:$0xff]
        %v10850 = vld [vmem:[%s10839 + $0x50] sm:$0xff]
        %v10851 = vld [vmem:[%s10839 + $0x58] sm:$0xff]
        %v10852 = vld [vmem:[%s10839 + $0x60] sm:$0xff]
        %v10853 = vld [vmem:[%s10839 + $0x68] sm:$0xff]
        %v10854 = vld [vmem:[%s10839 + $0x70] sm:$0xff]
        %v10855 = vld [vmem:[%s10839 + $0x78] sm:$0xff]
        %v10856 = vmul.f32 %v10194, %v10840
        %v10857 = vmul.f32 %v10195, %v10841
        %v10858 = vmul.f32 %v10196, %v10842
        %v10859 = vmul.f32 %v10197, %v10843
        %v10860 = vmul.f32 %v10198, %v10844
        %v10861 = vmul.f32 %v10199, %v10845
        %v10862 = vmul.f32 %v10200, %v10846
        %v10863 = vmul.f32 %v10201, %v10847
        %v10864 = vmul.f32 %v10202, %v10848
        %v10865 = vmul.f32 %v10203, %v10849
        %v10866 = vmul.f32 %v10204, %v10850
        %v10867 = vmul.f32 %v10205, %v10851
        %v10868 = vmul.f32 %v10206, %v10852
        %v10869 = vmul.f32 %v10207, %v10853
        %v10870 = vmul.f32 %v10208, %v10854
        %v10871 = vmul.f32 %v10209, %v10855
        %10872 = vadd.xlane.f32.xlu0 %v10856
        %v10873 = vpop.xlane.xlu0 %10872
        %10874 = vadd.xlane.f32.xlu0 %v10857
        %v10875 = vpop.xlane.xlu0 %10874
        %10876 = vadd.xlane.f32.xlu0 %v10858
        %v10877 = vpop.xlane.xlu0 %10876
        %10878 = vadd.xlane.f32.xlu0 %v10859
        %v10879 = vpop.xlane.xlu0 %10878
        %10880 = vadd.xlane.f32.xlu0 %v10860
        %v10881 = vpop.xlane.xlu0 %10880
        %10882 = vadd.xlane.f32.xlu0 %v10861
        %v10883 = vpop.xlane.xlu0 %10882
        %10884 = vadd.xlane.f32.xlu0 %v10862
        %v10885 = vpop.xlane.xlu0 %10884
        %10886 = vadd.xlane.f32.xlu0 %v10863
        %v10887 = vpop.xlane.xlu0 %10886
        %10888 = vadd.xlane.f32.xlu0 %v10864
        %v10889 = vpop.xlane.xlu0 %10888
        %10890 = vadd.xlane.f32.xlu0 %v10865
        %v10891 = vpop.xlane.xlu0 %10890
        %10892 = vadd.xlane.f32.xlu0 %v10866
        %v10893 = vpop.xlane.xlu0 %10892
        %10894 = vadd.xlane.f32.xlu0 %v10867
        %v10895 = vpop.xlane.xlu0 %10894
        %10896 = vadd.xlane.f32.xlu0 %v10868
        %v10897 = vpop.xlane.xlu0 %10896
        %10898 = vadd.xlane.f32.xlu0 %v10869
        %v10899 = vpop.xlane.xlu0 %10898
        %10900 = vadd.xlane.f32.xlu0 %v10870
        %v10901 = vpop.xlane.xlu0 %10900
        %10902 = vadd.xlane.f32.xlu0 %v10871
        %v10903 = vpop.xlane.xlu0 %10902
        %v10904 = vadd.f32 %v10873, %v10875
        %v10905 = vadd.f32 %v10904, %v10877
        %v10906 = vadd.f32 %v10905, %v10879
        %v10907 = vadd.f32 %v10906, %v10881
        %v10908 = vadd.f32 %v10907, %v10883
        %v10909 = vadd.f32 %v10908, %v10885
        %v10910 = vadd.f32 %v10909, %v10887
        %v10911 = vadd.f32 %v10910, %v10889
        %v10912 = vadd.f32 %v10911, %v10891
        %v10913 = vadd.f32 %v10912, %v10893
        %v10914 = vadd.f32 %v10913, %v10895
        %v10915 = vadd.f32 %v10914, %v10897
        %v10916 = vadd.f32 %v10915, %v10899
        %v10917 = vadd.f32 %v10916, %v10901
        %v10918 = vadd.f32 %v10917, %v10903
        %v10919 = vrot.slane %v10918, 4
        %v10920 = vadd.f32 %v10918, %v10919
        %v10921 = vrot.slane %v10920, 2
        %v10922 = vadd.f32 %v10920, %v10921
        %v10923 = vrot.slane %v10922, 1
        %v10924 = vadd.f32 %v10922, %v10923
        %v10925 = vld [vmem:[%s6] sm:$0x1]
        %v10926 = vadd.f32 %v10924, %v10925
        %vm10927 = vcmask 57400
        %10928 = vst.msk [vmem:[%s270] sm:$0x1] %vm10927, %v10926
        %s10929 = scalar_lea.vmem %s5, 1024
        %v10930 = vld [vmem:[%s10929] sm:$0xff]
        %v10931 = vld [vmem:[%s10929 + $0x8] sm:$0xff]
        %v10932 = vld [vmem:[%s10929 + $0x10] sm:$0xff]
        %v10933 = vld [vmem:[%s10929 + $0x18] sm:$0xff]
        %v10934 = vld [vmem:[%s10929 + $0x20] sm:$0xff]
        %v10935 = vld [vmem:[%s10929 + $0x28] sm:$0xff]
        %v10936 = vld [vmem:[%s10929 + $0x30] sm:$0xff]
        %v10937 = vld [vmem:[%s10929 + $0x38] sm:$0xff]
        %v10938 = vld [vmem:[%s10929 + $0x40] sm:$0xff]
        %v10939 = vld [vmem:[%s10929 + $0x48] sm:$0xff]
        %v10940 = vld [vmem:[%s10929 + $0x50] sm:$0xff]
        %v10941 = vld [vmem:[%s10929 + $0x58] sm:$0xff]
        %v10942 = vld [vmem:[%s10929 + $0x60] sm:$0xff]
        %v10943 = vld [vmem:[%s10929 + $0x68] sm:$0xff]
        %v10944 = vld [vmem:[%s10929 + $0x70] sm:$0xff]
        %v10945 = vld [vmem:[%s10929 + $0x78] sm:$0xff]
        %v10946 = vmul.f32 %v10194, %v10930
        %v10947 = vmul.f32 %v10195, %v10931
        %v10948 = vmul.f32 %v10196, %v10932
        %v10949 = vmul.f32 %v10197, %v10933
        %v10950 = vmul.f32 %v10198, %v10934
        %v10951 = vmul.f32 %v10199, %v10935
        %v10952 = vmul.f32 %v10200, %v10936
        %v10953 = vmul.f32 %v10201, %v10937
        %v10954 = vmul.f32 %v10202, %v10938
        %v10955 = vmul.f32 %v10203, %v10939
        %v10956 = vmul.f32 %v10204, %v10940
        %v10957 = vmul.f32 %v10205, %v10941
        %v10958 = vmul.f32 %v10206, %v10942
        %v10959 = vmul.f32 %v10207, %v10943
        %v10960 = vmul.f32 %v10208, %v10944
        %v10961 = vmul.f32 %v10209, %v10945
        %10962 = vadd.xlane.f32.xlu0 %v10946
        %v10963 = vpop.xlane.xlu0 %10962
        %10964 = vadd.xlane.f32.xlu0 %v10947
        %v10965 = vpop.xlane.xlu0 %10964
        %10966 = vadd.xlane.f32.xlu0 %v10948
        %v10967 = vpop.xlane.xlu0 %10966
        %10968 = vadd.xlane.f32.xlu0 %v10949
        %v10969 = vpop.xlane.xlu0 %10968
        %10970 = vadd.xlane.f32.xlu0 %v10950
        %v10971 = vpop.xlane.xlu0 %10970
        %10972 = vadd.xlane.f32.xlu0 %v10951
        %v10973 = vpop.xlane.xlu0 %10972
        %10974 = vadd.xlane.f32.xlu0 %v10952
        %v10975 = vpop.xlane.xlu0 %10974
        %10976 = vadd.xlane.f32.xlu0 %v10953
        %v10977 = vpop.xlane.xlu0 %10976
        %10978 = vadd.xlane.f32.xlu0 %v10954
        %v10979 = vpop.xlane.xlu0 %10978
        %10980 = vadd.xlane.f32.xlu0 %v10955
        %v10981 = vpop.xlane.xlu0 %10980
        %10982 = vadd.xlane.f32.xlu0 %v10956
        %v10983 = vpop.xlane.xlu0 %10982
        %10984 = vadd.xlane.f32.xlu0 %v10957
        %v10985 = vpop.xlane.xlu0 %10984
        %10986 = vadd.xlane.f32.xlu0 %v10958
        %v10987 = vpop.xlane.xlu0 %10986
        %10988 = vadd.xlane.f32.xlu0 %v10959
        %v10989 = vpop.xlane.xlu0 %10988
        %10990 = vadd.xlane.f32.xlu0 %v10960
        %v10991 = vpop.xlane.xlu0 %10990
        %10992 = vadd.xlane.f32.xlu0 %v10961
        %v10993 = vpop.xlane.xlu0 %10992
        %v10994 = vadd.f32 %v10963, %v10965
        %v10995 = vadd.f32 %v10994, %v10967
        %v10996 = vadd.f32 %v10995, %v10969
        %v10997 = vadd.f32 %v10996, %v10971
        %v10998 = vadd.f32 %v10997, %v10973
        %v10999 = vadd.f32 %v10998, %v10975
        %v11000 = vadd.f32 %v10999, %v10977
        %v11001 = vadd.f32 %v11000, %v10979
        %v11002 = vadd.f32 %v11001, %v10981
        %v11003 = vadd.f32 %v11002, %v10983
        %v11004 = vadd.f32 %v11003, %v10985
        %v11005 = vadd.f32 %v11004, %v10987
        %v11006 = vadd.f32 %v11005, %v10989
        %v11007 = vadd.f32 %v11006, %v10991
        %v11008 = vadd.f32 %v11007, %v10993
        %v11009 = vrot.slane %v11008, 4
        %v11010 = vadd.f32 %v11008, %v11009
        %v11011 = vrot.slane %v11010, 2
        %v11012 = vadd.f32 %v11010, %v11011
        %v11013 = vrot.slane %v11012, 1
        %v11014 = vadd.f32 %v11012, %v11013
        %v11015 = vld [vmem:[%s6] sm:$0x1]
        %v11016 = vadd.f32 %v11014, %v11015
        %vm11017 = vcmask 65600
        %11018 = vst.msk [vmem:[%s270] sm:$0x1] %vm11017, %v11016
        %s11019 = scalar_lea.vmem %s5, 1152
        %v11020 = vld [vmem:[%s11019] sm:$0xff]
        %v11021 = vld [vmem:[%s11019 + $0x8] sm:$0xff]
        %v11022 = vld [vmem:[%s11019 + $0x10] sm:$0xff]
        %v11023 = vld [vmem:[%s11019 + $0x18] sm:$0xff]
        %v11024 = vld [vmem:[%s11019 + $0x20] sm:$0xff]
        %v11025 = vld [vmem:[%s11019 + $0x28] sm:$0xff]
        %v11026 = vld [vmem:[%s11019 + $0x30] sm:$0xff]
        %v11027 = vld [vmem:[%s11019 + $0x38] sm:$0xff]
        %v11028 = vld [vmem:[%s11019 + $0x40] sm:$0xff]
        %v11029 = vld [vmem:[%s11019 + $0x48] sm:$0xff]
        %v11030 = vld [vmem:[%s11019 + $0x50] sm:$0xff]
        %v11031 = vld [vmem:[%s11019 + $0x58] sm:$0xff]
        %v11032 = vld [vmem:[%s11019 + $0x60] sm:$0xff]
        %v11033 = vld [vmem:[%s11019 + $0x68] sm:$0xff]
        %v11034 = vld [vmem:[%s11019 + $0x70] sm:$0xff]
        %v11035 = vld [vmem:[%s11019 + $0x78] sm:$0xff]
        %v11036 = vmul.f32 %v10194, %v11020
        %v11037 = vmul.f32 %v10195, %v11021
        %v11038 = vmul.f32 %v10196, %v11022
        %v11039 = vmul.f32 %v10197, %v11023
        %v11040 = vmul.f32 %v10198, %v11024
        %v11041 = vmul.f32 %v10199, %v11025
        %v11042 = vmul.f32 %v10200, %v11026
        %v11043 = vmul.f32 %v10201, %v11027
        %v11044 = vmul.f32 %v10202, %v11028
        %v11045 = vmul.f32 %v10203, %v11029
        %v11046 = vmul.f32 %v10204, %v11030
        %v11047 = vmul.f32 %v10205, %v11031
        %v11048 = vmul.f32 %v10206, %v11032
        %v11049 = vmul.f32 %v10207, %v11033
        %v11050 = vmul.f32 %v10208, %v11034
        %v11051 = vmul.f32 %v10209, %v11035
        %11052 = vadd.xlane.f32.xlu0 %v11036
        %v11053 = vpop.xlane.xlu0 %11052
        %11054 = vadd.xlane.f32.xlu0 %v11037
        %v11055 = vpop.xlane.xlu0 %11054
        %11056 = vadd.xlane.f32.xlu0 %v11038
        %v11057 = vpop.xlane.xlu0 %11056
        %11058 = vadd.xlane.f32.xlu0 %v11039
        %v11059 = vpop.xlane.xlu0 %11058
        %11060 = vadd.xlane.f32.xlu0 %v11040
        %v11061 = vpop.xlane.xlu0 %11060
        %11062 = vadd.xlane.f32.xlu0 %v11041
        %v11063 = vpop.xlane.xlu0 %11062
        %11064 = vadd.xlane.f32.xlu0 %v11042
        %v11065 = vpop.xlane.xlu0 %11064
        %11066 = vadd.xlane.f32.xlu0 %v11043
        %v11067 = vpop.xlane.xlu0 %11066
        %11068 = vadd.xlane.f32.xlu0 %v11044
        %v11069 = vpop.xlane.xlu0 %11068
        %11070 = vadd.xlane.f32.xlu0 %v11045
        %v11071 = vpop.xlane.xlu0 %11070
        %11072 = vadd.xlane.f32.xlu0 %v11046
        %v11073 = vpop.xlane.xlu0 %11072
        %11074 = vadd.xlane.f32.xlu0 %v11047
        %v11075 = vpop.xlane.xlu0 %11074
        %11076 = vadd.xlane.f32.xlu0 %v11048
        %v11077 = vpop.xlane.xlu0 %11076
        %11078 = vadd.xlane.f32.xlu0 %v11049
        %v11079 = vpop.xlane.xlu0 %11078
        %11080 = vadd.xlane.f32.xlu0 %v11050
        %v11081 = vpop.xlane.xlu0 %11080
        %11082 = vadd.xlane.f32.xlu0 %v11051
        %v11083 = vpop.xlane.xlu0 %11082
        %v11084 = vadd.f32 %v11053, %v11055
        %v11085 = vadd.f32 %v11084, %v11057
        %v11086 = vadd.f32 %v11085, %v11059
        %v11087 = vadd.f32 %v11086, %v11061
        %v11088 = vadd.f32 %v11087, %v11063
        %v11089 = vadd.f32 %v11088, %v11065
        %v11090 = vadd.f32 %v11089, %v11067
        %v11091 = vadd.f32 %v11090, %v11069
        %v11092 = vadd.f32 %v11091, %v11071
        %v11093 = vadd.f32 %v11092, %v11073
        %v11094 = vadd.f32 %v11093, %v11075
        %v11095 = vadd.f32 %v11094, %v11077
        %v11096 = vadd.f32 %v11095, %v11079
        %v11097 = vadd.f32 %v11096, %v11081
        %v11098 = vadd.f32 %v11097, %v11083
        %v11099 = vrot.slane %v11098, 4
        %v11100 = vadd.f32 %v11098, %v11099
        %v11101 = vrot.slane %v11100, 2
        %v11102 = vadd.f32 %v11100, %v11101
        %v11103 = vrot.slane %v11102, 1
        %v11104 = vadd.f32 %v11102, %v11103
        %v11105 = vld [vmem:[%s6] sm:$0x1]
        %v11106 = vadd.f32 %v11104, %v11105
        %vm11107 = vcmask 73800
        %11108 = vst.msk [vmem:[%s270] sm:$0x1] %vm11107, %v11106
        %s11109 = sand.u32 %s181, 1
        %s11110 = scalar_lea.sflag [#allocation5], %s11109
        %s11111 = sand.u32 %s181, 1
        %s11112 = scalar_lea.vmem [#allocation4], %s11111
        // Predicated region
        $region49: #{conv1_forward.1} parent=47 // pred_check
          %p11113 = pneg %p191
        $region50: #{conv1_forward.1} parent=47 // pred_check_branch
          %11115 = sbr.rel (%p11113) target = $region52
        $region51: #{conv1_forward.1} parent=47 // pred_region
          %s11117 = ssub.s32 16, 16
          %11118 = vsyncadd %s11110, %s11117
          %s11119 = smul.addr %s21, 16
          %s11120 = scalar_lea.hbm %s7, %s11119
          %s11122 = sshll.u32 %s11112, 4
          %s11123 = int_to_ptr.vmem [resolvable:$true] %s11122
          %11125 = dma.vmem_to_hbm [thread:$0]  %s11123, 16, %s11120, %s11110
        $region52: #{conv1_forward.1} parent=47 // pred_fallthru
          _
      $region48: #{conv1_forward.1} parent=5 // pred_fallthru
        _
      %p11126 = scmp.le.s32.totalorder 2, %s16
      // Predicated region
      $region53: #{conv1_forward.1} parent=5 // pred_check
        %p11127 = pneg %p11126
      $region54: #{conv1_forward.1} parent=5 // pred_check_branch
        %11129 = sbr.rel (%p11127) target = $region56
      $region55: #{conv1_forward.1} parent=5 // pred_region
        %s11130 = ssub.s32 %s16, 2
        // Predicated region
        $region57: #{conv1_forward.1} parent=55 // pred_check
          %p11131 = pneg %p197
        $region58: #{conv1_forward.1} parent=55 // pred_check_branch
          %11133 = sbr.rel (%p11131) target = $region60
        $region59: #{conv1_forward.1} parent=55 // pred_region
          %s11134 = sand.u32 %s182, 1
          %s11135 = scalar_lea.sflag [#allocation5], %s11134
          %s11136 = sand.u32 %s182, 1
          %s11137 = scalar_lea.vmem [#allocation4], %s11136
          %11138 = dma.done %s11135, 16
        $region60: #{conv1_forward.1} parent=55 // pred_fallthru
          _
      $region56: #{conv1_forward.1} parent=5 // pred_fallthru
        _
    $region6: #{conv1_forward.1} parent=1 // loop_footer
      %s20 = sadd.s32 1, %s16
    $region7: #{conv1_forward.1} parent=1 // loop_footer_branch
      %15 = sbr.rel target = $region3
    $region8: #{conv1_forward.1} parent=1 // loop_exit
      _
    %11139 = vsyncpa [#allocation5], 1
    %s11140 = scalar_lea.sflag [#allocation5], 1
    %11141 = vsyncpa %s11140, 1

</llo_original>
